<compile_context>
chip_gen: v7x
topology: tpu7x:2x2x1
jax: 0.10.0
libtpu: 0.0.40
codegen_flags: <defaults>
</compile_context>

<pallas_src>
import numpy as np
import jax
import jax.numpy as jnp
from jax import lax
from jax.experimental import pallas as pl
from jax.experimental.pallas import tpu as pltpu

EPS = 1e-5


# ----------------------------------------------------------------------------
# In-kernel matmul helpers
# ----------------------------------------------------------------------------
def _mxu(a, b):
    """Activation x weight matmul: bf16 operands (native MXU), f32 accumulate."""
    return jnp.dot(a.astype(jnp.bfloat16), b, preferred_element_type=jnp.float32)


def _dot_hi(a, b):
    """Tiny structural matmuls (2x2 pool / BN channel reduce-expand) against
    exact 0/0.5/1 constants: keep f32-accurate so batch statistics match an
    f32 reference (cost is negligible at these sizes)."""
    return jnp.dot(a, b, precision=jax.lax.Precision.HIGHEST,
                   preferred_element_type=jnp.float32)


def _bn2d_relu_pool(y, inv_n, p_rows, p_cols, s_reduce, s_expand):
    """BatchNorm2d (batch stats, gamma=1, beta=0, biased var) + ReLU + 2x2
    AvgPool on a batch-stacked activation y of shape (B*Ho, C*wo)."""
    colsum = jnp.sum(y, axis=0, keepdims=True)                       # (1, C*wo)
    mean_l = _dot_hi(_dot_hi(colsum, s_reduce) * inv_n, s_expand)    # (1, C*wo)
    cent = y - mean_l
    sqsum = jnp.sum(cent * cent, axis=0, keepdims=True)
    inv_l = _dot_hi(lax.rsqrt(_dot_hi(sqsum, s_reduce) * inv_n + EPS), s_expand)
    z = jnp.maximum(cent * inv_l, 0.0)                               # BN + ReLU
    return _dot_hi(_dot_hi(p_rows, z), p_cols)                       # 2x2 pool


def _bn1d(h):
    """BatchNorm1d (batch stats, gamma=1, beta=0, biased var) on (B, N)."""
    mean = jnp.mean(h, axis=0, keepdims=True)
    cent = h - mean
    var = jnp.mean(cent * cent, axis=0, keepdims=True)
    return cent * lax.rsqrt(var + EPS)


# ----------------------------------------------------------------------------
# Fused kernel: conv1+bn+relu+pool -> conv2+bn+relu+pool -> fc1/2/3 (+bn each)
#
# Activation layout: rows are batch-interleaved (row = spatial_row * B + b),
# lanes are channel-blocked (lane = channel * width + col).  With this layout
# every conv/fc input slab is one contiguous ref slice.
# ----------------------------------------------------------------------------
def _cnn_batch_kernel(x_ref, t1_ref, t2_ref, w1p_ref, w2_ref, w3_ref,
                      pr1_ref, pc1_ref, sr1_ref, se1_ref,
                      pr2_ref, pc2_ref, sr2_ref, se2_ref,
                      o_ref, a1_ref, a2_ref):
    H = x_ref.shape[1]             # 32
    B = x_ref.shape[0] // H        # batch
    K = t1_ref.shape[0]            # 5
    wo1 = H - K + 1                # 28
    h1 = wo1 // 2                  # 14
    wo2 = h1 - K + 1               # 10
    h2 = wo2 // 2                  # 5

    # ---- conv1: 5 accumulating MXU dots over kernel rows, batch stacked on M
    y = _mxu(x_ref[pl.ds(0, wo1 * B), :], t1_ref[0])
    for di in range(1, K):
        y = y + _mxu(x_ref[pl.ds(di * B, wo1 * B), :], t1_ref[di])
    # y: (B*28, 6*28)

    a1_ref[...] = _bn2d_relu_pool(
        y, 1.0 / float(B * wo1 * wo1),
        pr1_ref[...], pc1_ref[...], sr1_ref[...], se1_ref[...],
    ).astype(a1_ref.dtype)                                     # (B*14, 6*14) bf16

    # ---- conv2 (input-channel sum folded into the banded matmul's K dim)
    y = _mxu(a1_ref[pl.ds(0, wo2 * B), :], t2_ref[0])
    for di in range(1, K):
        y = y + _mxu(a1_ref[pl.ds(di * B, wo2 * B), :], t2_ref[di])
    # y: (B*10, 16*10)

    a2_ref[...] = _bn2d_relu_pool(
        y, 1.0 / float(B * wo2 * wo2),
        pr2_ref[...], pc2_ref[...], sr2_ref[...], se2_ref[...],
    ).astype(a2_ref.dtype)                                     # (B*5, 16*5) bf16

    # ---- fc1 (+bn): 5 dots of (B,80)@(80,120) accumulated; then fc2/fc3 (+bn)
    h = _mxu(a2_ref[pl.ds(0, B), :], w1p_ref[0])
    for i in range(1, h2):
        h = h + _mxu(a2_ref[pl.ds(i * B, B), :], w1p_ref[i])
    h = _bn1d(h)                                               # (B, 120)
    h = _bn1d(_mxu(h, w2_ref[...]))                            # (B, 84)
    h = _bn1d(_mxu(h, w3_ref[...]))                            # (B, num_classes)

    o_ref[...] = h                                             # one stacked store


def _full_spec(shape):
    return pl.BlockSpec(shape, lambda: (0,) * len(shape))


def cnn_batch_forward(x, kparams):
    """x: (B, 1, 32, 32) float32 -> (B, num_classes) float32 (one pallas_call)."""
    B = x.shape[0]
    H = x.shape[2]
    t1, t2 = kparams["t1"], kparams["t2"]
    K = t1.shape[0]
    wo1 = H - K + 1
    h1 = wo1 // 2
    wo2 = h1 - K + 1
    h2 = wo2 // 2
    c1 = t1.shape[2] // wo1
    c2 = t2.shape[2] // wo2
    n_cls = kparams["w3t"].shape[1]

    # Tiny (8 KB) relayout: (B,1,H,H) -> row-interleaved (H*B, H) bf16, so every
    # conv slab inside the kernel is a single contiguous ref load.
    x_il = jnp.transpose(x[:, 0, :, :], (1, 0, 2)).reshape(H * B, H)
    x_il = x_il.astype(jnp.bfloat16)

    args = (x_il, t1, t2, kparams["w1p"], kparams["w2t"], kparams["w3t"],
            kparams["pr1"], kparams["pc1"], kparams["sr1"], kparams["se1"],
            kparams["pr2"], kparams["pc2"], kparams["sr2"], kparams["se2"])

    return pl.pallas_call(
        _cnn_batch_kernel,
        out_shape=jax.ShapeDtypeStruct((B, n_cls), jnp.float32),
        in_specs=[_full_spec(a.shape) for a in args],
        out_specs=_full_spec((B, n_cls)),
        scratch_shapes=[pltpu.VMEM((B * h1, c1 * h1), jnp.bfloat16),   # a1
                        pltpu.VMEM((B * h2, c2 * h2), jnp.bfloat16)],  # a2
    )(*args)


# ----------------------------------------------------------------------------
# One-time host-side weight / constant re-layout (hoisted off the hot path)
# ----------------------------------------------------------------------------
def _conv_band_matrices(w, w_in):
    """w: (Cout, Cin, K, K) -> (K, Cin*w_in, Cout*wo) banded matrices with
    T[di, cin*w_in + k, cout*wo + j] = w[cout, cin, di, k - j] (0 <= k-j < K)."""
    cout, cin, k, _ = w.shape
    wo = w_in - k + 1
    dj = np.arange(w_in)[:, None] - np.arange(wo)[None, :]
    valid = ((dj >= 0) & (dj < k)).astype(np.float32)
    band = w[:, :, :, np.clip(dj, 0, k - 1)] * valid             # (Cout,Cin,K,w_in,wo)
    band = band.transpose(2, 1, 3, 0, 4).reshape(k, cin * w_in, cout * wo)
    return band.astype(np.float32)


def _pool_rows_interleaved(ho, batch):
    """(ho//2*B, ho*B): averages adjacent spatial rows in the batch-interleaved
    row layout (row index = spatial_row * B + b)."""
    m = np.zeros((ho // 2 * batch, ho * batch), np.float32)
    for r in range(ho // 2):
        for b in range(batch):
            m[r * batch + b, (2 * r) * batch + b] = 0.5
            m[r * batch + b, (2 * r + 1) * batch + b] = 0.5
    return m


def _pool_cols(c, wo):
    """(C*wo, C*wo//2): averages adjacent columns within each channel block."""
    m = np.zeros((c * wo, c * (wo // 2)), np.float32)
    for ch in range(c):
        for j in range(wo // 2):
            m[ch * wo + 2 * j, ch * (wo // 2) + j] = 0.5
            m[ch * wo + 2 * j + 1, ch * (wo // 2) + j] = 0.5
    return m


def _chan_reduce(c, wo):
    """(C*wo, C): sums each channel's wo lanes into one column."""
    m = np.zeros((c * wo, c), np.float32)
    for ch in range(c):
        m[ch * wo:(ch + 1) * wo, ch] = 1.0
    return m


def _chan_expand(c, wo):
    """(C, C*wo): broadcasts a per-channel scalar over its wo lanes."""
    return np.ascontiguousarray(_chan_reduce(c, wo).T)


def prepare_kernel_params(params, batch_size, image_size=32):
    """Build the kernel's weight layout and constant matrices once.  Conv/FC
    biases are intentionally dropped: each layer feeds a fresh BatchNorm
    (gamma=1, beta=0) whose mean subtraction cancels per-channel constants."""
    B = batch_size
    K = 5
    w1 = np.asarray(params["w1"], np.float32)      # (6, 1, 5, 5)
    w2 = np.asarray(params["w2"], np.float32)      # (16, 6, 5, 5)
    fw1 = np.asarray(params["fw1"], np.float32)    # (120, 400)
    fw2 = np.asarray(params["fw2"], np.float32)    # (84, 120)
    fw3 = np.asarray(params["fw3"], np.float32)    # (10, 84)

    c1, c2 = w1.shape[0], w2.shape[0]
    wo1 = image_size - K + 1                       # 28
    h1 = wo1 // 2                                  # 14
    wo2 = h1 - K + 1                               # 10
    h2 = wo2 // 2                                  # 5
    n_fc1 = fw1.shape[0]

    # fc1 features arrive per spatial row i with lanes (c*5 + j); permute
    # torch's (c, i, j) flattening once into (5, C2*5, 120).
    w1p = (fw1.reshape(n_fc1, c2, h2, h2)
              .transpose(2, 1, 3, 0)
              .reshape(h2, c2 * h2, n_fc1))

    bf16 = jnp.bfloat16
    return {
        # bf16 weights for the MXU (f32 accumulation happens in-kernel)
        "t1": jnp.asarray(_conv_band_matrices(w1, image_size), bf16),  # (5,32,168)
        "t2": jnp.asarray(_conv_band_matrices(w2, h1), bf16),          # (5,84,160)
        "w1p": jnp.asarray(w1p, bf16),                                 # (5,80,120)
        "w2t": jnp.asarray(np.ascontiguousarray(fw2.T), bf16),         # (120,84)
        "w3t": jnp.asarray(np.ascontiguousarray(fw3.T), bf16),         # (84,10)
        # f32 structural constants (pool / BN reduce-expand), ~140 KB total
        "pr1": jnp.asarray(_pool_rows_interleaved(wo1, B)),            # (28,56)
        "pc1": jnp.asarray(_pool_cols(c1, wo1)),                       # (168,84)
        "sr1": jnp.asarray(_chan_reduce(c1, wo1)),                     # (168,6)
        "se1": jnp.asarray(_chan_expand(c1, wo1)),                     # (6,168)
        "pr2": jnp.asarray(_pool_rows_interleaved(wo2, B)),            # (10,20)
        "pc2": jnp.asarray(_pool_cols(c2, wo2)),                       # (160,80)
        "sr2": jnp.asarray(_chan_reduce(c2, wo2)),                     # (160,16)
        "se2": jnp.asarray(_chan_expand(c2, wo2)),                     # (16,160)
    }


# ----------------------------------------------------------------------------
# Deterministic parameter init (matches torch: kaiming_uniform weights,
# uniform(+-1/sqrt(fan_in)) biases; BN gamma/beta are 1/0 implicitly).
# ----------------------------------------------------------------------------
def _kaiming_uniform(key, shape, fan_in):
    bound = (2.0 ** 0.5) * (3.0 / fan_in) ** 0.5
    return jax.random.uniform(key, shape, jnp.float32, -bound, bound)


def _bias_uniform(key, shape, fan_in):
    bound = 1.0 / (fan_in ** 0.5)
    return jax.random.uniform(key, shape, jnp.float32, -bound, bound)


def init_params(key, out_1=6, out_2=16, num_classes=10):
    ks = jax.random.split(key, 10)
    return {
        "w1": _kaiming_uniform(ks[0], (out_1, 1, 5, 5), fan_in=1 * 25),
        "b1": _bias_uniform(ks[1], (out_1,), fan_in=1 * 25),
        "w2": _kaiming_uniform(ks[2], (out_2, out_1, 5, 5), fan_in=out_1 * 25),
        "b2": _bias_uniform(ks[3], (out_2,), fan_in=out_1 * 25),
        "fw1": _kaiming_uniform(ks[4], (120, out_2 * 5 * 5), fan_in=out_2 * 25),
        "fb1": _bias_uniform(ks[5], (120,), fan_in=out_2 * 25),
        "fw2": _kaiming_uniform(ks[6], (84, 120), fan_in=120),
        "fb2": _bias_uniform(ks[7], (84,), fan_in=120),
        "fw3": _kaiming_uniform(ks[8], (num_classes, 84), fan_in=84),
        "fb3": _bias_uniform(ks[9], (num_classes,), fan_in=84),
    }


# ----------------------------------------------------------------------------
# Pure-JAX (XLA) reference with the PyTorch forward structure and the same
# compute-dtype policy as the kernel: bf16 matmul operands, f32 accumulation,
# f32 BatchNorm / pooling.  This keeps the B=2 BatchNorm1d layers (which
# amplify tiny perturbations) from masking the comparison.
# ----------------------------------------------------------------------------
def reference_forward(x, params):
    bf16 = jnp.bfloat16

    def bn(y, axes):
        mean = jnp.mean(y, axis=axes, keepdims=True)
        var = jnp.mean((y - mean) ** 2, axis=axes, keepdims=True)
        return (y - mean) * lax.rsqrt(var + EPS)

    def conv(y, w, b):
        out = lax.conv_general_dilated(
            y.astype(bf16), w.astype(bf16), (1, 1), "VALID",
            dimension_numbers=("NCHW", "OIHW", "NCHW"),
            preferred_element_type=jnp.float32)
        return out + b[None, :, None, None]

    def pool(y):
        bsz, c, h, w = y.shape
        return y.reshape(bsz, c, h // 2, 2, w // 2, 2).mean(axis=(3, 5))

    def fc(y, w, b):
        return jnp.dot(y.astype(bf16), w.T.astype(bf16),
                       preferred_element_type=jnp.float32) + b

    y = pool(jnp.maximum(bn(conv(x, params["w1"], params["b1"]), (0, 2, 3)), 0.0))
    y = pool(jnp.maximum(bn(conv(y, params["w2"], params["b2"]), (0, 2, 3)), 0.0))
    y = y.reshape(y.shape[0], -1)
    y = bn(fc(y, params["fw1"], params["fb1"]), (0,))
    y = bn(fc(y, params["fw2"], params["fb2"]), (0,))
    y = bn(fc(y, params["fw3"], params["fb3"]), (0,))
    return y


if __name__ == "__main__":
    key = jax.random.PRNGKey(0)
    k_param, k_x = jax.random.split(key)
    params = init_params(k_param)

    B = 2
    # LeNet needs 32x32 inputs so fc1 sees 16*5*5 = 400 features.
    x = jax.random.normal(k_x, (B, 1, 32, 32), dtype=jnp.float32)

    kparams = prepare_kernel_params(params, batch_size=B)  # one-time re-layout

    fwd = jax.jit(cnn_batch_forward)
    out = jax.block_until_ready(fwd(x, kparams))

    assert out.shape == (B, 10), out.shape
    assert bool(jnp.all(jnp.isfinite(out)))

    # Semantics check against the reference (same bf16-operand / f32-accumulate
    # policy, so kernel-vs-reference differences are only accumulation-order
    # level).  Tolerance stays loose because the batch-of-2 BatchNorm1d layers
    # amplify tiny fp differences on columns whose batch difference is near
    # zero; any real layout/weight bug produces O(1) errors on the ~+-1
    # normalized outputs and is still caught.
    ref = jax.block_until_ready(reference_forward(x, params))
    max_diff = float(jnp.max(jnp.abs(out - ref)))
    assert max_diff < 0.5, max_diff

    print("KERNEL_OK")
</pallas_src>

<mosaic_0001>
module attributes {stable_mosaic.version = 11 : i64} {
  func.func @_cnn_batch_kernel(%arg0: memref<64x32xbf16, #tpu.memory_space<vmem>>, %arg1: memref<5x32x168xbf16, #tpu.memory_space<vmem>>, %arg2: memref<5x84x160xbf16, #tpu.memory_space<vmem>>, %arg3: memref<5x80x120xbf16, #tpu.memory_space<vmem>>, %arg4: memref<120x84xbf16, #tpu.memory_space<vmem>>, %arg5: memref<84x10xbf16, #tpu.memory_space<vmem>>, %arg6: memref<28x56xf32, #tpu.memory_space<vmem>>, %arg7: memref<168x84xf32, #tpu.memory_space<vmem>>, %arg8: memref<168x6xf32, #tpu.memory_space<vmem>>, %arg9: memref<6x168xf32, #tpu.memory_space<vmem>>, %arg10: memref<10x20xf32, #tpu.memory_space<vmem>>, %arg11: memref<160x80xf32, #tpu.memory_space<vmem>>, %arg12: memref<160x16xf32, #tpu.memory_space<vmem>>, %arg13: memref<16x160xf32, #tpu.memory_space<vmem>>, %arg14: memref<2x10xf32, #tpu.memory_space<vmem>>, %arg15: memref<28x84xbf16, #tpu.memory_space<vmem>>, %arg16: memref<10x80xbf16, #tpu.memory_space<vmem>>) attributes {dimension_semantics = [], scalar_prefetch = 0 : i64, scratch_operands = 2 : i64, tpu.core_type = #tpu.core_type<tc>} {
    %c0 = arith.constant 0 : index
    %c0_0 = arith.constant 0 : index
    %0 = vector.load %arg0[%c0, %c0_0] : memref<64x32xbf16, #tpu.memory_space<vmem>>, vector<56x32xbf16>
    %c0_1 = arith.constant 0 : index
    %c0_2 = arith.constant 0 : index
    %c0_3 = arith.constant 0 : index
    %1 = vector.load %arg1[%c0_1, %c0_2, %c0_3] : memref<5x32x168xbf16, #tpu.memory_space<vmem>>, vector<1x32x168xbf16>
    %2 = vector.shape_cast %1 : vector<1x32x168xbf16> to vector<32x168xbf16>
    %cst = arith.constant dense<0.000000e+00> : vector<56x168xf32>
    %3 = tpu.matmul %0, %2, %cst {dimension_numbers = #tpu.dot_dimension_numbers<[1], [0], [0], [1], [0, 0, 1, 1], [], []>} : vector<56x32xbf16>, vector<32x168xbf16>, vector<56x168xf32> -> vector<56x168xf32>
    %c2 = arith.constant 2 : index
    %c0_4 = arith.constant 0 : index
    %4 = vector.load %arg0[%c2, %c0_4] : memref<64x32xbf16, #tpu.memory_space<vmem>>, vector<56x32xbf16>
    %c1 = arith.constant 1 : index
    %c0_5 = arith.constant 0 : index
    %c0_6 = arith.constant 0 : index
    %5 = vector.load %arg1[%c1, %c0_5, %c0_6] : memref<5x32x168xbf16, #tpu.memory_space<vmem>>, vector<1x32x168xbf16>
    %6 = vector.shape_cast %5 : vector<1x32x168xbf16> to vector<32x168xbf16>
    %cst_7 = arith.constant dense<0.000000e+00> : vector<56x168xf32>
    %7 = tpu.matmul %4, %6, %cst_7 {dimension_numbers = #tpu.dot_dimension_numbers<[1], [0], [0], [1], [0, 0, 1, 1], [], []>} : vector<56x32xbf16>, vector<32x168xbf16>, vector<56x168xf32> -> vector<56x168xf32>
    %8 = arith.addf %3, %7 : vector<56x168xf32>
    %c4 = arith.constant 4 : index
    %c0_8 = arith.constant 0 : index
    %9 = vector.load %arg0[%c4, %c0_8] : memref<64x32xbf16, #tpu.memory_space<vmem>>, vector<56x32xbf16>
    %c2_9 = arith.constant 2 : index
    %c0_10 = arith.constant 0 : index
    %c0_11 = arith.constant 0 : index
    %10 = vector.load %arg1[%c2_9, %c0_10, %c0_11] : memref<5x32x168xbf16, #tpu.memory_space<vmem>>, vector<1x32x168xbf16>
    %11 = vector.shape_cast %10 : vector<1x32x168xbf16> to vector<32x168xbf16>
    %cst_12 = arith.constant dense<0.000000e+00> : vector<56x168xf32>
    %12 = tpu.matmul %9, %11, %cst_12 {dimension_numbers = #tpu.dot_dimension_numbers<[1], [0], [0], [1], [0, 0, 1, 1], [], []>} : vector<56x32xbf16>, vector<32x168xbf16>, vector<56x168xf32> -> vector<56x168xf32>
    %13 = arith.addf %8, %12 : vector<56x168xf32>
    %c6 = arith.constant 6 : index
    %c0_13 = arith.constant 0 : index
    %14 = vector.load %arg0[%c6, %c0_13] : memref<64x32xbf16, #tpu.memory_space<vmem>>, vector<56x32xbf16>
    %c3 = arith.constant 3 : index
    %c0_14 = arith.constant 0 : index
    %c0_15 = arith.constant 0 : index
    %15 = vector.load %arg1[%c3, %c0_14, %c0_15] : memref<5x32x168xbf16, #tpu.memory_space<vmem>>, vector<1x32x168xbf16>
    %16 = vector.shape_cast %15 : vector<1x32x168xbf16> to vector<32x168xbf16>
    %cst_16 = arith.constant dense<0.000000e+00> : vector<56x168xf32>
    %17 = tpu.matmul %14, %16, %cst_16 {dimension_numbers = #tpu.dot_dimension_numbers<[1], [0], [0], [1], [0, 0, 1, 1], [], []>} : vector<56x32xbf16>, vector<32x168xbf16>, vector<56x168xf32> -> vector<56x168xf32>
    %18 = arith.addf %13, %17 : vector<56x168xf32>
    %c8 = arith.constant 8 : index
    %c0_17 = arith.constant 0 : index
    %19 = vector.load %arg0[%c8, %c0_17] : memref<64x32xbf16, #tpu.memory_space<vmem>>, vector<56x32xbf16>
    %c4_18 = arith.constant 4 : index
    %c0_19 = arith.constant 0 : index
    %c0_20 = arith.constant 0 : index
    %20 = vector.load %arg1[%c4_18, %c0_19, %c0_20] : memref<5x32x168xbf16, #tpu.memory_space<vmem>>, vector<1x32x168xbf16>
    %21 = vector.shape_cast %20 : vector<1x32x168xbf16> to vector<32x168xbf16>
    %cst_21 = arith.constant dense<0.000000e+00> : vector<56x168xf32>
    %22 = tpu.matmul %19, %21, %cst_21 {dimension_numbers = #tpu.dot_dimension_numbers<[1], [0], [0], [1], [0, 0, 1, 1], [], []>} : vector<56x32xbf16>, vector<32x168xbf16>, vector<56x168xf32> -> vector<56x168xf32>
    %23 = arith.addf %18, %22 : vector<56x168xf32>
    %c0_22 = arith.constant 0 : index
    %c0_23 = arith.constant 0 : index
    %24 = vector.load %arg6[%c0_22, %c0_23] : memref<28x56xf32, #tpu.memory_space<vmem>>, vector<28x56xf32>
    %c0_24 = arith.constant 0 : index
    %c0_25 = arith.constant 0 : index
    %25 = vector.load %arg7[%c0_24, %c0_25] : memref<168x84xf32, #tpu.memory_space<vmem>>, vector<168x84xf32>
    %c0_26 = arith.constant 0 : index
    %c0_27 = arith.constant 0 : index
    %26 = vector.load %arg8[%c0_26, %c0_27] : memref<168x6xf32, #tpu.memory_space<vmem>>, vector<168x6xf32>
    %c0_28 = arith.constant 0 : index
    %c0_29 = arith.constant 0 : index
    %27 = vector.load %arg9[%c0_28, %c0_29] : memref<6x168xf32, #tpu.memory_space<vmem>>, vector<6x168xf32>
    %cst_30 = arith.constant dense<0.000000e+00> : vector<168xf32>
    %28 = vector.multi_reduction <add>, %23, %cst_30 [0] : vector<56x168xf32> to vector<168xf32>
    %29 = vector.shape_cast %28 : vector<168xf32> to vector<1x168xf32>
    %cst_31 = arith.constant dense<0.000000e+00> : vector<1x6xf32>
    %30 = tpu.matmul %29, %26, %cst_31 {dimension_numbers = #tpu.dot_dimension_numbers<[1], [0], [0], [1], [0, 0, 1, 1], [], []>, precision = #tpu.contract_precision<fp32>} : vector<1x168xf32>, vector<168x6xf32>, vector<1x6xf32> -> vector<1x6xf32>
    %cst_32 = arith.constant 6.37755089E-4 : f32
    %31 = vector.broadcast %cst_32 : f32 to vector<1x6xf32>
    %32 = arith.mulf %30, %31 : vector<1x6xf32>
    %cst_33 = arith.constant dense<0.000000e+00> : vector<1x168xf32>
    %33 = tpu.matmul %32, %27, %cst_33 {dimension_numbers = #tpu.dot_dimension_numbers<[1], [0], [0], [1], [0, 0, 1, 1], [], []>, precision = #tpu.contract_precision<fp32>} : vector<1x6xf32>, vector<6x168xf32>, vector<1x168xf32> -> vector<1x168xf32>
    %34 = vector.broadcast %33 : vector<1x168xf32> to vector<56x168xf32>
    %35 = arith.subf %23, %34 : vector<56x168xf32>
    %36 = arith.mulf %35, %35 : vector<56x168xf32>
    %cst_34 = arith.constant dense<0.000000e+00> : vector<168xf32>
    %37 = vector.multi_reduction <add>, %36, %cst_34 [0] : vector<56x168xf32> to vector<168xf32>
    %38 = vector.shape_cast %37 : vector<168xf32> to vector<1x168xf32>
    %cst_35 = arith.constant dense<0.000000e+00> : vector<1x6xf32>
    %39 = tpu.matmul %38, %26, %cst_35 {dimension_numbers = #tpu.dot_dimension_numbers<[1], [0], [0], [1], [0, 0, 1, 1], [], []>, precision = #tpu.contract_precision<fp32>} : vector<1x168xf32>, vector<168x6xf32>, vector<1x6xf32> -> vector<1x6xf32>
    %cst_36 = arith.constant 6.37755089E-4 : f32
    %40 = vector.broadcast %cst_36 : f32 to vector<1x6xf32>
    %41 = arith.mulf %39, %40 : vector<1x6xf32>
    %cst_37 = arith.constant 9.99999974E-6 : f32
    %42 = vector.broadcast %cst_37 : f32 to vector<1x6xf32>
    %43 = arith.addf %41, %42 : vector<1x6xf32>
    %44 = math.rsqrt %43 : vector<1x6xf32>
    %cst_38 = arith.constant dense<0.000000e+00> : vector<1x168xf32>
    %45 = tpu.matmul %44, %27, %cst_38 {dimension_numbers = #tpu.dot_dimension_numbers<[1], [0], [0], [1], [0, 0, 1, 1], [], []>, precision = #tpu.contract_precision<fp32>} : vector<1x6xf32>, vector<6x168xf32>, vector<1x168xf32> -> vector<1x168xf32>
    %46 = vector.broadcast %45 : vector<1x168xf32> to vector<56x168xf32>
    %47 = arith.mulf %35, %46 : vector<56x168xf32>
    %cst_39 = arith.constant 0.000000e+00 : f32
    %48 = vector.broadcast %cst_39 : f32 to vector<56x168xf32>
    %49 = arith.maximumf %47, %48 : vector<56x168xf32>
    %cst_40 = arith.constant dense<0.000000e+00> : vector<28x168xf32>
    %50 = tpu.matmul %24, %49, %cst_40 {dimension_numbers = #tpu.dot_dimension_numbers<[1], [0], [0], [1], [0, 0, 1, 1], [], []>, precision = #tpu.contract_precision<fp32>} : vector<28x56xf32>, vector<56x168xf32>, vector<28x168xf32> -> vector<28x168xf32>
    %cst_41 = arith.constant dense<0.000000e+00> : vector<28x84xf32>
    %51 = tpu.matmul %50, %25, %cst_41 {dimension_numbers = #tpu.dot_dimension_numbers<[1], [0], [0], [1], [0, 0, 1, 1], [], []>, precision = #tpu.contract_precision<fp32>} : vector<28x168xf32>, vector<168x84xf32>, vector<28x84xf32> -> vector<28x84xf32>
    %52 = arith.truncf %51 : vector<28x84xf32> to vector<28x84xbf16>
    %c0_42 = arith.constant 0 : index
    %c0_43 = arith.constant 0 : index
    %53 = vector.load %arg15[%c0_42, %c0_43] : memref<28x84xbf16, #tpu.memory_space<vmem>>, vector<28x84xbf16>
    tpu.vector_store %arg15[%c0_42, %c0_43], %52 {strides = array<i32>} : memref<28x84xbf16, #tpu.memory_space<vmem>>, vector<28x84xbf16>,
    %c0_44 = arith.constant 0 : index
    %c0_45 = arith.constant 0 : index
    %54 = vector.load %arg15[%c0_44, %c0_45] : memref<28x84xbf16, #tpu.memory_space<vmem>>, vector<20x84xbf16>
    %c0_46 = arith.constant 0 : index
    %c0_47 = arith.constant 0 : index
    %c0_48 = arith.constant 0 : index
    %55 = vector.load %arg2[%c0_46, %c0_47, %c0_48] : memref<5x84x160xbf16, #tpu.memory_space<vmem>>, vector<1x84x160xbf16>
    %56 = vector.shape_cast %55 : vector<1x84x160xbf16> to vector<84x160xbf16>
    %cst_49 = arith.constant dense<0.000000e+00> : vector<20x160xf32>
    %57 = tpu.matmul %54, %56, %cst_49 {dimension_numbers = #tpu.dot_dimension_numbers<[1], [0], [0], [1], [0, 0, 1, 1], [], []>} : vector<20x84xbf16>, vector<84x160xbf16>, vector<20x160xf32> -> vector<20x160xf32>
    %c2_50 = arith.constant 2 : index
    %c0_51 = arith.constant 0 : index
    %58 = vector.load %arg15[%c2_50, %c0_51] : memref<28x84xbf16, #tpu.memory_space<vmem>>, vector<20x84xbf16>
    %c1_52 = arith.constant 1 : index
    %c0_53 = arith.constant 0 : index
    %c0_54 = arith.constant 0 : index
    %59 = vector.load %arg2[%c1_52, %c0_53, %c0_54] : memref<5x84x160xbf16, #tpu.memory_space<vmem>>, vector<1x84x160xbf16>
    %60 = vector.shape_cast %59 : vector<1x84x160xbf16> to vector<84x160xbf16>
    %cst_55 = arith.constant dense<0.000000e+00> : vector<20x160xf32>
    %61 = tpu.matmul %58, %60, %cst_55 {dimension_numbers = #tpu.dot_dimension_numbers<[1], [0], [0], [1], [0, 0, 1, 1], [], []>} : vector<20x84xbf16>, vector<84x160xbf16>, vector<20x160xf32> -> vector<20x160xf32>
    %62 = arith.addf %57, %61 : vector<20x160xf32>
    %c4_56 = arith.constant 4 : index
    %c0_57 = arith.constant 0 : index
    %63 = vector.load %arg15[%c4_56, %c0_57] : memref<28x84xbf16, #tpu.memory_space<vmem>>, vector<20x84xbf16>
    %c2_58 = arith.constant 2 : index
    %c0_59 = arith.constant 0 : index
    %c0_60 = arith.constant 0 : index
    %64 = vector.load %arg2[%c2_58, %c0_59, %c0_60] : memref<5x84x160xbf16, #tpu.memory_space<vmem>>, vector<1x84x160xbf16>
    %65 = vector.shape_cast %64 : vector<1x84x160xbf16> to vector<84x160xbf16>
    %cst_61 = arith.constant dense<0.000000e+00> : vector<20x160xf32>
    %66 = tpu.matmul %63, %65, %cst_61 {dimension_numbers = #tpu.dot_dimension_numbers<[1], [0], [0], [1], [0, 0, 1, 1], [], []>} : vector<20x84xbf16>, vector<84x160xbf16>, vector<20x160xf32> -> vector<20x160xf32>
    %67 = arith.addf %62, %66 : vector<20x160xf32>
    %c6_62 = arith.constant 6 : index
    %c0_63 = arith.constant 0 : index
    %68 = vector.load %arg15[%c6_62, %c0_63] : memref<28x84xbf16, #tpu.memory_space<vmem>>, vector<20x84xbf16>
    %c3_64 = arith.constant 3 : index
    %c0_65 = arith.constant 0 : index
    %c0_66 = arith.constant 0 : index
    %69 = vector.load %arg2[%c3_64, %c0_65, %c0_66] : memref<5x84x160xbf16, #tpu.memory_space<vmem>>, vector<1x84x160xbf16>
    %70 = vector.shape_cast %69 : vector<1x84x160xbf16> to vector<84x160xbf16>
    %cst_67 = arith.constant dense<0.000000e+00> : vector<20x160xf32>
    %71 = tpu.matmul %68, %70, %cst_67 {dimension_numbers = #tpu.dot_dimension_numbers<[1], [0], [0], [1], [0, 0, 1, 1], [], []>} : vector<20x84xbf16>, vector<84x160xbf16>, vector<20x160xf32> -> vector<20x160xf32>
    %72 = arith.addf %67, %71 : vector<20x160xf32>
    %c8_68 = arith.constant 8 : index
    %c0_69 = arith.constant 0 : index
    %73 = vector.load %arg15[%c8_68, %c0_69] : memref<28x84xbf16, #tpu.memory_space<vmem>>, vector<20x84xbf16>
    %c4_70 = arith.constant 4 : index
    %c0_71 = arith.constant 0 : index
    %c0_72 = arith.constant 0 : index
    %74 = vector.load %arg2[%c4_70, %c0_71, %c0_72] : memref<5x84x160xbf16, #tpu.memory_space<vmem>>, vector<1x84x160xbf16>
    %75 = vector.shape_cast %74 : vector<1x84x160xbf16> to vector<84x160xbf16>
    %cst_73 = arith.constant dense<0.000000e+00> : vector<20x160xf32>
    %76 = tpu.matmul %73, %75, %cst_73 {dimension_numbers = #tpu.dot_dimension_numbers<[1], [0], [0], [1], [0, 0, 1, 1], [], []>} : vector<20x84xbf16>, vector<84x160xbf16>, vector<20x160xf32> -> vector<20x160xf32>
    %77 = arith.addf %72, %76 : vector<20x160xf32>
    %c0_74 = arith.constant 0 : index
    %c0_75 = arith.constant 0 : index
    %78 = vector.load %arg10[%c0_74, %c0_75] : memref<10x20xf32, #tpu.memory_space<vmem>>, vector<10x20xf32>
    %c0_76 = arith.constant 0 : index
    %c0_77 = arith.constant 0 : index
    %79 = vector.load %arg11[%c0_76, %c0_77] : memref<160x80xf32, #tpu.memory_space<vmem>>, vector<160x80xf32>
    %c0_78 = arith.constant 0 : index
    %c0_79 = arith.constant 0 : index
    %80 = vector.load %arg12[%c0_78, %c0_79] : memref<160x16xf32, #tpu.memory_space<vmem>>, vector<160x16xf32>
    %c0_80 = arith.constant 0 : index
    %c0_81 = arith.constant 0 : index
    %81 = vector.load %arg13[%c0_80, %c0_81] : memref<16x160xf32, #tpu.memory_space<vmem>>, vector<16x160xf32>
    %cst_82 = arith.constant dense<0.000000e+00> : vector<160xf32>
    %82 = vector.multi_reduction <add>, %77, %cst_82 [0] : vector<20x160xf32> to vector<160xf32>
    %83 = vector.shape_cast %82 : vector<160xf32> to vector<1x160xf32>
    %cst_83 = arith.constant dense<0.000000e+00> : vector<1x16xf32>
    %84 = tpu.matmul %83, %80, %cst_83 {dimension_numbers = #tpu.dot_dimension_numbers<[1], [0], [0], [1], [0, 0, 1, 1], [], []>, precision = #tpu.contract_precision<fp32>} : vector<1x160xf32>, vector<160x16xf32>, vector<1x16xf32> -> vector<1x16xf32>
    %cst_84 = arith.constant 5.000000e-03 : f32
    %85 = vector.broadcast %cst_84 : f32 to vector<1x16xf32>
    %86 = arith.mulf %84, %85 : vector<1x16xf32>
    %cst_85 = arith.constant dense<0.000000e+00> : vector<1x160xf32>
    %87 = tpu.matmul %86, %81, %cst_85 {dimension_numbers = #tpu.dot_dimension_numbers<[1], [0], [0], [1], [0, 0, 1, 1], [], []>, precision = #tpu.contract_precision<fp32>} : vector<1x16xf32>, vector<16x160xf32>, vector<1x160xf32> -> vector<1x160xf32>
    %88 = vector.broadcast %87 : vector<1x160xf32> to vector<20x160xf32>
    %89 = arith.subf %77, %88 : vector<20x160xf32>
    %90 = arith.mulf %89, %89 : vector<20x160xf32>
    %cst_86 = arith.constant dense<0.000000e+00> : vector<160xf32>
    %91 = vector.multi_reduction <add>, %90, %cst_86 [0] : vector<20x160xf32> to vector<160xf32>
    %92 = vector.shape_cast %91 : vector<160xf32> to vector<1x160xf32>
    %cst_87 = arith.constant dense<0.000000e+00> : vector<1x16xf32>
    %93 = tpu.matmul %92, %80, %cst_87 {dimension_numbers = #tpu.dot_dimension_numbers<[1], [0], [0], [1], [0, 0, 1, 1], [], []>, precision = #tpu.contract_precision<fp32>} : vector<1x160xf32>, vector<160x16xf32>, vector<1x16xf32> -> vector<1x16xf32>
    %cst_88 = arith.constant 5.000000e-03 : f32
    %94 = vector.broadcast %cst_88 : f32 to vector<1x16xf32>
    %95 = arith.mulf %93, %94 : vector<1x16xf32>
    %cst_89 = arith.constant 9.99999974E-6 : f32
    %96 = vector.broadcast %cst_89 : f32 to vector<1x16xf32>
    %97 = arith.addf %95, %96 : vector<1x16xf32>
    %98 = math.rsqrt %97 : vector<1x16xf32>
    %cst_90 = arith.constant dense<0.000000e+00> : vector<1x160xf32>
    %99 = tpu.matmul %98, %81, %cst_90 {dimension_numbers = #tpu.dot_dimension_numbers<[1], [0], [0], [1], [0, 0, 1, 1], [], []>, precision = #tpu.contract_precision<fp32>} : vector<1x16xf32>, vector<16x160xf32>, vector<1x160xf32> -> vector<1x160xf32>
    %100 = vector.broadcast %99 : vector<1x160xf32> to vector<20x160xf32>
    %101 = arith.mulf %89, %100 : vector<20x160xf32>
    %cst_91 = arith.constant 0.000000e+00 : f32
    %102 = vector.broadcast %cst_91 : f32 to vector<20x160xf32>
    %103 = arith.maximumf %101, %102 : vector<20x160xf32>
    %cst_92 = arith.constant dense<0.000000e+00> : vector<10x160xf32>
    %104 = tpu.matmul %78, %103, %cst_92 {dimension_numbers = #tpu.dot_dimension_numbers<[1], [0], [0], [1], [0, 0, 1, 1], [], []>, precision = #tpu.contract_precision<fp32>} : vector<10x20xf32>, vector<20x160xf32>, vector<10x160xf32> -> vector<10x160xf32>
    %cst_93 = arith.constant dense<0.000000e+00> : vector<10x80xf32>
    %105 = tpu.matmul %104, %79, %cst_93 {dimension_numbers = #tpu.dot_dimension_numbers<[1], [0], [0], [1], [0, 0, 1, 1], [], []>, precision = #tpu.contract_precision<fp32>} : vector<10x160xf32>, vector<160x80xf32>, vector<10x80xf32> -> vector<10x80xf32>
    %106 = arith.truncf %105 : vector<10x80xf32> to vector<10x80xbf16>
    %c0_94 = arith.constant 0 : index
    %c0_95 = arith.constant 0 : index
    %107 = vector.load %arg16[%c0_94, %c0_95] : memref<10x80xbf16, #tpu.memory_space<vmem>>, vector<10x80xbf16>
    tpu.vector_store %arg16[%c0_94, %c0_95], %106 {strides = array<i32>} : memref<10x80xbf16, #tpu.memory_space<vmem>>, vector<10x80xbf16>,
    %c0_96 = arith.constant 0 : index
    %c0_97 = arith.constant 0 : index
    %108 = vector.load %arg16[%c0_96, %c0_97] : memref<10x80xbf16, #tpu.memory_space<vmem>>, vector<2x80xbf16>
    %c0_98 = arith.constant 0 : index
    %c0_99 = arith.constant 0 : index
    %c0_100 = arith.constant 0 : index
    %109 = vector.load %arg3[%c0_98, %c0_99, %c0_100] : memref<5x80x120xbf16, #tpu.memory_space<vmem>>, vector<1x80x120xbf16>
    %110 = vector.shape_cast %109 : vector<1x80x120xbf16> to vector<80x120xbf16>
    %cst_101 = arith.constant dense<0.000000e+00> : vector<2x120xf32>
    %111 = tpu.matmul %108, %110, %cst_101 {dimension_numbers = #tpu.dot_dimension_numbers<[1], [0], [0], [1], [0, 0, 1, 1], [], []>} : vector<2x80xbf16>, vector<80x120xbf16>, vector<2x120xf32> -> vector<2x120xf32>
    %c2_102 = arith.constant 2 : index
    %c0_103 = arith.constant 0 : index
    %112 = vector.load %arg16[%c2_102, %c0_103] : memref<10x80xbf16, #tpu.memory_space<vmem>>, vector<2x80xbf16>
    %c1_104 = arith.constant 1 : index
    %c0_105 = arith.constant 0 : index
    %c0_106 = arith.constant 0 : index
    %113 = vector.load %arg3[%c1_104, %c0_105, %c0_106] : memref<5x80x120xbf16, #tpu.memory_space<vmem>>, vector<1x80x120xbf16>
    %114 = vector.shape_cast %113 : vector<1x80x120xbf16> to vector<80x120xbf16>
    %cst_107 = arith.constant dense<0.000000e+00> : vector<2x120xf32>
    %115 = tpu.matmul %112, %114, %cst_107 {dimension_numbers = #tpu.dot_dimension_numbers<[1], [0], [0], [1], [0, 0, 1, 1], [], []>} : vector<2x80xbf16>, vector<80x120xbf16>, vector<2x120xf32> -> vector<2x120xf32>
    %116 = arith.addf %111, %115 : vector<2x120xf32>
    %c4_108 = arith.constant 4 : index
    %c0_109 = arith.constant 0 : index
    %117 = vector.load %arg16[%c4_108, %c0_109] : memref<10x80xbf16, #tpu.memory_space<vmem>>, vector<2x80xbf16>
    %c2_110 = arith.constant 2 : index
    %c0_111 = arith.constant 0 : index
    %c0_112 = arith.constant 0 : index
    %118 = vector.load %arg3[%c2_110, %c0_111, %c0_112] : memref<5x80x120xbf16, #tpu.memory_space<vmem>>, vector<1x80x120xbf16>
    %119 = vector.shape_cast %118 : vector<1x80x120xbf16> to vector<80x120xbf16>
    %cst_113 = arith.constant dense<0.000000e+00> : vector<2x120xf32>
    %120 = tpu.matmul %117, %119, %cst_113 {dimension_numbers = #tpu.dot_dimension_numbers<[1], [0], [0], [1], [0, 0, 1, 1], [], []>} : vector<2x80xbf16>, vector<80x120xbf16>, vector<2x120xf32> -> vector<2x120xf32>
    %121 = arith.addf %116, %120 : vector<2x120xf32>
    %c6_114 = arith.constant 6 : index
    %c0_115 = arith.constant 0 : index
    %122 = vector.load %arg16[%c6_114, %c0_115] : memref<10x80xbf16, #tpu.memory_space<vmem>>, vector<2x80xbf16>
    %c3_116 = arith.constant 3 : index
    %c0_117 = arith.constant 0 : index
    %c0_118 = arith.constant 0 : index
    %123 = vector.load %arg3[%c3_116, %c0_117, %c0_118] : memref<5x80x120xbf16, #tpu.memory_space<vmem>>, vector<1x80x120xbf16>
    %124 = vector.shape_cast %123 : vector<1x80x120xbf16> to vector<80x120xbf16>
    %cst_119 = arith.constant dense<0.000000e+00> : vector<2x120xf32>
    %125 = tpu.matmul %122, %124, %cst_119 {dimension_numbers = #tpu.dot_dimension_numbers<[1], [0], [0], [1], [0, 0, 1, 1], [], []>} : vector<2x80xbf16>, vector<80x120xbf16>, vector<2x120xf32> -> vector<2x120xf32>
    %126 = arith.addf %121, %125 : vector<2x120xf32>
    %c8_120 = arith.constant 8 : index
    %c0_121 = arith.constant 0 : index
    %127 = vector.load %arg16[%c8_120, %c0_121] : memref<10x80xbf16, #tpu.memory_space<vmem>>, vector<2x80xbf16>
    %c4_122 = arith.constant 4 : index
    %c0_123 = arith.constant 0 : index
    %c0_124 = arith.constant 0 : index
    %128 = vector.load %arg3[%c4_122, %c0_123, %c0_124] : memref<5x80x120xbf16, #tpu.memory_space<vmem>>, vector<1x80x120xbf16>
    %129 = vector.shape_cast %128 : vector<1x80x120xbf16> to vector<80x120xbf16>
    %cst_125 = arith.constant dense<0.000000e+00> : vector<2x120xf32>
    %130 = tpu.matmul %127, %129, %cst_125 {dimension_numbers = #tpu.dot_dimension_numbers<[1], [0], [0], [1], [0, 0, 1, 1], [], []>} : vector<2x80xbf16>, vector<80x120xbf16>, vector<2x120xf32> -> vector<2x120xf32>
    %131 = arith.addf %126, %130 : vector<2x120xf32>
    %cst_126 = arith.constant dense<0.000000e+00> : vector<120xf32>
    %132 = vector.multi_reduction <add>, %131, %cst_126 [0] : vector<2x120xf32> to vector<120xf32>
    %133 = vector.shape_cast %132 : vector<120xf32> to vector<1x120xf32>
    %cst_127 = arith.constant 2.000000e+00 : f32
    %134 = vector.broadcast %cst_127 : f32 to vector<1x120xf32>
    %135 = arith.divf %133, %134 : vector<1x120xf32>
    %136 = vector.broadcast %135 : vector<1x120xf32> to vector<2x120xf32>
    %137 = arith.subf %131, %136 : vector<2x120xf32>
    %138 = arith.mulf %137, %137 : vector<2x120xf32>
    %cst_128 = arith.constant dense<0.000000e+00> : vector<120xf32>
    %139 = vector.multi_reduction <add>, %138, %cst_128 [0] : vector<2x120xf32> to vector<120xf32>
    %140 = vector.shape_cast %139 : vector<120xf32> to vector<1x120xf32>
    %cst_129 = arith.constant 2.000000e+00 : f32
    %141 = vector.broadcast %cst_129 : f32 to vector<1x120xf32>
    %142 = arith.divf %140, %141 : vector<1x120xf32>
    %cst_130 = arith.constant 9.99999974E-6 : f32
    %143 = vector.broadcast %cst_130 : f32 to vector<1x120xf32>
    %144 = arith.addf %142, %143 : vector<1x120xf32>
    %145 = math.rsqrt %144 : vector<1x120xf32>
    %146 = vector.broadcast %145 : vector<1x120xf32> to vector<2x120xf32>
    %147 = arith.mulf %137, %146 : vector<2x120xf32>
    %c0_131 = arith.constant 0 : index
    %c0_132 = arith.constant 0 : index
    %148 = vector.load %arg4[%c0_131, %c0_132] : memref<120x84xbf16, #tpu.memory_space<vmem>>, vector<120x84xbf16>
    %149 = arith.truncf %147 : vector<2x120xf32> to vector<2x120xbf16>
    %cst_133 = arith.constant dense<0.000000e+00> : vector<2x84xf32>
    %150 = tpu.matmul %149, %148, %cst_133 {dimension_numbers = #tpu.dot_dimension_numbers<[1], [0], [0], [1], [0, 0, 1, 1], [], []>} : vector<2x120xbf16>, vector<120x84xbf16>, vector<2x84xf32> -> vector<2x84xf32>
    %cst_134 = arith.constant dense<0.000000e+00> : vector<84xf32>
    %151 = vector.multi_reduction <add>, %150, %cst_134 [0] : vector<2x84xf32> to vector<84xf32>
    %152 = vector.shape_cast %151 : vector<84xf32> to vector<1x84xf32>
    %cst_135 = arith.constant 2.000000e+00 : f32
    %153 = vector.broadcast %cst_135 : f32 to vector<1x84xf32>
    %154 = arith.divf %152, %153 : vector<1x84xf32>
    %155 = vector.broadcast %154 : vector<1x84xf32> to vector<2x84xf32>
    %156 = arith.subf %150, %155 : vector<2x84xf32>
    %157 = arith.mulf %156, %156 : vector<2x84xf32>
    %cst_136 = arith.constant dense<0.000000e+00> : vector<84xf32>
    %158 = vector.multi_reduction <add>, %157, %cst_136 [0] : vector<2x84xf32> to vector<84xf32>
    %159 = vector.shape_cast %158 : vector<84xf32> to vector<1x84xf32>
    %cst_137 = arith.constant 2.000000e+00 : f32
    %160 = vector.broadcast %cst_137 : f32 to vector<1x84xf32>
    %161 = arith.divf %159, %160 : vector<1x84xf32>
    %cst_138 = arith.constant 9.99999974E-6 : f32
    %162 = vector.broadcast %cst_138 : f32 to vector<1x84xf32>
    %163 = arith.addf %161, %162 : vector<1x84xf32>
    %164 = math.rsqrt %163 : vector<1x84xf32>
    %165 = vector.broadcast %164 : vector<1x84xf32> to vector<2x84xf32>
    %166 = arith.mulf %156, %165 : vector<2x84xf32>
    %c0_139 = arith.constant 0 : index
    %c0_140 = arith.constant 0 : index
    %167 = vector.load %arg5[%c0_139, %c0_140] : memref<84x10xbf16, #tpu.memory_space<vmem>>, vector<84x10xbf16>
    %168 = arith.truncf %166 : vector<2x84xf32> to vector<2x84xbf16>
    %cst_141 = arith.constant dense<0.000000e+00> : vector<2x10xf32>
    %169 = tpu.matmul %168, %167, %cst_141 {dimension_numbers = #tpu.dot_dimension_numbers<[1], [0], [0], [1], [0, 0, 1, 1], [], []>} : vector<2x84xbf16>, vector<84x10xbf16>, vector<2x10xf32> -> vector<2x10xf32>
    %cst_142 = arith.constant dense<0.000000e+00> : vector<10xf32>
    %170 = vector.multi_reduction <add>, %169, %cst_142 [0] : vector<2x10xf32> to vector<10xf32>
    %171 = vector.shape_cast %170 : vector<10xf32> to vector<1x10xf32>
    %cst_143 = arith.constant 2.000000e+00 : f32
    %172 = vector.broadcast %cst_143 : f32 to vector<1x10xf32>
    %173 = arith.divf %171, %172 : vector<1x10xf32>
    %174 = vector.broadcast %173 : vector<1x10xf32> to vector<2x10xf32>
    %175 = arith.subf %169, %174 : vector<2x10xf32>
    %176 = arith.mulf %175, %175 : vector<2x10xf32>
    %cst_144 = arith.constant dense<0.000000e+00> : vector<10xf32>
    %177 = vector.multi_reduction <add>, %176, %cst_144 [0] : vector<2x10xf32> to vector<10xf32>
    %178 = vector.shape_cast %177 : vector<10xf32> to vector<1x10xf32>
    %cst_145 = arith.constant 2.000000e+00 : f32
    %179 = vector.broadcast %cst_145 : f32 to vector<1x10xf32>
    %180 = arith.divf %178, %179 : vector<1x10xf32>
    %cst_146 = arith.constant 9.99999974E-6 : f32
    %181 = vector.broadcast %cst_146 : f32 to vector<1x10xf32>
    %182 = arith.addf %180, %181 : vector<1x10xf32>
    %183 = math.rsqrt %182 : vector<1x10xf32>
    %184 = vector.broadcast %183 : vector<1x10xf32> to vector<2x10xf32>
    %185 = arith.mulf %175, %184 : vector<2x10xf32>
    %c0_147 = arith.constant 0 : index
    %c0_148 = arith.constant 0 : index
    %186 = vector.load %arg14[%c0_147, %c0_148] : memref<2x10xf32, #tpu.memory_space<vmem>>, vector<2x10xf32>
    tpu.vector_store %arg14[%c0_147, %c0_148], %185 {strides = array<i32>} : memref<2x10xf32, #tpu.memory_space<vmem>>, vector<2x10xf32>,
    return
  }
}

</mosaic_0001>

<llo_original>
// kernel: cnn_batch_forward.1
$region0: #{cnn_batch_forward.1}
  #allocation0 [shape = 'u32[]', space=smem, size = 0x4, offset = 0x4, fixed_abs, tag = 'smem constant byte address 0x4 - core index']
  #allocation1 [shape = 'u32[144,128]{1,0:T(1,128)}', space=vmem, size = 0x12000, scoped, tag = 'internal scratch']
  #allocation2 [shape = 'bf16[28,84]{1,0:T(8,128)(2,1)}', space=vmem, size = 0x2000, scoped, tag = 'scratch operand']
  #allocation3 [shape = 'bf16[10,80]{1,0:T(8,128)(2,1)}', space=vmem, size = 0x1000, scoped, tag = 'scratch operand']
  %s0 = inlined_call_operand.vmem [shape: bf16[64,32], index: 0, kind: input, shape index: {}]
  %s1 = inlined_call_operand.vmem [shape: bf16[5,32,168], index: 1, kind: input, shape index: {}]
  %s2 = inlined_call_operand.vmem [shape: bf16[5,84,160], index: 2, kind: input, shape index: {}]
  %s3 = inlined_call_operand.vmem [shape: bf16[5,80,120], index: 3, kind: input, shape index: {}]
  %s4 = inlined_call_operand.vmem [shape: bf16[120,84], index: 4, kind: input, shape index: {}]
  %s5 = inlined_call_operand.vmem [shape: bf16[84,10], index: 5, kind: input, shape index: {}]
  %s6 = inlined_call_operand.vmem [shape: f32[28,56], index: 6, kind: input, shape index: {}]
  %s7 = inlined_call_operand.vmem [shape: f32[168,84], index: 7, kind: input, shape index: {}]
  %s8 = inlined_call_operand.vmem [shape: f32[168,6], index: 8, kind: input, shape index: {}]
  %s9 = inlined_call_operand.vmem [shape: f32[6,168], index: 9, kind: input, shape index: {}]
  %s10 = inlined_call_operand.vmem [shape: f32[10,20], index: 10, kind: input, shape index: {}]
  %s11 = inlined_call_operand.vmem [shape: f32[160,80], index: 11, kind: input, shape index: {}]
  %s12 = inlined_call_operand.vmem [shape: f32[160,16], index: 12, kind: input, shape index: {}]
  %s13 = inlined_call_operand.vmem [shape: f32[16,160], index: 13, kind: input, shape index: {}]
  %s14 = inlined_call_operand.hbm [shape: f32[2,10], index: 14, kind: output, shape index: {}]
  %s15 = sld [smem:[#allocation0]]
  $region66: #{cnn_batch_forward.1} parent=0
    _
  %s17 = ssub.s32 1, %s15
  %s18 = scalar_select 0, %s17, %s15
  $region1: #{cnn_batch_forward.1} parent=0
    #allocation4 [shape = 'u8[1024]{0}', space=vmem, size = 0x400, scoped, tag = 'output window, operand 0, single buffered']
    #allocation5 [shape = 's32[1]{0}', space=sflag, size = 0x4, scoped, tag = 'scoped memory for cnn_batch_forward.1']
    %19 = vsyncpa [#allocation5], 0
    // Predicated region
    $region2: #{cnn_batch_forward.1} parent=1 // pred_check
      _
    $region3: #{cnn_batch_forward.1} parent=1 // pred_check_branch
      %21 = sbr.rel (0) target = $region5
    $region4: #{cnn_batch_forward.1} parent=1 // pred_region
      _
    $region5: #{cnn_batch_forward.1} parent=1 // pred_fallthru
      _
    // Predicated region
    $region6: #{cnn_batch_forward.1} parent=1 // pred_check
      _
    $region7: #{cnn_batch_forward.1} parent=1 // pred_check_branch
      %23 = sbr.rel (0) target = $region9
    $region8: #{cnn_batch_forward.1} parent=1 // pred_region
      _
    $region9: #{cnn_batch_forward.1} parent=1 // pred_fallthru
      _
    // Predicated region
    $region10: #{cnn_batch_forward.1} parent=1 // pred_check
      _
    $region11: #{cnn_batch_forward.1} parent=1 // pred_check_branch
      %25 = sbr.rel (0) target = $region13
    $region12: #{cnn_batch_forward.1} parent=1 // pred_region
      _
    $region13: #{cnn_batch_forward.1} parent=1 // pred_fallthru
      _
    // Predicated region
    $region14: #{cnn_batch_forward.1} parent=1 // pred_check
      _
    $region15: #{cnn_batch_forward.1} parent=1 // pred_check_branch
      %27 = sbr.rel (0) target = $region17
    $region16: #{cnn_batch_forward.1} parent=1 // pred_region
      _
    $region17: #{cnn_batch_forward.1} parent=1 // pred_fallthru
      _
    // Predicated region
    $region18: #{cnn_batch_forward.1} parent=1 // pred_check
      _
    $region19: #{cnn_batch_forward.1} parent=1 // pred_check_branch
      %29 = sbr.rel (0) target = $region21
    $region20: #{cnn_batch_forward.1} parent=1 // pred_region
      _
    $region21: #{cnn_batch_forward.1} parent=1 // pred_fallthru
      _
    // Predicated region
    $region22: #{cnn_batch_forward.1} parent=1 // pred_check
      _
    $region23: #{cnn_batch_forward.1} parent=1 // pred_check_branch
      %31 = sbr.rel (0) target = $region25
    $region24: #{cnn_batch_forward.1} parent=1 // pred_region
      _
    $region25: #{cnn_batch_forward.1} parent=1 // pred_fallthru
      _
    // Predicated region
    $region26: #{cnn_batch_forward.1} parent=1 // pred_check
      _
    $region27: #{cnn_batch_forward.1} parent=1 // pred_check_branch
      %33 = sbr.rel (0) target = $region29
    $region28: #{cnn_batch_forward.1} parent=1 // pred_region
      _
    $region29: #{cnn_batch_forward.1} parent=1 // pred_fallthru
      _
    // Predicated region
    $region30: #{cnn_batch_forward.1} parent=1 // pred_check
      _
    $region31: #{cnn_batch_forward.1} parent=1 // pred_check_branch
      %35 = sbr.rel (0) target = $region33
    $region32: #{cnn_batch_forward.1} parent=1 // pred_region
      _
    $region33: #{cnn_batch_forward.1} parent=1 // pred_fallthru
      _
    // Predicated region
    $region34: #{cnn_batch_forward.1} parent=1 // pred_check
      _
    $region35: #{cnn_batch_forward.1} parent=1 // pred_check_branch
      %37 = sbr.rel (0) target = $region37
    $region36: #{cnn_batch_forward.1} parent=1 // pred_region
      _
    $region37: #{cnn_batch_forward.1} parent=1 // pred_fallthru
      _
    // Predicated region
    $region38: #{cnn_batch_forward.1} parent=1 // pred_check
      _
    $region39: #{cnn_batch_forward.1} parent=1 // pred_check_branch
      %39 = sbr.rel (0) target = $region41
    $region40: #{cnn_batch_forward.1} parent=1 // pred_region
      _
    $region41: #{cnn_batch_forward.1} parent=1 // pred_fallthru
      _
    // Predicated region
    $region42: #{cnn_batch_forward.1} parent=1 // pred_check
      _
    $region43: #{cnn_batch_forward.1} parent=1 // pred_check_branch
      %41 = sbr.rel (0) target = $region45
    $region44: #{cnn_batch_forward.1} parent=1 // pred_region
      _
    $region45: #{cnn_batch_forward.1} parent=1 // pred_fallthru
      _
    // Predicated region
    $region46: #{cnn_batch_forward.1} parent=1 // pred_check
      _
    $region47: #{cnn_batch_forward.1} parent=1 // pred_check_branch
      %43 = sbr.rel (0) target = $region49
    $region48: #{cnn_batch_forward.1} parent=1 // pred_region
      _
    $region49: #{cnn_batch_forward.1} parent=1 // pred_fallthru
      _
    // Predicated region
    $region50: #{cnn_batch_forward.1} parent=1 // pred_check
      _
    $region51: #{cnn_batch_forward.1} parent=1 // pred_check_branch
      %45 = sbr.rel (0) target = $region53
    $region52: #{cnn_batch_forward.1} parent=1 // pred_region
      _
    $region53: #{cnn_batch_forward.1} parent=1 // pred_fallthru
      _
    // Predicated region
    $region54: #{cnn_batch_forward.1} parent=1 // pred_check
      _
    $region55: #{cnn_batch_forward.1} parent=1 // pred_check_branch
      %47 = sbr.rel (0) target = $region57
    $region56: #{cnn_batch_forward.1} parent=1 // pred_region
      _
    $region57: #{cnn_batch_forward.1} parent=1 // pred_fallthru
      _
    %v49 = vld [vmem:[%s0] sm:$0xf]
    %v50 = vld [vmem:[%s0 + $0x4] sm:$0xf]
    %v51 = vld [vmem:[%s0 + $0x8] sm:$0xf]
    %v52 = vld [vmem:[%s0 + $0xc] sm:$0xf]
    %v53 = vld [vmem:[%s0 + $0x10] sm:$0xf]
    %v54 = vld [vmem:[%s0 + $0x14] sm:$0xf]
    %v55 = vld [vmem:[%s0 + $0x18] sm:$0xf]
    %v56 = vld [vmem:[%s1] sm:$0xff]
    %v57 = vld [vmem:[%s1 + $0x8] sm:$0xff]
    %v58 = vld [vmem:[%s1 + $0x10] sm:$0xff]
    %v59 = vld [vmem:[%s1 + $0x18] sm:$0xff]
    %v60 = vld [vmem:[%s0] sm:$0xe]
    %v61 = vld [vmem:[%s0 + $0x1c] sm:$0x1]
    %s62 = scalar_lea.vmem %s1, 32
    %v63 = vld [vmem:[%s62] sm:$0xff]
    %v64 = vld [vmem:[%s62 + $0x8] sm:$0xff]
    %v65 = vld [vmem:[%s62 + $0x10] sm:$0xff]
    %v66 = vld [vmem:[%s62 + $0x18] sm:$0xff]
    %v75 = vunpack.c.l.b16 %v60
    %v76 = vunpack.c.l.b16 %v50
    %v77 = vunpack.c.l.b16 %v51
    %v78 = vunpack.c.l.b16 %v52
    %v79 = vunpack.c.l.b16 %v53
    %v80 = vunpack.c.l.b16 %v54
    %v81 = vunpack.c.l.b16 %v55
    %v82 = vunpack.c.l.b16 %v61
    %v83 = vpack.c.b16 %v76, %v75
    %v84 = vpack.c.b16 %v78, %v77
    %v85 = vpack.c.b16 %v80, %v79
    %v86 = vpack.c.b16 %v82, %v81
    %vm87 = vcmask 1046528
    %v88 = vrot.slane %v83, 1
    %v89 = vrot.slane %v84, 1
    %v90 = vsel %vm87, %v88, %v89
    %v91 = vrot.slane %v85, 1
    %v92 = vsel %vm87, %v89, %v91
    %v93 = vrot.slane %v86, 1
    %v94 = vsel %vm87, %v91, %v93
    %v99 = vunpack.c.l.b16 %v63
    %v100 = vunpack.c.h.b16 %v63
    %v101 = vunpack.c.l.b16 %v64
    %v102 = vunpack.c.h.b16 %v64
    %v103 = vunpack.c.l.b16 %v65
    %v104 = vunpack.c.h.b16 %v65
    %v105 = vunpack.c.l.b16 %v66
    %v106 = vunpack.c.h.b16 %v66
    %v107 = vpack.c.b16 %v101, %v99
    %v108 = vpack.c.b16 %v102, %v100
    %v109 = vpack.c.b16 %v105, %v103
    %v110 = vpack.c.b16 %v106, %v104
    %vm115 = vcmask 261120
    %v117 = vsel %vm115, %v90, 0
    %v120 = vsel %vm115, %v92, 0
    %v123 = vsel %vm115, %v94, 0
    %v126 = vsel %vm115, %v93, 0
    %128 = vmatprep.subr.bf16.mxu0 %v108
    %129 = vmatpush1.bf16.msra.mxu0 %v107
    %130 = vmatprep.subr.bf16.mxu0 %v110
    %131 = vmatpush1.bf16.msra.mxu0 %v109
    %132 = vmatprep.subr.bf16.mxu0 0
    %133 = vmatpush1.bf16.msra.mxu0 0
    %134 = vmatprep.subr.bf16.mxu0 0
    %135 = vmatpush1.bf16.msra.mxu0 0
    %136 = vmatprep.subr.bf16.mxu0 0
    %137 = vmatpush1.bf16.msra.mxu0 0
    %138 = vmatprep.subr.bf16.mxu0 0
    %139 = vmatpush1.bf16.msra.mxu0 0
    %140 = vmatprep.subr.bf16.mxu0 0
    %141 = vmatpush1.bf16.msra.mxu0 0
    %142 = vmatprep.subr.bf16.mxu0 0
    %143 = vmatpush1.bf16.msra.mxu0 0
    %144 = vmatprep.subr.bf16.mxu0 0
    %145 = vmatpush1.bf16.msra.mxu0 0
    %146 = vmatprep.subr.bf16.mxu0 0
    %147 = vmatpush1.bf16.msra.mxu0 0
    %148 = vmatprep.subr.bf16.mxu0 0
    %149 = vmatpush1.bf16.msra.mxu0 0
    %150 = vmatprep.subr.bf16.mxu0 0
    %151 = vmatpush1.bf16.msra.mxu0 0
    %152 = vmatprep.subr.bf16.mxu0 0
    %153 = vmatpush1.bf16.msra.mxu0 0
    %154 = vmatprep.subr.bf16.mxu0 0
    %155 = vmatpush1.bf16.msra.mxu0 0
    %156 = vmatprep.subr.bf16.mxu0 0
    %157 = vmatpush1.bf16.msra.mxu0 0
    %158 = vmatprep.subr.bf16.mxu0 0
    %159 = vmatpush1.bf16.msra.mxu0 0
    %160 = vmatprep.mubr.bf16.mxu0 0
    %161 = vmatmul.mubr.bf16.gmra.mrb[0].mxu0 %v117
    %v162 = vpop.f32.mrb[0].mxu0
    %v163 = vadd.f32 0.0, %v162
    %v164 = vpop.f32.mrb[0].mxu0
    %v165 = vadd.f32 0.0, %v164
    %v166 = vpop.f32.mrb[0].mxu0
    %v167 = vadd.f32 0.0, %v166
    %v168 = vpop.f32.mrb[0].mxu0
    %v169 = vadd.f32 0.0, %v168
    %170 = vmatprep.mubr.bf16.mxu0 0
    %171 = vmatmul.mubr.bf16.gmra.mrb[0].mxu0 %v120
    %v172 = vpop.f32.mrb[0].mxu0
    %v173 = vadd.f32 0.0, %v172
    %v174 = vpop.f32.mrb[0].mxu0
    %v175 = vadd.f32 0.0, %v174
    %v176 = vpop.f32.mrb[0].mxu0
    %v177 = vadd.f32 0.0, %v176
    %v178 = vpop.f32.mrb[0].mxu0
    %v179 = vadd.f32 0.0, %v178
    %180 = vmatprep.mubr.bf16.mxu0 0
    %181 = vmatmul.mubr.bf16.gmra.mrb[0].mxu0 %v123
    %v182 = vpop.f32.mrb[0].mxu0
    %v183 = vadd.f32 0.0, %v182
    %v184 = vpop.f32.mrb[0].mxu0
    %v185 = vadd.f32 0.0, %v184
    %v186 = vpop.f32.mrb[0].mxu0
    %v187 = vadd.f32 0.0, %v186
    %v188 = vpop.f32.mrb[0].mxu0
    %v189 = vadd.f32 0.0, %v188
    %190 = vmatprep.mubr.bf16.mxu0 0
    %191 = vmatmul.mubr.bf16.gmra.mrb[0].mxu0 %v126
    %v192 = vpop.f32.mrb[0].mxu0
    %v193 = vadd.f32 0.0, %v192
    %v194 = vpop.f32.mrb[0].mxu0
    %v195 = vadd.f32 0.0, %v194
    %v196 = vpop.f32.mrb[0].mxu0
    %v197 = vpop.f32.mrb[0].mxu0
    %198 = vdwg.mxu0
    %v200 = vunpack.c.l.b16 %v49
    %v201 = vpack.c.b16 %v76, %v200
    %v202 = vpack.c.b16 %v81, %v81
    %v207 = vunpack.c.l.b16 %v56
    %v208 = vunpack.c.h.b16 %v56
    %v209 = vunpack.c.l.b16 %v57
    %v210 = vunpack.c.h.b16 %v57
    %v211 = vunpack.c.l.b16 %v58
    %v212 = vunpack.c.h.b16 %v58
    %v213 = vunpack.c.l.b16 %v59
    %v214 = vunpack.c.h.b16 %v59
    %v215 = vpack.c.b16 %v209, %v207
    %v216 = vpack.c.b16 %v210, %v208
    %v217 = vpack.c.b16 %v213, %v211
    %v218 = vpack.c.b16 %v214, %v212
    %v224 = vsel %vm115, %v201, 0
    %v227 = vsel %vm115, %v84, 0
    %v230 = vsel %vm115, %v85, 0
    %v233 = vsel %vm115, %v202, 0
    %235 = vmatprep.subr.bf16.mxu0 %v216
    %236 = vmatpush1.bf16.msra.mxu0 %v215
    %237 = vmatprep.subr.bf16.mxu0 %v218
    %238 = vmatpush1.bf16.msra.mxu0 %v217
    %239 = vmatprep.subr.bf16.mxu0 0
    %240 = vmatpush1.bf16.msra.mxu0 0
    %241 = vmatprep.subr.bf16.mxu0 0
    %242 = vmatpush1.bf16.msra.mxu0 0
    %243 = vmatprep.subr.bf16.mxu0 0
    %244 = vmatpush1.bf16.msra.mxu0 0
    %245 = vmatprep.subr.bf16.mxu0 0
    %246 = vmatpush1.bf16.msra.mxu0 0
    %247 = vmatprep.subr.bf16.mxu0 0
    %248 = vmatpush1.bf16.msra.mxu0 0
    %249 = vmatprep.subr.bf16.mxu0 0
    %250 = vmatpush1.bf16.msra.mxu0 0
    %251 = vmatprep.subr.bf16.mxu0 0
    %252 = vmatpush1.bf16.msra.mxu0 0
    %253 = vmatprep.subr.bf16.mxu0 0
    %254 = vmatpush1.bf16.msra.mxu0 0
    %255 = vmatprep.subr.bf16.mxu0 0
    %256 = vmatpush1.bf16.msra.mxu0 0
    %257 = vmatprep.subr.bf16.mxu0 0
    %258 = vmatpush1.bf16.msra.mxu0 0
    %259 = vmatprep.subr.bf16.mxu0 0
    %260 = vmatpush1.bf16.msra.mxu0 0
    %261 = vmatprep.subr.bf16.mxu0 0
    %262 = vmatpush1.bf16.msra.mxu0 0
    %263 = vmatprep.subr.bf16.mxu0 0
    %264 = vmatpush1.bf16.msra.mxu0 0
    %265 = vmatprep.subr.bf16.mxu0 0
    %266 = vmatpush1.bf16.msra.mxu0 0
    %267 = vmatprep.mubr.bf16.mxu0 0
    %268 = vmatmul.mubr.bf16.gmra.mrb[0].mxu0 %v224
    %v269 = vpop.f32.mrb[0].mxu0
    %v270 = vadd.f32 %v163, %v269
    %v271 = vpop.f32.mrb[0].mxu0
    %v272 = vadd.f32 %v165, %v271
    %v273 = vpop.f32.mrb[0].mxu0
    %v274 = vadd.f32 %v167, %v273
    %v275 = vpop.f32.mrb[0].mxu0
    %v276 = vadd.f32 %v169, %v275
    %277 = vmatprep.mubr.bf16.mxu0 0
    %278 = vmatmul.mubr.bf16.gmra.mrb[0].mxu0 %v227
    %v279 = vpop.f32.mrb[0].mxu0
    %v280 = vadd.f32 %v173, %v279
    %v281 = vpop.f32.mrb[0].mxu0
    %v282 = vadd.f32 %v175, %v281
    %v283 = vpop.f32.mrb[0].mxu0
    %v284 = vadd.f32 %v177, %v283
    %v285 = vpop.f32.mrb[0].mxu0
    %v286 = vadd.f32 %v179, %v285
    %287 = vmatprep.mubr.bf16.mxu0 0
    %288 = vmatmul.mubr.bf16.gmra.mrb[0].mxu0 %v230
    %v289 = vpop.f32.mrb[0].mxu0
    %v290 = vadd.f32 %v183, %v289
    %v291 = vpop.f32.mrb[0].mxu0
    %v292 = vadd.f32 %v185, %v291
    %v293 = vpop.f32.mrb[0].mxu0
    %v294 = vadd.f32 %v187, %v293
    %v295 = vpop.f32.mrb[0].mxu0
    %v296 = vadd.f32 %v189, %v295
    %297 = vmatprep.mubr.bf16.mxu0 0
    %298 = vmatmul.mubr.bf16.gmra.mrb[0].mxu0 %v233
    %v299 = vpop.f32.mrb[0].mxu0
    %v300 = vadd.f32 %v193, %v299
    %v301 = vpop.f32.mrb[0].mxu0
    %v302 = vadd.f32 %v195, %v301
    %v303 = vpop.f32.mrb[0].mxu0
    %v304 = vpop.f32.mrb[0].mxu0
    %305 = vdwg.mxu0
    %v306 = vld [vmem:[%s0] sm:$0xc]
    %v307 = vld [vmem:[%s0 + $0x1c] sm:$0x3]
    %s308 = scalar_lea.vmem %s1, 64
    %v309 = vld [vmem:[%s308] sm:$0xff]
    %v310 = vld [vmem:[%s308 + $0x8] sm:$0xff]
    %v311 = vld [vmem:[%s308 + $0x10] sm:$0xff]
    %v312 = vld [vmem:[%s308 + $0x18] sm:$0xff]
    %v315 = vunpack.c.l.b16 %v306
    %v316 = vunpack.c.l.b16 %v307
    %v317 = vpack.c.b16 %v76, %v315
    %v318 = vpack.c.b16 %v316, %v81
    %vm319 = vcmask 1045504
    %v320 = vrot.slane %v317, 2
    %v321 = vrot.slane %v84, 2
    %v322 = vsel %vm319, %v320, %v321
    %v323 = vrot.slane %v85, 2
    %v324 = vsel %vm319, %v321, %v323
    %v325 = vrot.slane %v318, 2
    %v326 = vsel %vm319, %v323, %v325
    %v331 = vunpack.c.l.b16 %v309
    %v332 = vunpack.c.h.b16 %v309
    %v333 = vunpack.c.l.b16 %v310
    %v334 = vunpack.c.h.b16 %v310
    %v335 = vunpack.c.l.b16 %v311
    %v336 = vunpack.c.h.b16 %v311
    %v337 = vunpack.c.l.b16 %v312
    %v338 = vunpack.c.h.b16 %v312
    %v339 = vpack.c.b16 %v333, %v331
    %v340 = vpack.c.b16 %v334, %v332
    %v341 = vpack.c.b16 %v337, %v335
    %v342 = vpack.c.b16 %v338, %v336
    %v348 = vsel %vm115, %v322, 0
    %v351 = vsel %vm115, %v324, 0
    %v354 = vsel %vm115, %v326, 0
    %v357 = vsel %vm115, %v325, 0
    %359 = vmatprep.subr.bf16.mxu0 %v340
    %360 = vmatpush1.bf16.msra.mxu0 %v339
    %361 = vmatprep.subr.bf16.mxu0 %v342
    %362 = vmatpush1.bf16.msra.mxu0 %v341
    %363 = vmatprep.subr.bf16.mxu0 0
    %364 = vmatpush1.bf16.msra.mxu0 0
    %365 = vmatprep.subr.bf16.mxu0 0
    %366 = vmatpush1.bf16.msra.mxu0 0
    %367 = vmatprep.subr.bf16.mxu0 0
    %368 = vmatpush1.bf16.msra.mxu0 0
    %369 = vmatprep.subr.bf16.mxu0 0
    %370 = vmatpush1.bf16.msra.mxu0 0
    %371 = vmatprep.subr.bf16.mxu0 0
    %372 = vmatpush1.bf16.msra.mxu0 0
    %373 = vmatprep.subr.bf16.mxu0 0
    %374 = vmatpush1.bf16.msra.mxu0 0
    %375 = vmatprep.subr.bf16.mxu0 0
    %376 = vmatpush1.bf16.msra.mxu0 0
    %377 = vmatprep.subr.bf16.mxu0 0
    %378 = vmatpush1.bf16.msra.mxu0 0
    %379 = vmatprep.subr.bf16.mxu0 0
    %380 = vmatpush1.bf16.msra.mxu0 0
    %381 = vmatprep.subr.bf16.mxu0 0
    %382 = vmatpush1.bf16.msra.mxu0 0
    %383 = vmatprep.subr.bf16.mxu0 0
    %384 = vmatpush1.bf16.msra.mxu0 0
    %385 = vmatprep.subr.bf16.mxu0 0
    %386 = vmatpush1.bf16.msra.mxu0 0
    %387 = vmatprep.subr.bf16.mxu0 0
    %388 = vmatpush1.bf16.msra.mxu0 0
    %389 = vmatprep.subr.bf16.mxu0 0
    %390 = vmatpush1.bf16.msra.mxu0 0
    %391 = vmatprep.mubr.bf16.mxu0 0
    %392 = vmatmul.mubr.bf16.gmra.mrb[0].mxu0 %v348
    %v393 = vpop.f32.mrb[0].mxu0
    %v394 = vadd.f32 0.0, %v393
    %v395 = vpop.f32.mrb[0].mxu0
    %v396 = vadd.f32 0.0, %v395
    %v397 = vpop.f32.mrb[0].mxu0
    %v398 = vadd.f32 0.0, %v397
    %v399 = vpop.f32.mrb[0].mxu0
    %v400 = vadd.f32 0.0, %v399
    %401 = vmatprep.mubr.bf16.mxu0 0
    %402 = vmatmul.mubr.bf16.gmra.mrb[0].mxu0 %v351
    %v403 = vpop.f32.mrb[0].mxu0
    %v404 = vadd.f32 0.0, %v403
    %v405 = vpop.f32.mrb[0].mxu0
    %v406 = vadd.f32 0.0, %v405
    %v407 = vpop.f32.mrb[0].mxu0
    %v408 = vadd.f32 0.0, %v407
    %v409 = vpop.f32.mrb[0].mxu0
    %v410 = vadd.f32 0.0, %v409
    %411 = vmatprep.mubr.bf16.mxu0 0
    %412 = vmatmul.mubr.bf16.gmra.mrb[0].mxu0 %v354
    %v413 = vpop.f32.mrb[0].mxu0
    %v414 = vadd.f32 0.0, %v413
    %v415 = vpop.f32.mrb[0].mxu0
    %v416 = vadd.f32 0.0, %v415
    %v417 = vpop.f32.mrb[0].mxu0
    %v418 = vadd.f32 0.0, %v417
    %v419 = vpop.f32.mrb[0].mxu0
    %v420 = vadd.f32 0.0, %v419
    %421 = vmatprep.mubr.bf16.mxu0 0
    %422 = vmatmul.mubr.bf16.gmra.mrb[0].mxu0 %v357
    %v423 = vpop.f32.mrb[0].mxu0
    %v424 = vadd.f32 0.0, %v423
    %v425 = vpop.f32.mrb[0].mxu0
    %v426 = vadd.f32 0.0, %v425
    %v427 = vpop.f32.mrb[0].mxu0
    %v428 = vpop.f32.mrb[0].mxu0
    %429 = vdwg.mxu0
    %v430 = vadd.f32 %v270, %v394
    %v431 = vadd.f32 %v272, %v396
    %v432 = vadd.f32 %v274, %v398
    %v433 = vadd.f32 %v276, %v400
    %v434 = vadd.f32 %v280, %v404
    %v435 = vadd.f32 %v282, %v406
    %v436 = vadd.f32 %v284, %v408
    %v437 = vadd.f32 %v286, %v410
    %v438 = vadd.f32 %v290, %v414
    %v439 = vadd.f32 %v292, %v416
    %v440 = vadd.f32 %v294, %v418
    %v441 = vadd.f32 %v296, %v420
    %v442 = vadd.f32 %v300, %v424
    %v443 = vadd.f32 %v302, %v426
    %v444 = vld [vmem:[%s0] sm:$0x8]
    %v445 = vld [vmem:[%s0 + $0x1c] sm:$0x7]
    %s446 = scalar_lea.vmem %s1, 96
    %v447 = vld [vmem:[%s446] sm:$0xff]
    %v448 = vld [vmem:[%s446 + $0x8] sm:$0xff]
    %v449 = vld [vmem:[%s446 + $0x10] sm:$0xff]
    %v450 = vld [vmem:[%s446 + $0x18] sm:$0xff]
    %v453 = vunpack.c.l.b16 %v444
    %v454 = vunpack.c.l.b16 %v445
    %v455 = vpack.c.b16 %v76, %v453
    %v456 = vpack.c.b16 %v454, %v81
    %vm457 = vcmask 1044480
    %v458 = vrot.slane %v455, 3
    %v459 = vrot.slane %v84, 3
    %v460 = vsel %vm457, %v458, %v459
    %v461 = vrot.slane %v85, 3
    %v462 = vsel %vm457, %v459, %v461
    %v463 = vrot.slane %v456, 3
    %v464 = vsel %vm457, %v461, %v463
    %v469 = vunpack.c.l.b16 %v447
    %v470 = vunpack.c.h.b16 %v447
    %v471 = vunpack.c.l.b16 %v448
    %v472 = vunpack.c.h.b16 %v448
    %v473 = vunpack.c.l.b16 %v449
    %v474 = vunpack.c.h.b16 %v449
    %v475 = vunpack.c.l.b16 %v450
    %v476 = vunpack.c.h.b16 %v450
    %v477 = vpack.c.b16 %v471, %v469
    %v478 = vpack.c.b16 %v472, %v470
    %v479 = vpack.c.b16 %v475, %v473
    %v480 = vpack.c.b16 %v476, %v474
    %v486 = vsel %vm115, %v460, 0
    %v489 = vsel %vm115, %v462, 0
    %v492 = vsel %vm115, %v464, 0
    %v495 = vsel %vm115, %v463, 0
    %497 = vmatprep.subr.bf16.mxu0 %v478
    %498 = vmatpush1.bf16.msra.mxu0 %v477
    %499 = vmatprep.subr.bf16.mxu0 %v480
    %500 = vmatpush1.bf16.msra.mxu0 %v479
    %501 = vmatprep.subr.bf16.mxu0 0
    %502 = vmatpush1.bf16.msra.mxu0 0
    %503 = vmatprep.subr.bf16.mxu0 0
    %504 = vmatpush1.bf16.msra.mxu0 0
    %505 = vmatprep.subr.bf16.mxu0 0
    %506 = vmatpush1.bf16.msra.mxu0 0
    %507 = vmatprep.subr.bf16.mxu0 0
    %508 = vmatpush1.bf16.msra.mxu0 0
    %509 = vmatprep.subr.bf16.mxu0 0
    %510 = vmatpush1.bf16.msra.mxu0 0
    %511 = vmatprep.subr.bf16.mxu0 0
    %512 = vmatpush1.bf16.msra.mxu0 0
    %513 = vmatprep.subr.bf16.mxu0 0
    %514 = vmatpush1.bf16.msra.mxu0 0
    %515 = vmatprep.subr.bf16.mxu0 0
    %516 = vmatpush1.bf16.msra.mxu0 0
    %517 = vmatprep.subr.bf16.mxu0 0
    %518 = vmatpush1.bf16.msra.mxu0 0
    %519 = vmatprep.subr.bf16.mxu0 0
    %520 = vmatpush1.bf16.msra.mxu0 0
    %521 = vmatprep.subr.bf16.mxu0 0
    %522 = vmatpush1.bf16.msra.mxu0 0
    %523 = vmatprep.subr.bf16.mxu0 0
    %524 = vmatpush1.bf16.msra.mxu0 0
    %525 = vmatprep.subr.bf16.mxu0 0
    %526 = vmatpush1.bf16.msra.mxu0 0
    %527 = vmatprep.subr.bf16.mxu0 0
    %528 = vmatpush1.bf16.msra.mxu0 0
    %529 = vmatprep.mubr.bf16.mxu0 0
    %530 = vmatmul.mubr.bf16.gmra.mrb[0].mxu0 %v486
    %v531 = vpop.f32.mrb[0].mxu0
    %v532 = vadd.f32 0.0, %v531
    %v533 = vpop.f32.mrb[0].mxu0
    %v534 = vadd.f32 0.0, %v533
    %v535 = vpop.f32.mrb[0].mxu0
    %v536 = vadd.f32 0.0, %v535
    %v537 = vpop.f32.mrb[0].mxu0
    %v538 = vadd.f32 0.0, %v537
    %539 = vmatprep.mubr.bf16.mxu0 0
    %540 = vmatmul.mubr.bf16.gmra.mrb[0].mxu0 %v489
    %v541 = vpop.f32.mrb[0].mxu0
    %v542 = vadd.f32 0.0, %v541
    %v543 = vpop.f32.mrb[0].mxu0
    %v544 = vadd.f32 0.0, %v543
    %v545 = vpop.f32.mrb[0].mxu0
    %v546 = vadd.f32 0.0, %v545
    %v547 = vpop.f32.mrb[0].mxu0
    %v548 = vadd.f32 0.0, %v547
    %549 = vmatprep.mubr.bf16.mxu0 0
    %550 = vmatmul.mubr.bf16.gmra.mrb[0].mxu0 %v492
    %v551 = vpop.f32.mrb[0].mxu0
    %v552 = vadd.f32 0.0, %v551
    %v553 = vpop.f32.mrb[0].mxu0
    %v554 = vadd.f32 0.0, %v553
    %v555 = vpop.f32.mrb[0].mxu0
    %v556 = vadd.f32 0.0, %v555
    %v557 = vpop.f32.mrb[0].mxu0
    %v558 = vadd.f32 0.0, %v557
    %559 = vmatprep.mubr.bf16.mxu0 0
    %560 = vmatmul.mubr.bf16.gmra.mrb[0].mxu0 %v495
    %v561 = vpop.f32.mrb[0].mxu0
    %v562 = vadd.f32 0.0, %v561
    %v563 = vpop.f32.mrb[0].mxu0
    %v564 = vadd.f32 0.0, %v563
    %v565 = vpop.f32.mrb[0].mxu0
    %v566 = vpop.f32.mrb[0].mxu0
    %567 = vdwg.mxu0
    %v568 = vadd.f32 %v430, %v532
    %v569 = vadd.f32 %v431, %v534
    %v570 = vadd.f32 %v432, %v536
    %v571 = vadd.f32 %v433, %v538
    %v572 = vadd.f32 %v434, %v542
    %v573 = vadd.f32 %v435, %v544
    %v574 = vadd.f32 %v436, %v546
    %v575 = vadd.f32 %v437, %v548
    %v576 = vadd.f32 %v438, %v552
    %v577 = vadd.f32 %v439, %v554
    %v578 = vadd.f32 %v440, %v556
    %v579 = vadd.f32 %v441, %v558
    %v580 = vadd.f32 %v442, %v562
    %v581 = vadd.f32 %v443, %v564
    %v582 = vld [vmem:[%s0 + $0x1c] sm:$0xf]
    %s583 = scalar_lea.vmem %s1, 128
    %v584 = vld [vmem:[%s583] sm:$0xff]
    %v585 = vld [vmem:[%s583 + $0x8] sm:$0xff]
    %v586 = vld [vmem:[%s583 + $0x10] sm:$0xff]
    %v587 = vld [vmem:[%s583 + $0x18] sm:$0xff]
    %v589 = vunpack.c.l.b16 %v582
    %v590 = vpack.c.b16 %v77, %v76
    %v591 = vpack.c.b16 %v79, %v78
    %v592 = vpack.c.b16 %v81, %v80
    %v593 = vpack.c.b16 %v589, %v589
    %v598 = vunpack.c.l.b16 %v584
    %v599 = vunpack.c.h.b16 %v584
    %v600 = vunpack.c.l.b16 %v585
    %v601 = vunpack.c.h.b16 %v585
    %v602 = vunpack.c.l.b16 %v586
    %v603 = vunpack.c.h.b16 %v586
    %v604 = vunpack.c.l.b16 %v587
    %v605 = vunpack.c.h.b16 %v587
    %v606 = vpack.c.b16 %v600, %v598
    %v607 = vpack.c.b16 %v601, %v599
    %v608 = vpack.c.b16 %v604, %v602
    %v609 = vpack.c.b16 %v605, %v603
    %v615 = vsel %vm115, %v590, 0
    %v618 = vsel %vm115, %v591, 0
    %v621 = vsel %vm115, %v592, 0
    %v624 = vsel %vm115, %v593, 0
    %626 = vmatprep.subr.bf16.mxu0 %v607
    %627 = vmatpush1.bf16.msra.mxu0 %v606
    %628 = vmatprep.subr.bf16.mxu0 %v609
    %629 = vmatpush1.bf16.msra.mxu0 %v608
    %630 = vmatprep.subr.bf16.mxu0 0
    %631 = vmatpush1.bf16.msra.mxu0 0
    %632 = vmatprep.subr.bf16.mxu0 0
    %633 = vmatpush1.bf16.msra.mxu0 0
    %634 = vmatprep.subr.bf16.mxu0 0
    %635 = vmatpush1.bf16.msra.mxu0 0
    %636 = vmatprep.subr.bf16.mxu0 0
    %637 = vmatpush1.bf16.msra.mxu0 0
    %638 = vmatprep.subr.bf16.mxu0 0
    %639 = vmatpush1.bf16.msra.mxu0 0
    %640 = vmatprep.subr.bf16.mxu0 0
    %641 = vmatpush1.bf16.msra.mxu0 0
    %642 = vmatprep.subr.bf16.mxu0 0
    %643 = vmatpush1.bf16.msra.mxu0 0
    %644 = vmatprep.subr.bf16.mxu0 0
    %645 = vmatpush1.bf16.msra.mxu0 0
    %646 = vmatprep.subr.bf16.mxu0 0
    %647 = vmatpush1.bf16.msra.mxu0 0
    %648 = vmatprep.subr.bf16.mxu0 0
    %649 = vmatpush1.bf16.msra.mxu0 0
    %650 = vmatprep.subr.bf16.mxu0 0
    %651 = vmatpush1.bf16.msra.mxu0 0
    %652 = vmatprep.subr.bf16.mxu0 0
    %653 = vmatpush1.bf16.msra.mxu0 0
    %654 = vmatprep.subr.bf16.mxu0 0
    %655 = vmatpush1.bf16.msra.mxu0 0
    %656 = vmatprep.subr.bf16.mxu0 0
    %657 = vmatpush1.bf16.msra.mxu0 0
    %658 = vmatprep.mubr.bf16.mxu0 0
    %659 = vmatmul.mubr.bf16.gmra.mrb[0].mxu0 %v615
    %v660 = vpop.f32.mrb[0].mxu0
    %v661 = vadd.f32 0.0, %v660
    %v662 = vpop.f32.mrb[0].mxu0
    %v663 = vadd.f32 0.0, %v662
    %v664 = vpop.f32.mrb[0].mxu0
    %v665 = vadd.f32 0.0, %v664
    %v666 = vpop.f32.mrb[0].mxu0
    %v667 = vadd.f32 0.0, %v666
    %668 = vmatprep.mubr.bf16.mxu0 0
    %669 = vmatmul.mubr.bf16.gmra.mrb[0].mxu0 %v618
    %v670 = vpop.f32.mrb[0].mxu0
    %v671 = vadd.f32 0.0, %v670
    %v672 = vpop.f32.mrb[0].mxu0
    %v673 = vadd.f32 0.0, %v672
    %v674 = vpop.f32.mrb[0].mxu0
    %v675 = vadd.f32 0.0, %v674
    %v676 = vpop.f32.mrb[0].mxu0
    %v677 = vadd.f32 0.0, %v676
    %678 = vmatprep.mubr.bf16.mxu0 0
    %679 = vmatmul.mubr.bf16.gmra.mrb[0].mxu0 %v621
    %v680 = vpop.f32.mrb[0].mxu0
    %v681 = vadd.f32 0.0, %v680
    %v682 = vpop.f32.mrb[0].mxu0
    %v683 = vadd.f32 0.0, %v682
    %v684 = vpop.f32.mrb[0].mxu0
    %v685 = vadd.f32 0.0, %v684
    %v686 = vpop.f32.mrb[0].mxu0
    %v687 = vadd.f32 0.0, %v686
    %688 = vmatprep.mubr.bf16.mxu0 0
    %689 = vmatmul.mubr.bf16.gmra.mrb[0].mxu0 %v624
    %v690 = vpop.f32.mrb[0].mxu0
    %v691 = vadd.f32 0.0, %v690
    %v692 = vpop.f32.mrb[0].mxu0
    %v693 = vadd.f32 0.0, %v692
    %v694 = vpop.f32.mrb[0].mxu0
    %v695 = vpop.f32.mrb[0].mxu0
    %696 = vdwg.mxu0
    %v697 = vadd.f32 %v568, %v661
    %v698 = vadd.f32 %v569, %v663
    %v699 = vadd.f32 %v570, %v665
    %v700 = vadd.f32 %v571, %v667
    %v701 = vadd.f32 %v572, %v671
    %v702 = vadd.f32 %v573, %v673
    %v703 = vadd.f32 %v574, %v675
    %v704 = vadd.f32 %v575, %v677
    %v705 = vadd.f32 %v576, %v681
    %v706 = vadd.f32 %v577, %v683
    %v707 = vadd.f32 %v578, %v685
    %v708 = vadd.f32 %v579, %v687
    %v709 = vadd.f32 %v580, %v691
    %v710 = vadd.f32 %v581, %v693
    %v711 = vld [vmem:[%s6] sm:$0xff]
    %v712 = vld [vmem:[%s6 + $0x8] sm:$0xff]
    %v713 = vld [vmem:[%s6 + $0x10] sm:$0xff]
    %v714 = vld [vmem:[%s6 + $0x18] sm:$0xf]
    %v715 = vld [vmem:[%s7] sm:$0xff]
    %v716 = vld [vmem:[%s7 + $0x8] sm:$0xff]
    %v717 = vld [vmem:[%s7 + $0x10] sm:$0xff]
    %v718 = vld [vmem:[%s7 + $0x18] sm:$0xff]
    %v719 = vld [vmem:[%s7 + $0x20] sm:$0xff]
    %v720 = vld [vmem:[%s7 + $0x28] sm:$0xff]
    %v721 = vld [vmem:[%s7 + $0x30] sm:$0xff]
    %v722 = vld [vmem:[%s7 + $0x38] sm:$0xff]
    %v723 = vld [vmem:[%s7 + $0x40] sm:$0xff]
    %v724 = vld [vmem:[%s7 + $0x48] sm:$0xff]
    %v725 = vld [vmem:[%s7 + $0x50] sm:$0xff]
    %v726 = vld [vmem:[%s7 + $0x58] sm:$0xff]
    %v727 = vld [vmem:[%s7 + $0x60] sm:$0xff]
    %v728 = vld [vmem:[%s7 + $0x68] sm:$0xff]
    %v729 = vld [vmem:[%s7 + $0x70] sm:$0xff]
    %v730 = vld [vmem:[%s7 + $0x78] sm:$0xff]
    %v731 = vld [vmem:[%s7 + $0x80] sm:$0xff]
    %v732 = vld [vmem:[%s7 + $0x88] sm:$0xff]
    %v733 = vld [vmem:[%s7 + $0x90] sm:$0xff]
    %v734 = vld [vmem:[%s7 + $0x98] sm:$0xff]
    %v735 = vld [vmem:[%s7 + $0xa0] sm:$0xff]
    %v736 = vld [vmem:[%s8] sm:$0xff]
    %v737 = vld [vmem:[%s8 + $0x8] sm:$0xff]
    %v738 = vld [vmem:[%s8 + $0x10] sm:$0xff]
    %v739 = vld [vmem:[%s8 + $0x18] sm:$0xff]
    %v740 = vld [vmem:[%s8 + $0x20] sm:$0xff]
    %v741 = vld [vmem:[%s8 + $0x28] sm:$0xff]
    %v742 = vld [vmem:[%s8 + $0x30] sm:$0xff]
    %v743 = vld [vmem:[%s8 + $0x38] sm:$0xff]
    %v744 = vld [vmem:[%s8 + $0x40] sm:$0xff]
    %v745 = vld [vmem:[%s8 + $0x48] sm:$0xff]
    %v746 = vld [vmem:[%s8 + $0x50] sm:$0xff]
    %v747 = vld [vmem:[%s8 + $0x58] sm:$0xff]
    %v748 = vld [vmem:[%s8 + $0x60] sm:$0xff]
    %v749 = vld [vmem:[%s8 + $0x68] sm:$0xff]
    %v750 = vld [vmem:[%s8 + $0x70] sm:$0xff]
    %v751 = vld [vmem:[%s8 + $0x78] sm:$0xff]
    %v752 = vld [vmem:[%s8 + $0x80] sm:$0xff]
    %v753 = vld [vmem:[%s8 + $0x88] sm:$0xff]
    %v754 = vld [vmem:[%s8 + $0x90] sm:$0xff]
    %v755 = vld [vmem:[%s8 + $0x98] sm:$0xff]
    %v756 = vld [vmem:[%s8 + $0xa0] sm:$0xff]
    %v757 = vld [vmem:[%s9] sm:$0x3f]
    %v758 = vld [vmem:[%s9 + $0x8] sm:$0x3f]
    %v759 = vadd.f32 %v697, %v699
    %v760 = vadd.f32 %v759, %v701
    %v761 = vadd.f32 %v760, %v703
    %v762 = vadd.f32 %v761, %v705
    %v763 = vadd.f32 %v762, %v707
    %v764 = vadd.f32 %v763, %v709
    %v765 = vrot.slane %v764, 4
    %v766 = vadd.f32 %v764, %v765
    %v767 = vrot.slane %v766, 2
    %v768 = vadd.f32 %v766, %v767
    %v769 = vrot.slane %v768, 1
    %v770 = vadd.f32 %v768, %v769
    %vm771 = vcmask 326656
    %v772 = vsel %vm771, %v698, 0.0
    %v773 = vsel %vm771, %v700, 0.0
    %v774 = vadd.f32 %v772, %v773
    %v775 = vsel %vm771, %v702, 0.0
    %v776 = vadd.f32 %v774, %v775
    %v777 = vsel %vm771, %v704, 0.0
    %v778 = vadd.f32 %v776, %v777
    %v779 = vsel %vm771, %v706, 0.0
    %v780 = vadd.f32 %v778, %v779
    %v781 = vsel %vm771, %v708, 0.0
    %v782 = vadd.f32 %v780, %v781
    %v783 = vsel %vm771, %v710, 0.0
    %v784 = vadd.f32 %v782, %v783
    %v785 = vrot.slane %v784, 4
    %v786 = vadd.f32 %v784, %v785
    %v787 = vrot.slane %v786, 2
    %v788 = vadd.f32 %v786, %v787
    %v789 = vrot.slane %v788, 1
    %v790 = vadd.f32 %v788, %v789
    %v792 = vsel %vm771, %v790, 0
    %794 = vmatprep.subr.mxu0 0.0
    %v795 = vand.u32 %v736, 4294901760
    %796 = vmatpush1.msra.mxu0 %v795
    %797 = vmatprep.subr.mxu0 0.0
    %v798 = vand.u32 %v737, 4294901760
    %799 = vmatpush1.msra.mxu0 %v798
    %800 = vmatprep.subr.mxu0 0.0
    %v801 = vand.u32 %v738, 4294901760
    %802 = vmatpush1.msra.mxu0 %v801
    %803 = vmatprep.subr.mxu0 0.0
    %v804 = vand.u32 %v739, 4294901760
    %805 = vmatpush1.msra.mxu0 %v804
    %806 = vmatprep.subr.mxu0 0.0
    %v807 = vand.u32 %v740, 4294901760
    %808 = vmatpush1.msra.mxu0 %v807
    %809 = vmatprep.subr.mxu0 0.0
    %v810 = vand.u32 %v741, 4294901760
    %811 = vmatpush1.msra.mxu0 %v810
    %812 = vmatprep.subr.mxu0 0.0
    %v813 = vand.u32 %v742, 4294901760
    %814 = vmatpush1.msra.mxu0 %v813
    %815 = vmatprep.subr.mxu0 0.0
    %v816 = vand.u32 %v743, 4294901760
    %817 = vmatpush1.msra.mxu0 %v816
    %818 = vmatprep.subr.mxu0 0.0
    %v819 = vand.u32 %v744, 4294901760
    %820 = vmatpush1.msra.mxu0 %v819
    %821 = vmatprep.subr.mxu0 0.0
    %v822 = vand.u32 %v745, 4294901760
    %823 = vmatpush1.msra.mxu0 %v822
    %824 = vmatprep.subr.mxu0 0.0
    %v825 = vand.u32 %v746, 4294901760
    %826 = vmatpush1.msra.mxu0 %v825
    %827 = vmatprep.subr.mxu0 0.0
    %v828 = vand.u32 %v747, 4294901760
    %829 = vmatpush1.msra.mxu0 %v828
    %830 = vmatprep.subr.mxu0 0.0
    %v831 = vand.u32 %v748, 4294901760
    %832 = vmatpush1.msra.mxu0 %v831
    %833 = vmatprep.subr.mxu0 0.0
    %v834 = vand.u32 %v749, 4294901760
    %835 = vmatpush1.msra.mxu0 %v834
    %836 = vmatprep.subr.mxu0 0.0
    %v837 = vand.u32 %v750, 4294901760
    %838 = vmatpush1.msra.mxu0 %v837
    %839 = vmatprep.subr.mxu0 0.0
    %v840 = vand.u32 %v751, 4294901760
    %841 = vmatpush1.msra.mxu0 %v840
    %842 = vmatprep.subr.mxu0 0.0
    %v843 = vand.u32 %v752, 4294901760
    %844 = vmatpush1.msra.mxu0 %v843
    %845 = vmatprep.subr.mxu0 0.0
    %v846 = vand.u32 %v753, 4294901760
    %847 = vmatpush1.msra.mxu0 %v846
    %848 = vmatprep.subr.mxu0 0.0
    %v849 = vand.u32 %v754, 4294901760
    %850 = vmatpush1.msra.mxu0 %v849
    %851 = vmatprep.subr.mxu0 0.0
    %v852 = vand.u32 %v755, 4294901760
    %853 = vmatpush1.msra.mxu0 %v852
    %854 = vmatprep.subr.mxu0 0.0
    %v855 = vand.u32 %v756, 4294901760
    %856 = vmatpush1.msra.mxu0 %v855
    %857 = vmatprep.subr.mxu0 0.0
    %858 = vmatpush1.msra.mxu0 0.0
    %859 = vmatprep.subr.mxu0 0.0
    %860 = vmatpush1.msra.mxu0 0.0
    %861 = vmatprep.subr.mxu0 0.0
    %862 = vmatpush1.msra.mxu0 0.0
    %863 = vmatprep.subr.mxu0 0.0
    %864 = vmatpush1.msra.mxu0 0.0
    %865 = vmatprep.subr.mxu0 0.0
    %866 = vmatpush1.msra.mxu0 0.0
    %867 = vmatprep.subr.mxu0 0.0
    %868 = vmatpush1.msra.mxu0 0.0
    %869 = vmatprep.subr.mxu0 0.0
    %870 = vmatpush1.msra.mxu0 0.0
    %871 = vmatprep.subr.mxu0 0.0
    %872 = vmatpush1.msra.mxu0 0.0
    %873 = vmatprep.subr.mxu0 0.0
    %874 = vmatpush1.msra.mxu0 0.0
    %875 = vmatprep.subr.mxu0 0.0
    %876 = vmatpush1.msra.mxu0 0.0
    %877 = vmatprep.subr.mxu0 0.0
    %878 = vmatpush1.msra.mxu0 0.0
    %v879 = vand.u32 %v792, 4294901760
    %v880 = vsub.f32 %v792, %v879
    %v881 = vand.u32 %v880, 4294901760
    %v882 = vsub.f32 %v880, %v881
    %v883 = vand.u32 %v882, 4294901760
    %884 = vmatprep.mubr.f32.mxu0 %v883
    %v885 = vand.u32 %v770, 4294901760
    %v886 = vsub.f32 %v770, %v885
    %v887 = vand.u32 %v886, 4294901760
    %v888 = vsub.f32 %v886, %v887
    %v889 = vand.u32 %v888, 4294901760
    %890 = vmatmul.mubr.f32.gmra.mrb[0].mxu0 %v889
    %v891 = vpop.f32.mrb[0].mxu0
    %v892 = vadd.f32 0.0, %v891
    %v893 = vpop.f32.mrb[0].mxu0
    %894 = vdwg.mxu0
    %895 = vmatprep.subr.mxu0 0.0
    %v896 = vand.u32 %v736, 4294901760
    %v897 = vsub.f32 %v736, %v896
    %v898 = vand.u32 %v897, 4294901760
    %v899 = vsub.f32 %v897, %v898
    %v900 = vand.u32 %v899, 4294901760
    %901 = vmatpush1.msra.mxu0 %v900
    %902 = vmatprep.subr.mxu0 0.0
    %v903 = vand.u32 %v737, 4294901760
    %v904 = vsub.f32 %v737, %v903
    %v905 = vand.u32 %v904, 4294901760
    %v906 = vsub.f32 %v904, %v905
    %v907 = vand.u32 %v906, 4294901760
    %908 = vmatpush1.msra.mxu0 %v907
    %909 = vmatprep.subr.mxu0 0.0
    %v910 = vand.u32 %v738, 4294901760
    %v911 = vsub.f32 %v738, %v910
    %v912 = vand.u32 %v911, 4294901760
    %v913 = vsub.f32 %v911, %v912
    %v914 = vand.u32 %v913, 4294901760
    %915 = vmatpush1.msra.mxu0 %v914
    %916 = vmatprep.subr.mxu0 0.0
    %v917 = vand.u32 %v739, 4294901760
    %v918 = vsub.f32 %v739, %v917
    %v919 = vand.u32 %v918, 4294901760
    %v920 = vsub.f32 %v918, %v919
    %v921 = vand.u32 %v920, 4294901760
    %922 = vmatpush1.msra.mxu0 %v921
    %923 = vmatprep.subr.mxu0 0.0
    %v924 = vand.u32 %v740, 4294901760
    %v925 = vsub.f32 %v740, %v924
    %v926 = vand.u32 %v925, 4294901760
    %v927 = vsub.f32 %v925, %v926
    %v928 = vand.u32 %v927, 4294901760
    %929 = vmatpush1.msra.mxu0 %v928
    %930 = vmatprep.subr.mxu0 0.0
    %v931 = vand.u32 %v741, 4294901760
    %v932 = vsub.f32 %v741, %v931
    %v933 = vand.u32 %v932, 4294901760
    %v934 = vsub.f32 %v932, %v933
    %v935 = vand.u32 %v934, 4294901760
    %936 = vmatpush1.msra.mxu0 %v935
    %937 = vmatprep.subr.mxu0 0.0
    %v938 = vand.u32 %v742, 4294901760
    %v939 = vsub.f32 %v742, %v938
    %v940 = vand.u32 %v939, 4294901760
    %v941 = vsub.f32 %v939, %v940
    %v942 = vand.u32 %v941, 4294901760
    %943 = vmatpush1.msra.mxu0 %v942
    %944 = vmatprep.subr.mxu0 0.0
    %v945 = vand.u32 %v743, 4294901760
    %v946 = vsub.f32 %v743, %v945
    %v947 = vand.u32 %v946, 4294901760
    %v948 = vsub.f32 %v946, %v947
    %v949 = vand.u32 %v948, 4294901760
    %950 = vmatpush1.msra.mxu0 %v949
    %951 = vmatprep.subr.mxu0 0.0
    %v952 = vand.u32 %v744, 4294901760
    %v953 = vsub.f32 %v744, %v952
    %v954 = vand.u32 %v953, 4294901760
    %v955 = vsub.f32 %v953, %v954
    %v956 = vand.u32 %v955, 4294901760
    %957 = vmatpush1.msra.mxu0 %v956
    %958 = vmatprep.subr.mxu0 0.0
    %v959 = vand.u32 %v745, 4294901760
    %v960 = vsub.f32 %v745, %v959
    %v961 = vand.u32 %v960, 4294901760
    %v962 = vsub.f32 %v960, %v961
    %v963 = vand.u32 %v962, 4294901760
    %964 = vmatpush1.msra.mxu0 %v963
    %965 = vmatprep.subr.mxu0 0.0
    %v966 = vand.u32 %v746, 4294901760
    %v967 = vsub.f32 %v746, %v966
    %v968 = vand.u32 %v967, 4294901760
    %v969 = vsub.f32 %v967, %v968
    %v970 = vand.u32 %v969, 4294901760
    %971 = vmatpush1.msra.mxu0 %v970
    %972 = vmatprep.subr.mxu0 0.0
    %v973 = vand.u32 %v747, 4294901760
    %v974 = vsub.f32 %v747, %v973
    %v975 = vand.u32 %v974, 4294901760
    %v976 = vsub.f32 %v974, %v975
    %v977 = vand.u32 %v976, 4294901760
    %978 = vmatpush1.msra.mxu0 %v977
    %979 = vmatprep.subr.mxu0 0.0
    %v980 = vand.u32 %v748, 4294901760
    %v981 = vsub.f32 %v748, %v980
    %v982 = vand.u32 %v981, 4294901760
    %v983 = vsub.f32 %v981, %v982
    %v984 = vand.u32 %v983, 4294901760
    %985 = vmatpush1.msra.mxu0 %v984
    %986 = vmatprep.subr.mxu0 0.0
    %v987 = vand.u32 %v749, 4294901760
    %v988 = vsub.f32 %v749, %v987
    %v989 = vand.u32 %v988, 4294901760
    %v990 = vsub.f32 %v988, %v989
    %v991 = vand.u32 %v990, 4294901760
    %992 = vmatpush1.msra.mxu0 %v991
    %993 = vmatprep.subr.mxu0 0.0
    %v994 = vand.u32 %v750, 4294901760
    %v995 = vsub.f32 %v750, %v994
    %v996 = vand.u32 %v995, 4294901760
    %v997 = vsub.f32 %v995, %v996
    %v998 = vand.u32 %v997, 4294901760
    %999 = vmatpush1.msra.mxu0 %v998
    %1000 = vmatprep.subr.mxu0 0.0
    %v1001 = vand.u32 %v751, 4294901760
    %v1002 = vsub.f32 %v751, %v1001
    %v1003 = vand.u32 %v1002, 4294901760
    %v1004 = vsub.f32 %v1002, %v1003
    %v1005 = vand.u32 %v1004, 4294901760
    %1006 = vmatpush1.msra.mxu0 %v1005
    %1007 = vmatprep.subr.mxu0 0.0
    %v1008 = vand.u32 %v752, 4294901760
    %v1009 = vsub.f32 %v752, %v1008
    %v1010 = vand.u32 %v1009, 4294901760
    %v1011 = vsub.f32 %v1009, %v1010
    %v1012 = vand.u32 %v1011, 4294901760
    %1013 = vmatpush1.msra.mxu0 %v1012
    %1014 = vmatprep.subr.mxu0 0.0
    %v1015 = vand.u32 %v753, 4294901760
    %v1016 = vsub.f32 %v753, %v1015
    %v1017 = vand.u32 %v1016, 4294901760
    %v1018 = vsub.f32 %v1016, %v1017
    %v1019 = vand.u32 %v1018, 4294901760
    %1020 = vmatpush1.msra.mxu0 %v1019
    %1021 = vmatprep.subr.mxu0 0.0
    %v1022 = vand.u32 %v754, 4294901760
    %v1023 = vsub.f32 %v754, %v1022
    %v1024 = vand.u32 %v1023, 4294901760
    %v1025 = vsub.f32 %v1023, %v1024
    %v1026 = vand.u32 %v1025, 4294901760
    %1027 = vmatpush1.msra.mxu0 %v1026
    %1028 = vmatprep.subr.mxu0 0.0
    %v1029 = vand.u32 %v755, 4294901760
    %v1030 = vsub.f32 %v755, %v1029
    %v1031 = vand.u32 %v1030, 4294901760
    %v1032 = vsub.f32 %v1030, %v1031
    %v1033 = vand.u32 %v1032, 4294901760
    %1034 = vmatpush1.msra.mxu0 %v1033
    %1035 = vmatprep.subr.mxu0 0.0
    %v1036 = vand.u32 %v756, 4294901760
    %v1037 = vsub.f32 %v756, %v1036
    %v1038 = vand.u32 %v1037, 4294901760
    %v1039 = vsub.f32 %v1037, %v1038
    %v1040 = vand.u32 %v1039, 4294901760
    %1041 = vmatpush1.msra.mxu0 %v1040
    %1042 = vmatprep.subr.mxu0 0.0
    %1043 = vmatpush1.msra.mxu0 0.0
    %1044 = vmatprep.subr.mxu0 0.0
    %1045 = vmatpush1.msra.mxu0 0.0
    %1046 = vmatprep.subr.mxu0 0.0
    %1047 = vmatpush1.msra.mxu0 0.0
    %1048 = vmatprep.subr.mxu0 0.0
    %1049 = vmatpush1.msra.mxu0 0.0
    %1050 = vmatprep.subr.mxu0 0.0
    %1051 = vmatpush1.msra.mxu0 0.0
    %1052 = vmatprep.subr.mxu0 0.0
    %1053 = vmatpush1.msra.mxu0 0.0
    %1054 = vmatprep.subr.mxu0 0.0
    %1055 = vmatpush1.msra.mxu0 0.0
    %1056 = vmatprep.subr.mxu0 0.0
    %1057 = vmatpush1.msra.mxu0 0.0
    %1058 = vmatprep.subr.mxu0 0.0
    %1059 = vmatpush1.msra.mxu0 0.0
    %1060 = vmatprep.subr.mxu0 0.0
    %1061 = vmatpush1.msra.mxu0 0.0
    %1062 = vmatprep.subr.mxu0 0.0
    %1063 = vmatpush1.msra.mxu0 0.0
    %v1064 = vand.u32 %v792, 4294901760
    %1065 = vmatprep.mubr.f32.mxu0 %v1064
    %v1066 = vand.u32 %v770, 4294901760
    %1067 = vmatmul.mubr.f32.gmra.mrb[0].mxu0 %v1066
    %v1068 = vpop.f32.mrb[0].mxu0
    %v1069 = vadd.f32 %v892, %v1068
    %v1070 = vpop.f32.mrb[0].mxu0
    %1071 = vdwg.mxu0
    %1072 = vmatprep.subr.mxu0 0.0
    %v1073 = vand.u32 %v736, 4294901760
    %v1074 = vsub.f32 %v736, %v1073
    %1075 = vmatpush1.msra.mxu0 %v1074
    %1076 = vmatprep.subr.mxu0 0.0
    %v1077 = vand.u32 %v737, 4294901760
    %v1078 = vsub.f32 %v737, %v1077
    %1079 = vmatpush1.msra.mxu0 %v1078
    %1080 = vmatprep.subr.mxu0 0.0
    %v1081 = vand.u32 %v738, 4294901760
    %v1082 = vsub.f32 %v738, %v1081
    %1083 = vmatpush1.msra.mxu0 %v1082
    %1084 = vmatprep.subr.mxu0 0.0
    %v1085 = vand.u32 %v739, 4294901760
    %v1086 = vsub.f32 %v739, %v1085
    %1087 = vmatpush1.msra.mxu0 %v1086
    %1088 = vmatprep.subr.mxu0 0.0
    %v1089 = vand.u32 %v740, 4294901760
    %v1090 = vsub.f32 %v740, %v1089
    %1091 = vmatpush1.msra.mxu0 %v1090
    %1092 = vmatprep.subr.mxu0 0.0
    %v1093 = vand.u32 %v741, 4294901760
    %v1094 = vsub.f32 %v741, %v1093
    %1095 = vmatpush1.msra.mxu0 %v1094
    %1096 = vmatprep.subr.mxu0 0.0
    %v1097 = vand.u32 %v742, 4294901760
    %v1098 = vsub.f32 %v742, %v1097
    %1099 = vmatpush1.msra.mxu0 %v1098
    %1100 = vmatprep.subr.mxu0 0.0
    %v1101 = vand.u32 %v743, 4294901760
    %v1102 = vsub.f32 %v743, %v1101
    %1103 = vmatpush1.msra.mxu0 %v1102
    %1104 = vmatprep.subr.mxu0 0.0
    %v1105 = vand.u32 %v744, 4294901760
    %v1106 = vsub.f32 %v744, %v1105
    %1107 = vmatpush1.msra.mxu0 %v1106
    %1108 = vmatprep.subr.mxu0 0.0
    %v1109 = vand.u32 %v745, 4294901760
    %v1110 = vsub.f32 %v745, %v1109
    %1111 = vmatpush1.msra.mxu0 %v1110
    %1112 = vmatprep.subr.mxu0 0.0
    %v1113 = vand.u32 %v746, 4294901760
    %v1114 = vsub.f32 %v746, %v1113
    %1115 = vmatpush1.msra.mxu0 %v1114
    %1116 = vmatprep.subr.mxu0 0.0
    %v1117 = vand.u32 %v747, 4294901760
    %v1118 = vsub.f32 %v747, %v1117
    %1119 = vmatpush1.msra.mxu0 %v1118
    %1120 = vmatprep.subr.mxu0 0.0
    %v1121 = vand.u32 %v748, 4294901760
    %v1122 = vsub.f32 %v748, %v1121
    %1123 = vmatpush1.msra.mxu0 %v1122
    %1124 = vmatprep.subr.mxu0 0.0
    %v1125 = vand.u32 %v749, 4294901760
    %v1126 = vsub.f32 %v749, %v1125
    %1127 = vmatpush1.msra.mxu0 %v1126
    %1128 = vmatprep.subr.mxu0 0.0
    %v1129 = vand.u32 %v750, 4294901760
    %v1130 = vsub.f32 %v750, %v1129
    %1131 = vmatpush1.msra.mxu0 %v1130
    %1132 = vmatprep.subr.mxu0 0.0
    %v1133 = vand.u32 %v751, 4294901760
    %v1134 = vsub.f32 %v751, %v1133
    %1135 = vmatpush1.msra.mxu0 %v1134
    %1136 = vmatprep.subr.mxu0 0.0
    %v1137 = vand.u32 %v752, 4294901760
    %v1138 = vsub.f32 %v752, %v1137
    %1139 = vmatpush1.msra.mxu0 %v1138
    %1140 = vmatprep.subr.mxu0 0.0
    %v1141 = vand.u32 %v753, 4294901760
    %v1142 = vsub.f32 %v753, %v1141
    %1143 = vmatpush1.msra.mxu0 %v1142
    %1144 = vmatprep.subr.mxu0 0.0
    %v1145 = vand.u32 %v754, 4294901760
    %v1146 = vsub.f32 %v754, %v1145
    %1147 = vmatpush1.msra.mxu0 %v1146
    %1148 = vmatprep.subr.mxu0 0.0
    %v1149 = vand.u32 %v755, 4294901760
    %v1150 = vsub.f32 %v755, %v1149
    %1151 = vmatpush1.msra.mxu0 %v1150
    %1152 = vmatprep.subr.mxu0 0.0
    %v1153 = vand.u32 %v756, 4294901760
    %v1154 = vsub.f32 %v756, %v1153
    %1155 = vmatpush1.msra.mxu0 %v1154
    %1156 = vmatprep.subr.mxu0 0.0
    %1157 = vmatpush1.msra.mxu0 0.0
    %1158 = vmatprep.subr.mxu0 0.0
    %1159 = vmatpush1.msra.mxu0 0.0
    %1160 = vmatprep.subr.mxu0 0.0
    %1161 = vmatpush1.msra.mxu0 0.0
    %1162 = vmatprep.subr.mxu0 0.0
    %1163 = vmatpush1.msra.mxu0 0.0
    %1164 = vmatprep.subr.mxu0 0.0
    %1165 = vmatpush1.msra.mxu0 0.0
    %1166 = vmatprep.subr.mxu0 0.0
    %1167 = vmatpush1.msra.mxu0 0.0
    %1168 = vmatprep.subr.mxu0 0.0
    %1169 = vmatpush1.msra.mxu0 0.0
    %1170 = vmatprep.subr.mxu0 0.0
    %1171 = vmatpush1.msra.mxu0 0.0
    %1172 = vmatprep.subr.mxu0 0.0
    %1173 = vmatpush1.msra.mxu0 0.0
    %1174 = vmatprep.subr.mxu0 0.0
    %1175 = vmatpush1.msra.mxu0 0.0
    %1176 = vmatprep.subr.mxu0 0.0
    %1177 = vmatpush1.msra.mxu0 0.0
    %v1178 = vand.u32 %v792, 4294901760
    %v1179 = vsub.f32 %v792, %v1178
    %1180 = vmatprep.mubr.f32.mxu0 %v1179
    %v1181 = vand.u32 %v770, 4294901760
    %v1182 = vsub.f32 %v770, %v1181
    %1183 = vmatmul.mubr.f32.gmra.mrb[0].mxu0 %v1182
    %v1184 = vpop.f32.mrb[0].mxu0
    %v1185 = vadd.f32 %v1069, %v1184
    %v1186 = vpop.f32.mrb[0].mxu0
    %1187 = vdwg.mxu0
    %1188 = vmatprep.subr.mxu0 0.0
    %v1189 = vand.u32 %v736, 4294901760
    %1190 = vmatpush1.msra.mxu0 %v1189
    %1191 = vmatprep.subr.mxu0 0.0
    %v1192 = vand.u32 %v737, 4294901760
    %1193 = vmatpush1.msra.mxu0 %v1192
    %1194 = vmatprep.subr.mxu0 0.0
    %v1195 = vand.u32 %v738, 4294901760
    %1196 = vmatpush1.msra.mxu0 %v1195
    %1197 = vmatprep.subr.mxu0 0.0
    %v1198 = vand.u32 %v739, 4294901760
    %1199 = vmatpush1.msra.mxu0 %v1198
    %1200 = vmatprep.subr.mxu0 0.0
    %v1201 = vand.u32 %v740, 4294901760
    %1202 = vmatpush1.msra.mxu0 %v1201
    %1203 = vmatprep.subr.mxu0 0.0
    %v1204 = vand.u32 %v741, 4294901760
    %1205 = vmatpush1.msra.mxu0 %v1204
    %1206 = vmatprep.subr.mxu0 0.0
    %v1207 = vand.u32 %v742, 4294901760
    %1208 = vmatpush1.msra.mxu0 %v1207
    %1209 = vmatprep.subr.mxu0 0.0
    %v1210 = vand.u32 %v743, 4294901760
    %1211 = vmatpush1.msra.mxu0 %v1210
    %1212 = vmatprep.subr.mxu0 0.0
    %v1213 = vand.u32 %v744, 4294901760
    %1214 = vmatpush1.msra.mxu0 %v1213
    %1215 = vmatprep.subr.mxu0 0.0
    %v1216 = vand.u32 %v745, 4294901760
    %1217 = vmatpush1.msra.mxu0 %v1216
    %1218 = vmatprep.subr.mxu0 0.0
    %v1219 = vand.u32 %v746, 4294901760
    %1220 = vmatpush1.msra.mxu0 %v1219
    %1221 = vmatprep.subr.mxu0 0.0
    %v1222 = vand.u32 %v747, 4294901760
    %1223 = vmatpush1.msra.mxu0 %v1222
    %1224 = vmatprep.subr.mxu0 0.0
    %v1225 = vand.u32 %v748, 4294901760
    %1226 = vmatpush1.msra.mxu0 %v1225
    %1227 = vmatprep.subr.mxu0 0.0
    %v1228 = vand.u32 %v749, 4294901760
    %1229 = vmatpush1.msra.mxu0 %v1228
    %1230 = vmatprep.subr.mxu0 0.0
    %v1231 = vand.u32 %v750, 4294901760
    %1232 = vmatpush1.msra.mxu0 %v1231
    %1233 = vmatprep.subr.mxu0 0.0
    %v1234 = vand.u32 %v751, 4294901760
    %1235 = vmatpush1.msra.mxu0 %v1234
    %1236 = vmatprep.subr.mxu0 0.0
    %v1237 = vand.u32 %v752, 4294901760
    %1238 = vmatpush1.msra.mxu0 %v1237
    %1239 = vmatprep.subr.mxu0 0.0
    %v1240 = vand.u32 %v753, 4294901760
    %1241 = vmatpush1.msra.mxu0 %v1240
    %1242 = vmatprep.subr.mxu0 0.0
    %v1243 = vand.u32 %v754, 4294901760
    %1244 = vmatpush1.msra.mxu0 %v1243
    %1245 = vmatprep.subr.mxu0 0.0
    %v1246 = vand.u32 %v755, 4294901760
    %1247 = vmatpush1.msra.mxu0 %v1246
    %1248 = vmatprep.subr.mxu0 0.0
    %v1249 = vand.u32 %v756, 4294901760
    %1250 = vmatpush1.msra.mxu0 %v1249
    %1251 = vmatprep.subr.mxu0 0.0
    %1252 = vmatpush1.msra.mxu0 0.0
    %1253 = vmatprep.subr.mxu0 0.0
    %1254 = vmatpush1.msra.mxu0 0.0
    %1255 = vmatprep.subr.mxu0 0.0
    %1256 = vmatpush1.msra.mxu0 0.0
    %1257 = vmatprep.subr.mxu0 0.0
    %1258 = vmatpush1.msra.mxu0 0.0
    %1259 = vmatprep.subr.mxu0 0.0
    %1260 = vmatpush1.msra.mxu0 0.0
    %1261 = vmatprep.subr.mxu0 0.0
    %1262 = vmatpush1.msra.mxu0 0.0
    %1263 = vmatprep.subr.mxu0 0.0
    %1264 = vmatpush1.msra.mxu0 0.0
    %1265 = vmatprep.subr.mxu0 0.0
    %1266 = vmatpush1.msra.mxu0 0.0
    %1267 = vmatprep.subr.mxu0 0.0
    %1268 = vmatpush1.msra.mxu0 0.0
    %1269 = vmatprep.subr.mxu0 0.0
    %1270 = vmatpush1.msra.mxu0 0.0
    %1271 = vmatprep.subr.mxu0 0.0
    %1272 = vmatpush1.msra.mxu0 0.0
    %v1273 = vand.u32 %v792, 4294901760
    %v1274 = vsub.f32 %v792, %v1273
    %v1275 = vand.u32 %v1274, 4294901760
    %1276 = vmatprep.mubr.f32.mxu0 %v1275
    %v1277 = vand.u32 %v770, 4294901760
    %v1278 = vsub.f32 %v770, %v1277
    %v1279 = vand.u32 %v1278, 4294901760
    %1280 = vmatmul.mubr.f32.gmra.mrb[0].mxu0 %v1279
    %v1281 = vpop.f32.mrb[0].mxu0
    %v1282 = vadd.f32 %v1185, %v1281
    %v1283 = vpop.f32.mrb[0].mxu0
    %1284 = vdwg.mxu0
    %1285 = vmatprep.subr.mxu0 0.0
    %v1286 = vand.u32 %v736, 4294901760
    %v1287 = vsub.f32 %v736, %v1286
    %v1288 = vand.u32 %v1287, 4294901760
    %1289 = vmatpush1.msra.mxu0 %v1288
    %1290 = vmatprep.subr.mxu0 0.0
    %v1291 = vand.u32 %v737, 4294901760
    %v1292 = vsub.f32 %v737, %v1291
    %v1293 = vand.u32 %v1292, 4294901760
    %1294 = vmatpush1.msra.mxu0 %v1293
    %1295 = vmatprep.subr.mxu0 0.0
    %v1296 = vand.u32 %v738, 4294901760
    %v1297 = vsub.f32 %v738, %v1296
    %v1298 = vand.u32 %v1297, 4294901760
    %1299 = vmatpush1.msra.mxu0 %v1298
    %1300 = vmatprep.subr.mxu0 0.0
    %v1301 = vand.u32 %v739, 4294901760
    %v1302 = vsub.f32 %v739, %v1301
    %v1303 = vand.u32 %v1302, 4294901760
    %1304 = vmatpush1.msra.mxu0 %v1303
    %1305 = vmatprep.subr.mxu0 0.0
    %v1306 = vand.u32 %v740, 4294901760
    %v1307 = vsub.f32 %v740, %v1306
    %v1308 = vand.u32 %v1307, 4294901760
    %1309 = vmatpush1.msra.mxu0 %v1308
    %1310 = vmatprep.subr.mxu0 0.0
    %v1311 = vand.u32 %v741, 4294901760
    %v1312 = vsub.f32 %v741, %v1311
    %v1313 = vand.u32 %v1312, 4294901760
    %1314 = vmatpush1.msra.mxu0 %v1313
    %1315 = vmatprep.subr.mxu0 0.0
    %v1316 = vand.u32 %v742, 4294901760
    %v1317 = vsub.f32 %v742, %v1316
    %v1318 = vand.u32 %v1317, 4294901760
    %1319 = vmatpush1.msra.mxu0 %v1318
    %1320 = vmatprep.subr.mxu0 0.0
    %v1321 = vand.u32 %v743, 4294901760
    %v1322 = vsub.f32 %v743, %v1321
    %v1323 = vand.u32 %v1322, 4294901760
    %1324 = vmatpush1.msra.mxu0 %v1323
    %1325 = vmatprep.subr.mxu0 0.0
    %v1326 = vand.u32 %v744, 4294901760
    %v1327 = vsub.f32 %v744, %v1326
    %v1328 = vand.u32 %v1327, 4294901760
    %1329 = vmatpush1.msra.mxu0 %v1328
    %1330 = vmatprep.subr.mxu0 0.0
    %v1331 = vand.u32 %v745, 4294901760
    %v1332 = vsub.f32 %v745, %v1331
    %v1333 = vand.u32 %v1332, 4294901760
    %1334 = vmatpush1.msra.mxu0 %v1333
    %1335 = vmatprep.subr.mxu0 0.0
    %v1336 = vand.u32 %v746, 4294901760
    %v1337 = vsub.f32 %v746, %v1336
    %v1338 = vand.u32 %v1337, 4294901760
    %1339 = vmatpush1.msra.mxu0 %v1338
    %1340 = vmatprep.subr.mxu0 0.0
    %v1341 = vand.u32 %v747, 4294901760
    %v1342 = vsub.f32 %v747, %v1341
    %v1343 = vand.u32 %v1342, 4294901760
    %1344 = vmatpush1.msra.mxu0 %v1343
    %1345 = vmatprep.subr.mxu0 0.0
    %v1346 = vand.u32 %v748, 4294901760
    %v1347 = vsub.f32 %v748, %v1346
    %v1348 = vand.u32 %v1347, 4294901760
    %1349 = vmatpush1.msra.mxu0 %v1348
    %1350 = vmatprep.subr.mxu0 0.0
    %v1351 = vand.u32 %v749, 4294901760
    %v1352 = vsub.f32 %v749, %v1351
    %v1353 = vand.u32 %v1352, 4294901760
    %1354 = vmatpush1.msra.mxu0 %v1353
    %1355 = vmatprep.subr.mxu0 0.0
    %v1356 = vand.u32 %v750, 4294901760
    %v1357 = vsub.f32 %v750, %v1356
    %v1358 = vand.u32 %v1357, 4294901760
    %1359 = vmatpush1.msra.mxu0 %v1358
    %1360 = vmatprep.subr.mxu0 0.0
    %v1361 = vand.u32 %v751, 4294901760
    %v1362 = vsub.f32 %v751, %v1361
    %v1363 = vand.u32 %v1362, 4294901760
    %1364 = vmatpush1.msra.mxu0 %v1363
    %1365 = vmatprep.subr.mxu0 0.0
    %v1366 = vand.u32 %v752, 4294901760
    %v1367 = vsub.f32 %v752, %v1366
    %v1368 = vand.u32 %v1367, 4294901760
    %1369 = vmatpush1.msra.mxu0 %v1368
    %1370 = vmatprep.subr.mxu0 0.0
    %v1371 = vand.u32 %v753, 4294901760
    %v1372 = vsub.f32 %v753, %v1371
    %v1373 = vand.u32 %v1372, 4294901760
    %1374 = vmatpush1.msra.mxu0 %v1373
    %1375 = vmatprep.subr.mxu0 0.0
    %v1376 = vand.u32 %v754, 4294901760
    %v1377 = vsub.f32 %v754, %v1376
    %v1378 = vand.u32 %v1377, 4294901760
    %1379 = vmatpush1.msra.mxu0 %v1378
    %1380 = vmatprep.subr.mxu0 0.0
    %v1381 = vand.u32 %v755, 4294901760
    %v1382 = vsub.f32 %v755, %v1381
    %v1383 = vand.u32 %v1382, 4294901760
    %1384 = vmatpush1.msra.mxu0 %v1383
    %1385 = vmatprep.subr.mxu0 0.0
    %v1386 = vand.u32 %v756, 4294901760
    %v1387 = vsub.f32 %v756, %v1386
    %v1388 = vand.u32 %v1387, 4294901760
    %1389 = vmatpush1.msra.mxu0 %v1388
    %1390 = vmatprep.subr.mxu0 0.0
    %1391 = vmatpush1.msra.mxu0 0.0
    %1392 = vmatprep.subr.mxu0 0.0
    %1393 = vmatpush1.msra.mxu0 0.0
    %1394 = vmatprep.subr.mxu0 0.0
    %1395 = vmatpush1.msra.mxu0 0.0
    %1396 = vmatprep.subr.mxu0 0.0
    %1397 = vmatpush1.msra.mxu0 0.0
    %1398 = vmatprep.subr.mxu0 0.0
    %1399 = vmatpush1.msra.mxu0 0.0
    %1400 = vmatprep.subr.mxu0 0.0
    %1401 = vmatpush1.msra.mxu0 0.0
    %1402 = vmatprep.subr.mxu0 0.0
    %1403 = vmatpush1.msra.mxu0 0.0
    %1404 = vmatprep.subr.mxu0 0.0
    %1405 = vmatpush1.msra.mxu0 0.0
    %1406 = vmatprep.subr.mxu0 0.0
    %1407 = vmatpush1.msra.mxu0 0.0
    %1408 = vmatprep.subr.mxu0 0.0
    %1409 = vmatpush1.msra.mxu0 0.0
    %1410 = vmatprep.subr.mxu0 0.0
    %1411 = vmatpush1.msra.mxu0 0.0
    %v1412 = vand.u32 %v792, 4294901760
    %1413 = vmatprep.mubr.f32.mxu0 %v1412
    %v1414 = vand.u32 %v770, 4294901760
    %1415 = vmatmul.mubr.f32.gmra.mrb[0].mxu0 %v1414
    %v1416 = vpop.f32.mrb[0].mxu0
    %v1417 = vadd.f32 %v1282, %v1416
    %v1418 = vpop.f32.mrb[0].mxu0
    %1419 = vdwg.mxu0
    %1420 = vmatprep.subr.mxu0 0.0
    %v1421 = vand.u32 %v736, 4294901760
    %1422 = vmatpush1.msra.mxu0 %v1421
    %1423 = vmatprep.subr.mxu0 0.0
    %v1424 = vand.u32 %v737, 4294901760
    %1425 = vmatpush1.msra.mxu0 %v1424
    %1426 = vmatprep.subr.mxu0 0.0
    %v1427 = vand.u32 %v738, 4294901760
    %1428 = vmatpush1.msra.mxu0 %v1427
    %1429 = vmatprep.subr.mxu0 0.0
    %v1430 = vand.u32 %v739, 4294901760
    %1431 = vmatpush1.msra.mxu0 %v1430
    %1432 = vmatprep.subr.mxu0 0.0
    %v1433 = vand.u32 %v740, 4294901760
    %1434 = vmatpush1.msra.mxu0 %v1433
    %1435 = vmatprep.subr.mxu0 0.0
    %v1436 = vand.u32 %v741, 4294901760
    %1437 = vmatpush1.msra.mxu0 %v1436
    %1438 = vmatprep.subr.mxu0 0.0
    %v1439 = vand.u32 %v742, 4294901760
    %1440 = vmatpush1.msra.mxu0 %v1439
    %1441 = vmatprep.subr.mxu0 0.0
    %v1442 = vand.u32 %v743, 4294901760
    %1443 = vmatpush1.msra.mxu0 %v1442
    %1444 = vmatprep.subr.mxu0 0.0
    %v1445 = vand.u32 %v744, 4294901760
    %1446 = vmatpush1.msra.mxu0 %v1445
    %1447 = vmatprep.subr.mxu0 0.0
    %v1448 = vand.u32 %v745, 4294901760
    %1449 = vmatpush1.msra.mxu0 %v1448
    %1450 = vmatprep.subr.mxu0 0.0
    %v1451 = vand.u32 %v746, 4294901760
    %1452 = vmatpush1.msra.mxu0 %v1451
    %1453 = vmatprep.subr.mxu0 0.0
    %v1454 = vand.u32 %v747, 4294901760
    %1455 = vmatpush1.msra.mxu0 %v1454
    %1456 = vmatprep.subr.mxu0 0.0
    %v1457 = vand.u32 %v748, 4294901760
    %1458 = vmatpush1.msra.mxu0 %v1457
    %1459 = vmatprep.subr.mxu0 0.0
    %v1460 = vand.u32 %v749, 4294901760
    %1461 = vmatpush1.msra.mxu0 %v1460
    %1462 = vmatprep.subr.mxu0 0.0
    %v1463 = vand.u32 %v750, 4294901760
    %1464 = vmatpush1.msra.mxu0 %v1463
    %1465 = vmatprep.subr.mxu0 0.0
    %v1466 = vand.u32 %v751, 4294901760
    %1467 = vmatpush1.msra.mxu0 %v1466
    %1468 = vmatprep.subr.mxu0 0.0
    %v1469 = vand.u32 %v752, 4294901760
    %1470 = vmatpush1.msra.mxu0 %v1469
    %1471 = vmatprep.subr.mxu0 0.0
    %v1472 = vand.u32 %v753, 4294901760
    %1473 = vmatpush1.msra.mxu0 %v1472
    %1474 = vmatprep.subr.mxu0 0.0
    %v1475 = vand.u32 %v754, 4294901760
    %1476 = vmatpush1.msra.mxu0 %v1475
    %1477 = vmatprep.subr.mxu0 0.0
    %v1478 = vand.u32 %v755, 4294901760
    %1479 = vmatpush1.msra.mxu0 %v1478
    %1480 = vmatprep.subr.mxu0 0.0
    %v1481 = vand.u32 %v756, 4294901760
    %1482 = vmatpush1.msra.mxu0 %v1481
    %1483 = vmatprep.subr.mxu0 0.0
    %1484 = vmatpush1.msra.mxu0 0.0
    %1485 = vmatprep.subr.mxu0 0.0
    %1486 = vmatpush1.msra.mxu0 0.0
    %1487 = vmatprep.subr.mxu0 0.0
    %1488 = vmatpush1.msra.mxu0 0.0
    %1489 = vmatprep.subr.mxu0 0.0
    %1490 = vmatpush1.msra.mxu0 0.0
    %1491 = vmatprep.subr.mxu0 0.0
    %1492 = vmatpush1.msra.mxu0 0.0
    %1493 = vmatprep.subr.mxu0 0.0
    %1494 = vmatpush1.msra.mxu0 0.0
    %1495 = vmatprep.subr.mxu0 0.0
    %1496 = vmatpush1.msra.mxu0 0.0
    %1497 = vmatprep.subr.mxu0 0.0
    %1498 = vmatpush1.msra.mxu0 0.0
    %1499 = vmatprep.subr.mxu0 0.0
    %1500 = vmatpush1.msra.mxu0 0.0
    %1501 = vmatprep.subr.mxu0 0.0
    %1502 = vmatpush1.msra.mxu0 0.0
    %1503 = vmatprep.subr.mxu0 0.0
    %1504 = vmatpush1.msra.mxu0 0.0
    %v1505 = vand.u32 %v792, 4294901760
    %1506 = vmatprep.mubr.f32.mxu0 %v1505
    %v1507 = vand.u32 %v770, 4294901760
    %1508 = vmatmul.mubr.f32.gmra.mrb[0].mxu0 %v1507
    %v1509 = vpop.f32.mrb[0].mxu0
    %v1510 = vadd.f32 %v1417, %v1509
    %v1511 = vpop.f32.mrb[0].mxu0
    %1512 = vdwg.mxu0
    %v1513 = vmul.f32 %v1510, 0.0006377551
    %vm1514 = vcmask 48128
    %v1516 = vsel %vm1514, %v1513, 0
    %vm1518 = vcmask 1045504
    %v1520 = vsel %vm1518, %v757, 0
    %v1523 = vsel %vm1518, %v758, 0
    %v1525 = vand.u32 %v1523, 4294901760
    %1526 = vmatprep.subr.mxu0 %v1525
    %v1527 = vand.u32 %v1520, 4294901760
    %1528 = vmatpush1.msra.mxu0 %v1527
    %1529 = vmatprep.subr.mxu0 0.0
    %1530 = vmatpush1.msra.mxu0 0.0
    %1531 = vmatprep.subr.mxu0 0.0
    %1532 = vmatpush1.msra.mxu0 0.0
    %1533 = vmatprep.subr.mxu0 0.0
    %1534 = vmatpush1.msra.mxu0 0.0
    %1535 = vmatprep.subr.mxu0 0.0
    %1536 = vmatpush1.msra.mxu0 0.0
    %1537 = vmatprep.subr.mxu0 0.0
    %1538 = vmatpush1.msra.mxu0 0.0
    %1539 = vmatprep.subr.mxu0 0.0
    %1540 = vmatpush1.msra.mxu0 0.0
    %1541 = vmatprep.subr.mxu0 0.0
    %1542 = vmatpush1.msra.mxu0 0.0
    %1543 = vmatprep.subr.mxu0 0.0
    %1544 = vmatpush1.msra.mxu0 0.0
    %1545 = vmatprep.subr.mxu0 0.0
    %1546 = vmatpush1.msra.mxu0 0.0
    %1547 = vmatprep.subr.mxu0 0.0
    %1548 = vmatpush1.msra.mxu0 0.0
    %1549 = vmatprep.subr.mxu0 0.0
    %1550 = vmatpush1.msra.mxu0 0.0
    %1551 = vmatprep.subr.mxu0 0.0
    %1552 = vmatpush1.msra.mxu0 0.0
    %1553 = vmatprep.subr.mxu0 0.0
    %1554 = vmatpush1.msra.mxu0 0.0
    %1555 = vmatprep.subr.mxu0 0.0
    %1556 = vmatpush1.msra.mxu0 0.0
    %1557 = vmatprep.subr.mxu0 0.0
    %1558 = vmatpush1.msra.mxu0 0.0
    %1559 = vmatprep.subr.mxu0 0.0
    %1560 = vmatpush1.msra.mxu0 0.0
    %1561 = vmatprep.subr.mxu0 0.0
    %1562 = vmatpush1.msra.mxu0 0.0
    %1563 = vmatprep.subr.mxu0 0.0
    %1564 = vmatpush1.msra.mxu0 0.0
    %1565 = vmatprep.subr.mxu0 0.0
    %1566 = vmatpush1.msra.mxu0 0.0
    %1567 = vmatprep.subr.mxu0 0.0
    %1568 = vmatpush1.msra.mxu0 0.0
    %1569 = vmatprep.subr.mxu0 0.0
    %1570 = vmatpush1.msra.mxu0 0.0
    %1571 = vmatprep.subr.mxu0 0.0
    %1572 = vmatpush1.msra.mxu0 0.0
    %1573 = vmatprep.subr.mxu0 0.0
    %1574 = vmatpush1.msra.mxu0 0.0
    %1575 = vmatprep.subr.mxu0 0.0
    %1576 = vmatpush1.msra.mxu0 0.0
    %1577 = vmatprep.subr.mxu0 0.0
    %1578 = vmatpush1.msra.mxu0 0.0
    %1579 = vmatprep.subr.mxu0 0.0
    %1580 = vmatpush1.msra.mxu0 0.0
    %1581 = vmatprep.subr.mxu0 0.0
    %1582 = vmatpush1.msra.mxu0 0.0
    %1583 = vmatprep.subr.mxu0 0.0
    %1584 = vmatpush1.msra.mxu0 0.0
    %1585 = vmatprep.subr.mxu0 0.0
    %1586 = vmatpush1.msra.mxu0 0.0
    %1587 = vmatprep.subr.mxu0 0.0
    %1588 = vmatpush1.msra.mxu0 0.0
    %1589 = vmatprep.subr.mxu0 0.0
    %1590 = vmatpush1.msra.mxu0 0.0
    %1591 = vmatprep.mubr.f32.mxu0 0.0
    %v1592 = vand.u32 %v1516, 4294901760
    %v1593 = vsub.f32 %v1516, %v1592
    %v1594 = vand.u32 %v1593, 4294901760
    %v1595 = vsub.f32 %v1593, %v1594
    %v1596 = vand.u32 %v1595, 4294901760
    %1597 = vmatmul.mubr.f32.gmra.mrb[0].mxu0 %v1596
    %v1598 = vpop.f32.mrb[0].mxu0
    %v1599 = vadd.f32 0.0, %v1598
    %v1600 = vpop.f32.mrb[0].mxu0
    %v1601 = vadd.f32 0.0, %v1600
    %1602 = vdwg.mxu0
    %v1603 = vand.u32 %v1523, 4294901760
    %v1604 = vsub.f32 %v1523, %v1603
    %v1605 = vand.u32 %v1604, 4294901760
    %v1606 = vsub.f32 %v1604, %v1605
    %v1607 = vand.u32 %v1606, 4294901760
    %1608 = vmatprep.subr.mxu0 %v1607
    %v1609 = vand.u32 %v1520, 4294901760
    %v1610 = vsub.f32 %v1520, %v1609
    %v1611 = vand.u32 %v1610, 4294901760
    %v1612 = vsub.f32 %v1610, %v1611
    %v1613 = vand.u32 %v1612, 4294901760
    %1614 = vmatpush1.msra.mxu0 %v1613
    %1615 = vmatprep.subr.mxu0 0.0
    %1616 = vmatpush1.msra.mxu0 0.0
    %1617 = vmatprep.subr.mxu0 0.0
    %1618 = vmatpush1.msra.mxu0 0.0
    %1619 = vmatprep.subr.mxu0 0.0
    %1620 = vmatpush1.msra.mxu0 0.0
    %1621 = vmatprep.subr.mxu0 0.0
    %1622 = vmatpush1.msra.mxu0 0.0
    %1623 = vmatprep.subr.mxu0 0.0
    %1624 = vmatpush1.msra.mxu0 0.0
    %1625 = vmatprep.subr.mxu0 0.0
    %1626 = vmatpush1.msra.mxu0 0.0
    %1627 = vmatprep.subr.mxu0 0.0
    %1628 = vmatpush1.msra.mxu0 0.0
    %1629 = vmatprep.subr.mxu0 0.0
    %1630 = vmatpush1.msra.mxu0 0.0
    %1631 = vmatprep.subr.mxu0 0.0
    %1632 = vmatpush1.msra.mxu0 0.0
    %1633 = vmatprep.subr.mxu0 0.0
    %1634 = vmatpush1.msra.mxu0 0.0
    %1635 = vmatprep.subr.mxu0 0.0
    %1636 = vmatpush1.msra.mxu0 0.0
    %1637 = vmatprep.subr.mxu0 0.0
    %1638 = vmatpush1.msra.mxu0 0.0
    %1639 = vmatprep.subr.mxu0 0.0
    %1640 = vmatpush1.msra.mxu0 0.0
    %1641 = vmatprep.subr.mxu0 0.0
    %1642 = vmatpush1.msra.mxu0 0.0
    %1643 = vmatprep.subr.mxu0 0.0
    %1644 = vmatpush1.msra.mxu0 0.0
    %1645 = vmatprep.subr.mxu0 0.0
    %1646 = vmatpush1.msra.mxu0 0.0
    %1647 = vmatprep.subr.mxu0 0.0
    %1648 = vmatpush1.msra.mxu0 0.0
    %1649 = vmatprep.subr.mxu0 0.0
    %1650 = vmatpush1.msra.mxu0 0.0
    %1651 = vmatprep.subr.mxu0 0.0
    %1652 = vmatpush1.msra.mxu0 0.0
    %1653 = vmatprep.subr.mxu0 0.0
    %1654 = vmatpush1.msra.mxu0 0.0
    %1655 = vmatprep.subr.mxu0 0.0
    %1656 = vmatpush1.msra.mxu0 0.0
    %1657 = vmatprep.subr.mxu0 0.0
    %1658 = vmatpush1.msra.mxu0 0.0
    %1659 = vmatprep.subr.mxu0 0.0
    %1660 = vmatpush1.msra.mxu0 0.0
    %1661 = vmatprep.subr.mxu0 0.0
    %1662 = vmatpush1.msra.mxu0 0.0
    %1663 = vmatprep.subr.mxu0 0.0
    %1664 = vmatpush1.msra.mxu0 0.0
    %1665 = vmatprep.subr.mxu0 0.0
    %1666 = vmatpush1.msra.mxu0 0.0
    %1667 = vmatprep.subr.mxu0 0.0
    %1668 = vmatpush1.msra.mxu0 0.0
    %1669 = vmatprep.subr.mxu0 0.0
    %1670 = vmatpush1.msra.mxu0 0.0
    %1671 = vmatprep.subr.mxu0 0.0
    %1672 = vmatpush1.msra.mxu0 0.0
    %1673 = vmatprep.subr.mxu0 0.0
    %1674 = vmatpush1.msra.mxu0 0.0
    %1675 = vmatprep.subr.mxu0 0.0
    %1676 = vmatpush1.msra.mxu0 0.0
    %1677 = vmatprep.mubr.f32.mxu0 0.0
    %v1678 = vand.u32 %v1516, 4294901760
    %1679 = vmatmul.mubr.f32.gmra.mrb[0].mxu0 %v1678
    %v1680 = vpop.f32.mrb[0].mxu0
    %v1681 = vadd.f32 %v1599, %v1680
    %v1682 = vpop.f32.mrb[0].mxu0
    %v1683 = vadd.f32 %v1601, %v1682
    %1684 = vdwg.mxu0
    %v1685 = vand.u32 %v1523, 4294901760
    %v1686 = vsub.f32 %v1523, %v1685
    %1687 = vmatprep.subr.mxu0 %v1686
    %v1688 = vand.u32 %v1520, 4294901760
    %v1689 = vsub.f32 %v1520, %v1688
    %1690 = vmatpush1.msra.mxu0 %v1689
    %1691 = vmatprep.subr.mxu0 0.0
    %1692 = vmatpush1.msra.mxu0 0.0
    %1693 = vmatprep.subr.mxu0 0.0
    %1694 = vmatpush1.msra.mxu0 0.0
    %1695 = vmatprep.subr.mxu0 0.0
    %1696 = vmatpush1.msra.mxu0 0.0
    %1697 = vmatprep.subr.mxu0 0.0
    %1698 = vmatpush1.msra.mxu0 0.0
    %1699 = vmatprep.subr.mxu0 0.0
    %1700 = vmatpush1.msra.mxu0 0.0
    %1701 = vmatprep.subr.mxu0 0.0
    %1702 = vmatpush1.msra.mxu0 0.0
    %1703 = vmatprep.subr.mxu0 0.0
    %1704 = vmatpush1.msra.mxu0 0.0
    %1705 = vmatprep.subr.mxu0 0.0
    %1706 = vmatpush1.msra.mxu0 0.0
    %1707 = vmatprep.subr.mxu0 0.0
    %1708 = vmatpush1.msra.mxu0 0.0
    %1709 = vmatprep.subr.mxu0 0.0
    %1710 = vmatpush1.msra.mxu0 0.0
    %1711 = vmatprep.subr.mxu0 0.0
    %1712 = vmatpush1.msra.mxu0 0.0
    %1713 = vmatprep.subr.mxu0 0.0
    %1714 = vmatpush1.msra.mxu0 0.0
    %1715 = vmatprep.subr.mxu0 0.0
    %1716 = vmatpush1.msra.mxu0 0.0
    %1717 = vmatprep.subr.mxu0 0.0
    %1718 = vmatpush1.msra.mxu0 0.0
    %1719 = vmatprep.subr.mxu0 0.0
    %1720 = vmatpush1.msra.mxu0 0.0
    %1721 = vmatprep.subr.mxu0 0.0
    %1722 = vmatpush1.msra.mxu0 0.0
    %1723 = vmatprep.subr.mxu0 0.0
    %1724 = vmatpush1.msra.mxu0 0.0
    %1725 = vmatprep.subr.mxu0 0.0
    %1726 = vmatpush1.msra.mxu0 0.0
    %1727 = vmatprep.subr.mxu0 0.0
    %1728 = vmatpush1.msra.mxu0 0.0
    %1729 = vmatprep.subr.mxu0 0.0
    %1730 = vmatpush1.msra.mxu0 0.0
    %1731 = vmatprep.subr.mxu0 0.0
    %1732 = vmatpush1.msra.mxu0 0.0
    %1733 = vmatprep.subr.mxu0 0.0
    %1734 = vmatpush1.msra.mxu0 0.0
    %1735 = vmatprep.subr.mxu0 0.0
    %1736 = vmatpush1.msra.mxu0 0.0
    %1737 = vmatprep.subr.mxu0 0.0
    %1738 = vmatpush1.msra.mxu0 0.0
    %1739 = vmatprep.subr.mxu0 0.0
    %1740 = vmatpush1.msra.mxu0 0.0
    %1741 = vmatprep.subr.mxu0 0.0
    %1742 = vmatpush1.msra.mxu0 0.0
    %1743 = vmatprep.subr.mxu0 0.0
    %1744 = vmatpush1.msra.mxu0 0.0
    %1745 = vmatprep.subr.mxu0 0.0
    %1746 = vmatpush1.msra.mxu0 0.0
    %1747 = vmatprep.subr.mxu0 0.0
    %1748 = vmatpush1.msra.mxu0 0.0
    %1749 = vmatprep.subr.mxu0 0.0
    %1750 = vmatpush1.msra.mxu0 0.0
    %1751 = vmatprep.subr.mxu0 0.0
    %1752 = vmatpush1.msra.mxu0 0.0
    %1753 = vmatprep.mubr.f32.mxu0 0.0
    %v1754 = vand.u32 %v1516, 4294901760
    %v1755 = vsub.f32 %v1516, %v1754
    %1756 = vmatmul.mubr.f32.gmra.mrb[0].mxu0 %v1755
    %v1757 = vpop.f32.mrb[0].mxu0
    %v1758 = vadd.f32 %v1681, %v1757
    %v1759 = vpop.f32.mrb[0].mxu0
    %v1760 = vadd.f32 %v1683, %v1759
    %1761 = vdwg.mxu0
    %v1762 = vand.u32 %v1523, 4294901760
    %1763 = vmatprep.subr.mxu0 %v1762
    %v1764 = vand.u32 %v1520, 4294901760
    %1765 = vmatpush1.msra.mxu0 %v1764
    %1766 = vmatprep.subr.mxu0 0.0
    %1767 = vmatpush1.msra.mxu0 0.0
    %1768 = vmatprep.subr.mxu0 0.0
    %1769 = vmatpush1.msra.mxu0 0.0
    %1770 = vmatprep.subr.mxu0 0.0
    %1771 = vmatpush1.msra.mxu0 0.0
    %1772 = vmatprep.subr.mxu0 0.0
    %1773 = vmatpush1.msra.mxu0 0.0
    %1774 = vmatprep.subr.mxu0 0.0
    %1775 = vmatpush1.msra.mxu0 0.0
    %1776 = vmatprep.subr.mxu0 0.0
    %1777 = vmatpush1.msra.mxu0 0.0
    %1778 = vmatprep.subr.mxu0 0.0
    %1779 = vmatpush1.msra.mxu0 0.0
    %1780 = vmatprep.subr.mxu0 0.0
    %1781 = vmatpush1.msra.mxu0 0.0
    %1782 = vmatprep.subr.mxu0 0.0
    %1783 = vmatpush1.msra.mxu0 0.0
    %1784 = vmatprep.subr.mxu0 0.0
    %1785 = vmatpush1.msra.mxu0 0.0
    %1786 = vmatprep.subr.mxu0 0.0
    %1787 = vmatpush1.msra.mxu0 0.0
    %1788 = vmatprep.subr.mxu0 0.0
    %1789 = vmatpush1.msra.mxu0 0.0
    %1790 = vmatprep.subr.mxu0 0.0
    %1791 = vmatpush1.msra.mxu0 0.0
    %1792 = vmatprep.subr.mxu0 0.0
    %1793 = vmatpush1.msra.mxu0 0.0
    %1794 = vmatprep.subr.mxu0 0.0
    %1795 = vmatpush1.msra.mxu0 0.0
    %1796 = vmatprep.subr.mxu0 0.0
    %1797 = vmatpush1.msra.mxu0 0.0
    %1798 = vmatprep.subr.mxu0 0.0
    %1799 = vmatpush1.msra.mxu0 0.0
    %1800 = vmatprep.subr.mxu0 0.0
    %1801 = vmatpush1.msra.mxu0 0.0
    %1802 = vmatprep.subr.mxu0 0.0
    %1803 = vmatpush1.msra.mxu0 0.0
    %1804 = vmatprep.subr.mxu0 0.0
    %1805 = vmatpush1.msra.mxu0 0.0
    %1806 = vmatprep.subr.mxu0 0.0
    %1807 = vmatpush1.msra.mxu0 0.0
    %1808 = vmatprep.subr.mxu0 0.0
    %1809 = vmatpush1.msra.mxu0 0.0
    %1810 = vmatprep.subr.mxu0 0.0
    %1811 = vmatpush1.msra.mxu0 0.0
    %1812 = vmatprep.subr.mxu0 0.0
    %1813 = vmatpush1.msra.mxu0 0.0
    %1814 = vmatprep.subr.mxu0 0.0
    %1815 = vmatpush1.msra.mxu0 0.0
    %1816 = vmatprep.subr.mxu0 0.0
    %1817 = vmatpush1.msra.mxu0 0.0
    %1818 = vmatprep.subr.mxu0 0.0
    %1819 = vmatpush1.msra.mxu0 0.0
    %1820 = vmatprep.subr.mxu0 0.0
    %1821 = vmatpush1.msra.mxu0 0.0
    %1822 = vmatprep.subr.mxu0 0.0
    %1823 = vmatpush1.msra.mxu0 0.0
    %1824 = vmatprep.subr.mxu0 0.0
    %1825 = vmatpush1.msra.mxu0 0.0
    %1826 = vmatprep.subr.mxu0 0.0
    %1827 = vmatpush1.msra.mxu0 0.0
    %1828 = vmatprep.mubr.f32.mxu0 0.0
    %v1829 = vand.u32 %v1516, 4294901760
    %v1830 = vsub.f32 %v1516, %v1829
    %v1831 = vand.u32 %v1830, 4294901760
    %1832 = vmatmul.mubr.f32.gmra.mrb[0].mxu0 %v1831
    %v1833 = vpop.f32.mrb[0].mxu0
    %v1834 = vadd.f32 %v1758, %v1833
    %v1835 = vpop.f32.mrb[0].mxu0
    %v1836 = vadd.f32 %v1760, %v1835
    %1837 = vdwg.mxu0
    %v1838 = vand.u32 %v1523, 4294901760
    %v1839 = vsub.f32 %v1523, %v1838
    %v1840 = vand.u32 %v1839, 4294901760
    %1841 = vmatprep.subr.mxu0 %v1840
    %v1842 = vand.u32 %v1520, 4294901760
    %v1843 = vsub.f32 %v1520, %v1842
    %v1844 = vand.u32 %v1843, 4294901760
    %1845 = vmatpush1.msra.mxu0 %v1844
    %1846 = vmatprep.subr.mxu0 0.0
    %1847 = vmatpush1.msra.mxu0 0.0
    %1848 = vmatprep.subr.mxu0 0.0
    %1849 = vmatpush1.msra.mxu0 0.0
    %1850 = vmatprep.subr.mxu0 0.0
    %1851 = vmatpush1.msra.mxu0 0.0
    %1852 = vmatprep.subr.mxu0 0.0
    %1853 = vmatpush1.msra.mxu0 0.0
    %1854 = vmatprep.subr.mxu0 0.0
    %1855 = vmatpush1.msra.mxu0 0.0
    %1856 = vmatprep.subr.mxu0 0.0
    %1857 = vmatpush1.msra.mxu0 0.0
    %1858 = vmatprep.subr.mxu0 0.0
    %1859 = vmatpush1.msra.mxu0 0.0
    %1860 = vmatprep.subr.mxu0 0.0
    %1861 = vmatpush1.msra.mxu0 0.0
    %1862 = vmatprep.subr.mxu0 0.0
    %1863 = vmatpush1.msra.mxu0 0.0
    %1864 = vmatprep.subr.mxu0 0.0
    %1865 = vmatpush1.msra.mxu0 0.0
    %1866 = vmatprep.subr.mxu0 0.0
    %1867 = vmatpush1.msra.mxu0 0.0
    %1868 = vmatprep.subr.mxu0 0.0
    %1869 = vmatpush1.msra.mxu0 0.0
    %1870 = vmatprep.subr.mxu0 0.0
    %1871 = vmatpush1.msra.mxu0 0.0
    %1872 = vmatprep.subr.mxu0 0.0
    %1873 = vmatpush1.msra.mxu0 0.0
    %1874 = vmatprep.subr.mxu0 0.0
    %1875 = vmatpush1.msra.mxu0 0.0
    %1876 = vmatprep.subr.mxu0 0.0
    %1877 = vmatpush1.msra.mxu0 0.0
    %1878 = vmatprep.subr.mxu0 0.0
    %1879 = vmatpush1.msra.mxu0 0.0
    %1880 = vmatprep.subr.mxu0 0.0
    %1881 = vmatpush1.msra.mxu0 0.0
    %1882 = vmatprep.subr.mxu0 0.0
    %1883 = vmatpush1.msra.mxu0 0.0
    %1884 = vmatprep.subr.mxu0 0.0
    %1885 = vmatpush1.msra.mxu0 0.0
    %1886 = vmatprep.subr.mxu0 0.0
    %1887 = vmatpush1.msra.mxu0 0.0
    %1888 = vmatprep.subr.mxu0 0.0
    %1889 = vmatpush1.msra.mxu0 0.0
    %1890 = vmatprep.subr.mxu0 0.0
    %1891 = vmatpush1.msra.mxu0 0.0
    %1892 = vmatprep.subr.mxu0 0.0
    %1893 = vmatpush1.msra.mxu0 0.0
    %1894 = vmatprep.subr.mxu0 0.0
    %1895 = vmatpush1.msra.mxu0 0.0
    %1896 = vmatprep.subr.mxu0 0.0
    %1897 = vmatpush1.msra.mxu0 0.0
    %1898 = vmatprep.subr.mxu0 0.0
    %1899 = vmatpush1.msra.mxu0 0.0
    %1900 = vmatprep.subr.mxu0 0.0
    %1901 = vmatpush1.msra.mxu0 0.0
    %1902 = vmatprep.subr.mxu0 0.0
    %1903 = vmatpush1.msra.mxu0 0.0
    %1904 = vmatprep.subr.mxu0 0.0
    %1905 = vmatpush1.msra.mxu0 0.0
    %1906 = vmatprep.subr.mxu0 0.0
    %1907 = vmatpush1.msra.mxu0 0.0
    %1908 = vmatprep.mubr.f32.mxu0 0.0
    %v1909 = vand.u32 %v1516, 4294901760
    %1910 = vmatmul.mubr.f32.gmra.mrb[0].mxu0 %v1909
    %v1911 = vpop.f32.mrb[0].mxu0
    %v1912 = vadd.f32 %v1834, %v1911
    %v1913 = vpop.f32.mrb[0].mxu0
    %v1914 = vadd.f32 %v1836, %v1913
    %1915 = vdwg.mxu0
    %v1916 = vand.u32 %v1523, 4294901760
    %1917 = vmatprep.subr.mxu0 %v1916
    %v1918 = vand.u32 %v1520, 4294901760
    %1919 = vmatpush1.msra.mxu0 %v1918
    %1920 = vmatprep.subr.mxu0 0.0
    %1921 = vmatpush1.msra.mxu0 0.0
    %1922 = vmatprep.subr.mxu0 0.0
    %1923 = vmatpush1.msra.mxu0 0.0
    %1924 = vmatprep.subr.mxu0 0.0
    %1925 = vmatpush1.msra.mxu0 0.0
    %1926 = vmatprep.subr.mxu0 0.0
    %1927 = vmatpush1.msra.mxu0 0.0
    %1928 = vmatprep.subr.mxu0 0.0
    %1929 = vmatpush1.msra.mxu0 0.0
    %1930 = vmatprep.subr.mxu0 0.0
    %1931 = vmatpush1.msra.mxu0 0.0
    %1932 = vmatprep.subr.mxu0 0.0
    %1933 = vmatpush1.msra.mxu0 0.0
    %1934 = vmatprep.subr.mxu0 0.0
    %1935 = vmatpush1.msra.mxu0 0.0
    %1936 = vmatprep.subr.mxu0 0.0
    %1937 = vmatpush1.msra.mxu0 0.0
    %1938 = vmatprep.subr.mxu0 0.0
    %1939 = vmatpush1.msra.mxu0 0.0
    %1940 = vmatprep.subr.mxu0 0.0
    %1941 = vmatpush1.msra.mxu0 0.0
    %1942 = vmatprep.subr.mxu0 0.0
    %1943 = vmatpush1.msra.mxu0 0.0
    %1944 = vmatprep.subr.mxu0 0.0
    %1945 = vmatpush1.msra.mxu0 0.0
    %1946 = vmatprep.subr.mxu0 0.0
    %1947 = vmatpush1.msra.mxu0 0.0
    %1948 = vmatprep.subr.mxu0 0.0
    %1949 = vmatpush1.msra.mxu0 0.0
    %1950 = vmatprep.subr.mxu0 0.0
    %1951 = vmatpush1.msra.mxu0 0.0
    %1952 = vmatprep.subr.mxu0 0.0
    %1953 = vmatpush1.msra.mxu0 0.0
    %1954 = vmatprep.subr.mxu0 0.0
    %1955 = vmatpush1.msra.mxu0 0.0
    %1956 = vmatprep.subr.mxu0 0.0
    %1957 = vmatpush1.msra.mxu0 0.0
    %1958 = vmatprep.subr.mxu0 0.0
    %1959 = vmatpush1.msra.mxu0 0.0
    %1960 = vmatprep.subr.mxu0 0.0
    %1961 = vmatpush1.msra.mxu0 0.0
    %1962 = vmatprep.subr.mxu0 0.0
    %1963 = vmatpush1.msra.mxu0 0.0
    %1964 = vmatprep.subr.mxu0 0.0
    %1965 = vmatpush1.msra.mxu0 0.0
    %1966 = vmatprep.subr.mxu0 0.0
    %1967 = vmatpush1.msra.mxu0 0.0
    %1968 = vmatprep.subr.mxu0 0.0
    %1969 = vmatpush1.msra.mxu0 0.0
    %1970 = vmatprep.subr.mxu0 0.0
    %1971 = vmatpush1.msra.mxu0 0.0
    %1972 = vmatprep.subr.mxu0 0.0
    %1973 = vmatpush1.msra.mxu0 0.0
    %1974 = vmatprep.subr.mxu0 0.0
    %1975 = vmatpush1.msra.mxu0 0.0
    %1976 = vmatprep.subr.mxu0 0.0
    %1977 = vmatpush1.msra.mxu0 0.0
    %1978 = vmatprep.subr.mxu0 0.0
    %1979 = vmatpush1.msra.mxu0 0.0
    %1980 = vmatprep.subr.mxu0 0.0
    %1981 = vmatpush1.msra.mxu0 0.0
    %1982 = vmatprep.mubr.f32.mxu0 0.0
    %v1983 = vand.u32 %v1516, 4294901760
    %1984 = vmatmul.mubr.f32.gmra.mrb[0].mxu0 %v1983
    %v1985 = vpop.f32.mrb[0].mxu0
    %v1986 = vadd.f32 %v1912, %v1985
    %v1987 = vpop.f32.mrb[0].mxu0
    %v1988 = vadd.f32 %v1914, %v1987
    %1989 = vdwg.mxu0
    %v1990 = vlaneseq
    %v1991 = vshrl.u32 %v1990, 7
    %v1992 = vsub.s32 0, %v1991
    %v1993 = vrot.slane %v1986, %v1992
    %v1994 = vlaneseq
    %v1995 = vshrl.u32 %v1994, 7
    %v1996 = vsub.s32 0, %v1995
    %v1997 = vrot.slane %v1988, %v1996
    %v1998 = vsub.f32 %v697, %v1993
    %v1999 = vsub.f32 %v698, %v1997
    %v2000 = vsub.f32 %v699, %v1993
    %v2001 = vsub.f32 %v700, %v1997
    %v2002 = vsub.f32 %v701, %v1993
    %v2003 = vsub.f32 %v702, %v1997
    %v2004 = vsub.f32 %v703, %v1993
    %v2005 = vsub.f32 %v704, %v1997
    %v2006 = vsub.f32 %v705, %v1993
    %v2007 = vsub.f32 %v706, %v1997
    %v2008 = vsub.f32 %v707, %v1993
    %v2009 = vsub.f32 %v708, %v1997
    %v2010 = vsub.f32 %v709, %v1993
    %v2011 = vsub.f32 %v710, %v1997
    %v2012 = vmul.f32 %v1998, %v1998
    %v2013 = vmul.f32 %v1999, %v1999
    %v2014 = vmul.f32 %v2000, %v2000
    %v2015 = vmul.f32 %v2001, %v2001
    %v2016 = vmul.f32 %v2002, %v2002
    %v2017 = vmul.f32 %v2003, %v2003
    %v2018 = vmul.f32 %v2004, %v2004
    %v2019 = vmul.f32 %v2005, %v2005
    %v2020 = vmul.f32 %v2006, %v2006
    %v2021 = vmul.f32 %v2007, %v2007
    %v2022 = vmul.f32 %v2008, %v2008
    %v2023 = vmul.f32 %v2009, %v2009
    %v2024 = vmul.f32 %v2010, %v2010
    %v2025 = vmul.f32 %v2011, %v2011
    %v2026 = vadd.f32 %v2012, %v2014
    %v2027 = vadd.f32 %v2026, %v2016
    %v2028 = vadd.f32 %v2027, %v2018
    %v2029 = vadd.f32 %v2028, %v2020
    %v2030 = vadd.f32 %v2029, %v2022
    %v2031 = vadd.f32 %v2030, %v2024
    %v2032 = vrot.slane %v2031, 4
    %v2033 = vadd.f32 %v2031, %v2032
    %v2034 = vrot.slane %v2033, 2
    %v2035 = vadd.f32 %v2033, %v2034
    %v2036 = vrot.slane %v2035, 1
    %v2037 = vadd.f32 %v2035, %v2036
    %v2038 = vsel %vm771, %v2013, 0.0
    %v2039 = vsel %vm771, %v2015, 0.0
    %v2040 = vadd.f32 %v2038, %v2039
    %v2041 = vsel %vm771, %v2017, 0.0
    %v2042 = vadd.f32 %v2040, %v2041
    %v2043 = vsel %vm771, %v2019, 0.0
    %v2044 = vadd.f32 %v2042, %v2043
    %v2045 = vsel %vm771, %v2021, 0.0
    %v2046 = vadd.f32 %v2044, %v2045
    %v2047 = vsel %vm771, %v2023, 0.0
    %v2048 = vadd.f32 %v2046, %v2047
    %v2049 = vsel %vm771, %v2025, 0.0
    %v2050 = vadd.f32 %v2048, %v2049
    %v2051 = vrot.slane %v2050, 4
    %v2052 = vadd.f32 %v2050, %v2051
    %v2053 = vrot.slane %v2052, 2
    %v2054 = vadd.f32 %v2052, %v2053
    %v2055 = vrot.slane %v2054, 1
    %v2056 = vadd.f32 %v2054, %v2055
    %v2058 = vsel %vm771, %v2056, 0
    %2060 = vmatprep.subr.mxu0 0.0
    %v2061 = vand.u32 %v736, 4294901760
    %2062 = vmatpush1.msra.mxu0 %v2061
    %2063 = vmatprep.subr.mxu0 0.0
    %v2064 = vand.u32 %v737, 4294901760
    %2065 = vmatpush1.msra.mxu0 %v2064
    %2066 = vmatprep.subr.mxu0 0.0
    %v2067 = vand.u32 %v738, 4294901760
    %2068 = vmatpush1.msra.mxu0 %v2067
    %2069 = vmatprep.subr.mxu0 0.0
    %v2070 = vand.u32 %v739, 4294901760
    %2071 = vmatpush1.msra.mxu0 %v2070
    %2072 = vmatprep.subr.mxu0 0.0
    %v2073 = vand.u32 %v740, 4294901760
    %2074 = vmatpush1.msra.mxu0 %v2073
    %2075 = vmatprep.subr.mxu0 0.0
    %v2076 = vand.u32 %v741, 4294901760
    %2077 = vmatpush1.msra.mxu0 %v2076
    %2078 = vmatprep.subr.mxu0 0.0
    %v2079 = vand.u32 %v742, 4294901760
    %2080 = vmatpush1.msra.mxu0 %v2079
    %2081 = vmatprep.subr.mxu0 0.0
    %v2082 = vand.u32 %v743, 4294901760
    %2083 = vmatpush1.msra.mxu0 %v2082
    %2084 = vmatprep.subr.mxu0 0.0
    %v2085 = vand.u32 %v744, 4294901760
    %2086 = vmatpush1.msra.mxu0 %v2085
    %2087 = vmatprep.subr.mxu0 0.0
    %v2088 = vand.u32 %v745, 4294901760
    %2089 = vmatpush1.msra.mxu0 %v2088
    %2090 = vmatprep.subr.mxu0 0.0
    %v2091 = vand.u32 %v746, 4294901760
    %2092 = vmatpush1.msra.mxu0 %v2091
    %2093 = vmatprep.subr.mxu0 0.0
    %v2094 = vand.u32 %v747, 4294901760
    %2095 = vmatpush1.msra.mxu0 %v2094
    %2096 = vmatprep.subr.mxu0 0.0
    %v2097 = vand.u32 %v748, 4294901760
    %2098 = vmatpush1.msra.mxu0 %v2097
    %2099 = vmatprep.subr.mxu0 0.0
    %v2100 = vand.u32 %v749, 4294901760
    %2101 = vmatpush1.msra.mxu0 %v2100
    %2102 = vmatprep.subr.mxu0 0.0
    %v2103 = vand.u32 %v750, 4294901760
    %2104 = vmatpush1.msra.mxu0 %v2103
    %2105 = vmatprep.subr.mxu0 0.0
    %v2106 = vand.u32 %v751, 4294901760
    %2107 = vmatpush1.msra.mxu0 %v2106
    %2108 = vmatprep.subr.mxu0 0.0
    %v2109 = vand.u32 %v752, 4294901760
    %2110 = vmatpush1.msra.mxu0 %v2109
    %2111 = vmatprep.subr.mxu0 0.0
    %v2112 = vand.u32 %v753, 4294901760
    %2113 = vmatpush1.msra.mxu0 %v2112
    %2114 = vmatprep.subr.mxu0 0.0
    %v2115 = vand.u32 %v754, 4294901760
    %2116 = vmatpush1.msra.mxu0 %v2115
    %2117 = vmatprep.subr.mxu0 0.0
    %v2118 = vand.u32 %v755, 4294901760
    %2119 = vmatpush1.msra.mxu0 %v2118
    %2120 = vmatprep.subr.mxu0 0.0
    %v2121 = vand.u32 %v756, 4294901760
    %2122 = vmatpush1.msra.mxu0 %v2121
    %2123 = vmatprep.subr.mxu0 0.0
    %2124 = vmatpush1.msra.mxu0 0.0
    %2125 = vmatprep.subr.mxu0 0.0
    %2126 = vmatpush1.msra.mxu0 0.0
    %2127 = vmatprep.subr.mxu0 0.0
    %2128 = vmatpush1.msra.mxu0 0.0
    %2129 = vmatprep.subr.mxu0 0.0
    %2130 = vmatpush1.msra.mxu0 0.0
    %2131 = vmatprep.subr.mxu0 0.0
    %2132 = vmatpush1.msra.mxu0 0.0
    %2133 = vmatprep.subr.mxu0 0.0
    %2134 = vmatpush1.msra.mxu0 0.0
    %2135 = vmatprep.subr.mxu0 0.0
    %2136 = vmatpush1.msra.mxu0 0.0
    %2137 = vmatprep.subr.mxu0 0.0
    %2138 = vmatpush1.msra.mxu0 0.0
    %2139 = vmatprep.subr.mxu0 0.0
    %2140 = vmatpush1.msra.mxu0 0.0
    %2141 = vmatprep.subr.mxu0 0.0
    %2142 = vmatpush1.msra.mxu0 0.0
    %2143 = vmatprep.subr.mxu0 0.0
    %2144 = vmatpush1.msra.mxu0 0.0
    %v2145 = vand.u32 %v2058, 4294901760
    %v2146 = vsub.f32 %v2058, %v2145
    %v2147 = vand.u32 %v2146, 4294901760
    %v2148 = vsub.f32 %v2146, %v2147
    %v2149 = vand.u32 %v2148, 4294901760
    %2150 = vmatprep.mubr.f32.mxu0 %v2149
    %v2151 = vand.u32 %v2037, 4294901760
    %v2152 = vsub.f32 %v2037, %v2151
    %v2153 = vand.u32 %v2152, 4294901760
    %v2154 = vsub.f32 %v2152, %v2153
    %v2155 = vand.u32 %v2154, 4294901760
    %2156 = vmatmul.mubr.f32.gmra.mrb[0].mxu0 %v2155
    %v2157 = vpop.f32.mrb[0].mxu0
    %v2158 = vadd.f32 0.0, %v2157
    %v2159 = vpop.f32.mrb[0].mxu0
    %2160 = vdwg.mxu0
    %2161 = vmatprep.subr.mxu0 0.0
    %v2162 = vand.u32 %v736, 4294901760
    %v2163 = vsub.f32 %v736, %v2162
    %v2164 = vand.u32 %v2163, 4294901760
    %v2165 = vsub.f32 %v2163, %v2164
    %v2166 = vand.u32 %v2165, 4294901760
    %2167 = vmatpush1.msra.mxu0 %v2166
    %2168 = vmatprep.subr.mxu0 0.0
    %v2169 = vand.u32 %v737, 4294901760
    %v2170 = vsub.f32 %v737, %v2169
    %v2171 = vand.u32 %v2170, 4294901760
    %v2172 = vsub.f32 %v2170, %v2171
    %v2173 = vand.u32 %v2172, 4294901760
    %2174 = vmatpush1.msra.mxu0 %v2173
    %2175 = vmatprep.subr.mxu0 0.0
    %v2176 = vand.u32 %v738, 4294901760
    %v2177 = vsub.f32 %v738, %v2176
    %v2178 = vand.u32 %v2177, 4294901760
    %v2179 = vsub.f32 %v2177, %v2178
    %v2180 = vand.u32 %v2179, 4294901760
    %2181 = vmatpush1.msra.mxu0 %v2180
    %2182 = vmatprep.subr.mxu0 0.0
    %v2183 = vand.u32 %v739, 4294901760
    %v2184 = vsub.f32 %v739, %v2183
    %v2185 = vand.u32 %v2184, 4294901760
    %v2186 = vsub.f32 %v2184, %v2185
    %v2187 = vand.u32 %v2186, 4294901760
    %2188 = vmatpush1.msra.mxu0 %v2187
    %2189 = vmatprep.subr.mxu0 0.0
    %v2190 = vand.u32 %v740, 4294901760
    %v2191 = vsub.f32 %v740, %v2190
    %v2192 = vand.u32 %v2191, 4294901760
    %v2193 = vsub.f32 %v2191, %v2192
    %v2194 = vand.u32 %v2193, 4294901760
    %2195 = vmatpush1.msra.mxu0 %v2194
    %2196 = vmatprep.subr.mxu0 0.0
    %v2197 = vand.u32 %v741, 4294901760
    %v2198 = vsub.f32 %v741, %v2197
    %v2199 = vand.u32 %v2198, 4294901760
    %v2200 = vsub.f32 %v2198, %v2199
    %v2201 = vand.u32 %v2200, 4294901760
    %2202 = vmatpush1.msra.mxu0 %v2201
    %2203 = vmatprep.subr.mxu0 0.0
    %v2204 = vand.u32 %v742, 4294901760
    %v2205 = vsub.f32 %v742, %v2204
    %v2206 = vand.u32 %v2205, 4294901760
    %v2207 = vsub.f32 %v2205, %v2206
    %v2208 = vand.u32 %v2207, 4294901760
    %2209 = vmatpush1.msra.mxu0 %v2208
    %2210 = vmatprep.subr.mxu0 0.0
    %v2211 = vand.u32 %v743, 4294901760
    %v2212 = vsub.f32 %v743, %v2211
    %v2213 = vand.u32 %v2212, 4294901760
    %v2214 = vsub.f32 %v2212, %v2213
    %v2215 = vand.u32 %v2214, 4294901760
    %2216 = vmatpush1.msra.mxu0 %v2215
    %2217 = vmatprep.subr.mxu0 0.0
    %v2218 = vand.u32 %v744, 4294901760
    %v2219 = vsub.f32 %v744, %v2218
    %v2220 = vand.u32 %v2219, 4294901760
    %v2221 = vsub.f32 %v2219, %v2220
    %v2222 = vand.u32 %v2221, 4294901760
    %2223 = vmatpush1.msra.mxu0 %v2222
    %2224 = vmatprep.subr.mxu0 0.0
    %v2225 = vand.u32 %v745, 4294901760
    %v2226 = vsub.f32 %v745, %v2225
    %v2227 = vand.u32 %v2226, 4294901760
    %v2228 = vsub.f32 %v2226, %v2227
    %v2229 = vand.u32 %v2228, 4294901760
    %2230 = vmatpush1.msra.mxu0 %v2229
    %2231 = vmatprep.subr.mxu0 0.0
    %v2232 = vand.u32 %v746, 4294901760
    %v2233 = vsub.f32 %v746, %v2232
    %v2234 = vand.u32 %v2233, 4294901760
    %v2235 = vsub.f32 %v2233, %v2234
    %v2236 = vand.u32 %v2235, 4294901760
    %2237 = vmatpush1.msra.mxu0 %v2236
    %2238 = vmatprep.subr.mxu0 0.0
    %v2239 = vand.u32 %v747, 4294901760
    %v2240 = vsub.f32 %v747, %v2239
    %v2241 = vand.u32 %v2240, 4294901760
    %v2242 = vsub.f32 %v2240, %v2241
    %v2243 = vand.u32 %v2242, 4294901760
    %2244 = vmatpush1.msra.mxu0 %v2243
    %2245 = vmatprep.subr.mxu0 0.0
    %v2246 = vand.u32 %v748, 4294901760
    %v2247 = vsub.f32 %v748, %v2246
    %v2248 = vand.u32 %v2247, 4294901760
    %v2249 = vsub.f32 %v2247, %v2248
    %v2250 = vand.u32 %v2249, 4294901760
    %2251 = vmatpush1.msra.mxu0 %v2250
    %2252 = vmatprep.subr.mxu0 0.0
    %v2253 = vand.u32 %v749, 4294901760
    %v2254 = vsub.f32 %v749, %v2253
    %v2255 = vand.u32 %v2254, 4294901760
    %v2256 = vsub.f32 %v2254, %v2255
    %v2257 = vand.u32 %v2256, 4294901760
    %2258 = vmatpush1.msra.mxu0 %v2257
    %2259 = vmatprep.subr.mxu0 0.0
    %v2260 = vand.u32 %v750, 4294901760
    %v2261 = vsub.f32 %v750, %v2260
    %v2262 = vand.u32 %v2261, 4294901760
    %v2263 = vsub.f32 %v2261, %v2262
    %v2264 = vand.u32 %v2263, 4294901760
    %2265 = vmatpush1.msra.mxu0 %v2264
    %2266 = vmatprep.subr.mxu0 0.0
    %v2267 = vand.u32 %v751, 4294901760
    %v2268 = vsub.f32 %v751, %v2267
    %v2269 = vand.u32 %v2268, 4294901760
    %v2270 = vsub.f32 %v2268, %v2269
    %v2271 = vand.u32 %v2270, 4294901760
    %2272 = vmatpush1.msra.mxu0 %v2271
    %2273 = vmatprep.subr.mxu0 0.0
    %v2274 = vand.u32 %v752, 4294901760
    %v2275 = vsub.f32 %v752, %v2274
    %v2276 = vand.u32 %v2275, 4294901760
    %v2277 = vsub.f32 %v2275, %v2276
    %v2278 = vand.u32 %v2277, 4294901760
    %2279 = vmatpush1.msra.mxu0 %v2278
    %2280 = vmatprep.subr.mxu0 0.0
    %v2281 = vand.u32 %v753, 4294901760
    %v2282 = vsub.f32 %v753, %v2281
    %v2283 = vand.u32 %v2282, 4294901760
    %v2284 = vsub.f32 %v2282, %v2283
    %v2285 = vand.u32 %v2284, 4294901760
    %2286 = vmatpush1.msra.mxu0 %v2285
    %2287 = vmatprep.subr.mxu0 0.0
    %v2288 = vand.u32 %v754, 4294901760
    %v2289 = vsub.f32 %v754, %v2288
    %v2290 = vand.u32 %v2289, 4294901760
    %v2291 = vsub.f32 %v2289, %v2290
    %v2292 = vand.u32 %v2291, 4294901760
    %2293 = vmatpush1.msra.mxu0 %v2292
    %2294 = vmatprep.subr.mxu0 0.0
    %v2295 = vand.u32 %v755, 4294901760
    %v2296 = vsub.f32 %v755, %v2295
    %v2297 = vand.u32 %v2296, 4294901760
    %v2298 = vsub.f32 %v2296, %v2297
    %v2299 = vand.u32 %v2298, 4294901760
    %2300 = vmatpush1.msra.mxu0 %v2299
    %2301 = vmatprep.subr.mxu0 0.0
    %v2302 = vand.u32 %v756, 4294901760
    %v2303 = vsub.f32 %v756, %v2302
    %v2304 = vand.u32 %v2303, 4294901760
    %v2305 = vsub.f32 %v2303, %v2304
    %v2306 = vand.u32 %v2305, 4294901760
    %2307 = vmatpush1.msra.mxu0 %v2306
    %2308 = vmatprep.subr.mxu0 0.0
    %2309 = vmatpush1.msra.mxu0 0.0
    %2310 = vmatprep.subr.mxu0 0.0
    %2311 = vmatpush1.msra.mxu0 0.0
    %2312 = vmatprep.subr.mxu0 0.0
    %2313 = vmatpush1.msra.mxu0 0.0
    %2314 = vmatprep.subr.mxu0 0.0
    %2315 = vmatpush1.msra.mxu0 0.0
    %2316 = vmatprep.subr.mxu0 0.0
    %2317 = vmatpush1.msra.mxu0 0.0
    %2318 = vmatprep.subr.mxu0 0.0
    %2319 = vmatpush1.msra.mxu0 0.0
    %2320 = vmatprep.subr.mxu0 0.0
    %2321 = vmatpush1.msra.mxu0 0.0
    %2322 = vmatprep.subr.mxu0 0.0
    %2323 = vmatpush1.msra.mxu0 0.0
    %2324 = vmatprep.subr.mxu0 0.0
    %2325 = vmatpush1.msra.mxu0 0.0
    %2326 = vmatprep.subr.mxu0 0.0
    %2327 = vmatpush1.msra.mxu0 0.0
    %2328 = vmatprep.subr.mxu0 0.0
    %2329 = vmatpush1.msra.mxu0 0.0
    %v2330 = vand.u32 %v2058, 4294901760
    %2331 = vmatprep.mubr.f32.mxu0 %v2330
    %v2332 = vand.u32 %v2037, 4294901760
    %2333 = vmatmul.mubr.f32.gmra.mrb[0].mxu0 %v2332
    %v2334 = vpop.f32.mrb[0].mxu0
    %v2335 = vadd.f32 %v2158, %v2334
    %v2336 = vpop.f32.mrb[0].mxu0
    %2337 = vdwg.mxu0
    %2338 = vmatprep.subr.mxu0 0.0
    %v2339 = vand.u32 %v736, 4294901760
    %v2340 = vsub.f32 %v736, %v2339
    %2341 = vmatpush1.msra.mxu0 %v2340
    %2342 = vmatprep.subr.mxu0 0.0
    %v2343 = vand.u32 %v737, 4294901760
    %v2344 = vsub.f32 %v737, %v2343
    %2345 = vmatpush1.msra.mxu0 %v2344
    %2346 = vmatprep.subr.mxu0 0.0
    %v2347 = vand.u32 %v738, 4294901760
    %v2348 = vsub.f32 %v738, %v2347
    %2349 = vmatpush1.msra.mxu0 %v2348
    %2350 = vmatprep.subr.mxu0 0.0
    %v2351 = vand.u32 %v739, 4294901760
    %v2352 = vsub.f32 %v739, %v2351
    %2353 = vmatpush1.msra.mxu0 %v2352
    %2354 = vmatprep.subr.mxu0 0.0
    %v2355 = vand.u32 %v740, 4294901760
    %v2356 = vsub.f32 %v740, %v2355
    %2357 = vmatpush1.msra.mxu0 %v2356
    %2358 = vmatprep.subr.mxu0 0.0
    %v2359 = vand.u32 %v741, 4294901760
    %v2360 = vsub.f32 %v741, %v2359
    %2361 = vmatpush1.msra.mxu0 %v2360
    %2362 = vmatprep.subr.mxu0 0.0
    %v2363 = vand.u32 %v742, 4294901760
    %v2364 = vsub.f32 %v742, %v2363
    %2365 = vmatpush1.msra.mxu0 %v2364
    %2366 = vmatprep.subr.mxu0 0.0
    %v2367 = vand.u32 %v743, 4294901760
    %v2368 = vsub.f32 %v743, %v2367
    %2369 = vmatpush1.msra.mxu0 %v2368
    %2370 = vmatprep.subr.mxu0 0.0
    %v2371 = vand.u32 %v744, 4294901760
    %v2372 = vsub.f32 %v744, %v2371
    %2373 = vmatpush1.msra.mxu0 %v2372
    %2374 = vmatprep.subr.mxu0 0.0
    %v2375 = vand.u32 %v745, 4294901760
    %v2376 = vsub.f32 %v745, %v2375
    %2377 = vmatpush1.msra.mxu0 %v2376
    %2378 = vmatprep.subr.mxu0 0.0
    %v2379 = vand.u32 %v746, 4294901760
    %v2380 = vsub.f32 %v746, %v2379
    %2381 = vmatpush1.msra.mxu0 %v2380
    %2382 = vmatprep.subr.mxu0 0.0
    %v2383 = vand.u32 %v747, 4294901760
    %v2384 = vsub.f32 %v747, %v2383
    %2385 = vmatpush1.msra.mxu0 %v2384
    %2386 = vmatprep.subr.mxu0 0.0
    %v2387 = vand.u32 %v748, 4294901760
    %v2388 = vsub.f32 %v748, %v2387
    %2389 = vmatpush1.msra.mxu0 %v2388
    %2390 = vmatprep.subr.mxu0 0.0
    %v2391 = vand.u32 %v749, 4294901760
    %v2392 = vsub.f32 %v749, %v2391
    %2393 = vmatpush1.msra.mxu0 %v2392
    %2394 = vmatprep.subr.mxu0 0.0
    %v2395 = vand.u32 %v750, 4294901760
    %v2396 = vsub.f32 %v750, %v2395
    %2397 = vmatpush1.msra.mxu0 %v2396
    %2398 = vmatprep.subr.mxu0 0.0
    %v2399 = vand.u32 %v751, 4294901760
    %v2400 = vsub.f32 %v751, %v2399
    %2401 = vmatpush1.msra.mxu0 %v2400
    %2402 = vmatprep.subr.mxu0 0.0
    %v2403 = vand.u32 %v752, 4294901760
    %v2404 = vsub.f32 %v752, %v2403
    %2405 = vmatpush1.msra.mxu0 %v2404
    %2406 = vmatprep.subr.mxu0 0.0
    %v2407 = vand.u32 %v753, 4294901760
    %v2408 = vsub.f32 %v753, %v2407
    %2409 = vmatpush1.msra.mxu0 %v2408
    %2410 = vmatprep.subr.mxu0 0.0
    %v2411 = vand.u32 %v754, 4294901760
    %v2412 = vsub.f32 %v754, %v2411
    %2413 = vmatpush1.msra.mxu0 %v2412
    %2414 = vmatprep.subr.mxu0 0.0
    %v2415 = vand.u32 %v755, 4294901760
    %v2416 = vsub.f32 %v755, %v2415
    %2417 = vmatpush1.msra.mxu0 %v2416
    %2418 = vmatprep.subr.mxu0 0.0
    %v2419 = vand.u32 %v756, 4294901760
    %v2420 = vsub.f32 %v756, %v2419
    %2421 = vmatpush1.msra.mxu0 %v2420
    %2422 = vmatprep.subr.mxu0 0.0
    %2423 = vmatpush1.msra.mxu0 0.0
    %2424 = vmatprep.subr.mxu0 0.0
    %2425 = vmatpush1.msra.mxu0 0.0
    %2426 = vmatprep.subr.mxu0 0.0
    %2427 = vmatpush1.msra.mxu0 0.0
    %2428 = vmatprep.subr.mxu0 0.0
    %2429 = vmatpush1.msra.mxu0 0.0
    %2430 = vmatprep.subr.mxu0 0.0
    %2431 = vmatpush1.msra.mxu0 0.0
    %2432 = vmatprep.subr.mxu0 0.0
    %2433 = vmatpush1.msra.mxu0 0.0
    %2434 = vmatprep.subr.mxu0 0.0
    %2435 = vmatpush1.msra.mxu0 0.0
    %2436 = vmatprep.subr.mxu0 0.0
    %2437 = vmatpush1.msra.mxu0 0.0
    %2438 = vmatprep.subr.mxu0 0.0
    %2439 = vmatpush1.msra.mxu0 0.0
    %2440 = vmatprep.subr.mxu0 0.0
    %2441 = vmatpush1.msra.mxu0 0.0
    %2442 = vmatprep.subr.mxu0 0.0
    %2443 = vmatpush1.msra.mxu0 0.0
    %v2444 = vand.u32 %v2058, 4294901760
    %v2445 = vsub.f32 %v2058, %v2444
    %2446 = vmatprep.mubr.f32.mxu0 %v2445
    %v2447 = vand.u32 %v2037, 4294901760
    %v2448 = vsub.f32 %v2037, %v2447
    %2449 = vmatmul.mubr.f32.gmra.mrb[0].mxu0 %v2448
    %v2450 = vpop.f32.mrb[0].mxu0
    %v2451 = vadd.f32 %v2335, %v2450
    %v2452 = vpop.f32.mrb[0].mxu0
    %2453 = vdwg.mxu0
    %2454 = vmatprep.subr.mxu0 0.0
    %v2455 = vand.u32 %v736, 4294901760
    %2456 = vmatpush1.msra.mxu0 %v2455
    %2457 = vmatprep.subr.mxu0 0.0
    %v2458 = vand.u32 %v737, 4294901760
    %2459 = vmatpush1.msra.mxu0 %v2458
    %2460 = vmatprep.subr.mxu0 0.0
    %v2461 = vand.u32 %v738, 4294901760
    %2462 = vmatpush1.msra.mxu0 %v2461
    %2463 = vmatprep.subr.mxu0 0.0
    %v2464 = vand.u32 %v739, 4294901760
    %2465 = vmatpush1.msra.mxu0 %v2464
    %2466 = vmatprep.subr.mxu0 0.0
    %v2467 = vand.u32 %v740, 4294901760
    %2468 = vmatpush1.msra.mxu0 %v2467
    %2469 = vmatprep.subr.mxu0 0.0
    %v2470 = vand.u32 %v741, 4294901760
    %2471 = vmatpush1.msra.mxu0 %v2470
    %2472 = vmatprep.subr.mxu0 0.0
    %v2473 = vand.u32 %v742, 4294901760
    %2474 = vmatpush1.msra.mxu0 %v2473
    %2475 = vmatprep.subr.mxu0 0.0
    %v2476 = vand.u32 %v743, 4294901760
    %2477 = vmatpush1.msra.mxu0 %v2476
    %2478 = vmatprep.subr.mxu0 0.0
    %v2479 = vand.u32 %v744, 4294901760
    %2480 = vmatpush1.msra.mxu0 %v2479
    %2481 = vmatprep.subr.mxu0 0.0
    %v2482 = vand.u32 %v745, 4294901760
    %2483 = vmatpush1.msra.mxu0 %v2482
    %2484 = vmatprep.subr.mxu0 0.0
    %v2485 = vand.u32 %v746, 4294901760
    %2486 = vmatpush1.msra.mxu0 %v2485
    %2487 = vmatprep.subr.mxu0 0.0
    %v2488 = vand.u32 %v747, 4294901760
    %2489 = vmatpush1.msra.mxu0 %v2488
    %2490 = vmatprep.subr.mxu0 0.0
    %v2491 = vand.u32 %v748, 4294901760
    %2492 = vmatpush1.msra.mxu0 %v2491
    %2493 = vmatprep.subr.mxu0 0.0
    %v2494 = vand.u32 %v749, 4294901760
    %2495 = vmatpush1.msra.mxu0 %v2494
    %2496 = vmatprep.subr.mxu0 0.0
    %v2497 = vand.u32 %v750, 4294901760
    %2498 = vmatpush1.msra.mxu0 %v2497
    %2499 = vmatprep.subr.mxu0 0.0
    %v2500 = vand.u32 %v751, 4294901760
    %2501 = vmatpush1.msra.mxu0 %v2500
    %2502 = vmatprep.subr.mxu0 0.0
    %v2503 = vand.u32 %v752, 4294901760
    %2504 = vmatpush1.msra.mxu0 %v2503
    %2505 = vmatprep.subr.mxu0 0.0
    %v2506 = vand.u32 %v753, 4294901760
    %2507 = vmatpush1.msra.mxu0 %v2506
    %2508 = vmatprep.subr.mxu0 0.0
    %v2509 = vand.u32 %v754, 4294901760
    %2510 = vmatpush1.msra.mxu0 %v2509
    %2511 = vmatprep.subr.mxu0 0.0
    %v2512 = vand.u32 %v755, 4294901760
    %2513 = vmatpush1.msra.mxu0 %v2512
    %2514 = vmatprep.subr.mxu0 0.0
    %v2515 = vand.u32 %v756, 4294901760
    %2516 = vmatpush1.msra.mxu0 %v2515
    %2517 = vmatprep.subr.mxu0 0.0
    %2518 = vmatpush1.msra.mxu0 0.0
    %2519 = vmatprep.subr.mxu0 0.0
    %2520 = vmatpush1.msra.mxu0 0.0
    %2521 = vmatprep.subr.mxu0 0.0
    %2522 = vmatpush1.msra.mxu0 0.0
    %2523 = vmatprep.subr.mxu0 0.0
    %2524 = vmatpush1.msra.mxu0 0.0
    %2525 = vmatprep.subr.mxu0 0.0
    %2526 = vmatpush1.msra.mxu0 0.0
    %2527 = vmatprep.subr.mxu0 0.0
    %2528 = vmatpush1.msra.mxu0 0.0
    %2529 = vmatprep.subr.mxu0 0.0
    %2530 = vmatpush1.msra.mxu0 0.0
    %2531 = vmatprep.subr.mxu0 0.0
    %2532 = vmatpush1.msra.mxu0 0.0
    %2533 = vmatprep.subr.mxu0 0.0
    %2534 = vmatpush1.msra.mxu0 0.0
    %2535 = vmatprep.subr.mxu0 0.0
    %2536 = vmatpush1.msra.mxu0 0.0
    %2537 = vmatprep.subr.mxu0 0.0
    %2538 = vmatpush1.msra.mxu0 0.0
    %v2539 = vand.u32 %v2058, 4294901760
    %v2540 = vsub.f32 %v2058, %v2539
    %v2541 = vand.u32 %v2540, 4294901760
    %2542 = vmatprep.mubr.f32.mxu0 %v2541
    %v2543 = vand.u32 %v2037, 4294901760
    %v2544 = vsub.f32 %v2037, %v2543
    %v2545 = vand.u32 %v2544, 4294901760
    %2546 = vmatmul.mubr.f32.gmra.mrb[0].mxu0 %v2545
    %v2547 = vpop.f32.mrb[0].mxu0
    %v2548 = vadd.f32 %v2451, %v2547
    %v2549 = vpop.f32.mrb[0].mxu0
    %2550 = vdwg.mxu0
    %2551 = vmatprep.subr.mxu0 0.0
    %v2552 = vand.u32 %v736, 4294901760
    %v2553 = vsub.f32 %v736, %v2552
    %v2554 = vand.u32 %v2553, 4294901760
    %2555 = vmatpush1.msra.mxu0 %v2554
    %2556 = vmatprep.subr.mxu0 0.0
    %v2557 = vand.u32 %v737, 4294901760
    %v2558 = vsub.f32 %v737, %v2557
    %v2559 = vand.u32 %v2558, 4294901760
    %2560 = vmatpush1.msra.mxu0 %v2559
    %2561 = vmatprep.subr.mxu0 0.0
    %v2562 = vand.u32 %v738, 4294901760
    %v2563 = vsub.f32 %v738, %v2562
    %v2564 = vand.u32 %v2563, 4294901760
    %2565 = vmatpush1.msra.mxu0 %v2564
    %2566 = vmatprep.subr.mxu0 0.0
    %v2567 = vand.u32 %v739, 4294901760
    %v2568 = vsub.f32 %v739, %v2567
    %v2569 = vand.u32 %v2568, 4294901760
    %2570 = vmatpush1.msra.mxu0 %v2569
    %2571 = vmatprep.subr.mxu0 0.0
    %v2572 = vand.u32 %v740, 4294901760
    %v2573 = vsub.f32 %v740, %v2572
    %v2574 = vand.u32 %v2573, 4294901760
    %2575 = vmatpush1.msra.mxu0 %v2574
    %2576 = vmatprep.subr.mxu0 0.0
    %v2577 = vand.u32 %v741, 4294901760
    %v2578 = vsub.f32 %v741, %v2577
    %v2579 = vand.u32 %v2578, 4294901760
    %2580 = vmatpush1.msra.mxu0 %v2579
    %2581 = vmatprep.subr.mxu0 0.0
    %v2582 = vand.u32 %v742, 4294901760
    %v2583 = vsub.f32 %v742, %v2582
    %v2584 = vand.u32 %v2583, 4294901760
    %2585 = vmatpush1.msra.mxu0 %v2584
    %2586 = vmatprep.subr.mxu0 0.0
    %v2587 = vand.u32 %v743, 4294901760
    %v2588 = vsub.f32 %v743, %v2587
    %v2589 = vand.u32 %v2588, 4294901760
    %2590 = vmatpush1.msra.mxu0 %v2589
    %2591 = vmatprep.subr.mxu0 0.0
    %v2592 = vand.u32 %v744, 4294901760
    %v2593 = vsub.f32 %v744, %v2592
    %v2594 = vand.u32 %v2593, 4294901760
    %2595 = vmatpush1.msra.mxu0 %v2594
    %2596 = vmatprep.subr.mxu0 0.0
    %v2597 = vand.u32 %v745, 4294901760
    %v2598 = vsub.f32 %v745, %v2597
    %v2599 = vand.u32 %v2598, 4294901760
    %2600 = vmatpush1.msra.mxu0 %v2599
    %2601 = vmatprep.subr.mxu0 0.0
    %v2602 = vand.u32 %v746, 4294901760
    %v2603 = vsub.f32 %v746, %v2602
    %v2604 = vand.u32 %v2603, 4294901760
    %2605 = vmatpush1.msra.mxu0 %v2604
    %2606 = vmatprep.subr.mxu0 0.0
    %v2607 = vand.u32 %v747, 4294901760
    %v2608 = vsub.f32 %v747, %v2607
    %v2609 = vand.u32 %v2608, 4294901760
    %2610 = vmatpush1.msra.mxu0 %v2609
    %2611 = vmatprep.subr.mxu0 0.0
    %v2612 = vand.u32 %v748, 4294901760
    %v2613 = vsub.f32 %v748, %v2612
    %v2614 = vand.u32 %v2613, 4294901760
    %2615 = vmatpush1.msra.mxu0 %v2614
    %2616 = vmatprep.subr.mxu0 0.0
    %v2617 = vand.u32 %v749, 4294901760
    %v2618 = vsub.f32 %v749, %v2617
    %v2619 = vand.u32 %v2618, 4294901760
    %2620 = vmatpush1.msra.mxu0 %v2619
    %2621 = vmatprep.subr.mxu0 0.0
    %v2622 = vand.u32 %v750, 4294901760
    %v2623 = vsub.f32 %v750, %v2622
    %v2624 = vand.u32 %v2623, 4294901760
    %2625 = vmatpush1.msra.mxu0 %v2624
    %2626 = vmatprep.subr.mxu0 0.0
    %v2627 = vand.u32 %v751, 4294901760
    %v2628 = vsub.f32 %v751, %v2627
    %v2629 = vand.u32 %v2628, 4294901760
    %2630 = vmatpush1.msra.mxu0 %v2629
    %2631 = vmatprep.subr.mxu0 0.0
    %v2632 = vand.u32 %v752, 4294901760
    %v2633 = vsub.f32 %v752, %v2632
    %v2634 = vand.u32 %v2633, 4294901760
    %2635 = vmatpush1.msra.mxu0 %v2634
    %2636 = vmatprep.subr.mxu0 0.0
    %v2637 = vand.u32 %v753, 4294901760
    %v2638 = vsub.f32 %v753, %v2637
    %v2639 = vand.u32 %v2638, 4294901760
    %2640 = vmatpush1.msra.mxu0 %v2639
    %2641 = vmatprep.subr.mxu0 0.0
    %v2642 = vand.u32 %v754, 4294901760
    %v2643 = vsub.f32 %v754, %v2642
    %v2644 = vand.u32 %v2643, 4294901760
    %2645 = vmatpush1.msra.mxu0 %v2644
    %2646 = vmatprep.subr.mxu0 0.0
    %v2647 = vand.u32 %v755, 4294901760
    %v2648 = vsub.f32 %v755, %v2647
    %v2649 = vand.u32 %v2648, 4294901760
    %2650 = vmatpush1.msra.mxu0 %v2649
    %2651 = vmatprep.subr.mxu0 0.0
    %v2652 = vand.u32 %v756, 4294901760
    %v2653 = vsub.f32 %v756, %v2652
    %v2654 = vand.u32 %v2653, 4294901760
    %2655 = vmatpush1.msra.mxu0 %v2654
    %2656 = vmatprep.subr.mxu0 0.0
    %2657 = vmatpush1.msra.mxu0 0.0
    %2658 = vmatprep.subr.mxu0 0.0
    %2659 = vmatpush1.msra.mxu0 0.0
    %2660 = vmatprep.subr.mxu0 0.0
    %2661 = vmatpush1.msra.mxu0 0.0
    %2662 = vmatprep.subr.mxu0 0.0
    %2663 = vmatpush1.msra.mxu0 0.0
    %2664 = vmatprep.subr.mxu0 0.0
    %2665 = vmatpush1.msra.mxu0 0.0
    %2666 = vmatprep.subr.mxu0 0.0
    %2667 = vmatpush1.msra.mxu0 0.0
    %2668 = vmatprep.subr.mxu0 0.0
    %2669 = vmatpush1.msra.mxu0 0.0
    %2670 = vmatprep.subr.mxu0 0.0
    %2671 = vmatpush1.msra.mxu0 0.0
    %2672 = vmatprep.subr.mxu0 0.0
    %2673 = vmatpush1.msra.mxu0 0.0
    %2674 = vmatprep.subr.mxu0 0.0
    %2675 = vmatpush1.msra.mxu0 0.0
    %2676 = vmatprep.subr.mxu0 0.0
    %2677 = vmatpush1.msra.mxu0 0.0
    %v2678 = vand.u32 %v2058, 4294901760
    %2679 = vmatprep.mubr.f32.mxu0 %v2678
    %v2680 = vand.u32 %v2037, 4294901760
    %2681 = vmatmul.mubr.f32.gmra.mrb[0].mxu0 %v2680
    %v2682 = vpop.f32.mrb[0].mxu0
    %v2683 = vadd.f32 %v2548, %v2682
    %v2684 = vpop.f32.mrb[0].mxu0
    %2685 = vdwg.mxu0
    %2686 = vmatprep.subr.mxu0 0.0
    %v2687 = vand.u32 %v736, 4294901760
    %2688 = vmatpush1.msra.mxu0 %v2687
    %2689 = vmatprep.subr.mxu0 0.0
    %v2690 = vand.u32 %v737, 4294901760
    %2691 = vmatpush1.msra.mxu0 %v2690
    %2692 = vmatprep.subr.mxu0 0.0
    %v2693 = vand.u32 %v738, 4294901760
    %2694 = vmatpush1.msra.mxu0 %v2693
    %2695 = vmatprep.subr.mxu0 0.0
    %v2696 = vand.u32 %v739, 4294901760
    %2697 = vmatpush1.msra.mxu0 %v2696
    %2698 = vmatprep.subr.mxu0 0.0
    %v2699 = vand.u32 %v740, 4294901760
    %2700 = vmatpush1.msra.mxu0 %v2699
    %2701 = vmatprep.subr.mxu0 0.0
    %v2702 = vand.u32 %v741, 4294901760
    %2703 = vmatpush1.msra.mxu0 %v2702
    %2704 = vmatprep.subr.mxu0 0.0
    %v2705 = vand.u32 %v742, 4294901760
    %2706 = vmatpush1.msra.mxu0 %v2705
    %2707 = vmatprep.subr.mxu0 0.0
    %v2708 = vand.u32 %v743, 4294901760
    %2709 = vmatpush1.msra.mxu0 %v2708
    %2710 = vmatprep.subr.mxu0 0.0
    %v2711 = vand.u32 %v744, 4294901760
    %2712 = vmatpush1.msra.mxu0 %v2711
    %2713 = vmatprep.subr.mxu0 0.0
    %v2714 = vand.u32 %v745, 4294901760
    %2715 = vmatpush1.msra.mxu0 %v2714
    %2716 = vmatprep.subr.mxu0 0.0
    %v2717 = vand.u32 %v746, 4294901760
    %2718 = vmatpush1.msra.mxu0 %v2717
    %2719 = vmatprep.subr.mxu0 0.0
    %v2720 = vand.u32 %v747, 4294901760
    %2721 = vmatpush1.msra.mxu0 %v2720
    %2722 = vmatprep.subr.mxu0 0.0
    %v2723 = vand.u32 %v748, 4294901760
    %2724 = vmatpush1.msra.mxu0 %v2723
    %2725 = vmatprep.subr.mxu0 0.0
    %v2726 = vand.u32 %v749, 4294901760
    %2727 = vmatpush1.msra.mxu0 %v2726
    %2728 = vmatprep.subr.mxu0 0.0
    %v2729 = vand.u32 %v750, 4294901760
    %2730 = vmatpush1.msra.mxu0 %v2729
    %2731 = vmatprep.subr.mxu0 0.0
    %v2732 = vand.u32 %v751, 4294901760
    %2733 = vmatpush1.msra.mxu0 %v2732
    %2734 = vmatprep.subr.mxu0 0.0
    %v2735 = vand.u32 %v752, 4294901760
    %2736 = vmatpush1.msra.mxu0 %v2735
    %2737 = vmatprep.subr.mxu0 0.0
    %v2738 = vand.u32 %v753, 4294901760
    %2739 = vmatpush1.msra.mxu0 %v2738
    %2740 = vmatprep.subr.mxu0 0.0
    %v2741 = vand.u32 %v754, 4294901760
    %2742 = vmatpush1.msra.mxu0 %v2741
    %2743 = vmatprep.subr.mxu0 0.0
    %v2744 = vand.u32 %v755, 4294901760
    %2745 = vmatpush1.msra.mxu0 %v2744
    %2746 = vmatprep.subr.mxu0 0.0
    %v2747 = vand.u32 %v756, 4294901760
    %2748 = vmatpush1.msra.mxu0 %v2747
    %2749 = vmatprep.subr.mxu0 0.0
    %2750 = vmatpush1.msra.mxu0 0.0
    %2751 = vmatprep.subr.mxu0 0.0
    %2752 = vmatpush1.msra.mxu0 0.0
    %2753 = vmatprep.subr.mxu0 0.0
    %2754 = vmatpush1.msra.mxu0 0.0
    %2755 = vmatprep.subr.mxu0 0.0
    %2756 = vmatpush1.msra.mxu0 0.0
    %2757 = vmatprep.subr.mxu0 0.0
    %2758 = vmatpush1.msra.mxu0 0.0
    %2759 = vmatprep.subr.mxu0 0.0
    %2760 = vmatpush1.msra.mxu0 0.0
    %2761 = vmatprep.subr.mxu0 0.0
    %2762 = vmatpush1.msra.mxu0 0.0
    %2763 = vmatprep.subr.mxu0 0.0
    %2764 = vmatpush1.msra.mxu0 0.0
    %2765 = vmatprep.subr.mxu0 0.0
    %2766 = vmatpush1.msra.mxu0 0.0
    %2767 = vmatprep.subr.mxu0 0.0
    %2768 = vmatpush1.msra.mxu0 0.0
    %2769 = vmatprep.subr.mxu0 0.0
    %2770 = vmatpush1.msra.mxu0 0.0
    %v2771 = vand.u32 %v2058, 4294901760
    %2772 = vmatprep.mubr.f32.mxu0 %v2771
    %v2773 = vand.u32 %v2037, 4294901760
    %2774 = vmatmul.mubr.f32.gmra.mrb[0].mxu0 %v2773
    %v2775 = vpop.f32.mrb[0].mxu0
    %v2776 = vadd.f32 %v2683, %v2775
    %v2777 = vpop.f32.mrb[0].mxu0
    %2778 = vdwg.mxu0
    %v2779 = vmul.f32 %v2776, 0.0006377551
    %v2780 = vadd.f32 %v2779, 1e-05
    %v2781 = vrsqrt.pop %v2780
    %v2783 = vsel %vm1514, %v2781, 0
    %v2785 = vand.u32 %v1523, 4294901760
    %2786 = vmatprep.subr.mxu0 %v2785
    %v2787 = vand.u32 %v1520, 4294901760
    %2788 = vmatpush1.msra.mxu0 %v2787
    %2789 = vmatprep.subr.mxu0 0.0
    %2790 = vmatpush1.msra.mxu0 0.0
    %2791 = vmatprep.subr.mxu0 0.0
    %2792 = vmatpush1.msra.mxu0 0.0
    %2793 = vmatprep.subr.mxu0 0.0
    %2794 = vmatpush1.msra.mxu0 0.0
    %2795 = vmatprep.subr.mxu0 0.0
    %2796 = vmatpush1.msra.mxu0 0.0
    %2797 = vmatprep.subr.mxu0 0.0
    %2798 = vmatpush1.msra.mxu0 0.0
    %2799 = vmatprep.subr.mxu0 0.0
    %2800 = vmatpush1.msra.mxu0 0.0
    %2801 = vmatprep.subr.mxu0 0.0
    %2802 = vmatpush1.msra.mxu0 0.0
    %2803 = vmatprep.subr.mxu0 0.0
    %2804 = vmatpush1.msra.mxu0 0.0
    %2805 = vmatprep.subr.mxu0 0.0
    %2806 = vmatpush1.msra.mxu0 0.0
    %2807 = vmatprep.subr.mxu0 0.0
    %2808 = vmatpush1.msra.mxu0 0.0
    %2809 = vmatprep.subr.mxu0 0.0
    %2810 = vmatpush1.msra.mxu0 0.0
    %2811 = vmatprep.subr.mxu0 0.0
    %2812 = vmatpush1.msra.mxu0 0.0
    %2813 = vmatprep.subr.mxu0 0.0
    %2814 = vmatpush1.msra.mxu0 0.0
    %2815 = vmatprep.subr.mxu0 0.0
    %2816 = vmatpush1.msra.mxu0 0.0
    %2817 = vmatprep.subr.mxu0 0.0
    %2818 = vmatpush1.msra.mxu0 0.0
    %2819 = vmatprep.subr.mxu0 0.0
    %2820 = vmatpush1.msra.mxu0 0.0
    %2821 = vmatprep.subr.mxu0 0.0
    %2822 = vmatpush1.msra.mxu0 0.0
    %2823 = vmatprep.subr.mxu0 0.0
    %2824 = vmatpush1.msra.mxu0 0.0
    %2825 = vmatprep.subr.mxu0 0.0
    %2826 = vmatpush1.msra.mxu0 0.0
    %2827 = vmatprep.subr.mxu0 0.0
    %2828 = vmatpush1.msra.mxu0 0.0
    %2829 = vmatprep.subr.mxu0 0.0
    %2830 = vmatpush1.msra.mxu0 0.0
    %2831 = vmatprep.subr.mxu0 0.0
    %2832 = vmatpush1.msra.mxu0 0.0
    %2833 = vmatprep.subr.mxu0 0.0
    %2834 = vmatpush1.msra.mxu0 0.0
    %2835 = vmatprep.subr.mxu0 0.0
    %2836 = vmatpush1.msra.mxu0 0.0
    %2837 = vmatprep.subr.mxu0 0.0
    %2838 = vmatpush1.msra.mxu0 0.0
    %2839 = vmatprep.subr.mxu0 0.0
    %2840 = vmatpush1.msra.mxu0 0.0
    %2841 = vmatprep.subr.mxu0 0.0
    %2842 = vmatpush1.msra.mxu0 0.0
    %2843 = vmatprep.subr.mxu0 0.0
    %2844 = vmatpush1.msra.mxu0 0.0
    %2845 = vmatprep.subr.mxu0 0.0
    %2846 = vmatpush1.msra.mxu0 0.0
    %2847 = vmatprep.subr.mxu0 0.0
    %2848 = vmatpush1.msra.mxu0 0.0
    %2849 = vmatprep.subr.mxu0 0.0
    %2850 = vmatpush1.msra.mxu0 0.0
    %2851 = vmatprep.mubr.f32.mxu0 0.0
    %v2852 = vand.u32 %v2783, 4294901760
    %v2853 = vsub.f32 %v2783, %v2852
    %v2854 = vand.u32 %v2853, 4294901760
    %v2855 = vsub.f32 %v2853, %v2854
    %v2856 = vand.u32 %v2855, 4294901760
    %2857 = vmatmul.mubr.f32.gmra.mrb[0].mxu0 %v2856
    %v2858 = vpop.f32.mrb[0].mxu0
    %v2859 = vadd.f32 0.0, %v2858
    %v2860 = vpop.f32.mrb[0].mxu0
    %v2861 = vadd.f32 0.0, %v2860
    %2862 = vdwg.mxu0
    %v2863 = vand.u32 %v1523, 4294901760
    %v2864 = vsub.f32 %v1523, %v2863
    %v2865 = vand.u32 %v2864, 4294901760
    %v2866 = vsub.f32 %v2864, %v2865
    %v2867 = vand.u32 %v2866, 4294901760
    %2868 = vmatprep.subr.mxu0 %v2867
    %v2869 = vand.u32 %v1520, 4294901760
    %v2870 = vsub.f32 %v1520, %v2869
    %v2871 = vand.u32 %v2870, 4294901760
    %v2872 = vsub.f32 %v2870, %v2871
    %v2873 = vand.u32 %v2872, 4294901760
    %2874 = vmatpush1.msra.mxu0 %v2873
    %2875 = vmatprep.subr.mxu0 0.0
    %2876 = vmatpush1.msra.mxu0 0.0
    %2877 = vmatprep.subr.mxu0 0.0
    %2878 = vmatpush1.msra.mxu0 0.0
    %2879 = vmatprep.subr.mxu0 0.0
    %2880 = vmatpush1.msra.mxu0 0.0
    %2881 = vmatprep.subr.mxu0 0.0
    %2882 = vmatpush1.msra.mxu0 0.0
    %2883 = vmatprep.subr.mxu0 0.0
    %2884 = vmatpush1.msra.mxu0 0.0
    %2885 = vmatprep.subr.mxu0 0.0
    %2886 = vmatpush1.msra.mxu0 0.0
    %2887 = vmatprep.subr.mxu0 0.0
    %2888 = vmatpush1.msra.mxu0 0.0
    %2889 = vmatprep.subr.mxu0 0.0
    %2890 = vmatpush1.msra.mxu0 0.0
    %2891 = vmatprep.subr.mxu0 0.0
    %2892 = vmatpush1.msra.mxu0 0.0
    %2893 = vmatprep.subr.mxu0 0.0
    %2894 = vmatpush1.msra.mxu0 0.0
    %2895 = vmatprep.subr.mxu0 0.0
    %2896 = vmatpush1.msra.mxu0 0.0
    %2897 = vmatprep.subr.mxu0 0.0
    %2898 = vmatpush1.msra.mxu0 0.0
    %2899 = vmatprep.subr.mxu0 0.0
    %2900 = vmatpush1.msra.mxu0 0.0
    %2901 = vmatprep.subr.mxu0 0.0
    %2902 = vmatpush1.msra.mxu0 0.0
    %2903 = vmatprep.subr.mxu0 0.0
    %2904 = vmatpush1.msra.mxu0 0.0
    %2905 = vmatprep.subr.mxu0 0.0
    %2906 = vmatpush1.msra.mxu0 0.0
    %2907 = vmatprep.subr.mxu0 0.0
    %2908 = vmatpush1.msra.mxu0 0.0
    %2909 = vmatprep.subr.mxu0 0.0
    %2910 = vmatpush1.msra.mxu0 0.0
    %2911 = vmatprep.subr.mxu0 0.0
    %2912 = vmatpush1.msra.mxu0 0.0
    %2913 = vmatprep.subr.mxu0 0.0
    %2914 = vmatpush1.msra.mxu0 0.0
    %2915 = vmatprep.subr.mxu0 0.0
    %2916 = vmatpush1.msra.mxu0 0.0
    %2917 = vmatprep.subr.mxu0 0.0
    %2918 = vmatpush1.msra.mxu0 0.0
    %2919 = vmatprep.subr.mxu0 0.0
    %2920 = vmatpush1.msra.mxu0 0.0
    %2921 = vmatprep.subr.mxu0 0.0
    %2922 = vmatpush1.msra.mxu0 0.0
    %2923 = vmatprep.subr.mxu0 0.0
    %2924 = vmatpush1.msra.mxu0 0.0
    %2925 = vmatprep.subr.mxu0 0.0
    %2926 = vmatpush1.msra.mxu0 0.0
    %2927 = vmatprep.subr.mxu0 0.0
    %2928 = vmatpush1.msra.mxu0 0.0
    %2929 = vmatprep.subr.mxu0 0.0
    %2930 = vmatpush1.msra.mxu0 0.0
    %2931 = vmatprep.subr.mxu0 0.0
    %2932 = vmatpush1.msra.mxu0 0.0
    %2933 = vmatprep.subr.mxu0 0.0
    %2934 = vmatpush1.msra.mxu0 0.0
    %2935 = vmatprep.subr.mxu0 0.0
    %2936 = vmatpush1.msra.mxu0 0.0
    %2937 = vmatprep.mubr.f32.mxu0 0.0
    %v2938 = vand.u32 %v2783, 4294901760
    %2939 = vmatmul.mubr.f32.gmra.mrb[0].mxu0 %v2938
    %v2940 = vpop.f32.mrb[0].mxu0
    %v2941 = vadd.f32 %v2859, %v2940
    %v2942 = vpop.f32.mrb[0].mxu0
    %v2943 = vadd.f32 %v2861, %v2942
    %2944 = vdwg.mxu0
    %v2945 = vand.u32 %v1523, 4294901760
    %v2946 = vsub.f32 %v1523, %v2945
    %2947 = vmatprep.subr.mxu0 %v2946
    %v2948 = vand.u32 %v1520, 4294901760
    %v2949 = vsub.f32 %v1520, %v2948
    %2950 = vmatpush1.msra.mxu0 %v2949
    %2951 = vmatprep.subr.mxu0 0.0
    %2952 = vmatpush1.msra.mxu0 0.0
    %2953 = vmatprep.subr.mxu0 0.0
    %2954 = vmatpush1.msra.mxu0 0.0
    %2955 = vmatprep.subr.mxu0 0.0
    %2956 = vmatpush1.msra.mxu0 0.0
    %2957 = vmatprep.subr.mxu0 0.0
    %2958 = vmatpush1.msra.mxu0 0.0
    %2959 = vmatprep.subr.mxu0 0.0
    %2960 = vmatpush1.msra.mxu0 0.0
    %2961 = vmatprep.subr.mxu0 0.0
    %2962 = vmatpush1.msra.mxu0 0.0
    %2963 = vmatprep.subr.mxu0 0.0
    %2964 = vmatpush1.msra.mxu0 0.0
    %2965 = vmatprep.subr.mxu0 0.0
    %2966 = vmatpush1.msra.mxu0 0.0
    %2967 = vmatprep.subr.mxu0 0.0
    %2968 = vmatpush1.msra.mxu0 0.0
    %2969 = vmatprep.subr.mxu0 0.0
    %2970 = vmatpush1.msra.mxu0 0.0
    %2971 = vmatprep.subr.mxu0 0.0
    %2972 = vmatpush1.msra.mxu0 0.0
    %2973 = vmatprep.subr.mxu0 0.0
    %2974 = vmatpush1.msra.mxu0 0.0
    %2975 = vmatprep.subr.mxu0 0.0
    %2976 = vmatpush1.msra.mxu0 0.0
    %2977 = vmatprep.subr.mxu0 0.0
    %2978 = vmatpush1.msra.mxu0 0.0
    %2979 = vmatprep.subr.mxu0 0.0
    %2980 = vmatpush1.msra.mxu0 0.0
    %2981 = vmatprep.subr.mxu0 0.0
    %2982 = vmatpush1.msra.mxu0 0.0
    %2983 = vmatprep.subr.mxu0 0.0
    %2984 = vmatpush1.msra.mxu0 0.0
    %2985 = vmatprep.subr.mxu0 0.0
    %2986 = vmatpush1.msra.mxu0 0.0
    %2987 = vmatprep.subr.mxu0 0.0
    %2988 = vmatpush1.msra.mxu0 0.0
    %2989 = vmatprep.subr.mxu0 0.0
    %2990 = vmatpush1.msra.mxu0 0.0
    %2991 = vmatprep.subr.mxu0 0.0
    %2992 = vmatpush1.msra.mxu0 0.0
    %2993 = vmatprep.subr.mxu0 0.0
    %2994 = vmatpush1.msra.mxu0 0.0
    %2995 = vmatprep.subr.mxu0 0.0
    %2996 = vmatpush1.msra.mxu0 0.0
    %2997 = vmatprep.subr.mxu0 0.0
    %2998 = vmatpush1.msra.mxu0 0.0
    %2999 = vmatprep.subr.mxu0 0.0
    %3000 = vmatpush1.msra.mxu0 0.0
    %3001 = vmatprep.subr.mxu0 0.0
    %3002 = vmatpush1.msra.mxu0 0.0
    %3003 = vmatprep.subr.mxu0 0.0
    %3004 = vmatpush1.msra.mxu0 0.0
    %3005 = vmatprep.subr.mxu0 0.0
    %3006 = vmatpush1.msra.mxu0 0.0
    %3007 = vmatprep.subr.mxu0 0.0
    %3008 = vmatpush1.msra.mxu0 0.0
    %3009 = vmatprep.subr.mxu0 0.0
    %3010 = vmatpush1.msra.mxu0 0.0
    %3011 = vmatprep.subr.mxu0 0.0
    %3012 = vmatpush1.msra.mxu0 0.0
    %3013 = vmatprep.mubr.f32.mxu0 0.0
    %v3014 = vand.u32 %v2783, 4294901760
    %v3015 = vsub.f32 %v2783, %v3014
    %3016 = vmatmul.mubr.f32.gmra.mrb[0].mxu0 %v3015
    %v3017 = vpop.f32.mrb[0].mxu0
    %v3018 = vadd.f32 %v2941, %v3017
    %v3019 = vpop.f32.mrb[0].mxu0
    %v3020 = vadd.f32 %v2943, %v3019
    %3021 = vdwg.mxu0
    %v3022 = vand.u32 %v1523, 4294901760
    %3023 = vmatprep.subr.mxu0 %v3022
    %v3024 = vand.u32 %v1520, 4294901760
    %3025 = vmatpush1.msra.mxu0 %v3024
    %3026 = vmatprep.subr.mxu0 0.0
    %3027 = vmatpush1.msra.mxu0 0.0
    %3028 = vmatprep.subr.mxu0 0.0
    %3029 = vmatpush1.msra.mxu0 0.0
    %3030 = vmatprep.subr.mxu0 0.0
    %3031 = vmatpush1.msra.mxu0 0.0
    %3032 = vmatprep.subr.mxu0 0.0
    %3033 = vmatpush1.msra.mxu0 0.0
    %3034 = vmatprep.subr.mxu0 0.0
    %3035 = vmatpush1.msra.mxu0 0.0
    %3036 = vmatprep.subr.mxu0 0.0
    %3037 = vmatpush1.msra.mxu0 0.0
    %3038 = vmatprep.subr.mxu0 0.0
    %3039 = vmatpush1.msra.mxu0 0.0
    %3040 = vmatprep.subr.mxu0 0.0
    %3041 = vmatpush1.msra.mxu0 0.0
    %3042 = vmatprep.subr.mxu0 0.0
    %3043 = vmatpush1.msra.mxu0 0.0
    %3044 = vmatprep.subr.mxu0 0.0
    %3045 = vmatpush1.msra.mxu0 0.0
    %3046 = vmatprep.subr.mxu0 0.0
    %3047 = vmatpush1.msra.mxu0 0.0
    %3048 = vmatprep.subr.mxu0 0.0
    %3049 = vmatpush1.msra.mxu0 0.0
    %3050 = vmatprep.subr.mxu0 0.0
    %3051 = vmatpush1.msra.mxu0 0.0
    %3052 = vmatprep.subr.mxu0 0.0
    %3053 = vmatpush1.msra.mxu0 0.0
    %3054 = vmatprep.subr.mxu0 0.0
    %3055 = vmatpush1.msra.mxu0 0.0
    %3056 = vmatprep.subr.mxu0 0.0
    %3057 = vmatpush1.msra.mxu0 0.0
    %3058 = vmatprep.subr.mxu0 0.0
    %3059 = vmatpush1.msra.mxu0 0.0
    %3060 = vmatprep.subr.mxu0 0.0
    %3061 = vmatpush1.msra.mxu0 0.0
    %3062 = vmatprep.subr.mxu0 0.0
    %3063 = vmatpush1.msra.mxu0 0.0
    %3064 = vmatprep.subr.mxu0 0.0
    %3065 = vmatpush1.msra.mxu0 0.0
    %3066 = vmatprep.subr.mxu0 0.0
    %3067 = vmatpush1.msra.mxu0 0.0
    %3068 = vmatprep.subr.mxu0 0.0
    %3069 = vmatpush1.msra.mxu0 0.0
    %3070 = vmatprep.subr.mxu0 0.0
    %3071 = vmatpush1.msra.mxu0 0.0
    %3072 = vmatprep.subr.mxu0 0.0
    %3073 = vmatpush1.msra.mxu0 0.0
    %3074 = vmatprep.subr.mxu0 0.0
    %3075 = vmatpush1.msra.mxu0 0.0
    %3076 = vmatprep.subr.mxu0 0.0
    %3077 = vmatpush1.msra.mxu0 0.0
    %3078 = vmatprep.subr.mxu0 0.0
    %3079 = vmatpush1.msra.mxu0 0.0
    %3080 = vmatprep.subr.mxu0 0.0
    %3081 = vmatpush1.msra.mxu0 0.0
    %3082 = vmatprep.subr.mxu0 0.0
    %3083 = vmatpush1.msra.mxu0 0.0
    %3084 = vmatprep.subr.mxu0 0.0
    %3085 = vmatpush1.msra.mxu0 0.0
    %3086 = vmatprep.subr.mxu0 0.0
    %3087 = vmatpush1.msra.mxu0 0.0
    %3088 = vmatprep.mubr.f32.mxu0 0.0
    %v3089 = vand.u32 %v2783, 4294901760
    %v3090 = vsub.f32 %v2783, %v3089
    %v3091 = vand.u32 %v3090, 4294901760
    %3092 = vmatmul.mubr.f32.gmra.mrb[0].mxu0 %v3091
    %v3093 = vpop.f32.mrb[0].mxu0
    %v3094 = vadd.f32 %v3018, %v3093
    %v3095 = vpop.f32.mrb[0].mxu0
    %v3096 = vadd.f32 %v3020, %v3095
    %3097 = vdwg.mxu0
    %v3098 = vand.u32 %v1523, 4294901760
    %v3099 = vsub.f32 %v1523, %v3098
    %v3100 = vand.u32 %v3099, 4294901760
    %3101 = vmatprep.subr.mxu0 %v3100
    %v3102 = vand.u32 %v1520, 4294901760
    %v3103 = vsub.f32 %v1520, %v3102
    %v3104 = vand.u32 %v3103, 4294901760
    %3105 = vmatpush1.msra.mxu0 %v3104
    %3106 = vmatprep.subr.mxu0 0.0
    %3107 = vmatpush1.msra.mxu0 0.0
    %3108 = vmatprep.subr.mxu0 0.0
    %3109 = vmatpush1.msra.mxu0 0.0
    %3110 = vmatprep.subr.mxu0 0.0
    %3111 = vmatpush1.msra.mxu0 0.0
    %3112 = vmatprep.subr.mxu0 0.0
    %3113 = vmatpush1.msra.mxu0 0.0
    %3114 = vmatprep.subr.mxu0 0.0
    %3115 = vmatpush1.msra.mxu0 0.0
    %3116 = vmatprep.subr.mxu0 0.0
    %3117 = vmatpush1.msra.mxu0 0.0
    %3118 = vmatprep.subr.mxu0 0.0
    %3119 = vmatpush1.msra.mxu0 0.0
    %3120 = vmatprep.subr.mxu0 0.0
    %3121 = vmatpush1.msra.mxu0 0.0
    %3122 = vmatprep.subr.mxu0 0.0
    %3123 = vmatpush1.msra.mxu0 0.0
    %3124 = vmatprep.subr.mxu0 0.0
    %3125 = vmatpush1.msra.mxu0 0.0
    %3126 = vmatprep.subr.mxu0 0.0
    %3127 = vmatpush1.msra.mxu0 0.0
    %3128 = vmatprep.subr.mxu0 0.0
    %3129 = vmatpush1.msra.mxu0 0.0
    %3130 = vmatprep.subr.mxu0 0.0
    %3131 = vmatpush1.msra.mxu0 0.0
    %3132 = vmatprep.subr.mxu0 0.0
    %3133 = vmatpush1.msra.mxu0 0.0
    %3134 = vmatprep.subr.mxu0 0.0
    %3135 = vmatpush1.msra.mxu0 0.0
    %3136 = vmatprep.subr.mxu0 0.0
    %3137 = vmatpush1.msra.mxu0 0.0
    %3138 = vmatprep.subr.mxu0 0.0
    %3139 = vmatpush1.msra.mxu0 0.0
    %3140 = vmatprep.subr.mxu0 0.0
    %3141 = vmatpush1.msra.mxu0 0.0
    %3142 = vmatprep.subr.mxu0 0.0
    %3143 = vmatpush1.msra.mxu0 0.0
    %3144 = vmatprep.subr.mxu0 0.0
    %3145 = vmatpush1.msra.mxu0 0.0
    %3146 = vmatprep.subr.mxu0 0.0
    %3147 = vmatpush1.msra.mxu0 0.0
    %3148 = vmatprep.subr.mxu0 0.0
    %3149 = vmatpush1.msra.mxu0 0.0
    %3150 = vmatprep.subr.mxu0 0.0
    %3151 = vmatpush1.msra.mxu0 0.0
    %3152 = vmatprep.subr.mxu0 0.0
    %3153 = vmatpush1.msra.mxu0 0.0
    %3154 = vmatprep.subr.mxu0 0.0
    %3155 = vmatpush1.msra.mxu0 0.0
    %3156 = vmatprep.subr.mxu0 0.0
    %3157 = vmatpush1.msra.mxu0 0.0
    %3158 = vmatprep.subr.mxu0 0.0
    %3159 = vmatpush1.msra.mxu0 0.0
    %3160 = vmatprep.subr.mxu0 0.0
    %3161 = vmatpush1.msra.mxu0 0.0
    %3162 = vmatprep.subr.mxu0 0.0
    %3163 = vmatpush1.msra.mxu0 0.0
    %3164 = vmatprep.subr.mxu0 0.0
    %3165 = vmatpush1.msra.mxu0 0.0
    %3166 = vmatprep.subr.mxu0 0.0
    %3167 = vmatpush1.msra.mxu0 0.0
    %3168 = vmatprep.mubr.f32.mxu0 0.0
    %v3169 = vand.u32 %v2783, 4294901760
    %3170 = vmatmul.mubr.f32.gmra.mrb[0].mxu0 %v3169
    %v3171 = vpop.f32.mrb[0].mxu0
    %v3172 = vadd.f32 %v3094, %v3171
    %v3173 = vpop.f32.mrb[0].mxu0
    %v3174 = vadd.f32 %v3096, %v3173
    %3175 = vdwg.mxu0
    %v3176 = vand.u32 %v1523, 4294901760
    %3177 = vmatprep.subr.mxu0 %v3176
    %v3178 = vand.u32 %v1520, 4294901760
    %3179 = vmatpush1.msra.mxu0 %v3178
    %3180 = vmatprep.subr.mxu0 0.0
    %3181 = vmatpush1.msra.mxu0 0.0
    %3182 = vmatprep.subr.mxu0 0.0
    %3183 = vmatpush1.msra.mxu0 0.0
    %3184 = vmatprep.subr.mxu0 0.0
    %3185 = vmatpush1.msra.mxu0 0.0
    %3186 = vmatprep.subr.mxu0 0.0
    %3187 = vmatpush1.msra.mxu0 0.0
    %3188 = vmatprep.subr.mxu0 0.0
    %3189 = vmatpush1.msra.mxu0 0.0
    %3190 = vmatprep.subr.mxu0 0.0
    %3191 = vmatpush1.msra.mxu0 0.0
    %3192 = vmatprep.subr.mxu0 0.0
    %3193 = vmatpush1.msra.mxu0 0.0
    %3194 = vmatprep.subr.mxu0 0.0
    %3195 = vmatpush1.msra.mxu0 0.0
    %3196 = vmatprep.subr.mxu0 0.0
    %3197 = vmatpush1.msra.mxu0 0.0
    %3198 = vmatprep.subr.mxu0 0.0
    %3199 = vmatpush1.msra.mxu0 0.0
    %3200 = vmatprep.subr.mxu0 0.0
    %3201 = vmatpush1.msra.mxu0 0.0
    %3202 = vmatprep.subr.mxu0 0.0
    %3203 = vmatpush1.msra.mxu0 0.0
    %3204 = vmatprep.subr.mxu0 0.0
    %3205 = vmatpush1.msra.mxu0 0.0
    %3206 = vmatprep.subr.mxu0 0.0
    %3207 = vmatpush1.msra.mxu0 0.0
    %3208 = vmatprep.subr.mxu0 0.0
    %3209 = vmatpush1.msra.mxu0 0.0
    %3210 = vmatprep.subr.mxu0 0.0
    %3211 = vmatpush1.msra.mxu0 0.0
    %3212 = vmatprep.subr.mxu0 0.0
    %3213 = vmatpush1.msra.mxu0 0.0
    %3214 = vmatprep.subr.mxu0 0.0
    %3215 = vmatpush1.msra.mxu0 0.0
    %3216 = vmatprep.subr.mxu0 0.0
    %3217 = vmatpush1.msra.mxu0 0.0
    %3218 = vmatprep.subr.mxu0 0.0
    %3219 = vmatpush1.msra.mxu0 0.0
    %3220 = vmatprep.subr.mxu0 0.0
    %3221 = vmatpush1.msra.mxu0 0.0
    %3222 = vmatprep.subr.mxu0 0.0
    %3223 = vmatpush1.msra.mxu0 0.0
    %3224 = vmatprep.subr.mxu0 0.0
    %3225 = vmatpush1.msra.mxu0 0.0
    %3226 = vmatprep.subr.mxu0 0.0
    %3227 = vmatpush1.msra.mxu0 0.0
    %3228 = vmatprep.subr.mxu0 0.0
    %3229 = vmatpush1.msra.mxu0 0.0
    %3230 = vmatprep.subr.mxu0 0.0
    %3231 = vmatpush1.msra.mxu0 0.0
    %3232 = vmatprep.subr.mxu0 0.0
    %3233 = vmatpush1.msra.mxu0 0.0
    %3234 = vmatprep.subr.mxu0 0.0
    %3235 = vmatpush1.msra.mxu0 0.0
    %3236 = vmatprep.subr.mxu0 0.0
    %3237 = vmatpush1.msra.mxu0 0.0
    %3238 = vmatprep.subr.mxu0 0.0
    %3239 = vmatpush1.msra.mxu0 0.0
    %3240 = vmatprep.subr.mxu0 0.0
    %3241 = vmatpush1.msra.mxu0 0.0
    %3242 = vmatprep.mubr.f32.mxu0 0.0
    %v3243 = vand.u32 %v2783, 4294901760
    %3244 = vmatmul.mubr.f32.gmra.mrb[0].mxu0 %v3243
    %v3245 = vpop.f32.mrb[0].mxu0
    %v3246 = vadd.f32 %v3172, %v3245
    %v3247 = vpop.f32.mrb[0].mxu0
    %v3248 = vadd.f32 %v3174, %v3247
    %3249 = vdwg.mxu0
    %v3250 = vlaneseq
    %v3251 = vshrl.u32 %v3250, 7
    %v3252 = vsub.s32 0, %v3251
    %v3253 = vrot.slane %v3246, %v3252
    %v3254 = vlaneseq
    %v3255 = vshrl.u32 %v3254, 7
    %v3256 = vsub.s32 0, %v3255
    %v3257 = vrot.slane %v3248, %v3256
    %v3258 = vmul.f32 %v1998, %v3253
    %v3259 = vmul.f32 %v1999, %v3257
    %v3260 = vmul.f32 %v2000, %v3253
    %v3261 = vmul.f32 %v2001, %v3257
    %v3262 = vmul.f32 %v2002, %v3253
    %v3263 = vmul.f32 %v2003, %v3257
    %v3264 = vmul.f32 %v2004, %v3253
    %v3265 = vmul.f32 %v2005, %v3257
    %v3266 = vmul.f32 %v2006, %v3253
    %v3267 = vmul.f32 %v2007, %v3257
    %v3268 = vmul.f32 %v2008, %v3253
    %v3269 = vmul.f32 %v2009, %v3257
    %v3270 = vmul.f32 %v2010, %v3253
    %v3271 = vmul.f32 %v2011, %v3257
    %v3272 = vmax.f32 %v3258, 0.0
    %v3273 = vmax.f32 %v3259, 0.0
    %v3274 = vmax.f32 %v3260, 0.0
    %v3275 = vmax.f32 %v3261, 0.0
    %v3276 = vmax.f32 %v3262, 0.0
    %v3277 = vmax.f32 %v3263, 0.0
    %v3278 = vmax.f32 %v3264, 0.0
    %v3279 = vmax.f32 %v3265, 0.0
    %v3280 = vmax.f32 %v3266, 0.0
    %v3281 = vmax.f32 %v3267, 0.0
    %v3282 = vmax.f32 %v3268, 0.0
    %v3283 = vmax.f32 %v3269, 0.0
    %v3284 = vmax.f32 %v3270, 0.0
    %v3285 = vmax.f32 %v3271, 0.0
    %vm3286 = vcmask 457728
    %v3288 = vsel %vm3286, %v711, 0
    %v3291 = vsel %vm3286, %v712, 0
    %v3294 = vsel %vm3286, %v713, 0
    %v3297 = vsel %vm3286, %v714, 0
    %v3299 = vand.u32 %v3273, 4294901760
    %3300 = vmatprep.subr.mxu0 %v3299
    %v3301 = vand.u32 %v3272, 4294901760
    %3302 = vmatpush1.msra.mxu0 %v3301
    %v3303 = vand.u32 %v3275, 4294901760
    %3304 = vmatprep.subr.mxu0 %v3303
    %v3305 = vand.u32 %v3274, 4294901760
    %3306 = vmatpush1.msra.mxu0 %v3305
    %v3307 = vand.u32 %v3277, 4294901760
    %3308 = vmatprep.subr.mxu0 %v3307
    %v3309 = vand.u32 %v3276, 4294901760
    %3310 = vmatpush1.msra.mxu0 %v3309
    %v3311 = vand.u32 %v3279, 4294901760
    %3312 = vmatprep.subr.mxu0 %v3311
    %v3313 = vand.u32 %v3278, 4294901760
    %3314 = vmatpush1.msra.mxu0 %v3313
    %v3315 = vand.u32 %v3281, 4294901760
    %3316 = vmatprep.subr.mxu0 %v3315
    %v3317 = vand.u32 %v3280, 4294901760
    %3318 = vmatpush1.msra.mxu0 %v3317
    %v3319 = vand.u32 %v3283, 4294901760
    %3320 = vmatprep.subr.mxu0 %v3319
    %v3321 = vand.u32 %v3282, 4294901760
    %3322 = vmatpush1.msra.mxu0 %v3321
    %v3323 = vand.u32 %v3285, 4294901760
    %3324 = vmatprep.subr.mxu0 %v3323
    %v3325 = vand.u32 %v3284, 4294901760
    %3326 = vmatpush1.msra.mxu0 %v3325
    %3327 = vmatprep.subr.mxu0 0.0
    %3328 = vmatpush1.msra.mxu0 0.0
    %3329 = vmatprep.subr.mxu0 0.0
    %3330 = vmatpush1.msra.mxu0 0.0
    %3331 = vmatprep.subr.mxu0 0.0
    %3332 = vmatpush1.msra.mxu0 0.0
    %3333 = vmatprep.subr.mxu0 0.0
    %3334 = vmatpush1.msra.mxu0 0.0
    %3335 = vmatprep.subr.mxu0 0.0
    %3336 = vmatpush1.msra.mxu0 0.0
    %3337 = vmatprep.subr.mxu0 0.0
    %3338 = vmatpush1.msra.mxu0 0.0
    %3339 = vmatprep.subr.mxu0 0.0
    %3340 = vmatpush1.msra.mxu0 0.0
    %3341 = vmatprep.subr.mxu0 0.0
    %3342 = vmatpush1.msra.mxu0 0.0
    %3343 = vmatprep.subr.mxu0 0.0
    %3344 = vmatpush1.msra.mxu0 0.0
    %3345 = vmatprep.subr.mxu0 0.0
    %3346 = vmatpush1.msra.mxu0 0.0
    %3347 = vmatprep.subr.mxu0 0.0
    %3348 = vmatpush1.msra.mxu0 0.0
    %3349 = vmatprep.subr.mxu0 0.0
    %3350 = vmatpush1.msra.mxu0 0.0
    %3351 = vmatprep.subr.mxu0 0.0
    %3352 = vmatpush1.msra.mxu0 0.0
    %3353 = vmatprep.subr.mxu0 0.0
    %3354 = vmatpush1.msra.mxu0 0.0
    %3355 = vmatprep.subr.mxu0 0.0
    %3356 = vmatpush1.msra.mxu0 0.0
    %3357 = vmatprep.subr.mxu0 0.0
    %3358 = vmatpush1.msra.mxu0 0.0
    %3359 = vmatprep.subr.mxu0 0.0
    %3360 = vmatpush1.msra.mxu0 0.0
    %3361 = vmatprep.subr.mxu0 0.0
    %3362 = vmatpush1.msra.mxu0 0.0
    %3363 = vmatprep.subr.mxu0 0.0
    %3364 = vmatpush1.msra.mxu0 0.0
    %3365 = vmatprep.subr.mxu0 0.0
    %3366 = vmatpush1.msra.mxu0 0.0
    %3367 = vmatprep.subr.mxu0 0.0
    %3368 = vmatpush1.msra.mxu0 0.0
    %3369 = vmatprep.subr.mxu0 0.0
    %3370 = vmatpush1.msra.mxu0 0.0
    %3371 = vmatprep.subr.mxu0 0.0
    %3372 = vmatpush1.msra.mxu0 0.0
    %3373 = vmatprep.subr.mxu0 0.0
    %3374 = vmatpush1.msra.mxu0 0.0
    %3375 = vmatprep.subr.mxu0 0.0
    %3376 = vmatpush1.msra.mxu0 0.0
    %3377 = vmatprep.mubr.f32.mxu0 0.0
    %v3378 = vand.u32 %v3288, 4294901760
    %v3379 = vsub.f32 %v3288, %v3378
    %v3380 = vand.u32 %v3379, 4294901760
    %v3381 = vsub.f32 %v3379, %v3380
    %v3382 = vand.u32 %v3381, 4294901760
    %3383 = vmatmul.mubr.f32.gmra.mrb[0].mxu0 %v3382
    %v3384 = vpop.f32.mrb[0].mxu0
    %v3385 = vadd.f32 0.0, %v3384
    %v3386 = vpop.f32.mrb[0].mxu0
    %v3387 = vadd.f32 0.0, %v3386
    %3388 = vmatprep.mubr.f32.mxu0 0.0
    %v3389 = vand.u32 %v3291, 4294901760
    %v3390 = vsub.f32 %v3291, %v3389
    %v3391 = vand.u32 %v3390, 4294901760
    %v3392 = vsub.f32 %v3390, %v3391
    %v3393 = vand.u32 %v3392, 4294901760
    %3394 = vmatmul.mubr.f32.gmra.mrb[0].mxu0 %v3393
    %v3395 = vpop.f32.mrb[0].mxu0
    %v3396 = vadd.f32 0.0, %v3395
    %v3397 = vpop.f32.mrb[0].mxu0
    %v3398 = vadd.f32 0.0, %v3397
    %3399 = vmatprep.mubr.f32.mxu0 0.0
    %v3400 = vand.u32 %v3294, 4294901760
    %v3401 = vsub.f32 %v3294, %v3400
    %v3402 = vand.u32 %v3401, 4294901760
    %v3403 = vsub.f32 %v3401, %v3402
    %v3404 = vand.u32 %v3403, 4294901760
    %3405 = vmatmul.mubr.f32.gmra.mrb[0].mxu0 %v3404
    %v3406 = vpop.f32.mrb[0].mxu0
    %v3407 = vadd.f32 0.0, %v3406
    %v3408 = vpop.f32.mrb[0].mxu0
    %v3409 = vadd.f32 0.0, %v3408
    %3410 = vmatprep.mubr.f32.mxu0 0.0
    %v3411 = vand.u32 %v3297, 4294901760
    %v3412 = vsub.f32 %v3297, %v3411
    %v3413 = vand.u32 %v3412, 4294901760
    %v3414 = vsub.f32 %v3412, %v3413
    %v3415 = vand.u32 %v3414, 4294901760
    %3416 = vmatmul.mubr.f32.gmra.mrb[0].mxu0 %v3415
    %v3417 = vpop.f32.mrb[0].mxu0
    %v3418 = vadd.f32 0.0, %v3417
    %v3419 = vpop.f32.mrb[0].mxu0
    %v3420 = vadd.f32 0.0, %v3419
    %3421 = vdwg.mxu0
    %v3422 = vand.u32 %v3273, 4294901760
    %v3423 = vsub.f32 %v3273, %v3422
    %v3424 = vand.u32 %v3423, 4294901760
    %v3425 = vsub.f32 %v3423, %v3424
    %v3426 = vand.u32 %v3425, 4294901760
    %3427 = vmatprep.subr.mxu0 %v3426
    %v3428 = vand.u32 %v3272, 4294901760
    %v3429 = vsub.f32 %v3272, %v3428
    %v3430 = vand.u32 %v3429, 4294901760
    %v3431 = vsub.f32 %v3429, %v3430
    %v3432 = vand.u32 %v3431, 4294901760
    %3433 = vmatpush1.msra.mxu0 %v3432
    %v3434 = vand.u32 %v3275, 4294901760
    %v3435 = vsub.f32 %v3275, %v3434
    %v3436 = vand.u32 %v3435, 4294901760
    %v3437 = vsub.f32 %v3435, %v3436
    %v3438 = vand.u32 %v3437, 4294901760
    %3439 = vmatprep.subr.mxu0 %v3438
    %v3440 = vand.u32 %v3274, 4294901760
    %v3441 = vsub.f32 %v3274, %v3440
    %v3442 = vand.u32 %v3441, 4294901760
    %v3443 = vsub.f32 %v3441, %v3442
    %v3444 = vand.u32 %v3443, 4294901760
    %3445 = vmatpush1.msra.mxu0 %v3444
    %v3446 = vand.u32 %v3277, 4294901760
    %v3447 = vsub.f32 %v3277, %v3446
    %v3448 = vand.u32 %v3447, 4294901760
    %v3449 = vsub.f32 %v3447, %v3448
    %v3450 = vand.u32 %v3449, 4294901760
    %3451 = vmatprep.subr.mxu0 %v3450
    %v3452 = vand.u32 %v3276, 4294901760
    %v3453 = vsub.f32 %v3276, %v3452
    %v3454 = vand.u32 %v3453, 4294901760
    %v3455 = vsub.f32 %v3453, %v3454
    %v3456 = vand.u32 %v3455, 4294901760
    %3457 = vmatpush1.msra.mxu0 %v3456
    %v3458 = vand.u32 %v3279, 4294901760
    %v3459 = vsub.f32 %v3279, %v3458
    %v3460 = vand.u32 %v3459, 4294901760
    %v3461 = vsub.f32 %v3459, %v3460
    %v3462 = vand.u32 %v3461, 4294901760
    %3463 = vmatprep.subr.mxu0 %v3462
    %v3464 = vand.u32 %v3278, 4294901760
    %v3465 = vsub.f32 %v3278, %v3464
    %v3466 = vand.u32 %v3465, 4294901760
    %v3467 = vsub.f32 %v3465, %v3466
    %v3468 = vand.u32 %v3467, 4294901760
    %3469 = vmatpush1.msra.mxu0 %v3468
    %v3470 = vand.u32 %v3281, 4294901760
    %v3471 = vsub.f32 %v3281, %v3470
    %v3472 = vand.u32 %v3471, 4294901760
    %v3473 = vsub.f32 %v3471, %v3472
    %v3474 = vand.u32 %v3473, 4294901760
    %3475 = vmatprep.subr.mxu0 %v3474
    %v3476 = vand.u32 %v3280, 4294901760
    %v3477 = vsub.f32 %v3280, %v3476
    %v3478 = vand.u32 %v3477, 4294901760
    %v3479 = vsub.f32 %v3477, %v3478
    %v3480 = vand.u32 %v3479, 4294901760
    %3481 = vmatpush1.msra.mxu0 %v3480
    %v3482 = vand.u32 %v3283, 4294901760
    %v3483 = vsub.f32 %v3283, %v3482
    %v3484 = vand.u32 %v3483, 4294901760
    %v3485 = vsub.f32 %v3483, %v3484
    %v3486 = vand.u32 %v3485, 4294901760
    %3487 = vmatprep.subr.mxu0 %v3486
    %v3488 = vand.u32 %v3282, 4294901760
    %v3489 = vsub.f32 %v3282, %v3488
    %v3490 = vand.u32 %v3489, 4294901760
    %v3491 = vsub.f32 %v3489, %v3490
    %v3492 = vand.u32 %v3491, 4294901760
    %3493 = vmatpush1.msra.mxu0 %v3492
    %v3494 = vand.u32 %v3285, 4294901760
    %v3495 = vsub.f32 %v3285, %v3494
    %v3496 = vand.u32 %v3495, 4294901760
    %v3497 = vsub.f32 %v3495, %v3496
    %v3498 = vand.u32 %v3497, 4294901760
    %3499 = vmatprep.subr.mxu0 %v3498
    %v3500 = vand.u32 %v3284, 4294901760
    %v3501 = vsub.f32 %v3284, %v3500
    %v3502 = vand.u32 %v3501, 4294901760
    %v3503 = vsub.f32 %v3501, %v3502
    %v3504 = vand.u32 %v3503, 4294901760
    %3505 = vmatpush1.msra.mxu0 %v3504
    %3506 = vmatprep.subr.mxu0 0.0
    %3507 = vmatpush1.msra.mxu0 0.0
    %3508 = vmatprep.subr.mxu0 0.0
    %3509 = vmatpush1.msra.mxu0 0.0
    %3510 = vmatprep.subr.mxu0 0.0
    %3511 = vmatpush1.msra.mxu0 0.0
    %3512 = vmatprep.subr.mxu0 0.0
    %3513 = vmatpush1.msra.mxu0 0.0
    %3514 = vmatprep.subr.mxu0 0.0
    %3515 = vmatpush1.msra.mxu0 0.0
    %3516 = vmatprep.subr.mxu0 0.0
    %3517 = vmatpush1.msra.mxu0 0.0
    %3518 = vmatprep.subr.mxu0 0.0
    %3519 = vmatpush1.msra.mxu0 0.0
    %3520 = vmatprep.subr.mxu0 0.0
    %3521 = vmatpush1.msra.mxu0 0.0
    %3522 = vmatprep.subr.mxu0 0.0
    %3523 = vmatpush1.msra.mxu0 0.0
    %3524 = vmatprep.subr.mxu0 0.0
    %3525 = vmatpush1.msra.mxu0 0.0
    %3526 = vmatprep.subr.mxu0 0.0
    %3527 = vmatpush1.msra.mxu0 0.0
    %3528 = vmatprep.subr.mxu0 0.0
    %3529 = vmatpush1.msra.mxu0 0.0
    %3530 = vmatprep.subr.mxu0 0.0
    %3531 = vmatpush1.msra.mxu0 0.0
    %3532 = vmatprep.subr.mxu0 0.0
    %3533 = vmatpush1.msra.mxu0 0.0
    %3534 = vmatprep.subr.mxu0 0.0
    %3535 = vmatpush1.msra.mxu0 0.0
    %3536 = vmatprep.subr.mxu0 0.0
    %3537 = vmatpush1.msra.mxu0 0.0
    %3538 = vmatprep.subr.mxu0 0.0
    %3539 = vmatpush1.msra.mxu0 0.0
    %3540 = vmatprep.subr.mxu0 0.0
    %3541 = vmatpush1.msra.mxu0 0.0
    %3542 = vmatprep.subr.mxu0 0.0
    %3543 = vmatpush1.msra.mxu0 0.0
    %3544 = vmatprep.subr.mxu0 0.0
    %3545 = vmatpush1.msra.mxu0 0.0
    %3546 = vmatprep.subr.mxu0 0.0
    %3547 = vmatpush1.msra.mxu0 0.0
    %3548 = vmatprep.subr.mxu0 0.0
    %3549 = vmatpush1.msra.mxu0 0.0
    %3550 = vmatprep.subr.mxu0 0.0
    %3551 = vmatpush1.msra.mxu0 0.0
    %3552 = vmatprep.subr.mxu0 0.0
    %3553 = vmatpush1.msra.mxu0 0.0
    %3554 = vmatprep.subr.mxu0 0.0
    %3555 = vmatpush1.msra.mxu0 0.0
    %3556 = vmatprep.mubr.f32.mxu0 0.0
    %v3557 = vand.u32 %v3288, 4294901760
    %3558 = vmatmul.mubr.f32.gmra.mrb[0].mxu0 %v3557
    %v3559 = vpop.f32.mrb[0].mxu0
    %v3560 = vadd.f32 %v3385, %v3559
    %v3561 = vpop.f32.mrb[0].mxu0
    %v3562 = vadd.f32 %v3387, %v3561
    %3563 = vmatprep.mubr.f32.mxu0 0.0
    %v3564 = vand.u32 %v3291, 4294901760
    %3565 = vmatmul.mubr.f32.gmra.mrb[0].mxu0 %v3564
    %v3566 = vpop.f32.mrb[0].mxu0
    %v3567 = vadd.f32 %v3396, %v3566
    %v3568 = vpop.f32.mrb[0].mxu0
    %v3569 = vadd.f32 %v3398, %v3568
    %3570 = vmatprep.mubr.f32.mxu0 0.0
    %v3571 = vand.u32 %v3294, 4294901760
    %3572 = vmatmul.mubr.f32.gmra.mrb[0].mxu0 %v3571
    %v3573 = vpop.f32.mrb[0].mxu0
    %v3574 = vadd.f32 %v3407, %v3573
    %v3575 = vpop.f32.mrb[0].mxu0
    %v3576 = vadd.f32 %v3409, %v3575
    %3577 = vmatprep.mubr.f32.mxu0 0.0
    %v3578 = vand.u32 %v3297, 4294901760
    %3579 = vmatmul.mubr.f32.gmra.mrb[0].mxu0 %v3578
    %v3580 = vpop.f32.mrb[0].mxu0
    %v3581 = vadd.f32 %v3418, %v3580
    %v3582 = vpop.f32.mrb[0].mxu0
    %v3583 = vadd.f32 %v3420, %v3582
    %3584 = vdwg.mxu0
    %v3585 = vand.u32 %v3273, 4294901760
    %v3586 = vsub.f32 %v3273, %v3585
    %3587 = vmatprep.subr.mxu0 %v3586
    %v3588 = vand.u32 %v3272, 4294901760
    %v3589 = vsub.f32 %v3272, %v3588
    %3590 = vmatpush1.msra.mxu0 %v3589
    %v3591 = vand.u32 %v3275, 4294901760
    %v3592 = vsub.f32 %v3275, %v3591
    %3593 = vmatprep.subr.mxu0 %v3592
    %v3594 = vand.u32 %v3274, 4294901760
    %v3595 = vsub.f32 %v3274, %v3594
    %3596 = vmatpush1.msra.mxu0 %v3595
    %v3597 = vand.u32 %v3277, 4294901760
    %v3598 = vsub.f32 %v3277, %v3597
    %3599 = vmatprep.subr.mxu0 %v3598
    %v3600 = vand.u32 %v3276, 4294901760
    %v3601 = vsub.f32 %v3276, %v3600
    %3602 = vmatpush1.msra.mxu0 %v3601
    %v3603 = vand.u32 %v3279, 4294901760
    %v3604 = vsub.f32 %v3279, %v3603
    %3605 = vmatprep.subr.mxu0 %v3604
    %v3606 = vand.u32 %v3278, 4294901760
    %v3607 = vsub.f32 %v3278, %v3606
    %3608 = vmatpush1.msra.mxu0 %v3607
    %v3609 = vand.u32 %v3281, 4294901760
    %v3610 = vsub.f32 %v3281, %v3609
    %3611 = vmatprep.subr.mxu0 %v3610
    %v3612 = vand.u32 %v3280, 4294901760
    %v3613 = vsub.f32 %v3280, %v3612
    %3614 = vmatpush1.msra.mxu0 %v3613
    %v3615 = vand.u32 %v3283, 4294901760
    %v3616 = vsub.f32 %v3283, %v3615
    %3617 = vmatprep.subr.mxu0 %v3616
    %v3618 = vand.u32 %v3282, 4294901760
    %v3619 = vsub.f32 %v3282, %v3618
    %3620 = vmatpush1.msra.mxu0 %v3619
    %v3621 = vand.u32 %v3285, 4294901760
    %v3622 = vsub.f32 %v3285, %v3621
    %3623 = vmatprep.subr.mxu0 %v3622
    %v3624 = vand.u32 %v3284, 4294901760
    %v3625 = vsub.f32 %v3284, %v3624
    %3626 = vmatpush1.msra.mxu0 %v3625
    %3627 = vmatprep.subr.mxu0 0.0
    %3628 = vmatpush1.msra.mxu0 0.0
    %3629 = vmatprep.subr.mxu0 0.0
    %3630 = vmatpush1.msra.mxu0 0.0
    %3631 = vmatprep.subr.mxu0 0.0
    %3632 = vmatpush1.msra.mxu0 0.0
    %3633 = vmatprep.subr.mxu0 0.0
    %3634 = vmatpush1.msra.mxu0 0.0
    %3635 = vmatprep.subr.mxu0 0.0
    %3636 = vmatpush1.msra.mxu0 0.0
    %3637 = vmatprep.subr.mxu0 0.0
    %3638 = vmatpush1.msra.mxu0 0.0
    %3639 = vmatprep.subr.mxu0 0.0
    %3640 = vmatpush1.msra.mxu0 0.0
    %3641 = vmatprep.subr.mxu0 0.0
    %3642 = vmatpush1.msra.mxu0 0.0
    %3643 = vmatprep.subr.mxu0 0.0
    %3644 = vmatpush1.msra.mxu0 0.0
    %3645 = vmatprep.subr.mxu0 0.0
    %3646 = vmatpush1.msra.mxu0 0.0
    %3647 = vmatprep.subr.mxu0 0.0
    %3648 = vmatpush1.msra.mxu0 0.0
    %3649 = vmatprep.subr.mxu0 0.0
    %3650 = vmatpush1.msra.mxu0 0.0
    %3651 = vmatprep.subr.mxu0 0.0
    %3652 = vmatpush1.msra.mxu0 0.0
    %3653 = vmatprep.subr.mxu0 0.0
    %3654 = vmatpush1.msra.mxu0 0.0
    %3655 = vmatprep.subr.mxu0 0.0
    %3656 = vmatpush1.msra.mxu0 0.0
    %3657 = vmatprep.subr.mxu0 0.0
    %3658 = vmatpush1.msra.mxu0 0.0
    %3659 = vmatprep.subr.mxu0 0.0
    %3660 = vmatpush1.msra.mxu0 0.0
    %3661 = vmatprep.subr.mxu0 0.0
    %3662 = vmatpush1.msra.mxu0 0.0
    %3663 = vmatprep.subr.mxu0 0.0
    %3664 = vmatpush1.msra.mxu0 0.0
    %3665 = vmatprep.subr.mxu0 0.0
    %3666 = vmatpush1.msra.mxu0 0.0
    %3667 = vmatprep.subr.mxu0 0.0
    %3668 = vmatpush1.msra.mxu0 0.0
    %3669 = vmatprep.subr.mxu0 0.0
    %3670 = vmatpush1.msra.mxu0 0.0
    %3671 = vmatprep.subr.mxu0 0.0
    %3672 = vmatpush1.msra.mxu0 0.0
    %3673 = vmatprep.subr.mxu0 0.0
    %3674 = vmatpush1.msra.mxu0 0.0
    %3675 = vmatprep.subr.mxu0 0.0
    %3676 = vmatpush1.msra.mxu0 0.0
    %3677 = vmatprep.mubr.f32.mxu0 0.0
    %v3678 = vand.u32 %v3288, 4294901760
    %v3679 = vsub.f32 %v3288, %v3678
    %3680 = vmatmul.mubr.f32.gmra.mrb[0].mxu0 %v3679
    %v3681 = vpop.f32.mrb[0].mxu0
    %v3682 = vadd.f32 %v3560, %v3681
    %v3683 = vpop.f32.mrb[0].mxu0
    %v3684 = vadd.f32 %v3562, %v3683
    %3685 = vmatprep.mubr.f32.mxu0 0.0
    %v3686 = vand.u32 %v3291, 4294901760
    %v3687 = vsub.f32 %v3291, %v3686
    %3688 = vmatmul.mubr.f32.gmra.mrb[0].mxu0 %v3687
    %v3689 = vpop.f32.mrb[0].mxu0
    %v3690 = vadd.f32 %v3567, %v3689
    %v3691 = vpop.f32.mrb[0].mxu0
    %v3692 = vadd.f32 %v3569, %v3691
    %3693 = vmatprep.mubr.f32.mxu0 0.0
    %v3694 = vand.u32 %v3294, 4294901760
    %v3695 = vsub.f32 %v3294, %v3694
    %3696 = vmatmul.mubr.f32.gmra.mrb[0].mxu0 %v3695
    %v3697 = vpop.f32.mrb[0].mxu0
    %v3698 = vadd.f32 %v3574, %v3697
    %v3699 = vpop.f32.mrb[0].mxu0
    %v3700 = vadd.f32 %v3576, %v3699
    %3701 = vmatprep.mubr.f32.mxu0 0.0
    %v3702 = vand.u32 %v3297, 4294901760
    %v3703 = vsub.f32 %v3297, %v3702
    %3704 = vmatmul.mubr.f32.gmra.mrb[0].mxu0 %v3703
    %v3705 = vpop.f32.mrb[0].mxu0
    %v3706 = vadd.f32 %v3581, %v3705
    %v3707 = vpop.f32.mrb[0].mxu0
    %v3708 = vadd.f32 %v3583, %v3707
    %3709 = vdwg.mxu0
    %v3710 = vand.u32 %v3273, 4294901760
    %3711 = vmatprep.subr.mxu0 %v3710
    %v3712 = vand.u32 %v3272, 4294901760
    %3713 = vmatpush1.msra.mxu0 %v3712
    %v3714 = vand.u32 %v3275, 4294901760
    %3715 = vmatprep.subr.mxu0 %v3714
    %v3716 = vand.u32 %v3274, 4294901760
    %3717 = vmatpush1.msra.mxu0 %v3716
    %v3718 = vand.u32 %v3277, 4294901760
    %3719 = vmatprep.subr.mxu0 %v3718
    %v3720 = vand.u32 %v3276, 4294901760
    %3721 = vmatpush1.msra.mxu0 %v3720
    %v3722 = vand.u32 %v3279, 4294901760
    %3723 = vmatprep.subr.mxu0 %v3722
    %v3724 = vand.u32 %v3278, 4294901760
    %3725 = vmatpush1.msra.mxu0 %v3724
    %v3726 = vand.u32 %v3281, 4294901760
    %3727 = vmatprep.subr.mxu0 %v3726
    %v3728 = vand.u32 %v3280, 4294901760
    %3729 = vmatpush1.msra.mxu0 %v3728
    %v3730 = vand.u32 %v3283, 4294901760
    %3731 = vmatprep.subr.mxu0 %v3730
    %v3732 = vand.u32 %v3282, 4294901760
    %3733 = vmatpush1.msra.mxu0 %v3732
    %v3734 = vand.u32 %v3285, 4294901760
    %3735 = vmatprep.subr.mxu0 %v3734
    %v3736 = vand.u32 %v3284, 4294901760
    %3737 = vmatpush1.msra.mxu0 %v3736
    %3738 = vmatprep.subr.mxu0 0.0
    %3739 = vmatpush1.msra.mxu0 0.0
    %3740 = vmatprep.subr.mxu0 0.0
    %3741 = vmatpush1.msra.mxu0 0.0
    %3742 = vmatprep.subr.mxu0 0.0
    %3743 = vmatpush1.msra.mxu0 0.0
    %3744 = vmatprep.subr.mxu0 0.0
    %3745 = vmatpush1.msra.mxu0 0.0
    %3746 = vmatprep.subr.mxu0 0.0
    %3747 = vmatpush1.msra.mxu0 0.0
    %3748 = vmatprep.subr.mxu0 0.0
    %3749 = vmatpush1.msra.mxu0 0.0
    %3750 = vmatprep.subr.mxu0 0.0
    %3751 = vmatpush1.msra.mxu0 0.0
    %3752 = vmatprep.subr.mxu0 0.0
    %3753 = vmatpush1.msra.mxu0 0.0
    %3754 = vmatprep.subr.mxu0 0.0
    %3755 = vmatpush1.msra.mxu0 0.0
    %3756 = vmatprep.subr.mxu0 0.0
    %3757 = vmatpush1.msra.mxu0 0.0
    %3758 = vmatprep.subr.mxu0 0.0
    %3759 = vmatpush1.msra.mxu0 0.0
    %3760 = vmatprep.subr.mxu0 0.0
    %3761 = vmatpush1.msra.mxu0 0.0
    %3762 = vmatprep.subr.mxu0 0.0
    %3763 = vmatpush1.msra.mxu0 0.0
    %3764 = vmatprep.subr.mxu0 0.0
    %3765 = vmatpush1.msra.mxu0 0.0
    %3766 = vmatprep.subr.mxu0 0.0
    %3767 = vmatpush1.msra.mxu0 0.0
    %3768 = vmatprep.subr.mxu0 0.0
    %3769 = vmatpush1.msra.mxu0 0.0
    %3770 = vmatprep.subr.mxu0 0.0
    %3771 = vmatpush1.msra.mxu0 0.0
    %3772 = vmatprep.subr.mxu0 0.0
    %3773 = vmatpush1.msra.mxu0 0.0
    %3774 = vmatprep.subr.mxu0 0.0
    %3775 = vmatpush1.msra.mxu0 0.0
    %3776 = vmatprep.subr.mxu0 0.0
    %3777 = vmatpush1.msra.mxu0 0.0
    %3778 = vmatprep.subr.mxu0 0.0
    %3779 = vmatpush1.msra.mxu0 0.0
    %3780 = vmatprep.subr.mxu0 0.0
    %3781 = vmatpush1.msra.mxu0 0.0
    %3782 = vmatprep.subr.mxu0 0.0
    %3783 = vmatpush1.msra.mxu0 0.0
    %3784 = vmatprep.subr.mxu0 0.0
    %3785 = vmatpush1.msra.mxu0 0.0
    %3786 = vmatprep.subr.mxu0 0.0
    %3787 = vmatpush1.msra.mxu0 0.0
    %3788 = vmatprep.mubr.f32.mxu0 0.0
    %v3789 = vand.u32 %v3288, 4294901760
    %v3790 = vsub.f32 %v3288, %v3789
    %v3791 = vand.u32 %v3790, 4294901760
    %3792 = vmatmul.mubr.f32.gmra.mrb[0].mxu0 %v3791
    %v3793 = vpop.f32.mrb[0].mxu0
    %v3794 = vadd.f32 %v3682, %v3793
    %v3795 = vpop.f32.mrb[0].mxu0
    %v3796 = vadd.f32 %v3684, %v3795
    %3797 = vmatprep.mubr.f32.mxu0 0.0
    %v3798 = vand.u32 %v3291, 4294901760
    %v3799 = vsub.f32 %v3291, %v3798
    %v3800 = vand.u32 %v3799, 4294901760
    %3801 = vmatmul.mubr.f32.gmra.mrb[0].mxu0 %v3800
    %v3802 = vpop.f32.mrb[0].mxu0
    %v3803 = vadd.f32 %v3690, %v3802
    %v3804 = vpop.f32.mrb[0].mxu0
    %v3805 = vadd.f32 %v3692, %v3804
    %3806 = vmatprep.mubr.f32.mxu0 0.0
    %v3807 = vand.u32 %v3294, 4294901760
    %v3808 = vsub.f32 %v3294, %v3807
    %v3809 = vand.u32 %v3808, 4294901760
    %3810 = vmatmul.mubr.f32.gmra.mrb[0].mxu0 %v3809
    %v3811 = vpop.f32.mrb[0].mxu0
    %v3812 = vadd.f32 %v3698, %v3811
    %v3813 = vpop.f32.mrb[0].mxu0
    %v3814 = vadd.f32 %v3700, %v3813
    %3815 = vmatprep.mubr.f32.mxu0 0.0
    %v3816 = vand.u32 %v3297, 4294901760
    %v3817 = vsub.f32 %v3297, %v3816
    %v3818 = vand.u32 %v3817, 4294901760
    %3819 = vmatmul.mubr.f32.gmra.mrb[0].mxu0 %v3818
    %v3820 = vpop.f32.mrb[0].mxu0
    %v3821 = vadd.f32 %v3706, %v3820
    %v3822 = vpop.f32.mrb[0].mxu0
    %v3823 = vadd.f32 %v3708, %v3822
    %3824 = vdwg.mxu0
    %v3825 = vand.u32 %v3273, 4294901760
    %v3826 = vsub.f32 %v3273, %v3825
    %v3827 = vand.u32 %v3826, 4294901760
    %3828 = vmatprep.subr.mxu0 %v3827
    %v3829 = vand.u32 %v3272, 4294901760
    %v3830 = vsub.f32 %v3272, %v3829
    %v3831 = vand.u32 %v3830, 4294901760
    %3832 = vmatpush1.msra.mxu0 %v3831
    %v3833 = vand.u32 %v3275, 4294901760
    %v3834 = vsub.f32 %v3275, %v3833
    %v3835 = vand.u32 %v3834, 4294901760
    %3836 = vmatprep.subr.mxu0 %v3835
    %v3837 = vand.u32 %v3274, 4294901760
    %v3838 = vsub.f32 %v3274, %v3837
    %v3839 = vand.u32 %v3838, 4294901760
    %3840 = vmatpush1.msra.mxu0 %v3839
    %v3841 = vand.u32 %v3277, 4294901760
    %v3842 = vsub.f32 %v3277, %v3841
    %v3843 = vand.u32 %v3842, 4294901760
    %3844 = vmatprep.subr.mxu0 %v3843
    %v3845 = vand.u32 %v3276, 4294901760
    %v3846 = vsub.f32 %v3276, %v3845
    %v3847 = vand.u32 %v3846, 4294901760
    %3848 = vmatpush1.msra.mxu0 %v3847
    %v3849 = vand.u32 %v3279, 4294901760
    %v3850 = vsub.f32 %v3279, %v3849
    %v3851 = vand.u32 %v3850, 4294901760
    %3852 = vmatprep.subr.mxu0 %v3851
    %v3853 = vand.u32 %v3278, 4294901760
    %v3854 = vsub.f32 %v3278, %v3853
    %v3855 = vand.u32 %v3854, 4294901760
    %3856 = vmatpush1.msra.mxu0 %v3855
    %v3857 = vand.u32 %v3281, 4294901760
    %v3858 = vsub.f32 %v3281, %v3857
    %v3859 = vand.u32 %v3858, 4294901760
    %3860 = vmatprep.subr.mxu0 %v3859
    %v3861 = vand.u32 %v3280, 4294901760
    %v3862 = vsub.f32 %v3280, %v3861
    %v3863 = vand.u32 %v3862, 4294901760
    %3864 = vmatpush1.msra.mxu0 %v3863
    %v3865 = vand.u32 %v3283, 4294901760
    %v3866 = vsub.f32 %v3283, %v3865
    %v3867 = vand.u32 %v3866, 4294901760
    %3868 = vmatprep.subr.mxu0 %v3867
    %v3869 = vand.u32 %v3282, 4294901760
    %v3870 = vsub.f32 %v3282, %v3869
    %v3871 = vand.u32 %v3870, 4294901760
    %3872 = vmatpush1.msra.mxu0 %v3871
    %v3873 = vand.u32 %v3285, 4294901760
    %v3874 = vsub.f32 %v3285, %v3873
    %v3875 = vand.u32 %v3874, 4294901760
    %3876 = vmatprep.subr.mxu0 %v3875
    %v3877 = vand.u32 %v3284, 4294901760
    %v3878 = vsub.f32 %v3284, %v3877
    %v3879 = vand.u32 %v3878, 4294901760
    %3880 = vmatpush1.msra.mxu0 %v3879
    %3881 = vmatprep.subr.mxu0 0.0
    %3882 = vmatpush1.msra.mxu0 0.0
    %3883 = vmatprep.subr.mxu0 0.0
    %3884 = vmatpush1.msra.mxu0 0.0
    %3885 = vmatprep.subr.mxu0 0.0
    %3886 = vmatpush1.msra.mxu0 0.0
    %3887 = vmatprep.subr.mxu0 0.0
    %3888 = vmatpush1.msra.mxu0 0.0
    %3889 = vmatprep.subr.mxu0 0.0
    %3890 = vmatpush1.msra.mxu0 0.0
    %3891 = vmatprep.subr.mxu0 0.0
    %3892 = vmatpush1.msra.mxu0 0.0
    %3893 = vmatprep.subr.mxu0 0.0
    %3894 = vmatpush1.msra.mxu0 0.0
    %3895 = vmatprep.subr.mxu0 0.0
    %3896 = vmatpush1.msra.mxu0 0.0
    %3897 = vmatprep.subr.mxu0 0.0
    %3898 = vmatpush1.msra.mxu0 0.0
    %3899 = vmatprep.subr.mxu0 0.0
    %3900 = vmatpush1.msra.mxu0 0.0
    %3901 = vmatprep.subr.mxu0 0.0
    %3902 = vmatpush1.msra.mxu0 0.0
    %3903 = vmatprep.subr.mxu0 0.0
    %3904 = vmatpush1.msra.mxu0 0.0
    %3905 = vmatprep.subr.mxu0 0.0
    %3906 = vmatpush1.msra.mxu0 0.0
    %3907 = vmatprep.subr.mxu0 0.0
    %3908 = vmatpush1.msra.mxu0 0.0
    %3909 = vmatprep.subr.mxu0 0.0
    %3910 = vmatpush1.msra.mxu0 0.0
    %3911 = vmatprep.subr.mxu0 0.0
    %3912 = vmatpush1.msra.mxu0 0.0
    %3913 = vmatprep.subr.mxu0 0.0
    %3914 = vmatpush1.msra.mxu0 0.0
    %3915 = vmatprep.subr.mxu0 0.0
    %3916 = vmatpush1.msra.mxu0 0.0
    %3917 = vmatprep.subr.mxu0 0.0
    %3918 = vmatpush1.msra.mxu0 0.0
    %3919 = vmatprep.subr.mxu0 0.0
    %3920 = vmatpush1.msra.mxu0 0.0
    %3921 = vmatprep.subr.mxu0 0.0
    %3922 = vmatpush1.msra.mxu0 0.0
    %3923 = vmatprep.subr.mxu0 0.0
    %3924 = vmatpush1.msra.mxu0 0.0
    %3925 = vmatprep.subr.mxu0 0.0
    %3926 = vmatpush1.msra.mxu0 0.0
    %3927 = vmatprep.subr.mxu0 0.0
    %3928 = vmatpush1.msra.mxu0 0.0
    %3929 = vmatprep.subr.mxu0 0.0
    %3930 = vmatpush1.msra.mxu0 0.0
    %3931 = vmatprep.mubr.f32.mxu0 0.0
    %v3932 = vand.u32 %v3288, 4294901760
    %3933 = vmatmul.mubr.f32.gmra.mrb[0].mxu0 %v3932
    %v3934 = vpop.f32.mrb[0].mxu0
    %v3935 = vadd.f32 %v3794, %v3934
    %v3936 = vpop.f32.mrb[0].mxu0
    %v3937 = vadd.f32 %v3796, %v3936
    %3938 = vmatprep.mubr.f32.mxu0 0.0
    %v3939 = vand.u32 %v3291, 4294901760
    %3940 = vmatmul.mubr.f32.gmra.mrb[0].mxu0 %v3939
    %v3941 = vpop.f32.mrb[0].mxu0
    %v3942 = vadd.f32 %v3803, %v3941
    %v3943 = vpop.f32.mrb[0].mxu0
    %v3944 = vadd.f32 %v3805, %v3943
    %3945 = vmatprep.mubr.f32.mxu0 0.0
    %v3946 = vand.u32 %v3294, 4294901760
    %3947 = vmatmul.mubr.f32.gmra.mrb[0].mxu0 %v3946
    %v3948 = vpop.f32.mrb[0].mxu0
    %v3949 = vadd.f32 %v3812, %v3948
    %v3950 = vpop.f32.mrb[0].mxu0
    %v3951 = vadd.f32 %v3814, %v3950
    %3952 = vmatprep.mubr.f32.mxu0 0.0
    %v3953 = vand.u32 %v3297, 4294901760
    %3954 = vmatmul.mubr.f32.gmra.mrb[0].mxu0 %v3953
    %v3955 = vpop.f32.mrb[0].mxu0
    %v3956 = vadd.f32 %v3821, %v3955
    %v3957 = vpop.f32.mrb[0].mxu0
    %v3958 = vadd.f32 %v3823, %v3957
    %3959 = vdwg.mxu0
    %v3960 = vand.u32 %v3273, 4294901760
    %3961 = vmatprep.subr.mxu0 %v3960
    %v3962 = vand.u32 %v3272, 4294901760
    %3963 = vmatpush1.msra.mxu0 %v3962
    %v3964 = vand.u32 %v3275, 4294901760
    %3965 = vmatprep.subr.mxu0 %v3964
    %v3966 = vand.u32 %v3274, 4294901760
    %3967 = vmatpush1.msra.mxu0 %v3966
    %v3968 = vand.u32 %v3277, 4294901760
    %3969 = vmatprep.subr.mxu0 %v3968
    %v3970 = vand.u32 %v3276, 4294901760
    %3971 = vmatpush1.msra.mxu0 %v3970
    %v3972 = vand.u32 %v3279, 4294901760
    %3973 = vmatprep.subr.mxu0 %v3972
    %v3974 = vand.u32 %v3278, 4294901760
    %3975 = vmatpush1.msra.mxu0 %v3974
    %v3976 = vand.u32 %v3281, 4294901760
    %3977 = vmatprep.subr.mxu0 %v3976
    %v3978 = vand.u32 %v3280, 4294901760
    %3979 = vmatpush1.msra.mxu0 %v3978
    %v3980 = vand.u32 %v3283, 4294901760
    %3981 = vmatprep.subr.mxu0 %v3980
    %v3982 = vand.u32 %v3282, 4294901760
    %3983 = vmatpush1.msra.mxu0 %v3982
    %v3984 = vand.u32 %v3285, 4294901760
    %3985 = vmatprep.subr.mxu0 %v3984
    %v3986 = vand.u32 %v3284, 4294901760
    %3987 = vmatpush1.msra.mxu0 %v3986
    %3988 = vmatprep.subr.mxu0 0.0
    %3989 = vmatpush1.msra.mxu0 0.0
    %3990 = vmatprep.subr.mxu0 0.0
    %3991 = vmatpush1.msra.mxu0 0.0
    %3992 = vmatprep.subr.mxu0 0.0
    %3993 = vmatpush1.msra.mxu0 0.0
    %3994 = vmatprep.subr.mxu0 0.0
    %3995 = vmatpush1.msra.mxu0 0.0
    %3996 = vmatprep.subr.mxu0 0.0
    %3997 = vmatpush1.msra.mxu0 0.0
    %3998 = vmatprep.subr.mxu0 0.0
    %3999 = vmatpush1.msra.mxu0 0.0
    %4000 = vmatprep.subr.mxu0 0.0
    %4001 = vmatpush1.msra.mxu0 0.0
    %4002 = vmatprep.subr.mxu0 0.0
    %4003 = vmatpush1.msra.mxu0 0.0
    %4004 = vmatprep.subr.mxu0 0.0
    %4005 = vmatpush1.msra.mxu0 0.0
    %4006 = vmatprep.subr.mxu0 0.0
    %4007 = vmatpush1.msra.mxu0 0.0
    %4008 = vmatprep.subr.mxu0 0.0
    %4009 = vmatpush1.msra.mxu0 0.0
    %4010 = vmatprep.subr.mxu0 0.0
    %4011 = vmatpush1.msra.mxu0 0.0
    %4012 = vmatprep.subr.mxu0 0.0
    %4013 = vmatpush1.msra.mxu0 0.0
    %4014 = vmatprep.subr.mxu0 0.0
    %4015 = vmatpush1.msra.mxu0 0.0
    %4016 = vmatprep.subr.mxu0 0.0
    %4017 = vmatpush1.msra.mxu0 0.0
    %4018 = vmatprep.subr.mxu0 0.0
    %4019 = vmatpush1.msra.mxu0 0.0
    %4020 = vmatprep.subr.mxu0 0.0
    %4021 = vmatpush1.msra.mxu0 0.0
    %4022 = vmatprep.subr.mxu0 0.0
    %4023 = vmatpush1.msra.mxu0 0.0
    %4024 = vmatprep.subr.mxu0 0.0
    %4025 = vmatpush1.msra.mxu0 0.0
    %4026 = vmatprep.subr.mxu0 0.0
    %4027 = vmatpush1.msra.mxu0 0.0
    %4028 = vmatprep.subr.mxu0 0.0
    %4029 = vmatpush1.msra.mxu0 0.0
    %4030 = vmatprep.subr.mxu0 0.0
    %4031 = vmatpush1.msra.mxu0 0.0
    %4032 = vmatprep.subr.mxu0 0.0
    %4033 = vmatpush1.msra.mxu0 0.0
    %4034 = vmatprep.subr.mxu0 0.0
    %4035 = vmatpush1.msra.mxu0 0.0
    %4036 = vmatprep.subr.mxu0 0.0
    %4037 = vmatpush1.msra.mxu0 0.0
    %4038 = vmatprep.mubr.f32.mxu0 0.0
    %v4039 = vand.u32 %v3288, 4294901760
    %4040 = vmatmul.mubr.f32.gmra.mrb[0].mxu0 %v4039
    %v4041 = vpop.f32.mrb[0].mxu0
    %v4042 = vadd.f32 %v3935, %v4041
    %v4043 = vpop.f32.mrb[0].mxu0
    %v4044 = vadd.f32 %v3937, %v4043
    %4045 = vmatprep.mubr.f32.mxu0 0.0
    %v4046 = vand.u32 %v3291, 4294901760
    %4047 = vmatmul.mubr.f32.gmra.mrb[0].mxu0 %v4046
    %v4048 = vpop.f32.mrb[0].mxu0
    %v4049 = vadd.f32 %v3942, %v4048
    %v4050 = vpop.f32.mrb[0].mxu0
    %v4051 = vadd.f32 %v3944, %v4050
    %4052 = vmatprep.mubr.f32.mxu0 0.0
    %v4053 = vand.u32 %v3294, 4294901760
    %4054 = vmatmul.mubr.f32.gmra.mrb[0].mxu0 %v4053
    %v4055 = vpop.f32.mrb[0].mxu0
    %v4056 = vadd.f32 %v3949, %v4055
    %v4057 = vpop.f32.mrb[0].mxu0
    %v4058 = vadd.f32 %v3951, %v4057
    %4059 = vmatprep.mubr.f32.mxu0 0.0
    %v4060 = vand.u32 %v3297, 4294901760
    %4061 = vmatmul.mubr.f32.gmra.mrb[0].mxu0 %v4060
    %v4062 = vpop.f32.mrb[0].mxu0
    %v4063 = vadd.f32 %v3956, %v4062
    %v4064 = vpop.f32.mrb[0].mxu0
    %v4065 = vadd.f32 %v3958, %v4064
    %4066 = vdwg.mxu0
    %v4068 = vsel %vm771, %v4044, 0
    %v4071 = vsel %vm771, %v4051, 0
    %v4074 = vsel %vm771, %v4058, 0
    %v4077 = vsel %vm771, %v4065, 0
    %4079 = vmatprep.subr.mxu0 0.0
    %v4080 = vand.u32 %v715, 4294901760
    %4081 = vmatpush1.msra.mxu0 %v4080
    %4082 = vmatprep.subr.mxu0 0.0
    %v4083 = vand.u32 %v716, 4294901760
    %4084 = vmatpush1.msra.mxu0 %v4083
    %4085 = vmatprep.subr.mxu0 0.0
    %v4086 = vand.u32 %v717, 4294901760
    %4087 = vmatpush1.msra.mxu0 %v4086
    %4088 = vmatprep.subr.mxu0 0.0
    %v4089 = vand.u32 %v718, 4294901760
    %4090 = vmatpush1.msra.mxu0 %v4089
    %4091 = vmatprep.subr.mxu0 0.0
    %v4092 = vand.u32 %v719, 4294901760
    %4093 = vmatpush1.msra.mxu0 %v4092
    %4094 = vmatprep.subr.mxu0 0.0
    %v4095 = vand.u32 %v720, 4294901760
    %4096 = vmatpush1.msra.mxu0 %v4095
    %4097 = vmatprep.subr.mxu0 0.0
    %v4098 = vand.u32 %v721, 4294901760
    %4099 = vmatpush1.msra.mxu0 %v4098
    %4100 = vmatprep.subr.mxu0 0.0
    %v4101 = vand.u32 %v722, 4294901760
    %4102 = vmatpush1.msra.mxu0 %v4101
    %4103 = vmatprep.subr.mxu0 0.0
    %v4104 = vand.u32 %v723, 4294901760
    %4105 = vmatpush1.msra.mxu0 %v4104
    %4106 = vmatprep.subr.mxu0 0.0
    %v4107 = vand.u32 %v724, 4294901760
    %4108 = vmatpush1.msra.mxu0 %v4107
    %4109 = vmatprep.subr.mxu0 0.0
    %v4110 = vand.u32 %v725, 4294901760
    %4111 = vmatpush1.msra.mxu0 %v4110
    %4112 = vmatprep.subr.mxu0 0.0
    %v4113 = vand.u32 %v726, 4294901760
    %4114 = vmatpush1.msra.mxu0 %v4113
    %4115 = vmatprep.subr.mxu0 0.0
    %v4116 = vand.u32 %v727, 4294901760
    %4117 = vmatpush1.msra.mxu0 %v4116
    %4118 = vmatprep.subr.mxu0 0.0
    %v4119 = vand.u32 %v728, 4294901760
    %4120 = vmatpush1.msra.mxu0 %v4119
    %4121 = vmatprep.subr.mxu0 0.0
    %v4122 = vand.u32 %v729, 4294901760
    %4123 = vmatpush1.msra.mxu0 %v4122
    %4124 = vmatprep.subr.mxu0 0.0
    %v4125 = vand.u32 %v730, 4294901760
    %4126 = vmatpush1.msra.mxu0 %v4125
    %4127 = vmatprep.subr.mxu0 0.0
    %v4128 = vand.u32 %v731, 4294901760
    %4129 = vmatpush1.msra.mxu0 %v4128
    %4130 = vmatprep.subr.mxu0 0.0
    %v4131 = vand.u32 %v732, 4294901760
    %4132 = vmatpush1.msra.mxu0 %v4131
    %4133 = vmatprep.subr.mxu0 0.0
    %v4134 = vand.u32 %v733, 4294901760
    %4135 = vmatpush1.msra.mxu0 %v4134
    %4136 = vmatprep.subr.mxu0 0.0
    %v4137 = vand.u32 %v734, 4294901760
    %4138 = vmatpush1.msra.mxu0 %v4137
    %4139 = vmatprep.subr.mxu0 0.0
    %v4140 = vand.u32 %v735, 4294901760
    %4141 = vmatpush1.msra.mxu0 %v4140
    %4142 = vmatprep.subr.mxu0 0.0
    %4143 = vmatpush1.msra.mxu0 0.0
    %4144 = vmatprep.subr.mxu0 0.0
    %4145 = vmatpush1.msra.mxu0 0.0
    %4146 = vmatprep.subr.mxu0 0.0
    %4147 = vmatpush1.msra.mxu0 0.0
    %4148 = vmatprep.subr.mxu0 0.0
    %4149 = vmatpush1.msra.mxu0 0.0
    %4150 = vmatprep.subr.mxu0 0.0
    %4151 = vmatpush1.msra.mxu0 0.0
    %4152 = vmatprep.subr.mxu0 0.0
    %4153 = vmatpush1.msra.mxu0 0.0
    %4154 = vmatprep.subr.mxu0 0.0
    %4155 = vmatpush1.msra.mxu0 0.0
    %4156 = vmatprep.subr.mxu0 0.0
    %4157 = vmatpush1.msra.mxu0 0.0
    %4158 = vmatprep.subr.mxu0 0.0
    %4159 = vmatpush1.msra.mxu0 0.0
    %4160 = vmatprep.subr.mxu0 0.0
    %4161 = vmatpush1.msra.mxu0 0.0
    %4162 = vmatprep.subr.mxu0 0.0
    %4163 = vmatpush1.msra.mxu0 0.0
    %v4164 = vand.u32 %v4068, 4294901760
    %v4165 = vsub.f32 %v4068, %v4164
    %v4166 = vand.u32 %v4165, 4294901760
    %v4167 = vsub.f32 %v4165, %v4166
    %v4168 = vand.u32 %v4167, 4294901760
    %4169 = vmatprep.mubr.f32.mxu0 %v4168
    %v4170 = vand.u32 %v4042, 4294901760
    %v4171 = vsub.f32 %v4042, %v4170
    %v4172 = vand.u32 %v4171, 4294901760
    %v4173 = vsub.f32 %v4171, %v4172
    %v4174 = vand.u32 %v4173, 4294901760
    %4175 = vmatmul.mubr.f32.gmra.mrb[0].mxu0 %v4174
    %v4176 = vpop.f32.mrb[0].mxu0
    %v4177 = vadd.f32 0.0, %v4176
    %v4178 = vpop.f32.mrb[0].mxu0
    %v4179 = vand.u32 %v4071, 4294901760
    %v4180 = vsub.f32 %v4071, %v4179
    %v4181 = vand.u32 %v4180, 4294901760
    %v4182 = vsub.f32 %v4180, %v4181
    %v4183 = vand.u32 %v4182, 4294901760
    %4184 = vmatprep.mubr.f32.mxu0 %v4183
    %v4185 = vand.u32 %v4049, 4294901760
    %v4186 = vsub.f32 %v4049, %v4185
    %v4187 = vand.u32 %v4186, 4294901760
    %v4188 = vsub.f32 %v4186, %v4187
    %v4189 = vand.u32 %v4188, 4294901760
    %4190 = vmatmul.mubr.f32.gmra.mrb[0].mxu0 %v4189
    %v4191 = vpop.f32.mrb[0].mxu0
    %v4192 = vadd.f32 0.0, %v4191
    %v4193 = vpop.f32.mrb[0].mxu0
    %v4194 = vand.u32 %v4074, 4294901760
    %v4195 = vsub.f32 %v4074, %v4194
    %v4196 = vand.u32 %v4195, 4294901760
    %v4197 = vsub.f32 %v4195, %v4196
    %v4198 = vand.u32 %v4197, 4294901760
    %4199 = vmatprep.mubr.f32.mxu0 %v4198
    %v4200 = vand.u32 %v4056, 4294901760
    %v4201 = vsub.f32 %v4056, %v4200
    %v4202 = vand.u32 %v4201, 4294901760
    %v4203 = vsub.f32 %v4201, %v4202
    %v4204 = vand.u32 %v4203, 4294901760
    %4205 = vmatmul.mubr.f32.gmra.mrb[0].mxu0 %v4204
    %v4206 = vpop.f32.mrb[0].mxu0
    %v4207 = vadd.f32 0.0, %v4206
    %v4208 = vpop.f32.mrb[0].mxu0
    %v4209 = vand.u32 %v4077, 4294901760
    %v4210 = vsub.f32 %v4077, %v4209
    %v4211 = vand.u32 %v4210, 4294901760
    %v4212 = vsub.f32 %v4210, %v4211
    %v4213 = vand.u32 %v4212, 4294901760
    %4214 = vmatprep.mubr.f32.mxu0 %v4213
    %v4215 = vand.u32 %v4063, 4294901760
    %v4216 = vsub.f32 %v4063, %v4215
    %v4217 = vand.u32 %v4216, 4294901760
    %v4218 = vsub.f32 %v4216, %v4217
    %v4219 = vand.u32 %v4218, 4294901760
    %4220 = vmatmul.mubr.f32.gmra.mrb[0].mxu0 %v4219
    %v4221 = vpop.f32.mrb[0].mxu0
    %v4222 = vadd.f32 0.0, %v4221
    %v4223 = vpop.f32.mrb[0].mxu0
    %4224 = vdwg.mxu0
    %4225 = vmatprep.subr.mxu0 0.0
    %v4226 = vand.u32 %v715, 4294901760
    %v4227 = vsub.f32 %v715, %v4226
    %v4228 = vand.u32 %v4227, 4294901760
    %v4229 = vsub.f32 %v4227, %v4228
    %v4230 = vand.u32 %v4229, 4294901760
    %4231 = vmatpush1.msra.mxu0 %v4230
    %4232 = vmatprep.subr.mxu0 0.0
    %v4233 = vand.u32 %v716, 4294901760
    %v4234 = vsub.f32 %v716, %v4233
    %v4235 = vand.u32 %v4234, 4294901760
    %v4236 = vsub.f32 %v4234, %v4235
    %v4237 = vand.u32 %v4236, 4294901760
    %4238 = vmatpush1.msra.mxu0 %v4237
    %4239 = vmatprep.subr.mxu0 0.0
    %v4240 = vand.u32 %v717, 4294901760
    %v4241 = vsub.f32 %v717, %v4240
    %v4242 = vand.u32 %v4241, 4294901760
    %v4243 = vsub.f32 %v4241, %v4242
    %v4244 = vand.u32 %v4243, 4294901760
    %4245 = vmatpush1.msra.mxu0 %v4244
    %4246 = vmatprep.subr.mxu0 0.0
    %v4247 = vand.u32 %v718, 4294901760
    %v4248 = vsub.f32 %v718, %v4247
    %v4249 = vand.u32 %v4248, 4294901760
    %v4250 = vsub.f32 %v4248, %v4249
    %v4251 = vand.u32 %v4250, 4294901760
    %4252 = vmatpush1.msra.mxu0 %v4251
    %4253 = vmatprep.subr.mxu0 0.0
    %v4254 = vand.u32 %v719, 4294901760
    %v4255 = vsub.f32 %v719, %v4254
    %v4256 = vand.u32 %v4255, 4294901760
    %v4257 = vsub.f32 %v4255, %v4256
    %v4258 = vand.u32 %v4257, 4294901760
    %4259 = vmatpush1.msra.mxu0 %v4258
    %4260 = vmatprep.subr.mxu0 0.0
    %v4261 = vand.u32 %v720, 4294901760
    %v4262 = vsub.f32 %v720, %v4261
    %v4263 = vand.u32 %v4262, 4294901760
    %v4264 = vsub.f32 %v4262, %v4263
    %v4265 = vand.u32 %v4264, 4294901760
    %4266 = vmatpush1.msra.mxu0 %v4265
    %4267 = vmatprep.subr.mxu0 0.0
    %v4268 = vand.u32 %v721, 4294901760
    %v4269 = vsub.f32 %v721, %v4268
    %v4270 = vand.u32 %v4269, 4294901760
    %v4271 = vsub.f32 %v4269, %v4270
    %v4272 = vand.u32 %v4271, 4294901760
    %4273 = vmatpush1.msra.mxu0 %v4272
    %4274 = vmatprep.subr.mxu0 0.0
    %v4275 = vand.u32 %v722, 4294901760
    %v4276 = vsub.f32 %v722, %v4275
    %v4277 = vand.u32 %v4276, 4294901760
    %v4278 = vsub.f32 %v4276, %v4277
    %v4279 = vand.u32 %v4278, 4294901760
    %4280 = vmatpush1.msra.mxu0 %v4279
    %4281 = vmatprep.subr.mxu0 0.0
    %v4282 = vand.u32 %v723, 4294901760
    %v4283 = vsub.f32 %v723, %v4282
    %v4284 = vand.u32 %v4283, 4294901760
    %v4285 = vsub.f32 %v4283, %v4284
    %v4286 = vand.u32 %v4285, 4294901760
    %4287 = vmatpush1.msra.mxu0 %v4286
    %4288 = vmatprep.subr.mxu0 0.0
    %v4289 = vand.u32 %v724, 4294901760
    %v4290 = vsub.f32 %v724, %v4289
    %v4291 = vand.u32 %v4290, 4294901760
    %v4292 = vsub.f32 %v4290, %v4291
    %v4293 = vand.u32 %v4292, 4294901760
    %4294 = vmatpush1.msra.mxu0 %v4293
    %4295 = vmatprep.subr.mxu0 0.0
    %v4296 = vand.u32 %v725, 4294901760
    %v4297 = vsub.f32 %v725, %v4296
    %v4298 = vand.u32 %v4297, 4294901760
    %v4299 = vsub.f32 %v4297, %v4298
    %v4300 = vand.u32 %v4299, 4294901760
    %4301 = vmatpush1.msra.mxu0 %v4300
    %4302 = vmatprep.subr.mxu0 0.0
    %v4303 = vand.u32 %v726, 4294901760
    %v4304 = vsub.f32 %v726, %v4303
    %v4305 = vand.u32 %v4304, 4294901760
    %v4306 = vsub.f32 %v4304, %v4305
    %v4307 = vand.u32 %v4306, 4294901760
    %4308 = vmatpush1.msra.mxu0 %v4307
    %4309 = vmatprep.subr.mxu0 0.0
    %v4310 = vand.u32 %v727, 4294901760
    %v4311 = vsub.f32 %v727, %v4310
    %v4312 = vand.u32 %v4311, 4294901760
    %v4313 = vsub.f32 %v4311, %v4312
    %v4314 = vand.u32 %v4313, 4294901760
    %4315 = vmatpush1.msra.mxu0 %v4314
    %4316 = vmatprep.subr.mxu0 0.0
    %v4317 = vand.u32 %v728, 4294901760
    %v4318 = vsub.f32 %v728, %v4317
    %v4319 = vand.u32 %v4318, 4294901760
    %v4320 = vsub.f32 %v4318, %v4319
    %v4321 = vand.u32 %v4320, 4294901760
    %4322 = vmatpush1.msra.mxu0 %v4321
    %4323 = vmatprep.subr.mxu0 0.0
    %v4324 = vand.u32 %v729, 4294901760
    %v4325 = vsub.f32 %v729, %v4324
    %v4326 = vand.u32 %v4325, 4294901760
    %v4327 = vsub.f32 %v4325, %v4326
    %v4328 = vand.u32 %v4327, 4294901760
    %4329 = vmatpush1.msra.mxu0 %v4328
    %4330 = vmatprep.subr.mxu0 0.0
    %v4331 = vand.u32 %v730, 4294901760
    %v4332 = vsub.f32 %v730, %v4331
    %v4333 = vand.u32 %v4332, 4294901760
    %v4334 = vsub.f32 %v4332, %v4333
    %v4335 = vand.u32 %v4334, 4294901760
    %4336 = vmatpush1.msra.mxu0 %v4335
    %4337 = vmatprep.subr.mxu0 0.0
    %v4338 = vand.u32 %v731, 4294901760
    %v4339 = vsub.f32 %v731, %v4338
    %v4340 = vand.u32 %v4339, 4294901760
    %v4341 = vsub.f32 %v4339, %v4340
    %v4342 = vand.u32 %v4341, 4294901760
    %4343 = vmatpush1.msra.mxu0 %v4342
    %4344 = vmatprep.subr.mxu0 0.0
    %v4345 = vand.u32 %v732, 4294901760
    %v4346 = vsub.f32 %v732, %v4345
    %v4347 = vand.u32 %v4346, 4294901760
    %v4348 = vsub.f32 %v4346, %v4347
    %v4349 = vand.u32 %v4348, 4294901760
    %4350 = vmatpush1.msra.mxu0 %v4349
    %4351 = vmatprep.subr.mxu0 0.0
    %v4352 = vand.u32 %v733, 4294901760
    %v4353 = vsub.f32 %v733, %v4352
    %v4354 = vand.u32 %v4353, 4294901760
    %v4355 = vsub.f32 %v4353, %v4354
    %v4356 = vand.u32 %v4355, 4294901760
    %4357 = vmatpush1.msra.mxu0 %v4356
    %4358 = vmatprep.subr.mxu0 0.0
    %v4359 = vand.u32 %v734, 4294901760
    %v4360 = vsub.f32 %v734, %v4359
    %v4361 = vand.u32 %v4360, 4294901760
    %v4362 = vsub.f32 %v4360, %v4361
    %v4363 = vand.u32 %v4362, 4294901760
    %4364 = vmatpush1.msra.mxu0 %v4363
    %4365 = vmatprep.subr.mxu0 0.0
    %v4366 = vand.u32 %v735, 4294901760
    %v4367 = vsub.f32 %v735, %v4366
    %v4368 = vand.u32 %v4367, 4294901760
    %v4369 = vsub.f32 %v4367, %v4368
    %v4370 = vand.u32 %v4369, 4294901760
    %4371 = vmatpush1.msra.mxu0 %v4370
    %4372 = vmatprep.subr.mxu0 0.0
    %4373 = vmatpush1.msra.mxu0 0.0
    %4374 = vmatprep.subr.mxu0 0.0
    %4375 = vmatpush1.msra.mxu0 0.0
    %4376 = vmatprep.subr.mxu0 0.0
    %4377 = vmatpush1.msra.mxu0 0.0
    %4378 = vmatprep.subr.mxu0 0.0
    %4379 = vmatpush1.msra.mxu0 0.0
    %4380 = vmatprep.subr.mxu0 0.0
    %4381 = vmatpush1.msra.mxu0 0.0
    %4382 = vmatprep.subr.mxu0 0.0
    %4383 = vmatpush1.msra.mxu0 0.0
    %4384 = vmatprep.subr.mxu0 0.0
    %4385 = vmatpush1.msra.mxu0 0.0
    %4386 = vmatprep.subr.mxu0 0.0
    %4387 = vmatpush1.msra.mxu0 0.0
    %4388 = vmatprep.subr.mxu0 0.0
    %4389 = vmatpush1.msra.mxu0 0.0
    %4390 = vmatprep.subr.mxu0 0.0
    %4391 = vmatpush1.msra.mxu0 0.0
    %4392 = vmatprep.subr.mxu0 0.0
    %4393 = vmatpush1.msra.mxu0 0.0
    %v4394 = vand.u32 %v4068, 4294901760
    %4395 = vmatprep.mubr.f32.mxu0 %v4394
    %v4396 = vand.u32 %v4042, 4294901760
    %4397 = vmatmul.mubr.f32.gmra.mrb[0].mxu0 %v4396
    %v4398 = vpop.f32.mrb[0].mxu0
    %v4399 = vadd.f32 %v4177, %v4398
    %v4400 = vpop.f32.mrb[0].mxu0
    %v4401 = vand.u32 %v4071, 4294901760
    %4402 = vmatprep.mubr.f32.mxu0 %v4401
    %v4403 = vand.u32 %v4049, 4294901760
    %4404 = vmatmul.mubr.f32.gmra.mrb[0].mxu0 %v4403
    %v4405 = vpop.f32.mrb[0].mxu0
    %v4406 = vadd.f32 %v4192, %v4405
    %v4407 = vpop.f32.mrb[0].mxu0
    %v4408 = vand.u32 %v4074, 4294901760
    %4409 = vmatprep.mubr.f32.mxu0 %v4408
    %v4410 = vand.u32 %v4056, 4294901760
    %4411 = vmatmul.mubr.f32.gmra.mrb[0].mxu0 %v4410
    %v4412 = vpop.f32.mrb[0].mxu0
    %v4413 = vadd.f32 %v4207, %v4412
    %v4414 = vpop.f32.mrb[0].mxu0
    %v4415 = vand.u32 %v4077, 4294901760
    %4416 = vmatprep.mubr.f32.mxu0 %v4415
    %v4417 = vand.u32 %v4063, 4294901760
    %4418 = vmatmul.mubr.f32.gmra.mrb[0].mxu0 %v4417
    %v4419 = vpop.f32.mrb[0].mxu0
    %v4420 = vadd.f32 %v4222, %v4419
    %v4421 = vpop.f32.mrb[0].mxu0
    %4422 = vdwg.mxu0
    %4423 = vmatprep.subr.mxu0 0.0
    %v4424 = vand.u32 %v715, 4294901760
    %v4425 = vsub.f32 %v715, %v4424
    %4426 = vmatpush1.msra.mxu0 %v4425
    %4427 = vmatprep.subr.mxu0 0.0
    %v4428 = vand.u32 %v716, 4294901760
    %v4429 = vsub.f32 %v716, %v4428
    %4430 = vmatpush1.msra.mxu0 %v4429
    %4431 = vmatprep.subr.mxu0 0.0
    %v4432 = vand.u32 %v717, 4294901760
    %v4433 = vsub.f32 %v717, %v4432
    %4434 = vmatpush1.msra.mxu0 %v4433
    %4435 = vmatprep.subr.mxu0 0.0
    %v4436 = vand.u32 %v718, 4294901760
    %v4437 = vsub.f32 %v718, %v4436
    %4438 = vmatpush1.msra.mxu0 %v4437
    %4439 = vmatprep.subr.mxu0 0.0
    %v4440 = vand.u32 %v719, 4294901760
    %v4441 = vsub.f32 %v719, %v4440
    %4442 = vmatpush1.msra.mxu0 %v4441
    %4443 = vmatprep.subr.mxu0 0.0
    %v4444 = vand.u32 %v720, 4294901760
    %v4445 = vsub.f32 %v720, %v4444
    %4446 = vmatpush1.msra.mxu0 %v4445
    %4447 = vmatprep.subr.mxu0 0.0
    %v4448 = vand.u32 %v721, 4294901760
    %v4449 = vsub.f32 %v721, %v4448
    %4450 = vmatpush1.msra.mxu0 %v4449
    %4451 = vmatprep.subr.mxu0 0.0
    %v4452 = vand.u32 %v722, 4294901760
    %v4453 = vsub.f32 %v722, %v4452
    %4454 = vmatpush1.msra.mxu0 %v4453
    %4455 = vmatprep.subr.mxu0 0.0
    %v4456 = vand.u32 %v723, 4294901760
    %v4457 = vsub.f32 %v723, %v4456
    %4458 = vmatpush1.msra.mxu0 %v4457
    %4459 = vmatprep.subr.mxu0 0.0
    %v4460 = vand.u32 %v724, 4294901760
    %v4461 = vsub.f32 %v724, %v4460
    %4462 = vmatpush1.msra.mxu0 %v4461
    %4463 = vmatprep.subr.mxu0 0.0
    %v4464 = vand.u32 %v725, 4294901760
    %v4465 = vsub.f32 %v725, %v4464
    %4466 = vmatpush1.msra.mxu0 %v4465
    %4467 = vmatprep.subr.mxu0 0.0
    %v4468 = vand.u32 %v726, 4294901760
    %v4469 = vsub.f32 %v726, %v4468
    %4470 = vmatpush1.msra.mxu0 %v4469
    %4471 = vmatprep.subr.mxu0 0.0
    %v4472 = vand.u32 %v727, 4294901760
    %v4473 = vsub.f32 %v727, %v4472
    %4474 = vmatpush1.msra.mxu0 %v4473
    %4475 = vmatprep.subr.mxu0 0.0
    %v4476 = vand.u32 %v728, 4294901760
    %v4477 = vsub.f32 %v728, %v4476
    %4478 = vmatpush1.msra.mxu0 %v4477
    %4479 = vmatprep.subr.mxu0 0.0
    %v4480 = vand.u32 %v729, 4294901760
    %v4481 = vsub.f32 %v729, %v4480
    %4482 = vmatpush1.msra.mxu0 %v4481
    %4483 = vmatprep.subr.mxu0 0.0
    %v4484 = vand.u32 %v730, 4294901760
    %v4485 = vsub.f32 %v730, %v4484
    %4486 = vmatpush1.msra.mxu0 %v4485
    %4487 = vmatprep.subr.mxu0 0.0
    %v4488 = vand.u32 %v731, 4294901760
    %v4489 = vsub.f32 %v731, %v4488
    %4490 = vmatpush1.msra.mxu0 %v4489
    %4491 = vmatprep.subr.mxu0 0.0
    %v4492 = vand.u32 %v732, 4294901760
    %v4493 = vsub.f32 %v732, %v4492
    %4494 = vmatpush1.msra.mxu0 %v4493
    %4495 = vmatprep.subr.mxu0 0.0
    %v4496 = vand.u32 %v733, 4294901760
    %v4497 = vsub.f32 %v733, %v4496
    %4498 = vmatpush1.msra.mxu0 %v4497
    %4499 = vmatprep.subr.mxu0 0.0
    %v4500 = vand.u32 %v734, 4294901760
    %v4501 = vsub.f32 %v734, %v4500
    %4502 = vmatpush1.msra.mxu0 %v4501
    %4503 = vmatprep.subr.mxu0 0.0
    %v4504 = vand.u32 %v735, 4294901760
    %v4505 = vsub.f32 %v735, %v4504
    %4506 = vmatpush1.msra.mxu0 %v4505
    %4507 = vmatprep.subr.mxu0 0.0
    %4508 = vmatpush1.msra.mxu0 0.0
    %4509 = vmatprep.subr.mxu0 0.0
    %4510 = vmatpush1.msra.mxu0 0.0
    %4511 = vmatprep.subr.mxu0 0.0
    %4512 = vmatpush1.msra.mxu0 0.0
    %4513 = vmatprep.subr.mxu0 0.0
    %4514 = vmatpush1.msra.mxu0 0.0
    %4515 = vmatprep.subr.mxu0 0.0
    %4516 = vmatpush1.msra.mxu0 0.0
    %4517 = vmatprep.subr.mxu0 0.0
    %4518 = vmatpush1.msra.mxu0 0.0
    %4519 = vmatprep.subr.mxu0 0.0
    %4520 = vmatpush1.msra.mxu0 0.0
    %4521 = vmatprep.subr.mxu0 0.0
    %4522 = vmatpush1.msra.mxu0 0.0
    %4523 = vmatprep.subr.mxu0 0.0
    %4524 = vmatpush1.msra.mxu0 0.0
    %4525 = vmatprep.subr.mxu0 0.0
    %4526 = vmatpush1.msra.mxu0 0.0
    %4527 = vmatprep.subr.mxu0 0.0
    %4528 = vmatpush1.msra.mxu0 0.0
    %v4529 = vand.u32 %v4068, 4294901760
    %v4530 = vsub.f32 %v4068, %v4529
    %4531 = vmatprep.mubr.f32.mxu0 %v4530
    %v4532 = vand.u32 %v4042, 4294901760
    %v4533 = vsub.f32 %v4042, %v4532
    %4534 = vmatmul.mubr.f32.gmra.mrb[0].mxu0 %v4533
    %v4535 = vpop.f32.mrb[0].mxu0
    %v4536 = vadd.f32 %v4399, %v4535
    %v4537 = vpop.f32.mrb[0].mxu0
    %v4538 = vand.u32 %v4071, 4294901760
    %v4539 = vsub.f32 %v4071, %v4538
    %4540 = vmatprep.mubr.f32.mxu0 %v4539
    %v4541 = vand.u32 %v4049, 4294901760
    %v4542 = vsub.f32 %v4049, %v4541
    %4543 = vmatmul.mubr.f32.gmra.mrb[0].mxu0 %v4542
    %v4544 = vpop.f32.mrb[0].mxu0
    %v4545 = vadd.f32 %v4406, %v4544
    %v4546 = vpop.f32.mrb[0].mxu0
    %v4547 = vand.u32 %v4074, 4294901760
    %v4548 = vsub.f32 %v4074, %v4547
    %4549 = vmatprep.mubr.f32.mxu0 %v4548
    %v4550 = vand.u32 %v4056, 4294901760
    %v4551 = vsub.f32 %v4056, %v4550
    %4552 = vmatmul.mubr.f32.gmra.mrb[0].mxu0 %v4551
    %v4553 = vpop.f32.mrb[0].mxu0
    %v4554 = vadd.f32 %v4413, %v4553
    %v4555 = vpop.f32.mrb[0].mxu0
    %v4556 = vand.u32 %v4077, 4294901760
    %v4557 = vsub.f32 %v4077, %v4556
    %4558 = vmatprep.mubr.f32.mxu0 %v4557
    %v4559 = vand.u32 %v4063, 4294901760
    %v4560 = vsub.f32 %v4063, %v4559
    %4561 = vmatmul.mubr.f32.gmra.mrb[0].mxu0 %v4560
    %v4562 = vpop.f32.mrb[0].mxu0
    %v4563 = vadd.f32 %v4420, %v4562
    %v4564 = vpop.f32.mrb[0].mxu0
    %4565 = vdwg.mxu0
    %4566 = vmatprep.subr.mxu0 0.0
    %v4567 = vand.u32 %v715, 4294901760
    %4568 = vmatpush1.msra.mxu0 %v4567
    %4569 = vmatprep.subr.mxu0 0.0
    %v4570 = vand.u32 %v716, 4294901760
    %4571 = vmatpush1.msra.mxu0 %v4570
    %4572 = vmatprep.subr.mxu0 0.0
    %v4573 = vand.u32 %v717, 4294901760
    %4574 = vmatpush1.msra.mxu0 %v4573
    %4575 = vmatprep.subr.mxu0 0.0
    %v4576 = vand.u32 %v718, 4294901760
    %4577 = vmatpush1.msra.mxu0 %v4576
    %4578 = vmatprep.subr.mxu0 0.0
    %v4579 = vand.u32 %v719, 4294901760
    %4580 = vmatpush1.msra.mxu0 %v4579
    %4581 = vmatprep.subr.mxu0 0.0
    %v4582 = vand.u32 %v720, 4294901760
    %4583 = vmatpush1.msra.mxu0 %v4582
    %4584 = vmatprep.subr.mxu0 0.0
    %v4585 = vand.u32 %v721, 4294901760
    %4586 = vmatpush1.msra.mxu0 %v4585
    %4587 = vmatprep.subr.mxu0 0.0
    %v4588 = vand.u32 %v722, 4294901760
    %4589 = vmatpush1.msra.mxu0 %v4588
    %4590 = vmatprep.subr.mxu0 0.0
    %v4591 = vand.u32 %v723, 4294901760
    %4592 = vmatpush1.msra.mxu0 %v4591
    %4593 = vmatprep.subr.mxu0 0.0
    %v4594 = vand.u32 %v724, 4294901760
    %4595 = vmatpush1.msra.mxu0 %v4594
    %4596 = vmatprep.subr.mxu0 0.0
    %v4597 = vand.u32 %v725, 4294901760
    %4598 = vmatpush1.msra.mxu0 %v4597
    %4599 = vmatprep.subr.mxu0 0.0
    %v4600 = vand.u32 %v726, 4294901760
    %4601 = vmatpush1.msra.mxu0 %v4600
    %4602 = vmatprep.subr.mxu0 0.0
    %v4603 = vand.u32 %v727, 4294901760
    %4604 = vmatpush1.msra.mxu0 %v4603
    %4605 = vmatprep.subr.mxu0 0.0
    %v4606 = vand.u32 %v728, 4294901760
    %4607 = vmatpush1.msra.mxu0 %v4606
    %4608 = vmatprep.subr.mxu0 0.0
    %v4609 = vand.u32 %v729, 4294901760
    %4610 = vmatpush1.msra.mxu0 %v4609
    %4611 = vmatprep.subr.mxu0 0.0
    %v4612 = vand.u32 %v730, 4294901760
    %4613 = vmatpush1.msra.mxu0 %v4612
    %4614 = vmatprep.subr.mxu0 0.0
    %v4615 = vand.u32 %v731, 4294901760
    %4616 = vmatpush1.msra.mxu0 %v4615
    %4617 = vmatprep.subr.mxu0 0.0
    %v4618 = vand.u32 %v732, 4294901760
    %4619 = vmatpush1.msra.mxu0 %v4618
    %4620 = vmatprep.subr.mxu0 0.0
    %v4621 = vand.u32 %v733, 4294901760
    %4622 = vmatpush1.msra.mxu0 %v4621
    %4623 = vmatprep.subr.mxu0 0.0
    %v4624 = vand.u32 %v734, 4294901760
    %4625 = vmatpush1.msra.mxu0 %v4624
    %4626 = vmatprep.subr.mxu0 0.0
    %v4627 = vand.u32 %v735, 4294901760
    %4628 = vmatpush1.msra.mxu0 %v4627
    %4629 = vmatprep.subr.mxu0 0.0
    %4630 = vmatpush1.msra.mxu0 0.0
    %4631 = vmatprep.subr.mxu0 0.0
    %4632 = vmatpush1.msra.mxu0 0.0
    %4633 = vmatprep.subr.mxu0 0.0
    %4634 = vmatpush1.msra.mxu0 0.0
    %4635 = vmatprep.subr.mxu0 0.0
    %4636 = vmatpush1.msra.mxu0 0.0
    %4637 = vmatprep.subr.mxu0 0.0
    %4638 = vmatpush1.msra.mxu0 0.0
    %4639 = vmatprep.subr.mxu0 0.0
    %4640 = vmatpush1.msra.mxu0 0.0
    %4641 = vmatprep.subr.mxu0 0.0
    %4642 = vmatpush1.msra.mxu0 0.0
    %4643 = vmatprep.subr.mxu0 0.0
    %4644 = vmatpush1.msra.mxu0 0.0
    %4645 = vmatprep.subr.mxu0 0.0
    %4646 = vmatpush1.msra.mxu0 0.0
    %4647 = vmatprep.subr.mxu0 0.0
    %4648 = vmatpush1.msra.mxu0 0.0
    %4649 = vmatprep.subr.mxu0 0.0
    %4650 = vmatpush1.msra.mxu0 0.0
    %v4651 = vand.u32 %v4068, 4294901760
    %v4652 = vsub.f32 %v4068, %v4651
    %v4653 = vand.u32 %v4652, 4294901760
    %4654 = vmatprep.mubr.f32.mxu0 %v4653
    %v4655 = vand.u32 %v4042, 4294901760
    %v4656 = vsub.f32 %v4042, %v4655
    %v4657 = vand.u32 %v4656, 4294901760
    %4658 = vmatmul.mubr.f32.gmra.mrb[0].mxu0 %v4657
    %v4659 = vpop.f32.mrb[0].mxu0
    %v4660 = vadd.f32 %v4536, %v4659
    %v4661 = vpop.f32.mrb[0].mxu0
    %v4662 = vand.u32 %v4071, 4294901760
    %v4663 = vsub.f32 %v4071, %v4662
    %v4664 = vand.u32 %v4663, 4294901760
    %4665 = vmatprep.mubr.f32.mxu0 %v4664
    %v4666 = vand.u32 %v4049, 4294901760
    %v4667 = vsub.f32 %v4049, %v4666
    %v4668 = vand.u32 %v4667, 4294901760
    %4669 = vmatmul.mubr.f32.gmra.mrb[0].mxu0 %v4668
    %v4670 = vpop.f32.mrb[0].mxu0
    %v4671 = vadd.f32 %v4545, %v4670
    %v4672 = vpop.f32.mrb[0].mxu0
    %v4673 = vand.u32 %v4074, 4294901760
    %v4674 = vsub.f32 %v4074, %v4673
    %v4675 = vand.u32 %v4674, 4294901760
    %4676 = vmatprep.mubr.f32.mxu0 %v4675
    %v4677 = vand.u32 %v4056, 4294901760
    %v4678 = vsub.f32 %v4056, %v4677
    %v4679 = vand.u32 %v4678, 4294901760
    %4680 = vmatmul.mubr.f32.gmra.mrb[0].mxu0 %v4679
    %v4681 = vpop.f32.mrb[0].mxu0
    %v4682 = vadd.f32 %v4554, %v4681
    %v4683 = vpop.f32.mrb[0].mxu0
    %v4684 = vand.u32 %v4077, 4294901760
    %v4685 = vsub.f32 %v4077, %v4684
    %v4686 = vand.u32 %v4685, 4294901760
    %4687 = vmatprep.mubr.f32.mxu0 %v4686
    %v4688 = vand.u32 %v4063, 4294901760
    %v4689 = vsub.f32 %v4063, %v4688
    %v4690 = vand.u32 %v4689, 4294901760
    %4691 = vmatmul.mubr.f32.gmra.mrb[0].mxu0 %v4690
    %v4692 = vpop.f32.mrb[0].mxu0
    %v4693 = vadd.f32 %v4563, %v4692
    %v4694 = vpop.f32.mrb[0].mxu0
    %4695 = vdwg.mxu0
    %4696 = vmatprep.subr.mxu0 0.0
    %v4697 = vand.u32 %v715, 4294901760
    %v4698 = vsub.f32 %v715, %v4697
    %v4699 = vand.u32 %v4698, 4294901760
    %4700 = vmatpush1.msra.mxu0 %v4699
    %4701 = vmatprep.subr.mxu0 0.0
    %v4702 = vand.u32 %v716, 4294901760
    %v4703 = vsub.f32 %v716, %v4702
    %v4704 = vand.u32 %v4703, 4294901760
    %4705 = vmatpush1.msra.mxu0 %v4704
    %4706 = vmatprep.subr.mxu0 0.0
    %v4707 = vand.u32 %v717, 4294901760
    %v4708 = vsub.f32 %v717, %v4707
    %v4709 = vand.u32 %v4708, 4294901760
    %4710 = vmatpush1.msra.mxu0 %v4709
    %4711 = vmatprep.subr.mxu0 0.0
    %v4712 = vand.u32 %v718, 4294901760
    %v4713 = vsub.f32 %v718, %v4712
    %v4714 = vand.u32 %v4713, 4294901760
    %4715 = vmatpush1.msra.mxu0 %v4714
    %4716 = vmatprep.subr.mxu0 0.0
    %v4717 = vand.u32 %v719, 4294901760
    %v4718 = vsub.f32 %v719, %v4717
    %v4719 = vand.u32 %v4718, 4294901760
    %4720 = vmatpush1.msra.mxu0 %v4719
    %4721 = vmatprep.subr.mxu0 0.0
    %v4722 = vand.u32 %v720, 4294901760
    %v4723 = vsub.f32 %v720, %v4722
    %v4724 = vand.u32 %v4723, 4294901760
    %4725 = vmatpush1.msra.mxu0 %v4724
    %4726 = vmatprep.subr.mxu0 0.0
    %v4727 = vand.u32 %v721, 4294901760
    %v4728 = vsub.f32 %v721, %v4727
    %v4729 = vand.u32 %v4728, 4294901760
    %4730 = vmatpush1.msra.mxu0 %v4729
    %4731 = vmatprep.subr.mxu0 0.0
    %v4732 = vand.u32 %v722, 4294901760
    %v4733 = vsub.f32 %v722, %v4732
    %v4734 = vand.u32 %v4733, 4294901760
    %4735 = vmatpush1.msra.mxu0 %v4734
    %4736 = vmatprep.subr.mxu0 0.0
    %v4737 = vand.u32 %v723, 4294901760
    %v4738 = vsub.f32 %v723, %v4737
    %v4739 = vand.u32 %v4738, 4294901760
    %4740 = vmatpush1.msra.mxu0 %v4739
    %4741 = vmatprep.subr.mxu0 0.0
    %v4742 = vand.u32 %v724, 4294901760
    %v4743 = vsub.f32 %v724, %v4742
    %v4744 = vand.u32 %v4743, 4294901760
    %4745 = vmatpush1.msra.mxu0 %v4744
    %4746 = vmatprep.subr.mxu0 0.0
    %v4747 = vand.u32 %v725, 4294901760
    %v4748 = vsub.f32 %v725, %v4747
    %v4749 = vand.u32 %v4748, 4294901760
    %4750 = vmatpush1.msra.mxu0 %v4749
    %4751 = vmatprep.subr.mxu0 0.0
    %v4752 = vand.u32 %v726, 4294901760
    %v4753 = vsub.f32 %v726, %v4752
    %v4754 = vand.u32 %v4753, 4294901760
    %4755 = vmatpush1.msra.mxu0 %v4754
    %4756 = vmatprep.subr.mxu0 0.0
    %v4757 = vand.u32 %v727, 4294901760
    %v4758 = vsub.f32 %v727, %v4757
    %v4759 = vand.u32 %v4758, 4294901760
    %4760 = vmatpush1.msra.mxu0 %v4759
    %4761 = vmatprep.subr.mxu0 0.0
    %v4762 = vand.u32 %v728, 4294901760
    %v4763 = vsub.f32 %v728, %v4762
    %v4764 = vand.u32 %v4763, 4294901760
    %4765 = vmatpush1.msra.mxu0 %v4764
    %4766 = vmatprep.subr.mxu0 0.0
    %v4767 = vand.u32 %v729, 4294901760
    %v4768 = vsub.f32 %v729, %v4767
    %v4769 = vand.u32 %v4768, 4294901760
    %4770 = vmatpush1.msra.mxu0 %v4769
    %4771 = vmatprep.subr.mxu0 0.0
    %v4772 = vand.u32 %v730, 4294901760
    %v4773 = vsub.f32 %v730, %v4772
    %v4774 = vand.u32 %v4773, 4294901760
    %4775 = vmatpush1.msra.mxu0 %v4774
    %4776 = vmatprep.subr.mxu0 0.0
    %v4777 = vand.u32 %v731, 4294901760
    %v4778 = vsub.f32 %v731, %v4777
    %v4779 = vand.u32 %v4778, 4294901760
    %4780 = vmatpush1.msra.mxu0 %v4779
    %4781 = vmatprep.subr.mxu0 0.0
    %v4782 = vand.u32 %v732, 4294901760
    %v4783 = vsub.f32 %v732, %v4782
    %v4784 = vand.u32 %v4783, 4294901760
    %4785 = vmatpush1.msra.mxu0 %v4784
    %4786 = vmatprep.subr.mxu0 0.0
    %v4787 = vand.u32 %v733, 4294901760
    %v4788 = vsub.f32 %v733, %v4787
    %v4789 = vand.u32 %v4788, 4294901760
    %4790 = vmatpush1.msra.mxu0 %v4789
    %4791 = vmatprep.subr.mxu0 0.0
    %v4792 = vand.u32 %v734, 4294901760
    %v4793 = vsub.f32 %v734, %v4792
    %v4794 = vand.u32 %v4793, 4294901760
    %4795 = vmatpush1.msra.mxu0 %v4794
    %4796 = vmatprep.subr.mxu0 0.0
    %v4797 = vand.u32 %v735, 4294901760
    %v4798 = vsub.f32 %v735, %v4797
    %v4799 = vand.u32 %v4798, 4294901760
    %4800 = vmatpush1.msra.mxu0 %v4799
    %4801 = vmatprep.subr.mxu0 0.0
    %4802 = vmatpush1.msra.mxu0 0.0
    %4803 = vmatprep.subr.mxu0 0.0
    %4804 = vmatpush1.msra.mxu0 0.0
    %4805 = vmatprep.subr.mxu0 0.0
    %4806 = vmatpush1.msra.mxu0 0.0
    %4807 = vmatprep.subr.mxu0 0.0
    %4808 = vmatpush1.msra.mxu0 0.0
    %4809 = vmatprep.subr.mxu0 0.0
    %4810 = vmatpush1.msra.mxu0 0.0
    %4811 = vmatprep.subr.mxu0 0.0
    %4812 = vmatpush1.msra.mxu0 0.0
    %4813 = vmatprep.subr.mxu0 0.0
    %4814 = vmatpush1.msra.mxu0 0.0
    %4815 = vmatprep.subr.mxu0 0.0
    %4816 = vmatpush1.msra.mxu0 0.0
    %4817 = vmatprep.subr.mxu0 0.0
    %4818 = vmatpush1.msra.mxu0 0.0
    %4819 = vmatprep.subr.mxu0 0.0
    %4820 = vmatpush1.msra.mxu0 0.0
    %4821 = vmatprep.subr.mxu0 0.0
    %4822 = vmatpush1.msra.mxu0 0.0
    %v4823 = vand.u32 %v4068, 4294901760
    %4824 = vmatprep.mubr.f32.mxu0 %v4823
    %v4825 = vand.u32 %v4042, 4294901760
    %4826 = vmatmul.mubr.f32.gmra.mrb[0].mxu0 %v4825
    %v4827 = vpop.f32.mrb[0].mxu0
    %v4828 = vadd.f32 %v4660, %v4827
    %v4829 = vpop.f32.mrb[0].mxu0
    %v4830 = vand.u32 %v4071, 4294901760
    %4831 = vmatprep.mubr.f32.mxu0 %v4830
    %v4832 = vand.u32 %v4049, 4294901760
    %4833 = vmatmul.mubr.f32.gmra.mrb[0].mxu0 %v4832
    %v4834 = vpop.f32.mrb[0].mxu0
    %v4835 = vadd.f32 %v4671, %v4834
    %v4836 = vpop.f32.mrb[0].mxu0
    %v4837 = vand.u32 %v4074, 4294901760
    %4838 = vmatprep.mubr.f32.mxu0 %v4837
    %v4839 = vand.u32 %v4056, 4294901760
    %4840 = vmatmul.mubr.f32.gmra.mrb[0].mxu0 %v4839
    %v4841 = vpop.f32.mrb[0].mxu0
    %v4842 = vadd.f32 %v4682, %v4841
    %v4843 = vpop.f32.mrb[0].mxu0
    %v4844 = vand.u32 %v4077, 4294901760
    %4845 = vmatprep.mubr.f32.mxu0 %v4844
    %v4846 = vand.u32 %v4063, 4294901760
    %4847 = vmatmul.mubr.f32.gmra.mrb[0].mxu0 %v4846
    %v4848 = vpop.f32.mrb[0].mxu0
    %v4849 = vadd.f32 %v4693, %v4848
    %v4850 = vpop.f32.mrb[0].mxu0
    %4851 = vdwg.mxu0
    %4852 = vmatprep.subr.mxu0 0.0
    %v4853 = vand.u32 %v715, 4294901760
    %4854 = vmatpush1.msra.mxu0 %v4853
    %4855 = vmatprep.subr.mxu0 0.0
    %v4856 = vand.u32 %v716, 4294901760
    %4857 = vmatpush1.msra.mxu0 %v4856
    %4858 = vmatprep.subr.mxu0 0.0
    %v4859 = vand.u32 %v717, 4294901760
    %4860 = vmatpush1.msra.mxu0 %v4859
    %4861 = vmatprep.subr.mxu0 0.0
    %v4862 = vand.u32 %v718, 4294901760
    %4863 = vmatpush1.msra.mxu0 %v4862
    %4864 = vmatprep.subr.mxu0 0.0
    %v4865 = vand.u32 %v719, 4294901760
    %4866 = vmatpush1.msra.mxu0 %v4865
    %4867 = vmatprep.subr.mxu0 0.0
    %v4868 = vand.u32 %v720, 4294901760
    %4869 = vmatpush1.msra.mxu0 %v4868
    %4870 = vmatprep.subr.mxu0 0.0
    %v4871 = vand.u32 %v721, 4294901760
    %4872 = vmatpush1.msra.mxu0 %v4871
    %4873 = vmatprep.subr.mxu0 0.0
    %v4874 = vand.u32 %v722, 4294901760
    %4875 = vmatpush1.msra.mxu0 %v4874
    %4876 = vmatprep.subr.mxu0 0.0
    %v4877 = vand.u32 %v723, 4294901760
    %4878 = vmatpush1.msra.mxu0 %v4877
    %4879 = vmatprep.subr.mxu0 0.0
    %v4880 = vand.u32 %v724, 4294901760
    %4881 = vmatpush1.msra.mxu0 %v4880
    %4882 = vmatprep.subr.mxu0 0.0
    %v4883 = vand.u32 %v725, 4294901760
    %4884 = vmatpush1.msra.mxu0 %v4883
    %4885 = vmatprep.subr.mxu0 0.0
    %v4886 = vand.u32 %v726, 4294901760
    %4887 = vmatpush1.msra.mxu0 %v4886
    %4888 = vmatprep.subr.mxu0 0.0
    %v4889 = vand.u32 %v727, 4294901760
    %4890 = vmatpush1.msra.mxu0 %v4889
    %4891 = vmatprep.subr.mxu0 0.0
    %v4892 = vand.u32 %v728, 4294901760
    %4893 = vmatpush1.msra.mxu0 %v4892
    %4894 = vmatprep.subr.mxu0 0.0
    %v4895 = vand.u32 %v729, 4294901760
    %4896 = vmatpush1.msra.mxu0 %v4895
    %4897 = vmatprep.subr.mxu0 0.0
    %v4898 = vand.u32 %v730, 4294901760
    %4899 = vmatpush1.msra.mxu0 %v4898
    %4900 = vmatprep.subr.mxu0 0.0
    %v4901 = vand.u32 %v731, 4294901760
    %4902 = vmatpush1.msra.mxu0 %v4901
    %4903 = vmatprep.subr.mxu0 0.0
    %v4904 = vand.u32 %v732, 4294901760
    %4905 = vmatpush1.msra.mxu0 %v4904
    %4906 = vmatprep.subr.mxu0 0.0
    %v4907 = vand.u32 %v733, 4294901760
    %4908 = vmatpush1.msra.mxu0 %v4907
    %4909 = vmatprep.subr.mxu0 0.0
    %v4910 = vand.u32 %v734, 4294901760
    %4911 = vmatpush1.msra.mxu0 %v4910
    %4912 = vmatprep.subr.mxu0 0.0
    %v4913 = vand.u32 %v735, 4294901760
    %4914 = vmatpush1.msra.mxu0 %v4913
    %4915 = vmatprep.subr.mxu0 0.0
    %4916 = vmatpush1.msra.mxu0 0.0
    %4917 = vmatprep.subr.mxu0 0.0
    %4918 = vmatpush1.msra.mxu0 0.0
    %4919 = vmatprep.subr.mxu0 0.0
    %4920 = vmatpush1.msra.mxu0 0.0
    %4921 = vmatprep.subr.mxu0 0.0
    %4922 = vmatpush1.msra.mxu0 0.0
    %4923 = vmatprep.subr.mxu0 0.0
    %4924 = vmatpush1.msra.mxu0 0.0
    %4925 = vmatprep.subr.mxu0 0.0
    %4926 = vmatpush1.msra.mxu0 0.0
    %4927 = vmatprep.subr.mxu0 0.0
    %4928 = vmatpush1.msra.mxu0 0.0
    %4929 = vmatprep.subr.mxu0 0.0
    %4930 = vmatpush1.msra.mxu0 0.0
    %4931 = vmatprep.subr.mxu0 0.0
    %4932 = vmatpush1.msra.mxu0 0.0
    %4933 = vmatprep.subr.mxu0 0.0
    %4934 = vmatpush1.msra.mxu0 0.0
    %4935 = vmatprep.subr.mxu0 0.0
    %4936 = vmatpush1.msra.mxu0 0.0
    %v4937 = vand.u32 %v4068, 4294901760
    %4938 = vmatprep.mubr.f32.mxu0 %v4937
    %v4939 = vand.u32 %v4042, 4294901760
    %4940 = vmatmul.mubr.f32.gmra.mrb[0].mxu0 %v4939
    %v4941 = vpop.f32.mrb[0].mxu0
    %v4942 = vadd.f32 %v4828, %v4941
    %v4943 = vpop.f32.mrb[0].mxu0
    %v4944 = vand.u32 %v4071, 4294901760
    %4945 = vmatprep.mubr.f32.mxu0 %v4944
    %v4946 = vand.u32 %v4049, 4294901760
    %4947 = vmatmul.mubr.f32.gmra.mrb[0].mxu0 %v4946
    %v4948 = vpop.f32.mrb[0].mxu0
    %v4949 = vadd.f32 %v4835, %v4948
    %v4950 = vpop.f32.mrb[0].mxu0
    %v4951 = vand.u32 %v4074, 4294901760
    %4952 = vmatprep.mubr.f32.mxu0 %v4951
    %v4953 = vand.u32 %v4056, 4294901760
    %4954 = vmatmul.mubr.f32.gmra.mrb[0].mxu0 %v4953
    %v4955 = vpop.f32.mrb[0].mxu0
    %v4956 = vadd.f32 %v4842, %v4955
    %v4957 = vpop.f32.mrb[0].mxu0
    %v4958 = vand.u32 %v4077, 4294901760
    %4959 = vmatprep.mubr.f32.mxu0 %v4958
    %v4960 = vand.u32 %v4063, 4294901760
    %4961 = vmatmul.mubr.f32.gmra.mrb[0].mxu0 %v4960
    %v4962 = vpop.f32.mrb[0].mxu0
    %v4963 = vadd.f32 %v4849, %v4962
    %v4964 = vpop.f32.mrb[0].mxu0
    %4965 = vdwg.mxu0
    %v4966 = vpack.c.bf16 %v4949, %v4942
    %v4967 = vpack.c.bf16 %v4963, %v4956
    %v4970 = vunpack.c.l.b16 %v4966
    %v4971 = vunpack.c.h.b16 %v4966
    %v4972 = vunpack.c.l.b16 %v4967
    %v4973 = vunpack.c.h.b16 %v4967
    %v4974 = vpack.c.b16 %v4970, %v4970
    %v4975 = vpack.c.b16 %v4971, %v4971
    %v4976 = vpack.c.b16 %v4972, %v4972
    %v4977 = vpack.c.b16 %v4973, %v4973
    %vm4982 = vcmask 683008
    %4983 = vst.msk [vmem:[#allocation2] sm:$0xf] %vm4982, %v4974
    %4984 = vst.msk [vmem:[#allocation2 + $0x4] sm:$0xf] %vm4982, %v4975
    %4985 = vst.msk [vmem:[#allocation2 + $0x8] sm:$0xf] %vm4982, %v4976
    %vm4986 = vcmask 680960
    %4987 = vst.msk [vmem:[#allocation2 + $0xc] sm:$0x3] %vm4986, %v4977
    %v4988 = vld [vmem:[#allocation2] sm:$0xf]
    %v4989 = vld [vmem:[#allocation2 + $0x4] sm:$0xf]
    %v4990 = vld [vmem:[#allocation2 + $0x8] sm:$0x3]
    %v4991 = vld [vmem:[%s2] sm:$0xff]
    %v4992 = vld [vmem:[%s2 + $0x8] sm:$0xff]
    %v4993 = vld [vmem:[%s2 + $0x10] sm:$0xff]
    %v4994 = vld [vmem:[%s2 + $0x18] sm:$0xff]
    %v4995 = vld [vmem:[%s2 + $0x20] sm:$0xff]
    %v4996 = vld [vmem:[%s2 + $0x28] sm:$0xff]
    %v4997 = vld [vmem:[%s2 + $0x30] sm:$0xff]
    %v4998 = vld [vmem:[%s2 + $0x38] sm:$0xff]
    %v4999 = vld [vmem:[%s2 + $0x40] sm:$0xff]
    %v5000 = vld [vmem:[%s2 + $0x48] sm:$0xff]
    %v5001 = vld [vmem:[%s2 + $0x50] sm:$0x33]
    %v5002 = vld [vmem:[#allocation2] sm:$0xe]
    %v5003 = vld [vmem:[#allocation2 + $0x8] sm:$0x7]
    %s5004 = scalar_lea.vmem %s2, 88
    %v5005 = vld [vmem:[%s5004] sm:$0xff]
    %v5006 = vld [vmem:[%s5004 + $0x8] sm:$0xff]
    %v5007 = vld [vmem:[%s5004 + $0x10] sm:$0xff]
    %v5008 = vld [vmem:[%s5004 + $0x18] sm:$0xff]
    %v5009 = vld [vmem:[%s5004 + $0x20] sm:$0xff]
    %v5010 = vld [vmem:[%s5004 + $0x28] sm:$0xff]
    %v5011 = vld [vmem:[%s5004 + $0x30] sm:$0xff]
    %v5012 = vld [vmem:[%s5004 + $0x38] sm:$0xff]
    %v5013 = vld [vmem:[%s5004 + $0x40] sm:$0xff]
    %v5014 = vld [vmem:[%s5004 + $0x48] sm:$0xff]
    %v5015 = vld [vmem:[%s5004 + $0x50] sm:$0x33]
    %v5019 = vunpack.c.l.b16 %v5002
    %v5020 = vunpack.c.l.b16 %v4989
    %v5021 = vunpack.c.l.b16 %v5003
    %v5022 = vpack.c.b16 %v5020, %v5019
    %v5023 = vpack.c.b16 %v5021, %v5021
    %v5024 = vrot.slane %v5022, 1
    %v5025 = vrot.slane %v5023, 1
    %v5026 = vsel %vm87, %v5024, %v5025
    %v5038 = vunpack.c.l.b16 %v5005
    %v5039 = vunpack.c.h.b16 %v5005
    %v5040 = vunpack.c.l.b16 %v5006
    %v5041 = vunpack.c.h.b16 %v5006
    %v5042 = vunpack.c.l.b16 %v5007
    %v5043 = vunpack.c.h.b16 %v5007
    %v5044 = vunpack.c.l.b16 %v5008
    %v5045 = vunpack.c.h.b16 %v5008
    %v5046 = vunpack.c.l.b16 %v5009
    %v5047 = vunpack.c.h.b16 %v5009
    %v5048 = vunpack.c.l.b16 %v5010
    %v5049 = vunpack.c.h.b16 %v5010
    %v5050 = vunpack.c.l.b16 %v5011
    %v5051 = vunpack.c.h.b16 %v5011
    %v5052 = vunpack.c.l.b16 %v5012
    %v5053 = vunpack.c.h.b16 %v5012
    %v5054 = vunpack.c.l.b16 %v5013
    %v5055 = vunpack.c.h.b16 %v5013
    %v5056 = vunpack.c.l.b16 %v5014
    %v5057 = vunpack.c.h.b16 %v5014
    %v5058 = vunpack.c.l.b16 %v5015
    %v5059 = vunpack.c.h.b16 %v5015
    %v5060 = vpack.c.b16 %v5040, %v5038
    %v5061 = vpack.c.b16 %v5041, %v5039
    %v5062 = vpack.c.b16 %v5044, %v5042
    %v5063 = vpack.c.b16 %v5045, %v5043
    %v5064 = vpack.c.b16 %v5048, %v5046
    %v5065 = vpack.c.b16 %v5049, %v5047
    %v5066 = vpack.c.b16 %v5052, %v5050
    %v5067 = vpack.c.b16 %v5053, %v5051
    %v5068 = vpack.c.b16 %v5056, %v5054
    %v5069 = vpack.c.b16 %v5057, %v5055
    %v5070 = vpack.c.b16 %v5058, %v5058
    %v5071 = vpack.c.b16 %v5059, %v5059
    %vm5082 = vcmask 687104
    %v5084 = vsel %vm5082, %v5026, 0
    %v5087 = vsel %vm5082, %v5025, 0
    %vm5089 = vcmask 1041408
    %v5091 = vsel %vm5089, %v5070, 0
    %v5094 = vsel %vm5089, %v5071, 0
    %5096 = vmatprep.subr.bf16.mxu0 %v5061
    %5097 = vmatpush1.bf16.msra.mxu0 %v5060
    %5098 = vmatprep.subr.bf16.mxu0 %v5063
    %5099 = vmatpush1.bf16.msra.mxu0 %v5062
    %5100 = vmatprep.subr.bf16.mxu0 %v5065
    %5101 = vmatpush1.bf16.msra.mxu0 %v5064
    %5102 = vmatprep.subr.bf16.mxu0 %v5067
    %5103 = vmatpush1.bf16.msra.mxu0 %v5066
    %5104 = vmatprep.subr.bf16.mxu0 %v5069
    %5105 = vmatpush1.bf16.msra.mxu0 %v5068
    %5106 = vmatprep.subr.bf16.mxu0 %v5094
    %5107 = vmatpush1.bf16.msra.mxu0 %v5091
    %5108 = vmatprep.subr.bf16.mxu0 0
    %5109 = vmatpush1.bf16.msra.mxu0 0
    %5110 = vmatprep.subr.bf16.mxu0 0
    %5111 = vmatpush1.bf16.msra.mxu0 0
    %5112 = vmatprep.subr.bf16.mxu0 0
    %5113 = vmatpush1.bf16.msra.mxu0 0
    %5114 = vmatprep.subr.bf16.mxu0 0
    %5115 = vmatpush1.bf16.msra.mxu0 0
    %5116 = vmatprep.subr.bf16.mxu0 0
    %5117 = vmatpush1.bf16.msra.mxu0 0
    %5118 = vmatprep.subr.bf16.mxu0 0
    %5119 = vmatpush1.bf16.msra.mxu0 0
    %5120 = vmatprep.subr.bf16.mxu0 0
    %5121 = vmatpush1.bf16.msra.mxu0 0
    %5122 = vmatprep.subr.bf16.mxu0 0
    %5123 = vmatpush1.bf16.msra.mxu0 0
    %5124 = vmatprep.subr.bf16.mxu0 0
    %5125 = vmatpush1.bf16.msra.mxu0 0
    %5126 = vmatprep.subr.bf16.mxu0 0
    %5127 = vmatpush1.bf16.msra.mxu0 0
    %5128 = vmatprep.mubr.bf16.mxu0 0
    %5129 = vmatmul.mubr.bf16.gmra.mrb[0].mxu0 %v5084
    %v5130 = vpop.f32.mrb[0].mxu0
    %v5131 = vadd.f32 0.0, %v5130
    %v5132 = vpop.f32.mrb[0].mxu0
    %v5133 = vadd.f32 0.0, %v5132
    %v5134 = vpop.f32.mrb[0].mxu0
    %v5135 = vadd.f32 0.0, %v5134
    %v5136 = vpop.f32.mrb[0].mxu0
    %v5137 = vadd.f32 0.0, %v5136
    %5138 = vmatprep.mubr.bf16.mxu0 0
    %5139 = vmatmul.mubr.bf16.gmra.mrb[0].mxu0 %v5087
    %v5140 = vpop.f32.mrb[0].mxu0
    %v5141 = vadd.f32 0.0, %v5140
    %v5142 = vpop.f32.mrb[0].mxu0
    %v5143 = vadd.f32 0.0, %v5142
    %v5144 = vpop.f32.mrb[0].mxu0
    %v5145 = vpop.f32.mrb[0].mxu0
    %5146 = vdwg.mxu0
    %v5149 = vunpack.c.l.b16 %v4988
    %v5150 = vunpack.c.l.b16 %v4990
    %v5151 = vpack.c.b16 %v5020, %v5149
    %v5152 = vpack.c.b16 %v5150, %v5150
    %v5164 = vunpack.c.l.b16 %v4991
    %v5165 = vunpack.c.h.b16 %v4991
    %v5166 = vunpack.c.l.b16 %v4992
    %v5167 = vunpack.c.h.b16 %v4992
    %v5168 = vunpack.c.l.b16 %v4993
    %v5169 = vunpack.c.h.b16 %v4993
    %v5170 = vunpack.c.l.b16 %v4994
    %v5171 = vunpack.c.h.b16 %v4994
    %v5172 = vunpack.c.l.b16 %v4995
    %v5173 = vunpack.c.h.b16 %v4995
    %v5174 = vunpack.c.l.b16 %v4996
    %v5175 = vunpack.c.h.b16 %v4996
    %v5176 = vunpack.c.l.b16 %v4997
    %v5177 = vunpack.c.h.b16 %v4997
    %v5178 = vunpack.c.l.b16 %v4998
    %v5179 = vunpack.c.h.b16 %v4998
    %v5180 = vunpack.c.l.b16 %v4999
    %v5181 = vunpack.c.h.b16 %v4999
    %v5182 = vunpack.c.l.b16 %v5000
    %v5183 = vunpack.c.h.b16 %v5000
    %v5184 = vunpack.c.l.b16 %v5001
    %v5185 = vunpack.c.h.b16 %v5001
    %v5186 = vpack.c.b16 %v5166, %v5164
    %v5187 = vpack.c.b16 %v5167, %v5165
    %v5188 = vpack.c.b16 %v5170, %v5168
    %v5189 = vpack.c.b16 %v5171, %v5169
    %v5190 = vpack.c.b16 %v5174, %v5172
    %v5191 = vpack.c.b16 %v5175, %v5173
    %v5192 = vpack.c.b16 %v5178, %v5176
    %v5193 = vpack.c.b16 %v5179, %v5177
    %v5194 = vpack.c.b16 %v5182, %v5180
    %v5195 = vpack.c.b16 %v5183, %v5181
    %v5196 = vpack.c.b16 %v5184, %v5184
    %v5197 = vpack.c.b16 %v5185, %v5185
    %v5209 = vsel %vm5082, %v5151, 0
    %v5212 = vsel %vm5082, %v5152, 0
    %v5215 = vsel %vm5089, %v5196, 0
    %v5218 = vsel %vm5089, %v5197, 0
    %5220 = vmatprep.subr.bf16.mxu0 %v5187
    %5221 = vmatpush1.bf16.msra.mxu0 %v5186
    %5222 = vmatprep.subr.bf16.mxu0 %v5189
    %5223 = vmatpush1.bf16.msra.mxu0 %v5188
    %5224 = vmatprep.subr.bf16.mxu0 %v5191
    %5225 = vmatpush1.bf16.msra.mxu0 %v5190
    %5226 = vmatprep.subr.bf16.mxu0 %v5193
    %5227 = vmatpush1.bf16.msra.mxu0 %v5192
    %5228 = vmatprep.subr.bf16.mxu0 %v5195
    %5229 = vmatpush1.bf16.msra.mxu0 %v5194
    %5230 = vmatprep.subr.bf16.mxu0 %v5218
    %5231 = vmatpush1.bf16.msra.mxu0 %v5215
    %5232 = vmatprep.subr.bf16.mxu0 0
    %5233 = vmatpush1.bf16.msra.mxu0 0
    %5234 = vmatprep.subr.bf16.mxu0 0
    %5235 = vmatpush1.bf16.msra.mxu0 0
    %5236 = vmatprep.subr.bf16.mxu0 0
    %5237 = vmatpush1.bf16.msra.mxu0 0
    %5238 = vmatprep.subr.bf16.mxu0 0
    %5239 = vmatpush1.bf16.msra.mxu0 0
    %5240 = vmatprep.subr.bf16.mxu0 0
    %5241 = vmatpush1.bf16.msra.mxu0 0
    %5242 = vmatprep.subr.bf16.mxu0 0
    %5243 = vmatpush1.bf16.msra.mxu0 0
    %5244 = vmatprep.subr.bf16.mxu0 0
    %5245 = vmatpush1.bf16.msra.mxu0 0
    %5246 = vmatprep.subr.bf16.mxu0 0
    %5247 = vmatpush1.bf16.msra.mxu0 0
    %5248 = vmatprep.subr.bf16.mxu0 0
    %5249 = vmatpush1.bf16.msra.mxu0 0
    %5250 = vmatprep.subr.bf16.mxu0 0
    %5251 = vmatpush1.bf16.msra.mxu0 0
    %5252 = vmatprep.mubr.bf16.mxu0 0
    %5253 = vmatmul.mubr.bf16.gmra.mrb[0].mxu0 %v5209
    %v5254 = vpop.f32.mrb[0].mxu0
    %v5255 = vadd.f32 %v5131, %v5254
    %v5256 = vpop.f32.mrb[0].mxu0
    %v5257 = vadd.f32 %v5133, %v5256
    %v5258 = vpop.f32.mrb[0].mxu0
    %v5259 = vadd.f32 %v5135, %v5258
    %v5260 = vpop.f32.mrb[0].mxu0
    %v5261 = vadd.f32 %v5137, %v5260
    %5262 = vmatprep.mubr.bf16.mxu0 0
    %5263 = vmatmul.mubr.bf16.gmra.mrb[0].mxu0 %v5212
    %v5264 = vpop.f32.mrb[0].mxu0
    %v5265 = vadd.f32 %v5141, %v5264
    %v5266 = vpop.f32.mrb[0].mxu0
    %v5267 = vadd.f32 %v5143, %v5266
    %v5268 = vpop.f32.mrb[0].mxu0
    %v5269 = vpop.f32.mrb[0].mxu0
    %5270 = vdwg.mxu0
    %v5271 = vld [vmem:[#allocation2] sm:$0xc]
    %v5272 = vld [vmem:[#allocation2 + $0x8] sm:$0xf]
    %s5273 = scalar_lea.vmem %s2, 176
    %v5274 = vld [vmem:[%s5273] sm:$0xff]
    %v5275 = vld [vmem:[%s5273 + $0x8] sm:$0xff]
    %v5276 = vld [vmem:[%s5273 + $0x10] sm:$0xff]
    %v5277 = vld [vmem:[%s5273 + $0x18] sm:$0xff]
    %v5278 = vld [vmem:[%s5273 + $0x20] sm:$0xff]
    %v5279 = vld [vmem:[%s5273 + $0x28] sm:$0xff]
    %v5280 = vld [vmem:[%s5273 + $0x30] sm:$0xff]
    %v5281 = vld [vmem:[%s5273 + $0x38] sm:$0xff]
    %v5282 = vld [vmem:[%s5273 + $0x40] sm:$0xff]
    %v5283 = vld [vmem:[%s5273 + $0x48] sm:$0xff]
    %v5284 = vld [vmem:[%s5273 + $0x50] sm:$0x33]
    %v5287 = vunpack.c.l.b16 %v5271
    %v5288 = vunpack.c.l.b16 %v5272
    %v5289 = vpack.c.b16 %v5020, %v5287
    %v5290 = vpack.c.b16 %v5288, %v5288
    %v5291 = vrot.slane %v5289, 2
    %v5292 = vrot.slane %v5290, 2
    %v5293 = vsel %vm319, %v5291, %v5292
    %v5305 = vunpack.c.l.b16 %v5274
    %v5306 = vunpack.c.h.b16 %v5274
    %v5307 = vunpack.c.l.b16 %v5275
    %v5308 = vunpack.c.h.b16 %v5275
    %v5309 = vunpack.c.l.b16 %v5276
    %v5310 = vunpack.c.h.b16 %v5276
    %v5311 = vunpack.c.l.b16 %v5277
    %v5312 = vunpack.c.h.b16 %v5277
    %v5313 = vunpack.c.l.b16 %v5278
    %v5314 = vunpack.c.h.b16 %v5278
    %v5315 = vunpack.c.l.b16 %v5279
    %v5316 = vunpack.c.h.b16 %v5279
    %v5317 = vunpack.c.l.b16 %v5280
    %v5318 = vunpack.c.h.b16 %v5280
    %v5319 = vunpack.c.l.b16 %v5281
    %v5320 = vunpack.c.h.b16 %v5281
    %v5321 = vunpack.c.l.b16 %v5282
    %v5322 = vunpack.c.h.b16 %v5282
    %v5323 = vunpack.c.l.b16 %v5283
    %v5324 = vunpack.c.h.b16 %v5283
    %v5325 = vunpack.c.l.b16 %v5284
    %v5326 = vunpack.c.h.b16 %v5284
    %v5327 = vpack.c.b16 %v5307, %v5305
    %v5328 = vpack.c.b16 %v5308, %v5306
    %v5329 = vpack.c.b16 %v5311, %v5309
    %v5330 = vpack.c.b16 %v5312, %v5310
    %v5331 = vpack.c.b16 %v5315, %v5313
    %v5332 = vpack.c.b16 %v5316, %v5314
    %v5333 = vpack.c.b16 %v5319, %v5317
    %v5334 = vpack.c.b16 %v5320, %v5318
    %v5335 = vpack.c.b16 %v5323, %v5321
    %v5336 = vpack.c.b16 %v5324, %v5322
    %v5337 = vpack.c.b16 %v5325, %v5325
    %v5338 = vpack.c.b16 %v5326, %v5326
    %v5350 = vsel %vm5082, %v5293, 0
    %v5353 = vsel %vm5082, %v5292, 0
    %v5356 = vsel %vm5089, %v5337, 0
    %v5359 = vsel %vm5089, %v5338, 0
    %5361 = vmatprep.subr.bf16.mxu0 %v5328
    %5362 = vmatpush1.bf16.msra.mxu0 %v5327
    %5363 = vmatprep.subr.bf16.mxu0 %v5330
    %5364 = vmatpush1.bf16.msra.mxu0 %v5329
    %5365 = vmatprep.subr.bf16.mxu0 %v5332
    %5366 = vmatpush1.bf16.msra.mxu0 %v5331
    %5367 = vmatprep.subr.bf16.mxu0 %v5334
    %5368 = vmatpush1.bf16.msra.mxu0 %v5333
    %5369 = vmatprep.subr.bf16.mxu0 %v5336
    %5370 = vmatpush1.bf16.msra.mxu0 %v5335
    %5371 = vmatprep.subr.bf16.mxu0 %v5359
    %5372 = vmatpush1.bf16.msra.mxu0 %v5356
    %5373 = vmatprep.subr.bf16.mxu0 0
    %5374 = vmatpush1.bf16.msra.mxu0 0
    %5375 = vmatprep.subr.bf16.mxu0 0
    %5376 = vmatpush1.bf16.msra.mxu0 0
    %5377 = vmatprep.subr.bf16.mxu0 0
    %5378 = vmatpush1.bf16.msra.mxu0 0
    %5379 = vmatprep.subr.bf16.mxu0 0
    %5380 = vmatpush1.bf16.msra.mxu0 0
    %5381 = vmatprep.subr.bf16.mxu0 0
    %5382 = vmatpush1.bf16.msra.mxu0 0
    %5383 = vmatprep.subr.bf16.mxu0 0
    %5384 = vmatpush1.bf16.msra.mxu0 0
    %5385 = vmatprep.subr.bf16.mxu0 0
    %5386 = vmatpush1.bf16.msra.mxu0 0
    %5387 = vmatprep.subr.bf16.mxu0 0
    %5388 = vmatpush1.bf16.msra.mxu0 0
    %5389 = vmatprep.subr.bf16.mxu0 0
    %5390 = vmatpush1.bf16.msra.mxu0 0
    %5391 = vmatprep.subr.bf16.mxu0 0
    %5392 = vmatpush1.bf16.msra.mxu0 0
    %5393 = vmatprep.mubr.bf16.mxu0 0
    %5394 = vmatmul.mubr.bf16.gmra.mrb[0].mxu0 %v5350
    %v5395 = vpop.f32.mrb[0].mxu0
    %v5396 = vadd.f32 0.0, %v5395
    %v5397 = vpop.f32.mrb[0].mxu0
    %v5398 = vadd.f32 0.0, %v5397
    %v5399 = vpop.f32.mrb[0].mxu0
    %v5400 = vadd.f32 0.0, %v5399
    %v5401 = vpop.f32.mrb[0].mxu0
    %v5402 = vadd.f32 0.0, %v5401
    %5403 = vmatprep.mubr.bf16.mxu0 0
    %5404 = vmatmul.mubr.bf16.gmra.mrb[0].mxu0 %v5353
    %v5405 = vpop.f32.mrb[0].mxu0
    %v5406 = vadd.f32 0.0, %v5405
    %v5407 = vpop.f32.mrb[0].mxu0
    %v5408 = vadd.f32 0.0, %v5407
    %v5409 = vpop.f32.mrb[0].mxu0
    %v5410 = vpop.f32.mrb[0].mxu0
    %5411 = vdwg.mxu0
    %v5412 = vadd.f32 %v5255, %v5396
    %v5413 = vadd.f32 %v5257, %v5398
    %v5414 = vadd.f32 %v5259, %v5400
    %v5415 = vadd.f32 %v5261, %v5402
    %v5416 = vadd.f32 %v5265, %v5406
    %v5417 = vadd.f32 %v5267, %v5408
    %v5418 = vld [vmem:[#allocation2] sm:$0x8]
    %v5419 = vld [vmem:[#allocation2 + $0x4] sm:$0xf]
    %v5420 = vld [vmem:[#allocation2 + $0x8] sm:$0xf]
    %v5421 = vld [vmem:[#allocation2 + $0xc] sm:$0x1]
    %s5422 = scalar_lea.vmem %s2, 264
    %v5423 = vld [vmem:[%s5422] sm:$0xff]
    %v5424 = vld [vmem:[%s5422 + $0x8] sm:$0xff]
    %v5425 = vld [vmem:[%s5422 + $0x10] sm:$0xff]
    %v5426 = vld [vmem:[%s5422 + $0x18] sm:$0xff]
    %v5427 = vld [vmem:[%s5422 + $0x20] sm:$0xff]
    %v5428 = vld [vmem:[%s5422 + $0x28] sm:$0xff]
    %v5429 = vld [vmem:[%s5422 + $0x30] sm:$0xff]
    %v5430 = vld [vmem:[%s5422 + $0x38] sm:$0xff]
    %v5431 = vld [vmem:[%s5422 + $0x40] sm:$0xff]
    %v5432 = vld [vmem:[%s5422 + $0x48] sm:$0xff]
    %v5433 = vld [vmem:[%s5422 + $0x50] sm:$0x33]
    %v5438 = vunpack.c.l.b16 %v5418
    %v5439 = vunpack.c.l.b16 %v5419
    %v5440 = vunpack.c.l.b16 %v5420
    %v5441 = vunpack.c.l.b16 %v5421
    %v5442 = vpack.c.b16 %v5439, %v5438
    %v5443 = vpack.c.b16 %v5441, %v5440
    %v5444 = vrot.slane %v5442, 3
    %v5445 = vrot.slane %v5443, 3
    %v5446 = vsel %vm457, %v5444, %v5445
    %v5458 = vunpack.c.l.b16 %v5423
    %v5459 = vunpack.c.h.b16 %v5423
    %v5460 = vunpack.c.l.b16 %v5424
    %v5461 = vunpack.c.h.b16 %v5424
    %v5462 = vunpack.c.l.b16 %v5425
    %v5463 = vunpack.c.h.b16 %v5425
    %v5464 = vunpack.c.l.b16 %v5426
    %v5465 = vunpack.c.h.b16 %v5426
    %v5466 = vunpack.c.l.b16 %v5427
    %v5467 = vunpack.c.h.b16 %v5427
    %v5468 = vunpack.c.l.b16 %v5428
    %v5469 = vunpack.c.h.b16 %v5428
    %v5470 = vunpack.c.l.b16 %v5429
    %v5471 = vunpack.c.h.b16 %v5429
    %v5472 = vunpack.c.l.b16 %v5430
    %v5473 = vunpack.c.h.b16 %v5430
    %v5474 = vunpack.c.l.b16 %v5431
    %v5475 = vunpack.c.h.b16 %v5431
    %v5476 = vunpack.c.l.b16 %v5432
    %v5477 = vunpack.c.h.b16 %v5432
    %v5478 = vunpack.c.l.b16 %v5433
    %v5479 = vunpack.c.h.b16 %v5433
    %v5480 = vpack.c.b16 %v5460, %v5458
    %v5481 = vpack.c.b16 %v5461, %v5459
    %v5482 = vpack.c.b16 %v5464, %v5462
    %v5483 = vpack.c.b16 %v5465, %v5463
    %v5484 = vpack.c.b16 %v5468, %v5466
    %v5485 = vpack.c.b16 %v5469, %v5467
    %v5486 = vpack.c.b16 %v5472, %v5470
    %v5487 = vpack.c.b16 %v5473, %v5471
    %v5488 = vpack.c.b16 %v5476, %v5474
    %v5489 = vpack.c.b16 %v5477, %v5475
    %v5490 = vpack.c.b16 %v5478, %v5478
    %v5491 = vpack.c.b16 %v5479, %v5479
    %v5503 = vsel %vm5082, %v5446, 0
    %v5506 = vsel %vm5082, %v5445, 0
    %v5509 = vsel %vm5089, %v5490, 0
    %v5512 = vsel %vm5089, %v5491, 0
    %5514 = vmatprep.subr.bf16.mxu0 %v5481
    %5515 = vmatpush1.bf16.msra.mxu0 %v5480
    %5516 = vmatprep.subr.bf16.mxu0 %v5483
    %5517 = vmatpush1.bf16.msra.mxu0 %v5482
    %5518 = vmatprep.subr.bf16.mxu0 %v5485
    %5519 = vmatpush1.bf16.msra.mxu0 %v5484
    %5520 = vmatprep.subr.bf16.mxu0 %v5487
    %5521 = vmatpush1.bf16.msra.mxu0 %v5486
    %5522 = vmatprep.subr.bf16.mxu0 %v5489
    %5523 = vmatpush1.bf16.msra.mxu0 %v5488
    %5524 = vmatprep.subr.bf16.mxu0 %v5512
    %5525 = vmatpush1.bf16.msra.mxu0 %v5509
    %5526 = vmatprep.subr.bf16.mxu0 0
    %5527 = vmatpush1.bf16.msra.mxu0 0
    %5528 = vmatprep.subr.bf16.mxu0 0
    %5529 = vmatpush1.bf16.msra.mxu0 0
    %5530 = vmatprep.subr.bf16.mxu0 0
    %5531 = vmatpush1.bf16.msra.mxu0 0
    %5532 = vmatprep.subr.bf16.mxu0 0
    %5533 = vmatpush1.bf16.msra.mxu0 0
    %5534 = vmatprep.subr.bf16.mxu0 0
    %5535 = vmatpush1.bf16.msra.mxu0 0
    %5536 = vmatprep.subr.bf16.mxu0 0
    %5537 = vmatpush1.bf16.msra.mxu0 0
    %5538 = vmatprep.subr.bf16.mxu0 0
    %5539 = vmatpush1.bf16.msra.mxu0 0
    %5540 = vmatprep.subr.bf16.mxu0 0
    %5541 = vmatpush1.bf16.msra.mxu0 0
    %5542 = vmatprep.subr.bf16.mxu0 0
    %5543 = vmatpush1.bf16.msra.mxu0 0
    %5544 = vmatprep.subr.bf16.mxu0 0
    %5545 = vmatpush1.bf16.msra.mxu0 0
    %5546 = vmatprep.mubr.bf16.mxu0 0
    %5547 = vmatmul.mubr.bf16.gmra.mrb[0].mxu0 %v5503
    %v5548 = vpop.f32.mrb[0].mxu0
    %v5549 = vadd.f32 0.0, %v5548
    %v5550 = vpop.f32.mrb[0].mxu0
    %v5551 = vadd.f32 0.0, %v5550
    %v5552 = vpop.f32.mrb[0].mxu0
    %v5553 = vadd.f32 0.0, %v5552
    %v5554 = vpop.f32.mrb[0].mxu0
    %v5555 = vadd.f32 0.0, %v5554
    %5556 = vmatprep.mubr.bf16.mxu0 0
    %5557 = vmatmul.mubr.bf16.gmra.mrb[0].mxu0 %v5506
    %v5558 = vpop.f32.mrb[0].mxu0
    %v5559 = vadd.f32 0.0, %v5558
    %v5560 = vpop.f32.mrb[0].mxu0
    %v5561 = vadd.f32 0.0, %v5560
    %v5562 = vpop.f32.mrb[0].mxu0
    %v5563 = vpop.f32.mrb[0].mxu0
    %5564 = vdwg.mxu0
    %v5565 = vadd.f32 %v5412, %v5549
    %v5566 = vadd.f32 %v5413, %v5551
    %v5567 = vadd.f32 %v5414, %v5553
    %v5568 = vadd.f32 %v5415, %v5555
    %v5569 = vadd.f32 %v5416, %v5559
    %v5570 = vadd.f32 %v5417, %v5561
    %v5571 = vld [vmem:[#allocation2 + $0xc] sm:$0x3]
    %s5572 = scalar_lea.vmem %s2, 352
    %v5573 = vld [vmem:[%s5572] sm:$0xff]
    %v5574 = vld [vmem:[%s5572 + $0x8] sm:$0xff]
    %v5575 = vld [vmem:[%s5572 + $0x10] sm:$0xff]
    %v5576 = vld [vmem:[%s5572 + $0x18] sm:$0xff]
    %v5577 = vld [vmem:[%s5572 + $0x20] sm:$0xff]
    %v5578 = vld [vmem:[%s5572 + $0x28] sm:$0xff]
    %v5579 = vld [vmem:[%s5572 + $0x30] sm:$0xff]
    %v5580 = vld [vmem:[%s5572 + $0x38] sm:$0xff]
    %v5581 = vld [vmem:[%s5572 + $0x40] sm:$0xff]
    %v5582 = vld [vmem:[%s5572 + $0x48] sm:$0xff]
    %v5583 = vld [vmem:[%s5572 + $0x50] sm:$0x33]
    %v5585 = vunpack.c.l.b16 %v5571
    %v5586 = vpack.c.b16 %v5440, %v5439
    %v5587 = vpack.c.b16 %v5585, %v5585
    %v5599 = vunpack.c.l.b16 %v5573
    %v5600 = vunpack.c.h.b16 %v5573
    %v5601 = vunpack.c.l.b16 %v5574
    %v5602 = vunpack.c.h.b16 %v5574
    %v5603 = vunpack.c.l.b16 %v5575
    %v5604 = vunpack.c.h.b16 %v5575
    %v5605 = vunpack.c.l.b16 %v5576
    %v5606 = vunpack.c.h.b16 %v5576
    %v5607 = vunpack.c.l.b16 %v5577
    %v5608 = vunpack.c.h.b16 %v5577
    %v5609 = vunpack.c.l.b16 %v5578
    %v5610 = vunpack.c.h.b16 %v5578
    %v5611 = vunpack.c.l.b16 %v5579
    %v5612 = vunpack.c.h.b16 %v5579
    %v5613 = vunpack.c.l.b16 %v5580
    %v5614 = vunpack.c.h.b16 %v5580
    %v5615 = vunpack.c.l.b16 %v5581
    %v5616 = vunpack.c.h.b16 %v5581
    %v5617 = vunpack.c.l.b16 %v5582
    %v5618 = vunpack.c.h.b16 %v5582
    %v5619 = vunpack.c.l.b16 %v5583
    %v5620 = vunpack.c.h.b16 %v5583
    %v5621 = vpack.c.b16 %v5601, %v5599
    %v5622 = vpack.c.b16 %v5602, %v5600
    %v5623 = vpack.c.b16 %v5605, %v5603
    %v5624 = vpack.c.b16 %v5606, %v5604
    %v5625 = vpack.c.b16 %v5609, %v5607
    %v5626 = vpack.c.b16 %v5610, %v5608
    %v5627 = vpack.c.b16 %v5613, %v5611
    %v5628 = vpack.c.b16 %v5614, %v5612
    %v5629 = vpack.c.b16 %v5617, %v5615
    %v5630 = vpack.c.b16 %v5618, %v5616
    %v5631 = vpack.c.b16 %v5619, %v5619
    %v5632 = vpack.c.b16 %v5620, %v5620
    %v5644 = vsel %vm5082, %v5586, 0
    %v5647 = vsel %vm5082, %v5587, 0
    %v5650 = vsel %vm5089, %v5631, 0
    %v5653 = vsel %vm5089, %v5632, 0
    %5655 = vmatprep.subr.bf16.mxu0 %v5622
    %5656 = vmatpush1.bf16.msra.mxu0 %v5621
    %5657 = vmatprep.subr.bf16.mxu0 %v5624
    %5658 = vmatpush1.bf16.msra.mxu0 %v5623
    %5659 = vmatprep.subr.bf16.mxu0 %v5626
    %5660 = vmatpush1.bf16.msra.mxu0 %v5625
    %5661 = vmatprep.subr.bf16.mxu0 %v5628
    %5662 = vmatpush1.bf16.msra.mxu0 %v5627
    %5663 = vmatprep.subr.bf16.mxu0 %v5630
    %5664 = vmatpush1.bf16.msra.mxu0 %v5629
    %5665 = vmatprep.subr.bf16.mxu0 %v5653
    %5666 = vmatpush1.bf16.msra.mxu0 %v5650
    %5667 = vmatprep.subr.bf16.mxu0 0
    %5668 = vmatpush1.bf16.msra.mxu0 0
    %5669 = vmatprep.subr.bf16.mxu0 0
    %5670 = vmatpush1.bf16.msra.mxu0 0
    %5671 = vmatprep.subr.bf16.mxu0 0
    %5672 = vmatpush1.bf16.msra.mxu0 0
    %5673 = vmatprep.subr.bf16.mxu0 0
    %5674 = vmatpush1.bf16.msra.mxu0 0
    %5675 = vmatprep.subr.bf16.mxu0 0
    %5676 = vmatpush1.bf16.msra.mxu0 0
    %5677 = vmatprep.subr.bf16.mxu0 0
    %5678 = vmatpush1.bf16.msra.mxu0 0
    %5679 = vmatprep.subr.bf16.mxu0 0
    %5680 = vmatpush1.bf16.msra.mxu0 0
    %5681 = vmatprep.subr.bf16.mxu0 0
    %5682 = vmatpush1.bf16.msra.mxu0 0
    %5683 = vmatprep.subr.bf16.mxu0 0
    %5684 = vmatpush1.bf16.msra.mxu0 0
    %5685 = vmatprep.subr.bf16.mxu0 0
    %5686 = vmatpush1.bf16.msra.mxu0 0
    %5687 = vmatprep.mubr.bf16.mxu0 0
    %5688 = vmatmul.mubr.bf16.gmra.mrb[0].mxu0 %v5644
    %v5689 = vpop.f32.mrb[0].mxu0
    %v5690 = vadd.f32 0.0, %v5689
    %v5691 = vpop.f32.mrb[0].mxu0
    %v5692 = vadd.f32 0.0, %v5691
    %v5693 = vpop.f32.mrb[0].mxu0
    %v5694 = vadd.f32 0.0, %v5693
    %v5695 = vpop.f32.mrb[0].mxu0
    %v5696 = vadd.f32 0.0, %v5695
    %5697 = vmatprep.mubr.bf16.mxu0 0
    %5698 = vmatmul.mubr.bf16.gmra.mrb[0].mxu0 %v5647
    %v5699 = vpop.f32.mrb[0].mxu0
    %v5700 = vadd.f32 0.0, %v5699
    %v5701 = vpop.f32.mrb[0].mxu0
    %v5702 = vadd.f32 0.0, %v5701
    %v5703 = vpop.f32.mrb[0].mxu0
    %v5704 = vpop.f32.mrb[0].mxu0
    %5705 = vdwg.mxu0
    %v5706 = vadd.f32 %v5565, %v5690
    %v5707 = vadd.f32 %v5566, %v5692
    %v5708 = vadd.f32 %v5567, %v5694
    %v5709 = vadd.f32 %v5568, %v5696
    %v5710 = vadd.f32 %v5569, %v5700
    %v5711 = vadd.f32 %v5570, %v5702
    %v5712 = vld [vmem:[%s10] sm:$0xff]
    %v5713 = vld [vmem:[%s10 + $0x8] sm:$0x3]
    %v5714 = vld [vmem:[%s11] sm:$0xff]
    %v5715 = vld [vmem:[%s11 + $0x8] sm:$0xff]
    %v5716 = vld [vmem:[%s11 + $0x10] sm:$0xff]
    %v5717 = vld [vmem:[%s11 + $0x18] sm:$0xff]
    %v5718 = vld [vmem:[%s11 + $0x20] sm:$0xff]
    %v5719 = vld [vmem:[%s11 + $0x28] sm:$0xff]
    %v5720 = vld [vmem:[%s11 + $0x30] sm:$0xff]
    %v5721 = vld [vmem:[%s11 + $0x38] sm:$0xff]
    %v5722 = vld [vmem:[%s11 + $0x40] sm:$0xff]
    %v5723 = vld [vmem:[%s11 + $0x48] sm:$0xff]
    %v5724 = vld [vmem:[%s11 + $0x50] sm:$0xff]
    %v5725 = vld [vmem:[%s11 + $0x58] sm:$0xff]
    %v5726 = vld [vmem:[%s11 + $0x60] sm:$0xff]
    %v5727 = vld [vmem:[%s11 + $0x68] sm:$0xff]
    %v5728 = vld [vmem:[%s11 + $0x70] sm:$0xff]
    %v5729 = vld [vmem:[%s11 + $0x78] sm:$0xff]
    %v5730 = vld [vmem:[%s11 + $0x80] sm:$0xff]
    %v5731 = vld [vmem:[%s11 + $0x88] sm:$0xff]
    %v5732 = vld [vmem:[%s11 + $0x90] sm:$0xff]
    %v5733 = vld [vmem:[%s11 + $0x98] sm:$0xff]
    %v5734 = vld [vmem:[%s12] sm:$0xff]
    %v5735 = vld [vmem:[%s12 + $0x8] sm:$0xff]
    %v5736 = vld [vmem:[%s12 + $0x10] sm:$0xff]
    %v5737 = vld [vmem:[%s12 + $0x18] sm:$0xff]
    %v5738 = vld [vmem:[%s12 + $0x20] sm:$0xff]
    %v5739 = vld [vmem:[%s12 + $0x28] sm:$0xff]
    %v5740 = vld [vmem:[%s12 + $0x30] sm:$0xff]
    %v5741 = vld [vmem:[%s12 + $0x38] sm:$0xff]
    %v5742 = vld [vmem:[%s12 + $0x40] sm:$0xff]
    %v5743 = vld [vmem:[%s12 + $0x48] sm:$0xff]
    %v5744 = vld [vmem:[%s12 + $0x50] sm:$0xff]
    %v5745 = vld [vmem:[%s12 + $0x58] sm:$0xff]
    %v5746 = vld [vmem:[%s12 + $0x60] sm:$0xff]
    %v5747 = vld [vmem:[%s12 + $0x68] sm:$0xff]
    %v5748 = vld [vmem:[%s12 + $0x70] sm:$0xff]
    %v5749 = vld [vmem:[%s12 + $0x78] sm:$0xff]
    %v5750 = vld [vmem:[%s12 + $0x80] sm:$0xff]
    %v5751 = vld [vmem:[%s12 + $0x88] sm:$0xff]
    %v5752 = vld [vmem:[%s12 + $0x90] sm:$0xff]
    %v5753 = vld [vmem:[%s12 + $0x98] sm:$0xff]
    %v5754 = vld [vmem:[%s13] sm:$0xff]
    %v5755 = vld [vmem:[%s13 + $0x8] sm:$0xff]
    %v5756 = vld [vmem:[%s13 + $0x10] sm:$0xff]
    %v5757 = vld [vmem:[%s13 + $0x18] sm:$0xff]
    %v5758 = vadd.f32 %v5706, %v5708
    %vm5759 = vcmask 1043456
    %v5760 = vsel %vm5759, %v5710, 0.0
    %v5761 = vadd.f32 %v5758, %v5760
    %v5762 = vrot.slane %v5761, 4
    %v5763 = vadd.f32 %v5761, %v5762
    %v5764 = vrot.slane %v5763, 2
    %v5765 = vadd.f32 %v5763, %v5764
    %v5766 = vrot.slane %v5765, 1
    %v5767 = vadd.f32 %v5765, %v5766
    %v5768 = vsel %vm115, %v5707, 0.0
    %v5769 = vsel %vm115, %v5709, 0.0
    %v5770 = vadd.f32 %v5768, %v5769
    %vm5771 = vcmask 257024
    %v5772 = vsel %vm5771, %v5711, 0.0
    %v5773 = vadd.f32 %v5770, %v5772
    %v5774 = vrot.slane %v5773, 4
    %v5775 = vadd.f32 %v5773, %v5774
    %v5776 = vrot.slane %v5775, 2
    %v5777 = vadd.f32 %v5775, %v5776
    %v5778 = vrot.slane %v5777, 1
    %v5779 = vadd.f32 %v5777, %v5778
    %v5781 = vsel %vm115, %v5779, 0
    %5783 = vmatprep.subr.mxu0 0.0
    %v5784 = vand.u32 %v5734, 4294901760
    %5785 = vmatpush1.msra.mxu0 %v5784
    %5786 = vmatprep.subr.mxu0 0.0
    %v5787 = vand.u32 %v5735, 4294901760
    %5788 = vmatpush1.msra.mxu0 %v5787
    %5789 = vmatprep.subr.mxu0 0.0
    %v5790 = vand.u32 %v5736, 4294901760
    %5791 = vmatpush1.msra.mxu0 %v5790
    %5792 = vmatprep.subr.mxu0 0.0
    %v5793 = vand.u32 %v5737, 4294901760
    %5794 = vmatpush1.msra.mxu0 %v5793
    %5795 = vmatprep.subr.mxu0 0.0
    %v5796 = vand.u32 %v5738, 4294901760
    %5797 = vmatpush1.msra.mxu0 %v5796
    %5798 = vmatprep.subr.mxu0 0.0
    %v5799 = vand.u32 %v5739, 4294901760
    %5800 = vmatpush1.msra.mxu0 %v5799
    %5801 = vmatprep.subr.mxu0 0.0
    %v5802 = vand.u32 %v5740, 4294901760
    %5803 = vmatpush1.msra.mxu0 %v5802
    %5804 = vmatprep.subr.mxu0 0.0
    %v5805 = vand.u32 %v5741, 4294901760
    %5806 = vmatpush1.msra.mxu0 %v5805
    %5807 = vmatprep.subr.mxu0 0.0
    %v5808 = vand.u32 %v5742, 4294901760
    %5809 = vmatpush1.msra.mxu0 %v5808
    %5810 = vmatprep.subr.mxu0 0.0
    %v5811 = vand.u32 %v5743, 4294901760
    %5812 = vmatpush1.msra.mxu0 %v5811
    %5813 = vmatprep.subr.mxu0 0.0
    %v5814 = vand.u32 %v5744, 4294901760
    %5815 = vmatpush1.msra.mxu0 %v5814
    %5816 = vmatprep.subr.mxu0 0.0
    %v5817 = vand.u32 %v5745, 4294901760
    %5818 = vmatpush1.msra.mxu0 %v5817
    %5819 = vmatprep.subr.mxu0 0.0
    %v5820 = vand.u32 %v5746, 4294901760
    %5821 = vmatpush1.msra.mxu0 %v5820
    %5822 = vmatprep.subr.mxu0 0.0
    %v5823 = vand.u32 %v5747, 4294901760
    %5824 = vmatpush1.msra.mxu0 %v5823
    %5825 = vmatprep.subr.mxu0 0.0
    %v5826 = vand.u32 %v5748, 4294901760
    %5827 = vmatpush1.msra.mxu0 %v5826
    %5828 = vmatprep.subr.mxu0 0.0
    %v5829 = vand.u32 %v5749, 4294901760
    %5830 = vmatpush1.msra.mxu0 %v5829
    %5831 = vmatprep.subr.mxu0 0.0
    %v5832 = vand.u32 %v5750, 4294901760
    %5833 = vmatpush1.msra.mxu0 %v5832
    %5834 = vmatprep.subr.mxu0 0.0
    %v5835 = vand.u32 %v5751, 4294901760
    %5836 = vmatpush1.msra.mxu0 %v5835
    %5837 = vmatprep.subr.mxu0 0.0
    %v5838 = vand.u32 %v5752, 4294901760
    %5839 = vmatpush1.msra.mxu0 %v5838
    %5840 = vmatprep.subr.mxu0 0.0
    %v5841 = vand.u32 %v5753, 4294901760
    %5842 = vmatpush1.msra.mxu0 %v5841
    %5843 = vmatprep.subr.mxu0 0.0
    %5844 = vmatpush1.msra.mxu0 0.0
    %5845 = vmatprep.subr.mxu0 0.0
    %5846 = vmatpush1.msra.mxu0 0.0
    %5847 = vmatprep.subr.mxu0 0.0
    %5848 = vmatpush1.msra.mxu0 0.0
    %5849 = vmatprep.subr.mxu0 0.0
    %5850 = vmatpush1.msra.mxu0 0.0
    %5851 = vmatprep.subr.mxu0 0.0
    %5852 = vmatpush1.msra.mxu0 0.0
    %5853 = vmatprep.subr.mxu0 0.0
    %5854 = vmatpush1.msra.mxu0 0.0
    %5855 = vmatprep.subr.mxu0 0.0
    %5856 = vmatpush1.msra.mxu0 0.0
    %5857 = vmatprep.subr.mxu0 0.0
    %5858 = vmatpush1.msra.mxu0 0.0
    %5859 = vmatprep.subr.mxu0 0.0
    %5860 = vmatpush1.msra.mxu0 0.0
    %5861 = vmatprep.subr.mxu0 0.0
    %5862 = vmatpush1.msra.mxu0 0.0
    %5863 = vmatprep.subr.mxu0 0.0
    %5864 = vmatpush1.msra.mxu0 0.0
    %5865 = vmatprep.subr.mxu0 0.0
    %5866 = vmatpush1.msra.mxu0 0.0
    %v5867 = vand.u32 %v5781, 4294901760
    %v5868 = vsub.f32 %v5781, %v5867
    %v5869 = vand.u32 %v5868, 4294901760
    %v5870 = vsub.f32 %v5868, %v5869
    %v5871 = vand.u32 %v5870, 4294901760
    %5872 = vmatprep.mubr.f32.mxu0 %v5871
    %v5873 = vand.u32 %v5767, 4294901760
    %v5874 = vsub.f32 %v5767, %v5873
    %v5875 = vand.u32 %v5874, 4294901760
    %v5876 = vsub.f32 %v5874, %v5875
    %v5877 = vand.u32 %v5876, 4294901760
    %5878 = vmatmul.mubr.f32.gmra.mrb[0].mxu0 %v5877
    %v5879 = vpop.f32.mrb[0].mxu0
    %v5880 = vadd.f32 0.0, %v5879
    %v5881 = vpop.f32.mrb[0].mxu0
    %5882 = vdwg.mxu0
    %5883 = vmatprep.subr.mxu0 0.0
    %v5884 = vand.u32 %v5734, 4294901760
    %v5885 = vsub.f32 %v5734, %v5884
    %v5886 = vand.u32 %v5885, 4294901760
    %v5887 = vsub.f32 %v5885, %v5886
    %v5888 = vand.u32 %v5887, 4294901760
    %5889 = vmatpush1.msra.mxu0 %v5888
    %5890 = vmatprep.subr.mxu0 0.0
    %v5891 = vand.u32 %v5735, 4294901760
    %v5892 = vsub.f32 %v5735, %v5891
    %v5893 = vand.u32 %v5892, 4294901760
    %v5894 = vsub.f32 %v5892, %v5893
    %v5895 = vand.u32 %v5894, 4294901760
    %5896 = vmatpush1.msra.mxu0 %v5895
    %5897 = vmatprep.subr.mxu0 0.0
    %v5898 = vand.u32 %v5736, 4294901760
    %v5899 = vsub.f32 %v5736, %v5898
    %v5900 = vand.u32 %v5899, 4294901760
    %v5901 = vsub.f32 %v5899, %v5900
    %v5902 = vand.u32 %v5901, 4294901760
    %5903 = vmatpush1.msra.mxu0 %v5902
    %5904 = vmatprep.subr.mxu0 0.0
    %v5905 = vand.u32 %v5737, 4294901760
    %v5906 = vsub.f32 %v5737, %v5905
    %v5907 = vand.u32 %v5906, 4294901760
    %v5908 = vsub.f32 %v5906, %v5907
    %v5909 = vand.u32 %v5908, 4294901760
    %5910 = vmatpush1.msra.mxu0 %v5909
    %5911 = vmatprep.subr.mxu0 0.0
    %v5912 = vand.u32 %v5738, 4294901760
    %v5913 = vsub.f32 %v5738, %v5912
    %v5914 = vand.u32 %v5913, 4294901760
    %v5915 = vsub.f32 %v5913, %v5914
    %v5916 = vand.u32 %v5915, 4294901760
    %5917 = vmatpush1.msra.mxu0 %v5916
    %5918 = vmatprep.subr.mxu0 0.0
    %v5919 = vand.u32 %v5739, 4294901760
    %v5920 = vsub.f32 %v5739, %v5919
    %v5921 = vand.u32 %v5920, 4294901760
    %v5922 = vsub.f32 %v5920, %v5921
    %v5923 = vand.u32 %v5922, 4294901760
    %5924 = vmatpush1.msra.mxu0 %v5923
    %5925 = vmatprep.subr.mxu0 0.0
    %v5926 = vand.u32 %v5740, 4294901760
    %v5927 = vsub.f32 %v5740, %v5926
    %v5928 = vand.u32 %v5927, 4294901760
    %v5929 = vsub.f32 %v5927, %v5928
    %v5930 = vand.u32 %v5929, 4294901760
    %5931 = vmatpush1.msra.mxu0 %v5930
    %5932 = vmatprep.subr.mxu0 0.0
    %v5933 = vand.u32 %v5741, 4294901760
    %v5934 = vsub.f32 %v5741, %v5933
    %v5935 = vand.u32 %v5934, 4294901760
    %v5936 = vsub.f32 %v5934, %v5935
    %v5937 = vand.u32 %v5936, 4294901760
    %5938 = vmatpush1.msra.mxu0 %v5937
    %5939 = vmatprep.subr.mxu0 0.0
    %v5940 = vand.u32 %v5742, 4294901760
    %v5941 = vsub.f32 %v5742, %v5940
    %v5942 = vand.u32 %v5941, 4294901760
    %v5943 = vsub.f32 %v5941, %v5942
    %v5944 = vand.u32 %v5943, 4294901760
    %5945 = vmatpush1.msra.mxu0 %v5944
    %5946 = vmatprep.subr.mxu0 0.0
    %v5947 = vand.u32 %v5743, 4294901760
    %v5948 = vsub.f32 %v5743, %v5947
    %v5949 = vand.u32 %v5948, 4294901760
    %v5950 = vsub.f32 %v5948, %v5949
    %v5951 = vand.u32 %v5950, 4294901760
    %5952 = vmatpush1.msra.mxu0 %v5951
    %5953 = vmatprep.subr.mxu0 0.0
    %v5954 = vand.u32 %v5744, 4294901760
    %v5955 = vsub.f32 %v5744, %v5954
    %v5956 = vand.u32 %v5955, 4294901760
    %v5957 = vsub.f32 %v5955, %v5956
    %v5958 = vand.u32 %v5957, 4294901760
    %5959 = vmatpush1.msra.mxu0 %v5958
    %5960 = vmatprep.subr.mxu0 0.0
    %v5961 = vand.u32 %v5745, 4294901760
    %v5962 = vsub.f32 %v5745, %v5961
    %v5963 = vand.u32 %v5962, 4294901760
    %v5964 = vsub.f32 %v5962, %v5963
    %v5965 = vand.u32 %v5964, 4294901760
    %5966 = vmatpush1.msra.mxu0 %v5965
    %5967 = vmatprep.subr.mxu0 0.0
    %v5968 = vand.u32 %v5746, 4294901760
    %v5969 = vsub.f32 %v5746, %v5968
    %v5970 = vand.u32 %v5969, 4294901760
    %v5971 = vsub.f32 %v5969, %v5970
    %v5972 = vand.u32 %v5971, 4294901760
    %5973 = vmatpush1.msra.mxu0 %v5972
    %5974 = vmatprep.subr.mxu0 0.0
    %v5975 = vand.u32 %v5747, 4294901760
    %v5976 = vsub.f32 %v5747, %v5975
    %v5977 = vand.u32 %v5976, 4294901760
    %v5978 = vsub.f32 %v5976, %v5977
    %v5979 = vand.u32 %v5978, 4294901760
    %5980 = vmatpush1.msra.mxu0 %v5979
    %5981 = vmatprep.subr.mxu0 0.0
    %v5982 = vand.u32 %v5748, 4294901760
    %v5983 = vsub.f32 %v5748, %v5982
    %v5984 = vand.u32 %v5983, 4294901760
    %v5985 = vsub.f32 %v5983, %v5984
    %v5986 = vand.u32 %v5985, 4294901760
    %5987 = vmatpush1.msra.mxu0 %v5986
    %5988 = vmatprep.subr.mxu0 0.0
    %v5989 = vand.u32 %v5749, 4294901760
    %v5990 = vsub.f32 %v5749, %v5989
    %v5991 = vand.u32 %v5990, 4294901760
    %v5992 = vsub.f32 %v5990, %v5991
    %v5993 = vand.u32 %v5992, 4294901760
    %5994 = vmatpush1.msra.mxu0 %v5993
    %5995 = vmatprep.subr.mxu0 0.0
    %v5996 = vand.u32 %v5750, 4294901760
    %v5997 = vsub.f32 %v5750, %v5996
    %v5998 = vand.u32 %v5997, 4294901760
    %v5999 = vsub.f32 %v5997, %v5998
    %v6000 = vand.u32 %v5999, 4294901760
    %6001 = vmatpush1.msra.mxu0 %v6000
    %6002 = vmatprep.subr.mxu0 0.0
    %v6003 = vand.u32 %v5751, 4294901760
    %v6004 = vsub.f32 %v5751, %v6003
    %v6005 = vand.u32 %v6004, 4294901760
    %v6006 = vsub.f32 %v6004, %v6005
    %v6007 = vand.u32 %v6006, 4294901760
    %6008 = vmatpush1.msra.mxu0 %v6007
    %6009 = vmatprep.subr.mxu0 0.0
    %v6010 = vand.u32 %v5752, 4294901760
    %v6011 = vsub.f32 %v5752, %v6010
    %v6012 = vand.u32 %v6011, 4294901760
    %v6013 = vsub.f32 %v6011, %v6012
    %v6014 = vand.u32 %v6013, 4294901760
    %6015 = vmatpush1.msra.mxu0 %v6014
    %6016 = vmatprep.subr.mxu0 0.0
    %v6017 = vand.u32 %v5753, 4294901760
    %v6018 = vsub.f32 %v5753, %v6017
    %v6019 = vand.u32 %v6018, 4294901760
    %v6020 = vsub.f32 %v6018, %v6019
    %v6021 = vand.u32 %v6020, 4294901760
    %6022 = vmatpush1.msra.mxu0 %v6021
    %6023 = vmatprep.subr.mxu0 0.0
    %6024 = vmatpush1.msra.mxu0 0.0
    %6025 = vmatprep.subr.mxu0 0.0
    %6026 = vmatpush1.msra.mxu0 0.0
    %6027 = vmatprep.subr.mxu0 0.0
    %6028 = vmatpush1.msra.mxu0 0.0
    %6029 = vmatprep.subr.mxu0 0.0
    %6030 = vmatpush1.msra.mxu0 0.0
    %6031 = vmatprep.subr.mxu0 0.0
    %6032 = vmatpush1.msra.mxu0 0.0
    %6033 = vmatprep.subr.mxu0 0.0
    %6034 = vmatpush1.msra.mxu0 0.0
    %6035 = vmatprep.subr.mxu0 0.0
    %6036 = vmatpush1.msra.mxu0 0.0
    %6037 = vmatprep.subr.mxu0 0.0
    %6038 = vmatpush1.msra.mxu0 0.0
    %6039 = vmatprep.subr.mxu0 0.0
    %6040 = vmatpush1.msra.mxu0 0.0
    %6041 = vmatprep.subr.mxu0 0.0
    %6042 = vmatpush1.msra.mxu0 0.0
    %6043 = vmatprep.subr.mxu0 0.0
    %6044 = vmatpush1.msra.mxu0 0.0
    %6045 = vmatprep.subr.mxu0 0.0
    %6046 = vmatpush1.msra.mxu0 0.0
    %v6047 = vand.u32 %v5781, 4294901760
    %6048 = vmatprep.mubr.f32.mxu0 %v6047
    %v6049 = vand.u32 %v5767, 4294901760
    %6050 = vmatmul.mubr.f32.gmra.mrb[0].mxu0 %v6049
    %v6051 = vpop.f32.mrb[0].mxu0
    %v6052 = vadd.f32 %v5880, %v6051
    %v6053 = vpop.f32.mrb[0].mxu0
    %6054 = vdwg.mxu0
    %6055 = vmatprep.subr.mxu0 0.0
    %v6056 = vand.u32 %v5734, 4294901760
    %v6057 = vsub.f32 %v5734, %v6056
    %6058 = vmatpush1.msra.mxu0 %v6057
    %6059 = vmatprep.subr.mxu0 0.0
    %v6060 = vand.u32 %v5735, 4294901760
    %v6061 = vsub.f32 %v5735, %v6060
    %6062 = vmatpush1.msra.mxu0 %v6061
    %6063 = vmatprep.subr.mxu0 0.0
    %v6064 = vand.u32 %v5736, 4294901760
    %v6065 = vsub.f32 %v5736, %v6064
    %6066 = vmatpush1.msra.mxu0 %v6065
    %6067 = vmatprep.subr.mxu0 0.0
    %v6068 = vand.u32 %v5737, 4294901760
    %v6069 = vsub.f32 %v5737, %v6068
    %6070 = vmatpush1.msra.mxu0 %v6069
    %6071 = vmatprep.subr.mxu0 0.0
    %v6072 = vand.u32 %v5738, 4294901760
    %v6073 = vsub.f32 %v5738, %v6072
    %6074 = vmatpush1.msra.mxu0 %v6073
    %6075 = vmatprep.subr.mxu0 0.0
    %v6076 = vand.u32 %v5739, 4294901760
    %v6077 = vsub.f32 %v5739, %v6076
    %6078 = vmatpush1.msra.mxu0 %v6077
    %6079 = vmatprep.subr.mxu0 0.0
    %v6080 = vand.u32 %v5740, 4294901760
    %v6081 = vsub.f32 %v5740, %v6080
    %6082 = vmatpush1.msra.mxu0 %v6081
    %6083 = vmatprep.subr.mxu0 0.0
    %v6084 = vand.u32 %v5741, 4294901760
    %v6085 = vsub.f32 %v5741, %v6084
    %6086 = vmatpush1.msra.mxu0 %v6085
    %6087 = vmatprep.subr.mxu0 0.0
    %v6088 = vand.u32 %v5742, 4294901760
    %v6089 = vsub.f32 %v5742, %v6088
    %6090 = vmatpush1.msra.mxu0 %v6089
    %6091 = vmatprep.subr.mxu0 0.0
    %v6092 = vand.u32 %v5743, 4294901760
    %v6093 = vsub.f32 %v5743, %v6092
    %6094 = vmatpush1.msra.mxu0 %v6093
    %6095 = vmatprep.subr.mxu0 0.0
    %v6096 = vand.u32 %v5744, 4294901760
    %v6097 = vsub.f32 %v5744, %v6096
    %6098 = vmatpush1.msra.mxu0 %v6097
    %6099 = vmatprep.subr.mxu0 0.0
    %v6100 = vand.u32 %v5745, 4294901760
    %v6101 = vsub.f32 %v5745, %v6100
    %6102 = vmatpush1.msra.mxu0 %v6101
    %6103 = vmatprep.subr.mxu0 0.0
    %v6104 = vand.u32 %v5746, 4294901760
    %v6105 = vsub.f32 %v5746, %v6104
    %6106 = vmatpush1.msra.mxu0 %v6105
    %6107 = vmatprep.subr.mxu0 0.0
    %v6108 = vand.u32 %v5747, 4294901760
    %v6109 = vsub.f32 %v5747, %v6108
    %6110 = vmatpush1.msra.mxu0 %v6109
    %6111 = vmatprep.subr.mxu0 0.0
    %v6112 = vand.u32 %v5748, 4294901760
    %v6113 = vsub.f32 %v5748, %v6112
    %6114 = vmatpush1.msra.mxu0 %v6113
    %6115 = vmatprep.subr.mxu0 0.0
    %v6116 = vand.u32 %v5749, 4294901760
    %v6117 = vsub.f32 %v5749, %v6116
    %6118 = vmatpush1.msra.mxu0 %v6117
    %6119 = vmatprep.subr.mxu0 0.0
    %v6120 = vand.u32 %v5750, 4294901760
    %v6121 = vsub.f32 %v5750, %v6120
    %6122 = vmatpush1.msra.mxu0 %v6121
    %6123 = vmatprep.subr.mxu0 0.0
    %v6124 = vand.u32 %v5751, 4294901760
    %v6125 = vsub.f32 %v5751, %v6124
    %6126 = vmatpush1.msra.mxu0 %v6125
    %6127 = vmatprep.subr.mxu0 0.0
    %v6128 = vand.u32 %v5752, 4294901760
    %v6129 = vsub.f32 %v5752, %v6128
    %6130 = vmatpush1.msra.mxu0 %v6129
    %6131 = vmatprep.subr.mxu0 0.0
    %v6132 = vand.u32 %v5753, 4294901760
    %v6133 = vsub.f32 %v5753, %v6132
    %6134 = vmatpush1.msra.mxu0 %v6133
    %6135 = vmatprep.subr.mxu0 0.0
    %6136 = vmatpush1.msra.mxu0 0.0
    %6137 = vmatprep.subr.mxu0 0.0
    %6138 = vmatpush1.msra.mxu0 0.0
    %6139 = vmatprep.subr.mxu0 0.0
    %6140 = vmatpush1.msra.mxu0 0.0
    %6141 = vmatprep.subr.mxu0 0.0
    %6142 = vmatpush1.msra.mxu0 0.0
    %6143 = vmatprep.subr.mxu0 0.0
    %6144 = vmatpush1.msra.mxu0 0.0
    %6145 = vmatprep.subr.mxu0 0.0
    %6146 = vmatpush1.msra.mxu0 0.0
    %6147 = vmatprep.subr.mxu0 0.0
    %6148 = vmatpush1.msra.mxu0 0.0
    %6149 = vmatprep.subr.mxu0 0.0
    %6150 = vmatpush1.msra.mxu0 0.0
    %6151 = vmatprep.subr.mxu0 0.0
    %6152 = vmatpush1.msra.mxu0 0.0
    %6153 = vmatprep.subr.mxu0 0.0
    %6154 = vmatpush1.msra.mxu0 0.0
    %6155 = vmatprep.subr.mxu0 0.0
    %6156 = vmatpush1.msra.mxu0 0.0
    %6157 = vmatprep.subr.mxu0 0.0
    %6158 = vmatpush1.msra.mxu0 0.0
    %v6159 = vand.u32 %v5781, 4294901760
    %v6160 = vsub.f32 %v5781, %v6159
    %6161 = vmatprep.mubr.f32.mxu0 %v6160
    %v6162 = vand.u32 %v5767, 4294901760
    %v6163 = vsub.f32 %v5767, %v6162
    %6164 = vmatmul.mubr.f32.gmra.mrb[0].mxu0 %v6163
    %v6165 = vpop.f32.mrb[0].mxu0
    %v6166 = vadd.f32 %v6052, %v6165
    %v6167 = vpop.f32.mrb[0].mxu0
    %6168 = vdwg.mxu0
    %6169 = vmatprep.subr.mxu0 0.0
    %v6170 = vand.u32 %v5734, 4294901760
    %6171 = vmatpush1.msra.mxu0 %v6170
    %6172 = vmatprep.subr.mxu0 0.0
    %v6173 = vand.u32 %v5735, 4294901760
    %6174 = vmatpush1.msra.mxu0 %v6173
    %6175 = vmatprep.subr.mxu0 0.0
    %v6176 = vand.u32 %v5736, 4294901760
    %6177 = vmatpush1.msra.mxu0 %v6176
    %6178 = vmatprep.subr.mxu0 0.0
    %v6179 = vand.u32 %v5737, 4294901760
    %6180 = vmatpush1.msra.mxu0 %v6179
    %6181 = vmatprep.subr.mxu0 0.0
    %v6182 = vand.u32 %v5738, 4294901760
    %6183 = vmatpush1.msra.mxu0 %v6182
    %6184 = vmatprep.subr.mxu0 0.0
    %v6185 = vand.u32 %v5739, 4294901760
    %6186 = vmatpush1.msra.mxu0 %v6185
    %6187 = vmatprep.subr.mxu0 0.0
    %v6188 = vand.u32 %v5740, 4294901760
    %6189 = vmatpush1.msra.mxu0 %v6188
    %6190 = vmatprep.subr.mxu0 0.0
    %v6191 = vand.u32 %v5741, 4294901760
    %6192 = vmatpush1.msra.mxu0 %v6191
    %6193 = vmatprep.subr.mxu0 0.0
    %v6194 = vand.u32 %v5742, 4294901760
    %6195 = vmatpush1.msra.mxu0 %v6194
    %6196 = vmatprep.subr.mxu0 0.0
    %v6197 = vand.u32 %v5743, 4294901760
    %6198 = vmatpush1.msra.mxu0 %v6197
    %6199 = vmatprep.subr.mxu0 0.0
    %v6200 = vand.u32 %v5744, 4294901760
    %6201 = vmatpush1.msra.mxu0 %v6200
    %6202 = vmatprep.subr.mxu0 0.0
    %v6203 = vand.u32 %v5745, 4294901760
    %6204 = vmatpush1.msra.mxu0 %v6203
    %6205 = vmatprep.subr.mxu0 0.0
    %v6206 = vand.u32 %v5746, 4294901760
    %6207 = vmatpush1.msra.mxu0 %v6206
    %6208 = vmatprep.subr.mxu0 0.0
    %v6209 = vand.u32 %v5747, 4294901760
    %6210 = vmatpush1.msra.mxu0 %v6209
    %6211 = vmatprep.subr.mxu0 0.0
    %v6212 = vand.u32 %v5748, 4294901760
    %6213 = vmatpush1.msra.mxu0 %v6212
    %6214 = vmatprep.subr.mxu0 0.0
    %v6215 = vand.u32 %v5749, 4294901760
    %6216 = vmatpush1.msra.mxu0 %v6215
    %6217 = vmatprep.subr.mxu0 0.0
    %v6218 = vand.u32 %v5750, 4294901760
    %6219 = vmatpush1.msra.mxu0 %v6218
    %6220 = vmatprep.subr.mxu0 0.0
    %v6221 = vand.u32 %v5751, 4294901760
    %6222 = vmatpush1.msra.mxu0 %v6221
    %6223 = vmatprep.subr.mxu0 0.0
    %v6224 = vand.u32 %v5752, 4294901760
    %6225 = vmatpush1.msra.mxu0 %v6224
    %6226 = vmatprep.subr.mxu0 0.0
    %v6227 = vand.u32 %v5753, 4294901760
    %6228 = vmatpush1.msra.mxu0 %v6227
    %6229 = vmatprep.subr.mxu0 0.0
    %6230 = vmatpush1.msra.mxu0 0.0
    %6231 = vmatprep.subr.mxu0 0.0
    %6232 = vmatpush1.msra.mxu0 0.0
    %6233 = vmatprep.subr.mxu0 0.0
    %6234 = vmatpush1.msra.mxu0 0.0
    %6235 = vmatprep.subr.mxu0 0.0
    %6236 = vmatpush1.msra.mxu0 0.0
    %6237 = vmatprep.subr.mxu0 0.0
    %6238 = vmatpush1.msra.mxu0 0.0
    %6239 = vmatprep.subr.mxu0 0.0
    %6240 = vmatpush1.msra.mxu0 0.0
    %6241 = vmatprep.subr.mxu0 0.0
    %6242 = vmatpush1.msra.mxu0 0.0
    %6243 = vmatprep.subr.mxu0 0.0
    %6244 = vmatpush1.msra.mxu0 0.0
    %6245 = vmatprep.subr.mxu0 0.0
    %6246 = vmatpush1.msra.mxu0 0.0
    %6247 = vmatprep.subr.mxu0 0.0
    %6248 = vmatpush1.msra.mxu0 0.0
    %6249 = vmatprep.subr.mxu0 0.0
    %6250 = vmatpush1.msra.mxu0 0.0
    %6251 = vmatprep.subr.mxu0 0.0
    %6252 = vmatpush1.msra.mxu0 0.0
    %v6253 = vand.u32 %v5781, 4294901760
    %v6254 = vsub.f32 %v5781, %v6253
    %v6255 = vand.u32 %v6254, 4294901760
    %6256 = vmatprep.mubr.f32.mxu0 %v6255
    %v6257 = vand.u32 %v5767, 4294901760
    %v6258 = vsub.f32 %v5767, %v6257
    %v6259 = vand.u32 %v6258, 4294901760
    %6260 = vmatmul.mubr.f32.gmra.mrb[0].mxu0 %v6259
    %v6261 = vpop.f32.mrb[0].mxu0
    %v6262 = vadd.f32 %v6166, %v6261
    %v6263 = vpop.f32.mrb[0].mxu0
    %6264 = vdwg.mxu0
    %6265 = vmatprep.subr.mxu0 0.0
    %v6266 = vand.u32 %v5734, 4294901760
    %v6267 = vsub.f32 %v5734, %v6266
    %v6268 = vand.u32 %v6267, 4294901760
    %6269 = vmatpush1.msra.mxu0 %v6268
    %6270 = vmatprep.subr.mxu0 0.0
    %v6271 = vand.u32 %v5735, 4294901760
    %v6272 = vsub.f32 %v5735, %v6271
    %v6273 = vand.u32 %v6272, 4294901760
    %6274 = vmatpush1.msra.mxu0 %v6273
    %6275 = vmatprep.subr.mxu0 0.0
    %v6276 = vand.u32 %v5736, 4294901760
    %v6277 = vsub.f32 %v5736, %v6276
    %v6278 = vand.u32 %v6277, 4294901760
    %6279 = vmatpush1.msra.mxu0 %v6278
    %6280 = vmatprep.subr.mxu0 0.0
    %v6281 = vand.u32 %v5737, 4294901760
    %v6282 = vsub.f32 %v5737, %v6281
    %v6283 = vand.u32 %v6282, 4294901760
    %6284 = vmatpush1.msra.mxu0 %v6283
    %6285 = vmatprep.subr.mxu0 0.0
    %v6286 = vand.u32 %v5738, 4294901760
    %v6287 = vsub.f32 %v5738, %v6286
    %v6288 = vand.u32 %v6287, 4294901760
    %6289 = vmatpush1.msra.mxu0 %v6288
    %6290 = vmatprep.subr.mxu0 0.0
    %v6291 = vand.u32 %v5739, 4294901760
    %v6292 = vsub.f32 %v5739, %v6291
    %v6293 = vand.u32 %v6292, 4294901760
    %6294 = vmatpush1.msra.mxu0 %v6293
    %6295 = vmatprep.subr.mxu0 0.0
    %v6296 = vand.u32 %v5740, 4294901760
    %v6297 = vsub.f32 %v5740, %v6296
    %v6298 = vand.u32 %v6297, 4294901760
    %6299 = vmatpush1.msra.mxu0 %v6298
    %6300 = vmatprep.subr.mxu0 0.0
    %v6301 = vand.u32 %v5741, 4294901760
    %v6302 = vsub.f32 %v5741, %v6301
    %v6303 = vand.u32 %v6302, 4294901760
    %6304 = vmatpush1.msra.mxu0 %v6303
    %6305 = vmatprep.subr.mxu0 0.0
    %v6306 = vand.u32 %v5742, 4294901760
    %v6307 = vsub.f32 %v5742, %v6306
    %v6308 = vand.u32 %v6307, 4294901760
    %6309 = vmatpush1.msra.mxu0 %v6308
    %6310 = vmatprep.subr.mxu0 0.0
    %v6311 = vand.u32 %v5743, 4294901760
    %v6312 = vsub.f32 %v5743, %v6311
    %v6313 = vand.u32 %v6312, 4294901760
    %6314 = vmatpush1.msra.mxu0 %v6313
    %6315 = vmatprep.subr.mxu0 0.0
    %v6316 = vand.u32 %v5744, 4294901760
    %v6317 = vsub.f32 %v5744, %v6316
    %v6318 = vand.u32 %v6317, 4294901760
    %6319 = vmatpush1.msra.mxu0 %v6318
    %6320 = vmatprep.subr.mxu0 0.0
    %v6321 = vand.u32 %v5745, 4294901760
    %v6322 = vsub.f32 %v5745, %v6321
    %v6323 = vand.u32 %v6322, 4294901760
    %6324 = vmatpush1.msra.mxu0 %v6323
    %6325 = vmatprep.subr.mxu0 0.0
    %v6326 = vand.u32 %v5746, 4294901760
    %v6327 = vsub.f32 %v5746, %v6326
    %v6328 = vand.u32 %v6327, 4294901760
    %6329 = vmatpush1.msra.mxu0 %v6328
    %6330 = vmatprep.subr.mxu0 0.0
    %v6331 = vand.u32 %v5747, 4294901760
    %v6332 = vsub.f32 %v5747, %v6331
    %v6333 = vand.u32 %v6332, 4294901760
    %6334 = vmatpush1.msra.mxu0 %v6333
    %6335 = vmatprep.subr.mxu0 0.0
    %v6336 = vand.u32 %v5748, 4294901760
    %v6337 = vsub.f32 %v5748, %v6336
    %v6338 = vand.u32 %v6337, 4294901760
    %6339 = vmatpush1.msra.mxu0 %v6338
    %6340 = vmatprep.subr.mxu0 0.0
    %v6341 = vand.u32 %v5749, 4294901760
    %v6342 = vsub.f32 %v5749, %v6341
    %v6343 = vand.u32 %v6342, 4294901760
    %6344 = vmatpush1.msra.mxu0 %v6343
    %6345 = vmatprep.subr.mxu0 0.0
    %v6346 = vand.u32 %v5750, 4294901760
    %v6347 = vsub.f32 %v5750, %v6346
    %v6348 = vand.u32 %v6347, 4294901760
    %6349 = vmatpush1.msra.mxu0 %v6348
    %6350 = vmatprep.subr.mxu0 0.0
    %v6351 = vand.u32 %v5751, 4294901760
    %v6352 = vsub.f32 %v5751, %v6351
    %v6353 = vand.u32 %v6352, 4294901760
    %6354 = vmatpush1.msra.mxu0 %v6353
    %6355 = vmatprep.subr.mxu0 0.0
    %v6356 = vand.u32 %v5752, 4294901760
    %v6357 = vsub.f32 %v5752, %v6356
    %v6358 = vand.u32 %v6357, 4294901760
    %6359 = vmatpush1.msra.mxu0 %v6358
    %6360 = vmatprep.subr.mxu0 0.0
    %v6361 = vand.u32 %v5753, 4294901760
    %v6362 = vsub.f32 %v5753, %v6361
    %v6363 = vand.u32 %v6362, 4294901760
    %6364 = vmatpush1.msra.mxu0 %v6363
    %6365 = vmatprep.subr.mxu0 0.0
    %6366 = vmatpush1.msra.mxu0 0.0
    %6367 = vmatprep.subr.mxu0 0.0
    %6368 = vmatpush1.msra.mxu0 0.0
    %6369 = vmatprep.subr.mxu0 0.0
    %6370 = vmatpush1.msra.mxu0 0.0
    %6371 = vmatprep.subr.mxu0 0.0
    %6372 = vmatpush1.msra.mxu0 0.0
    %6373 = vmatprep.subr.mxu0 0.0
    %6374 = vmatpush1.msra.mxu0 0.0
    %6375 = vmatprep.subr.mxu0 0.0
    %6376 = vmatpush1.msra.mxu0 0.0
    %6377 = vmatprep.subr.mxu0 0.0
    %6378 = vmatpush1.msra.mxu0 0.0
    %6379 = vmatprep.subr.mxu0 0.0
    %6380 = vmatpush1.msra.mxu0 0.0
    %6381 = vmatprep.subr.mxu0 0.0
    %6382 = vmatpush1.msra.mxu0 0.0
    %6383 = vmatprep.subr.mxu0 0.0
    %6384 = vmatpush1.msra.mxu0 0.0
    %6385 = vmatprep.subr.mxu0 0.0
    %6386 = vmatpush1.msra.mxu0 0.0
    %6387 = vmatprep.subr.mxu0 0.0
    %6388 = vmatpush1.msra.mxu0 0.0
    %v6389 = vand.u32 %v5781, 4294901760
    %6390 = vmatprep.mubr.f32.mxu0 %v6389
    %v6391 = vand.u32 %v5767, 4294901760
    %6392 = vmatmul.mubr.f32.gmra.mrb[0].mxu0 %v6391
    %v6393 = vpop.f32.mrb[0].mxu0
    %v6394 = vadd.f32 %v6262, %v6393
    %v6395 = vpop.f32.mrb[0].mxu0
    %6396 = vdwg.mxu0
    %6397 = vmatprep.subr.mxu0 0.0
    %v6398 = vand.u32 %v5734, 4294901760
    %6399 = vmatpush1.msra.mxu0 %v6398
    %6400 = vmatprep.subr.mxu0 0.0
    %v6401 = vand.u32 %v5735, 4294901760
    %6402 = vmatpush1.msra.mxu0 %v6401
    %6403 = vmatprep.subr.mxu0 0.0
    %v6404 = vand.u32 %v5736, 4294901760
    %6405 = vmatpush1.msra.mxu0 %v6404
    %6406 = vmatprep.subr.mxu0 0.0
    %v6407 = vand.u32 %v5737, 4294901760
    %6408 = vmatpush1.msra.mxu0 %v6407
    %6409 = vmatprep.subr.mxu0 0.0
    %v6410 = vand.u32 %v5738, 4294901760
    %6411 = vmatpush1.msra.mxu0 %v6410
    %6412 = vmatprep.subr.mxu0 0.0
    %v6413 = vand.u32 %v5739, 4294901760
    %6414 = vmatpush1.msra.mxu0 %v6413
    %6415 = vmatprep.subr.mxu0 0.0
    %v6416 = vand.u32 %v5740, 4294901760
    %6417 = vmatpush1.msra.mxu0 %v6416
    %6418 = vmatprep.subr.mxu0 0.0
    %v6419 = vand.u32 %v5741, 4294901760
    %6420 = vmatpush1.msra.mxu0 %v6419
    %6421 = vmatprep.subr.mxu0 0.0
    %v6422 = vand.u32 %v5742, 4294901760
    %6423 = vmatpush1.msra.mxu0 %v6422
    %6424 = vmatprep.subr.mxu0 0.0
    %v6425 = vand.u32 %v5743, 4294901760
    %6426 = vmatpush1.msra.mxu0 %v6425
    %6427 = vmatprep.subr.mxu0 0.0
    %v6428 = vand.u32 %v5744, 4294901760
    %6429 = vmatpush1.msra.mxu0 %v6428
    %6430 = vmatprep.subr.mxu0 0.0
    %v6431 = vand.u32 %v5745, 4294901760
    %6432 = vmatpush1.msra.mxu0 %v6431
    %6433 = vmatprep.subr.mxu0 0.0
    %v6434 = vand.u32 %v5746, 4294901760
    %6435 = vmatpush1.msra.mxu0 %v6434
    %6436 = vmatprep.subr.mxu0 0.0
    %v6437 = vand.u32 %v5747, 4294901760
    %6438 = vmatpush1.msra.mxu0 %v6437
    %6439 = vmatprep.subr.mxu0 0.0
    %v6440 = vand.u32 %v5748, 4294901760
    %6441 = vmatpush1.msra.mxu0 %v6440
    %6442 = vmatprep.subr.mxu0 0.0
    %v6443 = vand.u32 %v5749, 4294901760
    %6444 = vmatpush1.msra.mxu0 %v6443
    %6445 = vmatprep.subr.mxu0 0.0
    %v6446 = vand.u32 %v5750, 4294901760
    %6447 = vmatpush1.msra.mxu0 %v6446
    %6448 = vmatprep.subr.mxu0 0.0
    %v6449 = vand.u32 %v5751, 4294901760
    %6450 = vmatpush1.msra.mxu0 %v6449
    %6451 = vmatprep.subr.mxu0 0.0
    %v6452 = vand.u32 %v5752, 4294901760
    %6453 = vmatpush1.msra.mxu0 %v6452
    %6454 = vmatprep.subr.mxu0 0.0
    %v6455 = vand.u32 %v5753, 4294901760
    %6456 = vmatpush1.msra.mxu0 %v6455
    %6457 = vmatprep.subr.mxu0 0.0
    %6458 = vmatpush1.msra.mxu0 0.0
    %6459 = vmatprep.subr.mxu0 0.0
    %6460 = vmatpush1.msra.mxu0 0.0
    %6461 = vmatprep.subr.mxu0 0.0
    %6462 = vmatpush1.msra.mxu0 0.0
    %6463 = vmatprep.subr.mxu0 0.0
    %6464 = vmatpush1.msra.mxu0 0.0
    %6465 = vmatprep.subr.mxu0 0.0
    %6466 = vmatpush1.msra.mxu0 0.0
    %6467 = vmatprep.subr.mxu0 0.0
    %6468 = vmatpush1.msra.mxu0 0.0
    %6469 = vmatprep.subr.mxu0 0.0
    %6470 = vmatpush1.msra.mxu0 0.0
    %6471 = vmatprep.subr.mxu0 0.0
    %6472 = vmatpush1.msra.mxu0 0.0
    %6473 = vmatprep.subr.mxu0 0.0
    %6474 = vmatpush1.msra.mxu0 0.0
    %6475 = vmatprep.subr.mxu0 0.0
    %6476 = vmatpush1.msra.mxu0 0.0
    %6477 = vmatprep.subr.mxu0 0.0
    %6478 = vmatpush1.msra.mxu0 0.0
    %6479 = vmatprep.subr.mxu0 0.0
    %6480 = vmatpush1.msra.mxu0 0.0
    %v6481 = vand.u32 %v5781, 4294901760
    %6482 = vmatprep.mubr.f32.mxu0 %v6481
    %v6483 = vand.u32 %v5767, 4294901760
    %6484 = vmatmul.mubr.f32.gmra.mrb[0].mxu0 %v6483
    %v6485 = vpop.f32.mrb[0].mxu0
    %v6486 = vadd.f32 %v6394, %v6485
    %v6487 = vpop.f32.mrb[0].mxu0
    %6488 = vdwg.mxu0
    %v6489 = vmul.f32 %v6486, 0.005
    %vm6490 = vcmask 130048
    %v6492 = vsel %vm6490, %v6489, 0
    %v6494 = vand.u32 %v5755, 4294901760
    %6495 = vmatprep.subr.mxu0 %v6494
    %v6496 = vand.u32 %v5754, 4294901760
    %6497 = vmatpush1.msra.mxu0 %v6496
    %v6498 = vand.u32 %v5757, 4294901760
    %6499 = vmatprep.subr.mxu0 %v6498
    %v6500 = vand.u32 %v5756, 4294901760
    %6501 = vmatpush1.msra.mxu0 %v6500
    %6502 = vmatprep.subr.mxu0 0.0
    %6503 = vmatpush1.msra.mxu0 0.0
    %6504 = vmatprep.subr.mxu0 0.0
    %6505 = vmatpush1.msra.mxu0 0.0
    %6506 = vmatprep.subr.mxu0 0.0
    %6507 = vmatpush1.msra.mxu0 0.0
    %6508 = vmatprep.subr.mxu0 0.0
    %6509 = vmatpush1.msra.mxu0 0.0
    %6510 = vmatprep.subr.mxu0 0.0
    %6511 = vmatpush1.msra.mxu0 0.0
    %6512 = vmatprep.subr.mxu0 0.0
    %6513 = vmatpush1.msra.mxu0 0.0
    %6514 = vmatprep.subr.mxu0 0.0
    %6515 = vmatpush1.msra.mxu0 0.0
    %6516 = vmatprep.subr.mxu0 0.0
    %6517 = vmatpush1.msra.mxu0 0.0
    %6518 = vmatprep.subr.mxu0 0.0
    %6519 = vmatpush1.msra.mxu0 0.0
    %6520 = vmatprep.subr.mxu0 0.0
    %6521 = vmatpush1.msra.mxu0 0.0
    %6522 = vmatprep.subr.mxu0 0.0
    %6523 = vmatpush1.msra.mxu0 0.0
    %6524 = vmatprep.subr.mxu0 0.0
    %6525 = vmatpush1.msra.mxu0 0.0
    %6526 = vmatprep.subr.mxu0 0.0
    %6527 = vmatpush1.msra.mxu0 0.0
    %6528 = vmatprep.subr.mxu0 0.0
    %6529 = vmatpush1.msra.mxu0 0.0
    %6530 = vmatprep.subr.mxu0 0.0
    %6531 = vmatpush1.msra.mxu0 0.0
    %6532 = vmatprep.subr.mxu0 0.0
    %6533 = vmatpush1.msra.mxu0 0.0
    %6534 = vmatprep.subr.mxu0 0.0
    %6535 = vmatpush1.msra.mxu0 0.0
    %6536 = vmatprep.subr.mxu0 0.0
    %6537 = vmatpush1.msra.mxu0 0.0
    %6538 = vmatprep.subr.mxu0 0.0
    %6539 = vmatpush1.msra.mxu0 0.0
    %6540 = vmatprep.subr.mxu0 0.0
    %6541 = vmatpush1.msra.mxu0 0.0
    %6542 = vmatprep.subr.mxu0 0.0
    %6543 = vmatpush1.msra.mxu0 0.0
    %6544 = vmatprep.subr.mxu0 0.0
    %6545 = vmatpush1.msra.mxu0 0.0
    %6546 = vmatprep.subr.mxu0 0.0
    %6547 = vmatpush1.msra.mxu0 0.0
    %6548 = vmatprep.subr.mxu0 0.0
    %6549 = vmatpush1.msra.mxu0 0.0
    %6550 = vmatprep.subr.mxu0 0.0
    %6551 = vmatpush1.msra.mxu0 0.0
    %6552 = vmatprep.subr.mxu0 0.0
    %6553 = vmatpush1.msra.mxu0 0.0
    %6554 = vmatprep.subr.mxu0 0.0
    %6555 = vmatpush1.msra.mxu0 0.0
    %6556 = vmatprep.subr.mxu0 0.0
    %6557 = vmatpush1.msra.mxu0 0.0
    %6558 = vmatprep.subr.mxu0 0.0
    %6559 = vmatpush1.msra.mxu0 0.0
    %6560 = vmatprep.subr.mxu0 0.0
    %6561 = vmatpush1.msra.mxu0 0.0
    %6562 = vmatprep.mubr.f32.mxu0 0.0
    %v6563 = vand.u32 %v6492, 4294901760
    %v6564 = vsub.f32 %v6492, %v6563
    %v6565 = vand.u32 %v6564, 4294901760
    %v6566 = vsub.f32 %v6564, %v6565
    %v6567 = vand.u32 %v6566, 4294901760
    %6568 = vmatmul.mubr.f32.gmra.mrb[0].mxu0 %v6567
    %v6569 = vpop.f32.mrb[0].mxu0
    %v6570 = vadd.f32 0.0, %v6569
    %v6571 = vpop.f32.mrb[0].mxu0
    %v6572 = vadd.f32 0.0, %v6571
    %6573 = vdwg.mxu0
    %v6574 = vand.u32 %v5755, 4294901760
    %v6575 = vsub.f32 %v5755, %v6574
    %v6576 = vand.u32 %v6575, 4294901760
    %v6577 = vsub.f32 %v6575, %v6576
    %v6578 = vand.u32 %v6577, 4294901760
    %6579 = vmatprep.subr.mxu0 %v6578
    %v6580 = vand.u32 %v5754, 4294901760
    %v6581 = vsub.f32 %v5754, %v6580
    %v6582 = vand.u32 %v6581, 4294901760
    %v6583 = vsub.f32 %v6581, %v6582
    %v6584 = vand.u32 %v6583, 4294901760
    %6585 = vmatpush1.msra.mxu0 %v6584
    %v6586 = vand.u32 %v5757, 4294901760
    %v6587 = vsub.f32 %v5757, %v6586
    %v6588 = vand.u32 %v6587, 4294901760
    %v6589 = vsub.f32 %v6587, %v6588
    %v6590 = vand.u32 %v6589, 4294901760
    %6591 = vmatprep.subr.mxu0 %v6590
    %v6592 = vand.u32 %v5756, 4294901760
    %v6593 = vsub.f32 %v5756, %v6592
    %v6594 = vand.u32 %v6593, 4294901760
    %v6595 = vsub.f32 %v6593, %v6594
    %v6596 = vand.u32 %v6595, 4294901760
    %6597 = vmatpush1.msra.mxu0 %v6596
    %6598 = vmatprep.subr.mxu0 0.0
    %6599 = vmatpush1.msra.mxu0 0.0
    %6600 = vmatprep.subr.mxu0 0.0
    %6601 = vmatpush1.msra.mxu0 0.0
    %6602 = vmatprep.subr.mxu0 0.0
    %6603 = vmatpush1.msra.mxu0 0.0
    %6604 = vmatprep.subr.mxu0 0.0
    %6605 = vmatpush1.msra.mxu0 0.0
    %6606 = vmatprep.subr.mxu0 0.0
    %6607 = vmatpush1.msra.mxu0 0.0
    %6608 = vmatprep.subr.mxu0 0.0
    %6609 = vmatpush1.msra.mxu0 0.0
    %6610 = vmatprep.subr.mxu0 0.0
    %6611 = vmatpush1.msra.mxu0 0.0
    %6612 = vmatprep.subr.mxu0 0.0
    %6613 = vmatpush1.msra.mxu0 0.0
    %6614 = vmatprep.subr.mxu0 0.0
    %6615 = vmatpush1.msra.mxu0 0.0
    %6616 = vmatprep.subr.mxu0 0.0
    %6617 = vmatpush1.msra.mxu0 0.0
    %6618 = vmatprep.subr.mxu0 0.0
    %6619 = vmatpush1.msra.mxu0 0.0
    %6620 = vmatprep.subr.mxu0 0.0
    %6621 = vmatpush1.msra.mxu0 0.0
    %6622 = vmatprep.subr.mxu0 0.0
    %6623 = vmatpush1.msra.mxu0 0.0
    %6624 = vmatprep.subr.mxu0 0.0
    %6625 = vmatpush1.msra.mxu0 0.0
    %6626 = vmatprep.subr.mxu0 0.0
    %6627 = vmatpush1.msra.mxu0 0.0
    %6628 = vmatprep.subr.mxu0 0.0
    %6629 = vmatpush1.msra.mxu0 0.0
    %6630 = vmatprep.subr.mxu0 0.0
    %6631 = vmatpush1.msra.mxu0 0.0
    %6632 = vmatprep.subr.mxu0 0.0
    %6633 = vmatpush1.msra.mxu0 0.0
    %6634 = vmatprep.subr.mxu0 0.0
    %6635 = vmatpush1.msra.mxu0 0.0
    %6636 = vmatprep.subr.mxu0 0.0
    %6637 = vmatpush1.msra.mxu0 0.0
    %6638 = vmatprep.subr.mxu0 0.0
    %6639 = vmatpush1.msra.mxu0 0.0
    %6640 = vmatprep.subr.mxu0 0.0
    %6641 = vmatpush1.msra.mxu0 0.0
    %6642 = vmatprep.subr.mxu0 0.0
    %6643 = vmatpush1.msra.mxu0 0.0
    %6644 = vmatprep.subr.mxu0 0.0
    %6645 = vmatpush1.msra.mxu0 0.0
    %6646 = vmatprep.subr.mxu0 0.0
    %6647 = vmatpush1.msra.mxu0 0.0
    %6648 = vmatprep.subr.mxu0 0.0
    %6649 = vmatpush1.msra.mxu0 0.0
    %6650 = vmatprep.subr.mxu0 0.0
    %6651 = vmatpush1.msra.mxu0 0.0
    %6652 = vmatprep.subr.mxu0 0.0
    %6653 = vmatpush1.msra.mxu0 0.0
    %6654 = vmatprep.subr.mxu0 0.0
    %6655 = vmatpush1.msra.mxu0 0.0
    %6656 = vmatprep.subr.mxu0 0.0
    %6657 = vmatpush1.msra.mxu0 0.0
    %6658 = vmatprep.mubr.f32.mxu0 0.0
    %v6659 = vand.u32 %v6492, 4294901760
    %6660 = vmatmul.mubr.f32.gmra.mrb[0].mxu0 %v6659
    %v6661 = vpop.f32.mrb[0].mxu0
    %v6662 = vadd.f32 %v6570, %v6661
    %v6663 = vpop.f32.mrb[0].mxu0
    %v6664 = vadd.f32 %v6572, %v6663
    %6665 = vdwg.mxu0
    %v6666 = vand.u32 %v5755, 4294901760
    %v6667 = vsub.f32 %v5755, %v6666
    %6668 = vmatprep.subr.mxu0 %v6667
    %v6669 = vand.u32 %v5754, 4294901760
    %v6670 = vsub.f32 %v5754, %v6669
    %6671 = vmatpush1.msra.mxu0 %v6670
    %v6672 = vand.u32 %v5757, 4294901760
    %v6673 = vsub.f32 %v5757, %v6672
    %6674 = vmatprep.subr.mxu0 %v6673
    %v6675 = vand.u32 %v5756, 4294901760
    %v6676 = vsub.f32 %v5756, %v6675
    %6677 = vmatpush1.msra.mxu0 %v6676
    %6678 = vmatprep.subr.mxu0 0.0
    %6679 = vmatpush1.msra.mxu0 0.0
    %6680 = vmatprep.subr.mxu0 0.0
    %6681 = vmatpush1.msra.mxu0 0.0
    %6682 = vmatprep.subr.mxu0 0.0
    %6683 = vmatpush1.msra.mxu0 0.0
    %6684 = vmatprep.subr.mxu0 0.0
    %6685 = vmatpush1.msra.mxu0 0.0
    %6686 = vmatprep.subr.mxu0 0.0
    %6687 = vmatpush1.msra.mxu0 0.0
    %6688 = vmatprep.subr.mxu0 0.0
    %6689 = vmatpush1.msra.mxu0 0.0
    %6690 = vmatprep.subr.mxu0 0.0
    %6691 = vmatpush1.msra.mxu0 0.0
    %6692 = vmatprep.subr.mxu0 0.0
    %6693 = vmatpush1.msra.mxu0 0.0
    %6694 = vmatprep.subr.mxu0 0.0
    %6695 = vmatpush1.msra.mxu0 0.0
    %6696 = vmatprep.subr.mxu0 0.0
    %6697 = vmatpush1.msra.mxu0 0.0
    %6698 = vmatprep.subr.mxu0 0.0
    %6699 = vmatpush1.msra.mxu0 0.0
    %6700 = vmatprep.subr.mxu0 0.0
    %6701 = vmatpush1.msra.mxu0 0.0
    %6702 = vmatprep.subr.mxu0 0.0
    %6703 = vmatpush1.msra.mxu0 0.0
    %6704 = vmatprep.subr.mxu0 0.0
    %6705 = vmatpush1.msra.mxu0 0.0
    %6706 = vmatprep.subr.mxu0 0.0
    %6707 = vmatpush1.msra.mxu0 0.0
    %6708 = vmatprep.subr.mxu0 0.0
    %6709 = vmatpush1.msra.mxu0 0.0
    %6710 = vmatprep.subr.mxu0 0.0
    %6711 = vmatpush1.msra.mxu0 0.0
    %6712 = vmatprep.subr.mxu0 0.0
    %6713 = vmatpush1.msra.mxu0 0.0
    %6714 = vmatprep.subr.mxu0 0.0
    %6715 = vmatpush1.msra.mxu0 0.0
    %6716 = vmatprep.subr.mxu0 0.0
    %6717 = vmatpush1.msra.mxu0 0.0
    %6718 = vmatprep.subr.mxu0 0.0
    %6719 = vmatpush1.msra.mxu0 0.0
    %6720 = vmatprep.subr.mxu0 0.0
    %6721 = vmatpush1.msra.mxu0 0.0
    %6722 = vmatprep.subr.mxu0 0.0
    %6723 = vmatpush1.msra.mxu0 0.0
    %6724 = vmatprep.subr.mxu0 0.0
    %6725 = vmatpush1.msra.mxu0 0.0
    %6726 = vmatprep.subr.mxu0 0.0
    %6727 = vmatpush1.msra.mxu0 0.0
    %6728 = vmatprep.subr.mxu0 0.0
    %6729 = vmatpush1.msra.mxu0 0.0
    %6730 = vmatprep.subr.mxu0 0.0
    %6731 = vmatpush1.msra.mxu0 0.0
    %6732 = vmatprep.subr.mxu0 0.0
    %6733 = vmatpush1.msra.mxu0 0.0
    %6734 = vmatprep.subr.mxu0 0.0
    %6735 = vmatpush1.msra.mxu0 0.0
    %6736 = vmatprep.subr.mxu0 0.0
    %6737 = vmatpush1.msra.mxu0 0.0
    %6738 = vmatprep.mubr.f32.mxu0 0.0
    %v6739 = vand.u32 %v6492, 4294901760
    %v6740 = vsub.f32 %v6492, %v6739
    %6741 = vmatmul.mubr.f32.gmra.mrb[0].mxu0 %v6740
    %v6742 = vpop.f32.mrb[0].mxu0
    %v6743 = vadd.f32 %v6662, %v6742
    %v6744 = vpop.f32.mrb[0].mxu0
    %v6745 = vadd.f32 %v6664, %v6744
    %6746 = vdwg.mxu0
    %v6747 = vand.u32 %v5755, 4294901760
    %6748 = vmatprep.subr.mxu0 %v6747
    %v6749 = vand.u32 %v5754, 4294901760
    %6750 = vmatpush1.msra.mxu0 %v6749
    %v6751 = vand.u32 %v5757, 4294901760
    %6752 = vmatprep.subr.mxu0 %v6751
    %v6753 = vand.u32 %v5756, 4294901760
    %6754 = vmatpush1.msra.mxu0 %v6753
    %6755 = vmatprep.subr.mxu0 0.0
    %6756 = vmatpush1.msra.mxu0 0.0
    %6757 = vmatprep.subr.mxu0 0.0
    %6758 = vmatpush1.msra.mxu0 0.0
    %6759 = vmatprep.subr.mxu0 0.0
    %6760 = vmatpush1.msra.mxu0 0.0
    %6761 = vmatprep.subr.mxu0 0.0
    %6762 = vmatpush1.msra.mxu0 0.0
    %6763 = vmatprep.subr.mxu0 0.0
    %6764 = vmatpush1.msra.mxu0 0.0
    %6765 = vmatprep.subr.mxu0 0.0
    %6766 = vmatpush1.msra.mxu0 0.0
    %6767 = vmatprep.subr.mxu0 0.0
    %6768 = vmatpush1.msra.mxu0 0.0
    %6769 = vmatprep.subr.mxu0 0.0
    %6770 = vmatpush1.msra.mxu0 0.0
    %6771 = vmatprep.subr.mxu0 0.0
    %6772 = vmatpush1.msra.mxu0 0.0
    %6773 = vmatprep.subr.mxu0 0.0
    %6774 = vmatpush1.msra.mxu0 0.0
    %6775 = vmatprep.subr.mxu0 0.0
    %6776 = vmatpush1.msra.mxu0 0.0
    %6777 = vmatprep.subr.mxu0 0.0
    %6778 = vmatpush1.msra.mxu0 0.0
    %6779 = vmatprep.subr.mxu0 0.0
    %6780 = vmatpush1.msra.mxu0 0.0
    %6781 = vmatprep.subr.mxu0 0.0
    %6782 = vmatpush1.msra.mxu0 0.0
    %6783 = vmatprep.subr.mxu0 0.0
    %6784 = vmatpush1.msra.mxu0 0.0
    %6785 = vmatprep.subr.mxu0 0.0
    %6786 = vmatpush1.msra.mxu0 0.0
    %6787 = vmatprep.subr.mxu0 0.0
    %6788 = vmatpush1.msra.mxu0 0.0
    %6789 = vmatprep.subr.mxu0 0.0
    %6790 = vmatpush1.msra.mxu0 0.0
    %6791 = vmatprep.subr.mxu0 0.0
    %6792 = vmatpush1.msra.mxu0 0.0
    %6793 = vmatprep.subr.mxu0 0.0
    %6794 = vmatpush1.msra.mxu0 0.0
    %6795 = vmatprep.subr.mxu0 0.0
    %6796 = vmatpush1.msra.mxu0 0.0
    %6797 = vmatprep.subr.mxu0 0.0
    %6798 = vmatpush1.msra.mxu0 0.0
    %6799 = vmatprep.subr.mxu0 0.0
    %6800 = vmatpush1.msra.mxu0 0.0
    %6801 = vmatprep.subr.mxu0 0.0
    %6802 = vmatpush1.msra.mxu0 0.0
    %6803 = vmatprep.subr.mxu0 0.0
    %6804 = vmatpush1.msra.mxu0 0.0
    %6805 = vmatprep.subr.mxu0 0.0
    %6806 = vmatpush1.msra.mxu0 0.0
    %6807 = vmatprep.subr.mxu0 0.0
    %6808 = vmatpush1.msra.mxu0 0.0
    %6809 = vmatprep.subr.mxu0 0.0
    %6810 = vmatpush1.msra.mxu0 0.0
    %6811 = vmatprep.subr.mxu0 0.0
    %6812 = vmatpush1.msra.mxu0 0.0
    %6813 = vmatprep.subr.mxu0 0.0
    %6814 = vmatpush1.msra.mxu0 0.0
    %6815 = vmatprep.mubr.f32.mxu0 0.0
    %v6816 = vand.u32 %v6492, 4294901760
    %v6817 = vsub.f32 %v6492, %v6816
    %v6818 = vand.u32 %v6817, 4294901760
    %6819 = vmatmul.mubr.f32.gmra.mrb[0].mxu0 %v6818
    %v6820 = vpop.f32.mrb[0].mxu0
    %v6821 = vadd.f32 %v6743, %v6820
    %v6822 = vpop.f32.mrb[0].mxu0
    %v6823 = vadd.f32 %v6745, %v6822
    %6824 = vdwg.mxu0
    %v6825 = vand.u32 %v5755, 4294901760
    %v6826 = vsub.f32 %v5755, %v6825
    %v6827 = vand.u32 %v6826, 4294901760
    %6828 = vmatprep.subr.mxu0 %v6827
    %v6829 = vand.u32 %v5754, 4294901760
    %v6830 = vsub.f32 %v5754, %v6829
    %v6831 = vand.u32 %v6830, 4294901760
    %6832 = vmatpush1.msra.mxu0 %v6831
    %v6833 = vand.u32 %v5757, 4294901760
    %v6834 = vsub.f32 %v5757, %v6833
    %v6835 = vand.u32 %v6834, 4294901760
    %6836 = vmatprep.subr.mxu0 %v6835
    %v6837 = vand.u32 %v5756, 4294901760
    %v6838 = vsub.f32 %v5756, %v6837
    %v6839 = vand.u32 %v6838, 4294901760
    %6840 = vmatpush1.msra.mxu0 %v6839
    %6841 = vmatprep.subr.mxu0 0.0
    %6842 = vmatpush1.msra.mxu0 0.0
    %6843 = vmatprep.subr.mxu0 0.0
    %6844 = vmatpush1.msra.mxu0 0.0
    %6845 = vmatprep.subr.mxu0 0.0
    %6846 = vmatpush1.msra.mxu0 0.0
    %6847 = vmatprep.subr.mxu0 0.0
    %6848 = vmatpush1.msra.mxu0 0.0
    %6849 = vmatprep.subr.mxu0 0.0
    %6850 = vmatpush1.msra.mxu0 0.0
    %6851 = vmatprep.subr.mxu0 0.0
    %6852 = vmatpush1.msra.mxu0 0.0
    %6853 = vmatprep.subr.mxu0 0.0
    %6854 = vmatpush1.msra.mxu0 0.0
    %6855 = vmatprep.subr.mxu0 0.0
    %6856 = vmatpush1.msra.mxu0 0.0
    %6857 = vmatprep.subr.mxu0 0.0
    %6858 = vmatpush1.msra.mxu0 0.0
    %6859 = vmatprep.subr.mxu0 0.0
    %6860 = vmatpush1.msra.mxu0 0.0
    %6861 = vmatprep.subr.mxu0 0.0
    %6862 = vmatpush1.msra.mxu0 0.0
    %6863 = vmatprep.subr.mxu0 0.0
    %6864 = vmatpush1.msra.mxu0 0.0
    %6865 = vmatprep.subr.mxu0 0.0
    %6866 = vmatpush1.msra.mxu0 0.0
    %6867 = vmatprep.subr.mxu0 0.0
    %6868 = vmatpush1.msra.mxu0 0.0
    %6869 = vmatprep.subr.mxu0 0.0
    %6870 = vmatpush1.msra.mxu0 0.0
    %6871 = vmatprep.subr.mxu0 0.0
    %6872 = vmatpush1.msra.mxu0 0.0
    %6873 = vmatprep.subr.mxu0 0.0
    %6874 = vmatpush1.msra.mxu0 0.0
    %6875 = vmatprep.subr.mxu0 0.0
    %6876 = vmatpush1.msra.mxu0 0.0
    %6877 = vmatprep.subr.mxu0 0.0
    %6878 = vmatpush1.msra.mxu0 0.0
    %6879 = vmatprep.subr.mxu0 0.0
    %6880 = vmatpush1.msra.mxu0 0.0
    %6881 = vmatprep.subr.mxu0 0.0
    %6882 = vmatpush1.msra.mxu0 0.0
    %6883 = vmatprep.subr.mxu0 0.0
    %6884 = vmatpush1.msra.mxu0 0.0
    %6885 = vmatprep.subr.mxu0 0.0
    %6886 = vmatpush1.msra.mxu0 0.0
    %6887 = vmatprep.subr.mxu0 0.0
    %6888 = vmatpush1.msra.mxu0 0.0
    %6889 = vmatprep.subr.mxu0 0.0
    %6890 = vmatpush1.msra.mxu0 0.0
    %6891 = vmatprep.subr.mxu0 0.0
    %6892 = vmatpush1.msra.mxu0 0.0
    %6893 = vmatprep.subr.mxu0 0.0
    %6894 = vmatpush1.msra.mxu0 0.0
    %6895 = vmatprep.subr.mxu0 0.0
    %6896 = vmatpush1.msra.mxu0 0.0
    %6897 = vmatprep.subr.mxu0 0.0
    %6898 = vmatpush1.msra.mxu0 0.0
    %6899 = vmatprep.subr.mxu0 0.0
    %6900 = vmatpush1.msra.mxu0 0.0
    %6901 = vmatprep.mubr.f32.mxu0 0.0
    %v6902 = vand.u32 %v6492, 4294901760
    %6903 = vmatmul.mubr.f32.gmra.mrb[0].mxu0 %v6902
    %v6904 = vpop.f32.mrb[0].mxu0
    %v6905 = vadd.f32 %v6821, %v6904
    %v6906 = vpop.f32.mrb[0].mxu0
    %v6907 = vadd.f32 %v6823, %v6906
    %6908 = vdwg.mxu0
    %v6909 = vand.u32 %v5755, 4294901760
    %6910 = vmatprep.subr.mxu0 %v6909
    %v6911 = vand.u32 %v5754, 4294901760
    %6912 = vmatpush1.msra.mxu0 %v6911
    %v6913 = vand.u32 %v5757, 4294901760
    %6914 = vmatprep.subr.mxu0 %v6913
    %v6915 = vand.u32 %v5756, 4294901760
    %6916 = vmatpush1.msra.mxu0 %v6915
    %6917 = vmatprep.subr.mxu0 0.0
    %6918 = vmatpush1.msra.mxu0 0.0
    %6919 = vmatprep.subr.mxu0 0.0
    %6920 = vmatpush1.msra.mxu0 0.0
    %6921 = vmatprep.subr.mxu0 0.0
    %6922 = vmatpush1.msra.mxu0 0.0
    %6923 = vmatprep.subr.mxu0 0.0
    %6924 = vmatpush1.msra.mxu0 0.0
    %6925 = vmatprep.subr.mxu0 0.0
    %6926 = vmatpush1.msra.mxu0 0.0
    %6927 = vmatprep.subr.mxu0 0.0
    %6928 = vmatpush1.msra.mxu0 0.0
    %6929 = vmatprep.subr.mxu0 0.0
    %6930 = vmatpush1.msra.mxu0 0.0
    %6931 = vmatprep.subr.mxu0 0.0
    %6932 = vmatpush1.msra.mxu0 0.0
    %6933 = vmatprep.subr.mxu0 0.0
    %6934 = vmatpush1.msra.mxu0 0.0
    %6935 = vmatprep.subr.mxu0 0.0
    %6936 = vmatpush1.msra.mxu0 0.0
    %6937 = vmatprep.subr.mxu0 0.0
    %6938 = vmatpush1.msra.mxu0 0.0
    %6939 = vmatprep.subr.mxu0 0.0
    %6940 = vmatpush1.msra.mxu0 0.0
    %6941 = vmatprep.subr.mxu0 0.0
    %6942 = vmatpush1.msra.mxu0 0.0
    %6943 = vmatprep.subr.mxu0 0.0
    %6944 = vmatpush1.msra.mxu0 0.0
    %6945 = vmatprep.subr.mxu0 0.0
    %6946 = vmatpush1.msra.mxu0 0.0
    %6947 = vmatprep.subr.mxu0 0.0
    %6948 = vmatpush1.msra.mxu0 0.0
    %6949 = vmatprep.subr.mxu0 0.0
    %6950 = vmatpush1.msra.mxu0 0.0
    %6951 = vmatprep.subr.mxu0 0.0
    %6952 = vmatpush1.msra.mxu0 0.0
    %6953 = vmatprep.subr.mxu0 0.0
    %6954 = vmatpush1.msra.mxu0 0.0
    %6955 = vmatprep.subr.mxu0 0.0
    %6956 = vmatpush1.msra.mxu0 0.0
    %6957 = vmatprep.subr.mxu0 0.0
    %6958 = vmatpush1.msra.mxu0 0.0
    %6959 = vmatprep.subr.mxu0 0.0
    %6960 = vmatpush1.msra.mxu0 0.0
    %6961 = vmatprep.subr.mxu0 0.0
    %6962 = vmatpush1.msra.mxu0 0.0
    %6963 = vmatprep.subr.mxu0 0.0
    %6964 = vmatpush1.msra.mxu0 0.0
    %6965 = vmatprep.subr.mxu0 0.0
    %6966 = vmatpush1.msra.mxu0 0.0
    %6967 = vmatprep.subr.mxu0 0.0
    %6968 = vmatpush1.msra.mxu0 0.0
    %6969 = vmatprep.subr.mxu0 0.0
    %6970 = vmatpush1.msra.mxu0 0.0
    %6971 = vmatprep.subr.mxu0 0.0
    %6972 = vmatpush1.msra.mxu0 0.0
    %6973 = vmatprep.subr.mxu0 0.0
    %6974 = vmatpush1.msra.mxu0 0.0
    %6975 = vmatprep.subr.mxu0 0.0
    %6976 = vmatpush1.msra.mxu0 0.0
    %6977 = vmatprep.mubr.f32.mxu0 0.0
    %v6978 = vand.u32 %v6492, 4294901760
    %6979 = vmatmul.mubr.f32.gmra.mrb[0].mxu0 %v6978
    %v6980 = vpop.f32.mrb[0].mxu0
    %v6981 = vadd.f32 %v6905, %v6980
    %v6982 = vpop.f32.mrb[0].mxu0
    %v6983 = vadd.f32 %v6907, %v6982
    %6984 = vdwg.mxu0
    %v6985 = vlaneseq
    %v6986 = vshrl.u32 %v6985, 7
    %v6987 = vsub.s32 0, %v6986
    %v6988 = vrot.slane %v6981, %v6987
    %v6989 = vlaneseq
    %v6990 = vshrl.u32 %v6989, 7
    %v6991 = vsub.s32 0, %v6990
    %v6992 = vrot.slane %v6983, %v6991
    %v6993 = vsub.f32 %v5706, %v6988
    %v6994 = vsub.f32 %v5707, %v6992
    %v6995 = vsub.f32 %v5708, %v6988
    %v6996 = vsub.f32 %v5709, %v6992
    %v6997 = vsub.f32 %v5710, %v6988
    %v6998 = vsub.f32 %v5711, %v6992
    %v6999 = vmul.f32 %v6993, %v6993
    %v7000 = vmul.f32 %v6994, %v6994
    %v7001 = vmul.f32 %v6995, %v6995
    %v7002 = vmul.f32 %v6996, %v6996
    %v7003 = vmul.f32 %v6997, %v6997
    %v7004 = vmul.f32 %v6998, %v6998
    %v7005 = vadd.f32 %v6999, %v7001
    %v7006 = vsel %vm5759, %v7003, 0.0
    %v7007 = vadd.f32 %v7005, %v7006
    %v7008 = vrot.slane %v7007, 4
    %v7009 = vadd.f32 %v7007, %v7008
    %v7010 = vrot.slane %v7009, 2
    %v7011 = vadd.f32 %v7009, %v7010
    %v7012 = vrot.slane %v7011, 1
    %v7013 = vadd.f32 %v7011, %v7012
    %v7014 = vsel %vm115, %v7000, 0.0
    %v7015 = vsel %vm115, %v7002, 0.0
    %v7016 = vadd.f32 %v7014, %v7015
    %v7017 = vsel %vm5771, %v7004, 0.0
    %v7018 = vadd.f32 %v7016, %v7017
    %v7019 = vrot.slane %v7018, 4
    %v7020 = vadd.f32 %v7018, %v7019
    %v7021 = vrot.slane %v7020, 2
    %v7022 = vadd.f32 %v7020, %v7021
    %v7023 = vrot.slane %v7022, 1
    %v7024 = vadd.f32 %v7022, %v7023
    %v7026 = vsel %vm115, %v7024, 0
    %7028 = vmatprep.subr.mxu0 0.0
    %v7029 = vand.u32 %v5734, 4294901760
    %7030 = vmatpush1.msra.mxu0 %v7029
    %7031 = vmatprep.subr.mxu0 0.0
    %v7032 = vand.u32 %v5735, 4294901760
    %7033 = vmatpush1.msra.mxu0 %v7032
    %7034 = vmatprep.subr.mxu0 0.0
    %v7035 = vand.u32 %v5736, 4294901760
    %7036 = vmatpush1.msra.mxu0 %v7035
    %7037 = vmatprep.subr.mxu0 0.0
    %v7038 = vand.u32 %v5737, 4294901760
    %7039 = vmatpush1.msra.mxu0 %v7038
    %7040 = vmatprep.subr.mxu0 0.0
    %v7041 = vand.u32 %v5738, 4294901760
    %7042 = vmatpush1.msra.mxu0 %v7041
    %7043 = vmatprep.subr.mxu0 0.0
    %v7044 = vand.u32 %v5739, 4294901760
    %7045 = vmatpush1.msra.mxu0 %v7044
    %7046 = vmatprep.subr.mxu0 0.0
    %v7047 = vand.u32 %v5740, 4294901760
    %7048 = vmatpush1.msra.mxu0 %v7047
    %7049 = vmatprep.subr.mxu0 0.0
    %v7050 = vand.u32 %v5741, 4294901760
    %7051 = vmatpush1.msra.mxu0 %v7050
    %7052 = vmatprep.subr.mxu0 0.0
    %v7053 = vand.u32 %v5742, 4294901760
    %7054 = vmatpush1.msra.mxu0 %v7053
    %7055 = vmatprep.subr.mxu0 0.0
    %v7056 = vand.u32 %v5743, 4294901760
    %7057 = vmatpush1.msra.mxu0 %v7056
    %7058 = vmatprep.subr.mxu0 0.0
    %v7059 = vand.u32 %v5744, 4294901760
    %7060 = vmatpush1.msra.mxu0 %v7059
    %7061 = vmatprep.subr.mxu0 0.0
    %v7062 = vand.u32 %v5745, 4294901760
    %7063 = vmatpush1.msra.mxu0 %v7062
    %7064 = vmatprep.subr.mxu0 0.0
    %v7065 = vand.u32 %v5746, 4294901760
    %7066 = vmatpush1.msra.mxu0 %v7065
    %7067 = vmatprep.subr.mxu0 0.0
    %v7068 = vand.u32 %v5747, 4294901760
    %7069 = vmatpush1.msra.mxu0 %v7068
    %7070 = vmatprep.subr.mxu0 0.0
    %v7071 = vand.u32 %v5748, 4294901760
    %7072 = vmatpush1.msra.mxu0 %v7071
    %7073 = vmatprep.subr.mxu0 0.0
    %v7074 = vand.u32 %v5749, 4294901760
    %7075 = vmatpush1.msra.mxu0 %v7074
    %7076 = vmatprep.subr.mxu0 0.0
    %v7077 = vand.u32 %v5750, 4294901760
    %7078 = vmatpush1.msra.mxu0 %v7077
    %7079 = vmatprep.subr.mxu0 0.0
    %v7080 = vand.u32 %v5751, 4294901760
    %7081 = vmatpush1.msra.mxu0 %v7080
    %7082 = vmatprep.subr.mxu0 0.0
    %v7083 = vand.u32 %v5752, 4294901760
    %7084 = vmatpush1.msra.mxu0 %v7083
    %7085 = vmatprep.subr.mxu0 0.0
    %v7086 = vand.u32 %v5753, 4294901760
    %7087 = vmatpush1.msra.mxu0 %v7086
    %7088 = vmatprep.subr.mxu0 0.0
    %7089 = vmatpush1.msra.mxu0 0.0
    %7090 = vmatprep.subr.mxu0 0.0
    %7091 = vmatpush1.msra.mxu0 0.0
    %7092 = vmatprep.subr.mxu0 0.0
    %7093 = vmatpush1.msra.mxu0 0.0
    %7094 = vmatprep.subr.mxu0 0.0
    %7095 = vmatpush1.msra.mxu0 0.0
    %7096 = vmatprep.subr.mxu0 0.0
    %7097 = vmatpush1.msra.mxu0 0.0
    %7098 = vmatprep.subr.mxu0 0.0
    %7099 = vmatpush1.msra.mxu0 0.0
    %7100 = vmatprep.subr.mxu0 0.0
    %7101 = vmatpush1.msra.mxu0 0.0
    %7102 = vmatprep.subr.mxu0 0.0
    %7103 = vmatpush1.msra.mxu0 0.0
    %7104 = vmatprep.subr.mxu0 0.0
    %7105 = vmatpush1.msra.mxu0 0.0
    %7106 = vmatprep.subr.mxu0 0.0
    %7107 = vmatpush1.msra.mxu0 0.0
    %7108 = vmatprep.subr.mxu0 0.0
    %7109 = vmatpush1.msra.mxu0 0.0
    %7110 = vmatprep.subr.mxu0 0.0
    %7111 = vmatpush1.msra.mxu0 0.0
    %v7112 = vand.u32 %v7026, 4294901760
    %v7113 = vsub.f32 %v7026, %v7112
    %v7114 = vand.u32 %v7113, 4294901760
    %v7115 = vsub.f32 %v7113, %v7114
    %v7116 = vand.u32 %v7115, 4294901760
    %7117 = vmatprep.mubr.f32.mxu0 %v7116
    %v7118 = vand.u32 %v7013, 4294901760
    %v7119 = vsub.f32 %v7013, %v7118
    %v7120 = vand.u32 %v7119, 4294901760
    %v7121 = vsub.f32 %v7119, %v7120
    %v7122 = vand.u32 %v7121, 4294901760
    %7123 = vmatmul.mubr.f32.gmra.mrb[0].mxu0 %v7122
    %v7124 = vpop.f32.mrb[0].mxu0
    %v7125 = vadd.f32 0.0, %v7124
    %v7126 = vpop.f32.mrb[0].mxu0
    %7127 = vdwg.mxu0
    %7128 = vmatprep.subr.mxu0 0.0
    %v7129 = vand.u32 %v5734, 4294901760
    %v7130 = vsub.f32 %v5734, %v7129
    %v7131 = vand.u32 %v7130, 4294901760
    %v7132 = vsub.f32 %v7130, %v7131
    %v7133 = vand.u32 %v7132, 4294901760
    %7134 = vmatpush1.msra.mxu0 %v7133
    %7135 = vmatprep.subr.mxu0 0.0
    %v7136 = vand.u32 %v5735, 4294901760
    %v7137 = vsub.f32 %v5735, %v7136
    %v7138 = vand.u32 %v7137, 4294901760
    %v7139 = vsub.f32 %v7137, %v7138
    %v7140 = vand.u32 %v7139, 4294901760
    %7141 = vmatpush1.msra.mxu0 %v7140
    %7142 = vmatprep.subr.mxu0 0.0
    %v7143 = vand.u32 %v5736, 4294901760
    %v7144 = vsub.f32 %v5736, %v7143
    %v7145 = vand.u32 %v7144, 4294901760
    %v7146 = vsub.f32 %v7144, %v7145
    %v7147 = vand.u32 %v7146, 4294901760
    %7148 = vmatpush1.msra.mxu0 %v7147
    %7149 = vmatprep.subr.mxu0 0.0
    %v7150 = vand.u32 %v5737, 4294901760
    %v7151 = vsub.f32 %v5737, %v7150
    %v7152 = vand.u32 %v7151, 4294901760
    %v7153 = vsub.f32 %v7151, %v7152
    %v7154 = vand.u32 %v7153, 4294901760
    %7155 = vmatpush1.msra.mxu0 %v7154
    %7156 = vmatprep.subr.mxu0 0.0
    %v7157 = vand.u32 %v5738, 4294901760
    %v7158 = vsub.f32 %v5738, %v7157
    %v7159 = vand.u32 %v7158, 4294901760
    %v7160 = vsub.f32 %v7158, %v7159
    %v7161 = vand.u32 %v7160, 4294901760
    %7162 = vmatpush1.msra.mxu0 %v7161
    %7163 = vmatprep.subr.mxu0 0.0
    %v7164 = vand.u32 %v5739, 4294901760
    %v7165 = vsub.f32 %v5739, %v7164
    %v7166 = vand.u32 %v7165, 4294901760
    %v7167 = vsub.f32 %v7165, %v7166
    %v7168 = vand.u32 %v7167, 4294901760
    %7169 = vmatpush1.msra.mxu0 %v7168
    %7170 = vmatprep.subr.mxu0 0.0
    %v7171 = vand.u32 %v5740, 4294901760
    %v7172 = vsub.f32 %v5740, %v7171
    %v7173 = vand.u32 %v7172, 4294901760
    %v7174 = vsub.f32 %v7172, %v7173
    %v7175 = vand.u32 %v7174, 4294901760
    %7176 = vmatpush1.msra.mxu0 %v7175
    %7177 = vmatprep.subr.mxu0 0.0
    %v7178 = vand.u32 %v5741, 4294901760
    %v7179 = vsub.f32 %v5741, %v7178
    %v7180 = vand.u32 %v7179, 4294901760
    %v7181 = vsub.f32 %v7179, %v7180
    %v7182 = vand.u32 %v7181, 4294901760
    %7183 = vmatpush1.msra.mxu0 %v7182
    %7184 = vmatprep.subr.mxu0 0.0
    %v7185 = vand.u32 %v5742, 4294901760
    %v7186 = vsub.f32 %v5742, %v7185
    %v7187 = vand.u32 %v7186, 4294901760
    %v7188 = vsub.f32 %v7186, %v7187
    %v7189 = vand.u32 %v7188, 4294901760
    %7190 = vmatpush1.msra.mxu0 %v7189
    %7191 = vmatprep.subr.mxu0 0.0
    %v7192 = vand.u32 %v5743, 4294901760
    %v7193 = vsub.f32 %v5743, %v7192
    %v7194 = vand.u32 %v7193, 4294901760
    %v7195 = vsub.f32 %v7193, %v7194
    %v7196 = vand.u32 %v7195, 4294901760
    %7197 = vmatpush1.msra.mxu0 %v7196
    %7198 = vmatprep.subr.mxu0 0.0
    %v7199 = vand.u32 %v5744, 4294901760
    %v7200 = vsub.f32 %v5744, %v7199
    %v7201 = vand.u32 %v7200, 4294901760
    %v7202 = vsub.f32 %v7200, %v7201
    %v7203 = vand.u32 %v7202, 4294901760
    %7204 = vmatpush1.msra.mxu0 %v7203
    %7205 = vmatprep.subr.mxu0 0.0
    %v7206 = vand.u32 %v5745, 4294901760
    %v7207 = vsub.f32 %v5745, %v7206
    %v7208 = vand.u32 %v7207, 4294901760
    %v7209 = vsub.f32 %v7207, %v7208
    %v7210 = vand.u32 %v7209, 4294901760
    %7211 = vmatpush1.msra.mxu0 %v7210
    %7212 = vmatprep.subr.mxu0 0.0
    %v7213 = vand.u32 %v5746, 4294901760
    %v7214 = vsub.f32 %v5746, %v7213
    %v7215 = vand.u32 %v7214, 4294901760
    %v7216 = vsub.f32 %v7214, %v7215
    %v7217 = vand.u32 %v7216, 4294901760
    %7218 = vmatpush1.msra.mxu0 %v7217
    %7219 = vmatprep.subr.mxu0 0.0
    %v7220 = vand.u32 %v5747, 4294901760
    %v7221 = vsub.f32 %v5747, %v7220
    %v7222 = vand.u32 %v7221, 4294901760
    %v7223 = vsub.f32 %v7221, %v7222
    %v7224 = vand.u32 %v7223, 4294901760
    %7225 = vmatpush1.msra.mxu0 %v7224
    %7226 = vmatprep.subr.mxu0 0.0
    %v7227 = vand.u32 %v5748, 4294901760
    %v7228 = vsub.f32 %v5748, %v7227
    %v7229 = vand.u32 %v7228, 4294901760
    %v7230 = vsub.f32 %v7228, %v7229
    %v7231 = vand.u32 %v7230, 4294901760
    %7232 = vmatpush1.msra.mxu0 %v7231
    %7233 = vmatprep.subr.mxu0 0.0
    %v7234 = vand.u32 %v5749, 4294901760
    %v7235 = vsub.f32 %v5749, %v7234
    %v7236 = vand.u32 %v7235, 4294901760
    %v7237 = vsub.f32 %v7235, %v7236
    %v7238 = vand.u32 %v7237, 4294901760
    %7239 = vmatpush1.msra.mxu0 %v7238
    %7240 = vmatprep.subr.mxu0 0.0
    %v7241 = vand.u32 %v5750, 4294901760
    %v7242 = vsub.f32 %v5750, %v7241
    %v7243 = vand.u32 %v7242, 4294901760
    %v7244 = vsub.f32 %v7242, %v7243
    %v7245 = vand.u32 %v7244, 4294901760
    %7246 = vmatpush1.msra.mxu0 %v7245
    %7247 = vmatprep.subr.mxu0 0.0
    %v7248 = vand.u32 %v5751, 4294901760
    %v7249 = vsub.f32 %v5751, %v7248
    %v7250 = vand.u32 %v7249, 4294901760
    %v7251 = vsub.f32 %v7249, %v7250
    %v7252 = vand.u32 %v7251, 4294901760
    %7253 = vmatpush1.msra.mxu0 %v7252
    %7254 = vmatprep.subr.mxu0 0.0
    %v7255 = vand.u32 %v5752, 4294901760
    %v7256 = vsub.f32 %v5752, %v7255
    %v7257 = vand.u32 %v7256, 4294901760
    %v7258 = vsub.f32 %v7256, %v7257
    %v7259 = vand.u32 %v7258, 4294901760
    %7260 = vmatpush1.msra.mxu0 %v7259
    %7261 = vmatprep.subr.mxu0 0.0
    %v7262 = vand.u32 %v5753, 4294901760
    %v7263 = vsub.f32 %v5753, %v7262
    %v7264 = vand.u32 %v7263, 4294901760
    %v7265 = vsub.f32 %v7263, %v7264
    %v7266 = vand.u32 %v7265, 4294901760
    %7267 = vmatpush1.msra.mxu0 %v7266
    %7268 = vmatprep.subr.mxu0 0.0
    %7269 = vmatpush1.msra.mxu0 0.0
    %7270 = vmatprep.subr.mxu0 0.0
    %7271 = vmatpush1.msra.mxu0 0.0
    %7272 = vmatprep.subr.mxu0 0.0
    %7273 = vmatpush1.msra.mxu0 0.0
    %7274 = vmatprep.subr.mxu0 0.0
    %7275 = vmatpush1.msra.mxu0 0.0
    %7276 = vmatprep.subr.mxu0 0.0
    %7277 = vmatpush1.msra.mxu0 0.0
    %7278 = vmatprep.subr.mxu0 0.0
    %7279 = vmatpush1.msra.mxu0 0.0
    %7280 = vmatprep.subr.mxu0 0.0
    %7281 = vmatpush1.msra.mxu0 0.0
    %7282 = vmatprep.subr.mxu0 0.0
    %7283 = vmatpush1.msra.mxu0 0.0
    %7284 = vmatprep.subr.mxu0 0.0
    %7285 = vmatpush1.msra.mxu0 0.0
    %7286 = vmatprep.subr.mxu0 0.0
    %7287 = vmatpush1.msra.mxu0 0.0
    %7288 = vmatprep.subr.mxu0 0.0
    %7289 = vmatpush1.msra.mxu0 0.0
    %7290 = vmatprep.subr.mxu0 0.0
    %7291 = vmatpush1.msra.mxu0 0.0
    %v7292 = vand.u32 %v7026, 4294901760
    %7293 = vmatprep.mubr.f32.mxu0 %v7292
    %v7294 = vand.u32 %v7013, 4294901760
    %7295 = vmatmul.mubr.f32.gmra.mrb[0].mxu0 %v7294
    %v7296 = vpop.f32.mrb[0].mxu0
    %v7297 = vadd.f32 %v7125, %v7296
    %v7298 = vpop.f32.mrb[0].mxu0
    %7299 = vdwg.mxu0
    %7300 = vmatprep.subr.mxu0 0.0
    %v7301 = vand.u32 %v5734, 4294901760
    %v7302 = vsub.f32 %v5734, %v7301
    %7303 = vmatpush1.msra.mxu0 %v7302
    %7304 = vmatprep.subr.mxu0 0.0
    %v7305 = vand.u32 %v5735, 4294901760
    %v7306 = vsub.f32 %v5735, %v7305
    %7307 = vmatpush1.msra.mxu0 %v7306
    %7308 = vmatprep.subr.mxu0 0.0
    %v7309 = vand.u32 %v5736, 4294901760
    %v7310 = vsub.f32 %v5736, %v7309
    %7311 = vmatpush1.msra.mxu0 %v7310
    %7312 = vmatprep.subr.mxu0 0.0
    %v7313 = vand.u32 %v5737, 4294901760
    %v7314 = vsub.f32 %v5737, %v7313
    %7315 = vmatpush1.msra.mxu0 %v7314
    %7316 = vmatprep.subr.mxu0 0.0
    %v7317 = vand.u32 %v5738, 4294901760
    %v7318 = vsub.f32 %v5738, %v7317
    %7319 = vmatpush1.msra.mxu0 %v7318
    %7320 = vmatprep.subr.mxu0 0.0
    %v7321 = vand.u32 %v5739, 4294901760
    %v7322 = vsub.f32 %v5739, %v7321
    %7323 = vmatpush1.msra.mxu0 %v7322
    %7324 = vmatprep.subr.mxu0 0.0
    %v7325 = vand.u32 %v5740, 4294901760
    %v7326 = vsub.f32 %v5740, %v7325
    %7327 = vmatpush1.msra.mxu0 %v7326
    %7328 = vmatprep.subr.mxu0 0.0
    %v7329 = vand.u32 %v5741, 4294901760
    %v7330 = vsub.f32 %v5741, %v7329
    %7331 = vmatpush1.msra.mxu0 %v7330
    %7332 = vmatprep.subr.mxu0 0.0
    %v7333 = vand.u32 %v5742, 4294901760
    %v7334 = vsub.f32 %v5742, %v7333
    %7335 = vmatpush1.msra.mxu0 %v7334
    %7336 = vmatprep.subr.mxu0 0.0
    %v7337 = vand.u32 %v5743, 4294901760
    %v7338 = vsub.f32 %v5743, %v7337
    %7339 = vmatpush1.msra.mxu0 %v7338
    %7340 = vmatprep.subr.mxu0 0.0
    %v7341 = vand.u32 %v5744, 4294901760
    %v7342 = vsub.f32 %v5744, %v7341
    %7343 = vmatpush1.msra.mxu0 %v7342
    %7344 = vmatprep.subr.mxu0 0.0
    %v7345 = vand.u32 %v5745, 4294901760
    %v7346 = vsub.f32 %v5745, %v7345
    %7347 = vmatpush1.msra.mxu0 %v7346
    %7348 = vmatprep.subr.mxu0 0.0
    %v7349 = vand.u32 %v5746, 4294901760
    %v7350 = vsub.f32 %v5746, %v7349
    %7351 = vmatpush1.msra.mxu0 %v7350
    %7352 = vmatprep.subr.mxu0 0.0
    %v7353 = vand.u32 %v5747, 4294901760
    %v7354 = vsub.f32 %v5747, %v7353
    %7355 = vmatpush1.msra.mxu0 %v7354
    %7356 = vmatprep.subr.mxu0 0.0
    %v7357 = vand.u32 %v5748, 4294901760
    %v7358 = vsub.f32 %v5748, %v7357
    %7359 = vmatpush1.msra.mxu0 %v7358
    %7360 = vmatprep.subr.mxu0 0.0
    %v7361 = vand.u32 %v5749, 4294901760
    %v7362 = vsub.f32 %v5749, %v7361
    %7363 = vmatpush1.msra.mxu0 %v7362
    %7364 = vmatprep.subr.mxu0 0.0
    %v7365 = vand.u32 %v5750, 4294901760
    %v7366 = vsub.f32 %v5750, %v7365
    %7367 = vmatpush1.msra.mxu0 %v7366
    %7368 = vmatprep.subr.mxu0 0.0
    %v7369 = vand.u32 %v5751, 4294901760
    %v7370 = vsub.f32 %v5751, %v7369
    %7371 = vmatpush1.msra.mxu0 %v7370
    %7372 = vmatprep.subr.mxu0 0.0
    %v7373 = vand.u32 %v5752, 4294901760
    %v7374 = vsub.f32 %v5752, %v7373
    %7375 = vmatpush1.msra.mxu0 %v7374
    %7376 = vmatprep.subr.mxu0 0.0
    %v7377 = vand.u32 %v5753, 4294901760
    %v7378 = vsub.f32 %v5753, %v7377
    %7379 = vmatpush1.msra.mxu0 %v7378
    %7380 = vmatprep.subr.mxu0 0.0
    %7381 = vmatpush1.msra.mxu0 0.0
    %7382 = vmatprep.subr.mxu0 0.0
    %7383 = vmatpush1.msra.mxu0 0.0
    %7384 = vmatprep.subr.mxu0 0.0
    %7385 = vmatpush1.msra.mxu0 0.0
    %7386 = vmatprep.subr.mxu0 0.0
    %7387 = vmatpush1.msra.mxu0 0.0
    %7388 = vmatprep.subr.mxu0 0.0
    %7389 = vmatpush1.msra.mxu0 0.0
    %7390 = vmatprep.subr.mxu0 0.0
    %7391 = vmatpush1.msra.mxu0 0.0
    %7392 = vmatprep.subr.mxu0 0.0
    %7393 = vmatpush1.msra.mxu0 0.0
    %7394 = vmatprep.subr.mxu0 0.0
    %7395 = vmatpush1.msra.mxu0 0.0
    %7396 = vmatprep.subr.mxu0 0.0
    %7397 = vmatpush1.msra.mxu0 0.0
    %7398 = vmatprep.subr.mxu0 0.0
    %7399 = vmatpush1.msra.mxu0 0.0
    %7400 = vmatprep.subr.mxu0 0.0
    %7401 = vmatpush1.msra.mxu0 0.0
    %7402 = vmatprep.subr.mxu0 0.0
    %7403 = vmatpush1.msra.mxu0 0.0
    %v7404 = vand.u32 %v7026, 4294901760
    %v7405 = vsub.f32 %v7026, %v7404
    %7406 = vmatprep.mubr.f32.mxu0 %v7405
    %v7407 = vand.u32 %v7013, 4294901760
    %v7408 = vsub.f32 %v7013, %v7407
    %7409 = vmatmul.mubr.f32.gmra.mrb[0].mxu0 %v7408
    %v7410 = vpop.f32.mrb[0].mxu0
    %v7411 = vadd.f32 %v7297, %v7410
    %v7412 = vpop.f32.mrb[0].mxu0
    %7413 = vdwg.mxu0
    %7414 = vmatprep.subr.mxu0 0.0
    %v7415 = vand.u32 %v5734, 4294901760
    %7416 = vmatpush1.msra.mxu0 %v7415
    %7417 = vmatprep.subr.mxu0 0.0
    %v7418 = vand.u32 %v5735, 4294901760
    %7419 = vmatpush1.msra.mxu0 %v7418
    %7420 = vmatprep.subr.mxu0 0.0
    %v7421 = vand.u32 %v5736, 4294901760
    %7422 = vmatpush1.msra.mxu0 %v7421
    %7423 = vmatprep.subr.mxu0 0.0
    %v7424 = vand.u32 %v5737, 4294901760
    %7425 = vmatpush1.msra.mxu0 %v7424
    %7426 = vmatprep.subr.mxu0 0.0
    %v7427 = vand.u32 %v5738, 4294901760
    %7428 = vmatpush1.msra.mxu0 %v7427
    %7429 = vmatprep.subr.mxu0 0.0
    %v7430 = vand.u32 %v5739, 4294901760
    %7431 = vmatpush1.msra.mxu0 %v7430
    %7432 = vmatprep.subr.mxu0 0.0
    %v7433 = vand.u32 %v5740, 4294901760
    %7434 = vmatpush1.msra.mxu0 %v7433
    %7435 = vmatprep.subr.mxu0 0.0
    %v7436 = vand.u32 %v5741, 4294901760
    %7437 = vmatpush1.msra.mxu0 %v7436
    %7438 = vmatprep.subr.mxu0 0.0
    %v7439 = vand.u32 %v5742, 4294901760
    %7440 = vmatpush1.msra.mxu0 %v7439
    %7441 = vmatprep.subr.mxu0 0.0
    %v7442 = vand.u32 %v5743, 4294901760
    %7443 = vmatpush1.msra.mxu0 %v7442
    %7444 = vmatprep.subr.mxu0 0.0
    %v7445 = vand.u32 %v5744, 4294901760
    %7446 = vmatpush1.msra.mxu0 %v7445
    %7447 = vmatprep.subr.mxu0 0.0
    %v7448 = vand.u32 %v5745, 4294901760
    %7449 = vmatpush1.msra.mxu0 %v7448
    %7450 = vmatprep.subr.mxu0 0.0
    %v7451 = vand.u32 %v5746, 4294901760
    %7452 = vmatpush1.msra.mxu0 %v7451
    %7453 = vmatprep.subr.mxu0 0.0
    %v7454 = vand.u32 %v5747, 4294901760
    %7455 = vmatpush1.msra.mxu0 %v7454
    %7456 = vmatprep.subr.mxu0 0.0
    %v7457 = vand.u32 %v5748, 4294901760
    %7458 = vmatpush1.msra.mxu0 %v7457
    %7459 = vmatprep.subr.mxu0 0.0
    %v7460 = vand.u32 %v5749, 4294901760
    %7461 = vmatpush1.msra.mxu0 %v7460
    %7462 = vmatprep.subr.mxu0 0.0
    %v7463 = vand.u32 %v5750, 4294901760
    %7464 = vmatpush1.msra.mxu0 %v7463
    %7465 = vmatprep.subr.mxu0 0.0
    %v7466 = vand.u32 %v5751, 4294901760
    %7467 = vmatpush1.msra.mxu0 %v7466
    %7468 = vmatprep.subr.mxu0 0.0
    %v7469 = vand.u32 %v5752, 4294901760
    %7470 = vmatpush1.msra.mxu0 %v7469
    %7471 = vmatprep.subr.mxu0 0.0
    %v7472 = vand.u32 %v5753, 4294901760
    %7473 = vmatpush1.msra.mxu0 %v7472
    %7474 = vmatprep.subr.mxu0 0.0
    %7475 = vmatpush1.msra.mxu0 0.0
    %7476 = vmatprep.subr.mxu0 0.0
    %7477 = vmatpush1.msra.mxu0 0.0
    %7478 = vmatprep.subr.mxu0 0.0
    %7479 = vmatpush1.msra.mxu0 0.0
    %7480 = vmatprep.subr.mxu0 0.0
    %7481 = vmatpush1.msra.mxu0 0.0
    %7482 = vmatprep.subr.mxu0 0.0
    %7483 = vmatpush1.msra.mxu0 0.0
    %7484 = vmatprep.subr.mxu0 0.0
    %7485 = vmatpush1.msra.mxu0 0.0
    %7486 = vmatprep.subr.mxu0 0.0
    %7487 = vmatpush1.msra.mxu0 0.0
    %7488 = vmatprep.subr.mxu0 0.0
    %7489 = vmatpush1.msra.mxu0 0.0
    %7490 = vmatprep.subr.mxu0 0.0
    %7491 = vmatpush1.msra.mxu0 0.0
    %7492 = vmatprep.subr.mxu0 0.0
    %7493 = vmatpush1.msra.mxu0 0.0
    %7494 = vmatprep.subr.mxu0 0.0
    %7495 = vmatpush1.msra.mxu0 0.0
    %7496 = vmatprep.subr.mxu0 0.0
    %7497 = vmatpush1.msra.mxu0 0.0
    %v7498 = vand.u32 %v7026, 4294901760
    %v7499 = vsub.f32 %v7026, %v7498
    %v7500 = vand.u32 %v7499, 4294901760
    %7501 = vmatprep.mubr.f32.mxu0 %v7500
    %v7502 = vand.u32 %v7013, 4294901760
    %v7503 = vsub.f32 %v7013, %v7502
    %v7504 = vand.u32 %v7503, 4294901760
    %7505 = vmatmul.mubr.f32.gmra.mrb[0].mxu0 %v7504
    %v7506 = vpop.f32.mrb[0].mxu0
    %v7507 = vadd.f32 %v7411, %v7506
    %v7508 = vpop.f32.mrb[0].mxu0
    %7509 = vdwg.mxu0
    %7510 = vmatprep.subr.mxu0 0.0
    %v7511 = vand.u32 %v5734, 4294901760
    %v7512 = vsub.f32 %v5734, %v7511
    %v7513 = vand.u32 %v7512, 4294901760
    %7514 = vmatpush1.msra.mxu0 %v7513
    %7515 = vmatprep.subr.mxu0 0.0
    %v7516 = vand.u32 %v5735, 4294901760
    %v7517 = vsub.f32 %v5735, %v7516
    %v7518 = vand.u32 %v7517, 4294901760
    %7519 = vmatpush1.msra.mxu0 %v7518
    %7520 = vmatprep.subr.mxu0 0.0
    %v7521 = vand.u32 %v5736, 4294901760
    %v7522 = vsub.f32 %v5736, %v7521
    %v7523 = vand.u32 %v7522, 4294901760
    %7524 = vmatpush1.msra.mxu0 %v7523
    %7525 = vmatprep.subr.mxu0 0.0
    %v7526 = vand.u32 %v5737, 4294901760
    %v7527 = vsub.f32 %v5737, %v7526
    %v7528 = vand.u32 %v7527, 4294901760
    %7529 = vmatpush1.msra.mxu0 %v7528
    %7530 = vmatprep.subr.mxu0 0.0
    %v7531 = vand.u32 %v5738, 4294901760
    %v7532 = vsub.f32 %v5738, %v7531
    %v7533 = vand.u32 %v7532, 4294901760
    %7534 = vmatpush1.msra.mxu0 %v7533
    %7535 = vmatprep.subr.mxu0 0.0
    %v7536 = vand.u32 %v5739, 4294901760
    %v7537 = vsub.f32 %v5739, %v7536
    %v7538 = vand.u32 %v7537, 4294901760
    %7539 = vmatpush1.msra.mxu0 %v7538
    %7540 = vmatprep.subr.mxu0 0.0
    %v7541 = vand.u32 %v5740, 4294901760
    %v7542 = vsub.f32 %v5740, %v7541
    %v7543 = vand.u32 %v7542, 4294901760
    %7544 = vmatpush1.msra.mxu0 %v7543
    %7545 = vmatprep.subr.mxu0 0.0
    %v7546 = vand.u32 %v5741, 4294901760
    %v7547 = vsub.f32 %v5741, %v7546
    %v7548 = vand.u32 %v7547, 4294901760
    %7549 = vmatpush1.msra.mxu0 %v7548
    %7550 = vmatprep.subr.mxu0 0.0
    %v7551 = vand.u32 %v5742, 4294901760
    %v7552 = vsub.f32 %v5742, %v7551
    %v7553 = vand.u32 %v7552, 4294901760
    %7554 = vmatpush1.msra.mxu0 %v7553
    %7555 = vmatprep.subr.mxu0 0.0
    %v7556 = vand.u32 %v5743, 4294901760
    %v7557 = vsub.f32 %v5743, %v7556
    %v7558 = vand.u32 %v7557, 4294901760
    %7559 = vmatpush1.msra.mxu0 %v7558
    %7560 = vmatprep.subr.mxu0 0.0
    %v7561 = vand.u32 %v5744, 4294901760
    %v7562 = vsub.f32 %v5744, %v7561
    %v7563 = vand.u32 %v7562, 4294901760
    %7564 = vmatpush1.msra.mxu0 %v7563
    %7565 = vmatprep.subr.mxu0 0.0
    %v7566 = vand.u32 %v5745, 4294901760
    %v7567 = vsub.f32 %v5745, %v7566
    %v7568 = vand.u32 %v7567, 4294901760
    %7569 = vmatpush1.msra.mxu0 %v7568
    %7570 = vmatprep.subr.mxu0 0.0
    %v7571 = vand.u32 %v5746, 4294901760
    %v7572 = vsub.f32 %v5746, %v7571
    %v7573 = vand.u32 %v7572, 4294901760
    %7574 = vmatpush1.msra.mxu0 %v7573
    %7575 = vmatprep.subr.mxu0 0.0
    %v7576 = vand.u32 %v5747, 4294901760
    %v7577 = vsub.f32 %v5747, %v7576
    %v7578 = vand.u32 %v7577, 4294901760
    %7579 = vmatpush1.msra.mxu0 %v7578
    %7580 = vmatprep.subr.mxu0 0.0
    %v7581 = vand.u32 %v5748, 4294901760
    %v7582 = vsub.f32 %v5748, %v7581
    %v7583 = vand.u32 %v7582, 4294901760
    %7584 = vmatpush1.msra.mxu0 %v7583
    %7585 = vmatprep.subr.mxu0 0.0
    %v7586 = vand.u32 %v5749, 4294901760
    %v7587 = vsub.f32 %v5749, %v7586
    %v7588 = vand.u32 %v7587, 4294901760
    %7589 = vmatpush1.msra.mxu0 %v7588
    %7590 = vmatprep.subr.mxu0 0.0
    %v7591 = vand.u32 %v5750, 4294901760
    %v7592 = vsub.f32 %v5750, %v7591
    %v7593 = vand.u32 %v7592, 4294901760
    %7594 = vmatpush1.msra.mxu0 %v7593
    %7595 = vmatprep.subr.mxu0 0.0
    %v7596 = vand.u32 %v5751, 4294901760
    %v7597 = vsub.f32 %v5751, %v7596
    %v7598 = vand.u32 %v7597, 4294901760
    %7599 = vmatpush1.msra.mxu0 %v7598
    %7600 = vmatprep.subr.mxu0 0.0
    %v7601 = vand.u32 %v5752, 4294901760
    %v7602 = vsub.f32 %v5752, %v7601
    %v7603 = vand.u32 %v7602, 4294901760
    %7604 = vmatpush1.msra.mxu0 %v7603
    %7605 = vmatprep.subr.mxu0 0.0
    %v7606 = vand.u32 %v5753, 4294901760
    %v7607 = vsub.f32 %v5753, %v7606
    %v7608 = vand.u32 %v7607, 4294901760
    %7609 = vmatpush1.msra.mxu0 %v7608
    %7610 = vmatprep.subr.mxu0 0.0
    %7611 = vmatpush1.msra.mxu0 0.0
    %7612 = vmatprep.subr.mxu0 0.0
    %7613 = vmatpush1.msra.mxu0 0.0
    %7614 = vmatprep.subr.mxu0 0.0
    %7615 = vmatpush1.msra.mxu0 0.0
    %7616 = vmatprep.subr.mxu0 0.0
    %7617 = vmatpush1.msra.mxu0 0.0
    %7618 = vmatprep.subr.mxu0 0.0
    %7619 = vmatpush1.msra.mxu0 0.0
    %7620 = vmatprep.subr.mxu0 0.0
    %7621 = vmatpush1.msra.mxu0 0.0
    %7622 = vmatprep.subr.mxu0 0.0
    %7623 = vmatpush1.msra.mxu0 0.0
    %7624 = vmatprep.subr.mxu0 0.0
    %7625 = vmatpush1.msra.mxu0 0.0
    %7626 = vmatprep.subr.mxu0 0.0
    %7627 = vmatpush1.msra.mxu0 0.0
    %7628 = vmatprep.subr.mxu0 0.0
    %7629 = vmatpush1.msra.mxu0 0.0
    %7630 = vmatprep.subr.mxu0 0.0
    %7631 = vmatpush1.msra.mxu0 0.0
    %7632 = vmatprep.subr.mxu0 0.0
    %7633 = vmatpush1.msra.mxu0 0.0
    %v7634 = vand.u32 %v7026, 4294901760
    %7635 = vmatprep.mubr.f32.mxu0 %v7634
    %v7636 = vand.u32 %v7013, 4294901760
    %7637 = vmatmul.mubr.f32.gmra.mrb[0].mxu0 %v7636
    %v7638 = vpop.f32.mrb[0].mxu0
    %v7639 = vadd.f32 %v7507, %v7638
    %v7640 = vpop.f32.mrb[0].mxu0
    %7641 = vdwg.mxu0
    %7642 = vmatprep.subr.mxu0 0.0
    %v7643 = vand.u32 %v5734, 4294901760
    %7644 = vmatpush1.msra.mxu0 %v7643
    %7645 = vmatprep.subr.mxu0 0.0
    %v7646 = vand.u32 %v5735, 4294901760
    %7647 = vmatpush1.msra.mxu0 %v7646
    %7648 = vmatprep.subr.mxu0 0.0
    %v7649 = vand.u32 %v5736, 4294901760
    %7650 = vmatpush1.msra.mxu0 %v7649
    %7651 = vmatprep.subr.mxu0 0.0
    %v7652 = vand.u32 %v5737, 4294901760
    %7653 = vmatpush1.msra.mxu0 %v7652
    %7654 = vmatprep.subr.mxu0 0.0
    %v7655 = vand.u32 %v5738, 4294901760
    %7656 = vmatpush1.msra.mxu0 %v7655
    %7657 = vmatprep.subr.mxu0 0.0
    %v7658 = vand.u32 %v5739, 4294901760
    %7659 = vmatpush1.msra.mxu0 %v7658
    %7660 = vmatprep.subr.mxu0 0.0
    %v7661 = vand.u32 %v5740, 4294901760
    %7662 = vmatpush1.msra.mxu0 %v7661
    %7663 = vmatprep.subr.mxu0 0.0
    %v7664 = vand.u32 %v5741, 4294901760
    %7665 = vmatpush1.msra.mxu0 %v7664
    %7666 = vmatprep.subr.mxu0 0.0
    %v7667 = vand.u32 %v5742, 4294901760
    %7668 = vmatpush1.msra.mxu0 %v7667
    %7669 = vmatprep.subr.mxu0 0.0
    %v7670 = vand.u32 %v5743, 4294901760
    %7671 = vmatpush1.msra.mxu0 %v7670
    %7672 = vmatprep.subr.mxu0 0.0
    %v7673 = vand.u32 %v5744, 4294901760
    %7674 = vmatpush1.msra.mxu0 %v7673
    %7675 = vmatprep.subr.mxu0 0.0
    %v7676 = vand.u32 %v5745, 4294901760
    %7677 = vmatpush1.msra.mxu0 %v7676
    %7678 = vmatprep.subr.mxu0 0.0
    %v7679 = vand.u32 %v5746, 4294901760
    %7680 = vmatpush1.msra.mxu0 %v7679
    %7681 = vmatprep.subr.mxu0 0.0
    %v7682 = vand.u32 %v5747, 4294901760
    %7683 = vmatpush1.msra.mxu0 %v7682
    %7684 = vmatprep.subr.mxu0 0.0
    %v7685 = vand.u32 %v5748, 4294901760
    %7686 = vmatpush1.msra.mxu0 %v7685
    %7687 = vmatprep.subr.mxu0 0.0
    %v7688 = vand.u32 %v5749, 4294901760
    %7689 = vmatpush1.msra.mxu0 %v7688
    %7690 = vmatprep.subr.mxu0 0.0
    %v7691 = vand.u32 %v5750, 4294901760
    %7692 = vmatpush1.msra.mxu0 %v7691
    %7693 = vmatprep.subr.mxu0 0.0
    %v7694 = vand.u32 %v5751, 4294901760
    %7695 = vmatpush1.msra.mxu0 %v7694
    %7696 = vmatprep.subr.mxu0 0.0
    %v7697 = vand.u32 %v5752, 4294901760
    %7698 = vmatpush1.msra.mxu0 %v7697
    %7699 = vmatprep.subr.mxu0 0.0
    %v7700 = vand.u32 %v5753, 4294901760
    %7701 = vmatpush1.msra.mxu0 %v7700
    %7702 = vmatprep.subr.mxu0 0.0
    %7703 = vmatpush1.msra.mxu0 0.0
    %7704 = vmatprep.subr.mxu0 0.0
    %7705 = vmatpush1.msra.mxu0 0.0
    %7706 = vmatprep.subr.mxu0 0.0
    %7707 = vmatpush1.msra.mxu0 0.0
    %7708 = vmatprep.subr.mxu0 0.0
    %7709 = vmatpush1.msra.mxu0 0.0
    %7710 = vmatprep.subr.mxu0 0.0
    %7711 = vmatpush1.msra.mxu0 0.0
    %7712 = vmatprep.subr.mxu0 0.0
    %7713 = vmatpush1.msra.mxu0 0.0
    %7714 = vmatprep.subr.mxu0 0.0
    %7715 = vmatpush1.msra.mxu0 0.0
    %7716 = vmatprep.subr.mxu0 0.0
    %7717 = vmatpush1.msra.mxu0 0.0
    %7718 = vmatprep.subr.mxu0 0.0
    %7719 = vmatpush1.msra.mxu0 0.0
    %7720 = vmatprep.subr.mxu0 0.0
    %7721 = vmatpush1.msra.mxu0 0.0
    %7722 = vmatprep.subr.mxu0 0.0
    %7723 = vmatpush1.msra.mxu0 0.0
    %7724 = vmatprep.subr.mxu0 0.0
    %7725 = vmatpush1.msra.mxu0 0.0
    %v7726 = vand.u32 %v7026, 4294901760
    %7727 = vmatprep.mubr.f32.mxu0 %v7726
    %v7728 = vand.u32 %v7013, 4294901760
    %7729 = vmatmul.mubr.f32.gmra.mrb[0].mxu0 %v7728
    %v7730 = vpop.f32.mrb[0].mxu0
    %v7731 = vadd.f32 %v7639, %v7730
    %v7732 = vpop.f32.mrb[0].mxu0
    %7733 = vdwg.mxu0
    %v7734 = vmul.f32 %v7731, 0.005
    %v7735 = vadd.f32 %v7734, 1e-05
    %v7736 = vrsqrt.pop %v7735
    %v7738 = vsel %vm6490, %v7736, 0
    %v7740 = vand.u32 %v5755, 4294901760
    %7741 = vmatprep.subr.mxu0 %v7740
    %v7742 = vand.u32 %v5754, 4294901760
    %7743 = vmatpush1.msra.mxu0 %v7742
    %v7744 = vand.u32 %v5757, 4294901760
    %7745 = vmatprep.subr.mxu0 %v7744
    %v7746 = vand.u32 %v5756, 4294901760
    %7747 = vmatpush1.msra.mxu0 %v7746
    %7748 = vmatprep.subr.mxu0 0.0
    %7749 = vmatpush1.msra.mxu0 0.0
    %7750 = vmatprep.subr.mxu0 0.0
    %7751 = vmatpush1.msra.mxu0 0.0
    %7752 = vmatprep.subr.mxu0 0.0
    %7753 = vmatpush1.msra.mxu0 0.0
    %7754 = vmatprep.subr.mxu0 0.0
    %7755 = vmatpush1.msra.mxu0 0.0
    %7756 = vmatprep.subr.mxu0 0.0
    %7757 = vmatpush1.msra.mxu0 0.0
    %7758 = vmatprep.subr.mxu0 0.0
    %7759 = vmatpush1.msra.mxu0 0.0
    %7760 = vmatprep.subr.mxu0 0.0
    %7761 = vmatpush1.msra.mxu0 0.0
    %7762 = vmatprep.subr.mxu0 0.0
    %7763 = vmatpush1.msra.mxu0 0.0
    %7764 = vmatprep.subr.mxu0 0.0
    %7765 = vmatpush1.msra.mxu0 0.0
    %7766 = vmatprep.subr.mxu0 0.0
    %7767 = vmatpush1.msra.mxu0 0.0
    %7768 = vmatprep.subr.mxu0 0.0
    %7769 = vmatpush1.msra.mxu0 0.0
    %7770 = vmatprep.subr.mxu0 0.0
    %7771 = vmatpush1.msra.mxu0 0.0
    %7772 = vmatprep.subr.mxu0 0.0
    %7773 = vmatpush1.msra.mxu0 0.0
    %7774 = vmatprep.subr.mxu0 0.0
    %7775 = vmatpush1.msra.mxu0 0.0
    %7776 = vmatprep.subr.mxu0 0.0
    %7777 = vmatpush1.msra.mxu0 0.0
    %7778 = vmatprep.subr.mxu0 0.0
    %7779 = vmatpush1.msra.mxu0 0.0
    %7780 = vmatprep.subr.mxu0 0.0
    %7781 = vmatpush1.msra.mxu0 0.0
    %7782 = vmatprep.subr.mxu0 0.0
    %7783 = vmatpush1.msra.mxu0 0.0
    %7784 = vmatprep.subr.mxu0 0.0
    %7785 = vmatpush1.msra.mxu0 0.0
    %7786 = vmatprep.subr.mxu0 0.0
    %7787 = vmatpush1.msra.mxu0 0.0
    %7788 = vmatprep.subr.mxu0 0.0
    %7789 = vmatpush1.msra.mxu0 0.0
    %7790 = vmatprep.subr.mxu0 0.0
    %7791 = vmatpush1.msra.mxu0 0.0
    %7792 = vmatprep.subr.mxu0 0.0
    %7793 = vmatpush1.msra.mxu0 0.0
    %7794 = vmatprep.subr.mxu0 0.0
    %7795 = vmatpush1.msra.mxu0 0.0
    %7796 = vmatprep.subr.mxu0 0.0
    %7797 = vmatpush1.msra.mxu0 0.0
    %7798 = vmatprep.subr.mxu0 0.0
    %7799 = vmatpush1.msra.mxu0 0.0
    %7800 = vmatprep.subr.mxu0 0.0
    %7801 = vmatpush1.msra.mxu0 0.0
    %7802 = vmatprep.subr.mxu0 0.0
    %7803 = vmatpush1.msra.mxu0 0.0
    %7804 = vmatprep.subr.mxu0 0.0
    %7805 = vmatpush1.msra.mxu0 0.0
    %7806 = vmatprep.subr.mxu0 0.0
    %7807 = vmatpush1.msra.mxu0 0.0
    %7808 = vmatprep.mubr.f32.mxu0 0.0
    %v7809 = vand.u32 %v7738, 4294901760
    %v7810 = vsub.f32 %v7738, %v7809
    %v7811 = vand.u32 %v7810, 4294901760
    %v7812 = vsub.f32 %v7810, %v7811
    %v7813 = vand.u32 %v7812, 4294901760
    %7814 = vmatmul.mubr.f32.gmra.mrb[0].mxu0 %v7813
    %v7815 = vpop.f32.mrb[0].mxu0
    %v7816 = vadd.f32 0.0, %v7815
    %v7817 = vpop.f32.mrb[0].mxu0
    %v7818 = vadd.f32 0.0, %v7817
    %7819 = vdwg.mxu0
    %v7820 = vand.u32 %v5755, 4294901760
    %v7821 = vsub.f32 %v5755, %v7820
    %v7822 = vand.u32 %v7821, 4294901760
    %v7823 = vsub.f32 %v7821, %v7822
    %v7824 = vand.u32 %v7823, 4294901760
    %7825 = vmatprep.subr.mxu0 %v7824
    %v7826 = vand.u32 %v5754, 4294901760
    %v7827 = vsub.f32 %v5754, %v7826
    %v7828 = vand.u32 %v7827, 4294901760
    %v7829 = vsub.f32 %v7827, %v7828
    %v7830 = vand.u32 %v7829, 4294901760
    %7831 = vmatpush1.msra.mxu0 %v7830
    %v7832 = vand.u32 %v5757, 4294901760
    %v7833 = vsub.f32 %v5757, %v7832
    %v7834 = vand.u32 %v7833, 4294901760
    %v7835 = vsub.f32 %v7833, %v7834
    %v7836 = vand.u32 %v7835, 4294901760
    %7837 = vmatprep.subr.mxu0 %v7836
    %v7838 = vand.u32 %v5756, 4294901760
    %v7839 = vsub.f32 %v5756, %v7838
    %v7840 = vand.u32 %v7839, 4294901760
    %v7841 = vsub.f32 %v7839, %v7840
    %v7842 = vand.u32 %v7841, 4294901760
    %7843 = vmatpush1.msra.mxu0 %v7842
    %7844 = vmatprep.subr.mxu0 0.0
    %7845 = vmatpush1.msra.mxu0 0.0
    %7846 = vmatprep.subr.mxu0 0.0
    %7847 = vmatpush1.msra.mxu0 0.0
    %7848 = vmatprep.subr.mxu0 0.0
    %7849 = vmatpush1.msra.mxu0 0.0
    %7850 = vmatprep.subr.mxu0 0.0
    %7851 = vmatpush1.msra.mxu0 0.0
    %7852 = vmatprep.subr.mxu0 0.0
    %7853 = vmatpush1.msra.mxu0 0.0
    %7854 = vmatprep.subr.mxu0 0.0
    %7855 = vmatpush1.msra.mxu0 0.0
    %7856 = vmatprep.subr.mxu0 0.0
    %7857 = vmatpush1.msra.mxu0 0.0
    %7858 = vmatprep.subr.mxu0 0.0
    %7859 = vmatpush1.msra.mxu0 0.0
    %7860 = vmatprep.subr.mxu0 0.0
    %7861 = vmatpush1.msra.mxu0 0.0
    %7862 = vmatprep.subr.mxu0 0.0
    %7863 = vmatpush1.msra.mxu0 0.0
    %7864 = vmatprep.subr.mxu0 0.0
    %7865 = vmatpush1.msra.mxu0 0.0
    %7866 = vmatprep.subr.mxu0 0.0
    %7867 = vmatpush1.msra.mxu0 0.0
    %7868 = vmatprep.subr.mxu0 0.0
    %7869 = vmatpush1.msra.mxu0 0.0
    %7870 = vmatprep.subr.mxu0 0.0
    %7871 = vmatpush1.msra.mxu0 0.0
    %7872 = vmatprep.subr.mxu0 0.0
    %7873 = vmatpush1.msra.mxu0 0.0
    %7874 = vmatprep.subr.mxu0 0.0
    %7875 = vmatpush1.msra.mxu0 0.0
    %7876 = vmatprep.subr.mxu0 0.0
    %7877 = vmatpush1.msra.mxu0 0.0
    %7878 = vmatprep.subr.mxu0 0.0
    %7879 = vmatpush1.msra.mxu0 0.0
    %7880 = vmatprep.subr.mxu0 0.0
    %7881 = vmatpush1.msra.mxu0 0.0
    %7882 = vmatprep.subr.mxu0 0.0
    %7883 = vmatpush1.msra.mxu0 0.0
    %7884 = vmatprep.subr.mxu0 0.0
    %7885 = vmatpush1.msra.mxu0 0.0
    %7886 = vmatprep.subr.mxu0 0.0
    %7887 = vmatpush1.msra.mxu0 0.0
    %7888 = vmatprep.subr.mxu0 0.0
    %7889 = vmatpush1.msra.mxu0 0.0
    %7890 = vmatprep.subr.mxu0 0.0
    %7891 = vmatpush1.msra.mxu0 0.0
    %7892 = vmatprep.subr.mxu0 0.0
    %7893 = vmatpush1.msra.mxu0 0.0
    %7894 = vmatprep.subr.mxu0 0.0
    %7895 = vmatpush1.msra.mxu0 0.0
    %7896 = vmatprep.subr.mxu0 0.0
    %7897 = vmatpush1.msra.mxu0 0.0
    %7898 = vmatprep.subr.mxu0 0.0
    %7899 = vmatpush1.msra.mxu0 0.0
    %7900 = vmatprep.subr.mxu0 0.0
    %7901 = vmatpush1.msra.mxu0 0.0
    %7902 = vmatprep.subr.mxu0 0.0
    %7903 = vmatpush1.msra.mxu0 0.0
    %7904 = vmatprep.mubr.f32.mxu0 0.0
    %v7905 = vand.u32 %v7738, 4294901760
    %7906 = vmatmul.mubr.f32.gmra.mrb[0].mxu0 %v7905
    %v7907 = vpop.f32.mrb[0].mxu0
    %v7908 = vadd.f32 %v7816, %v7907
    %v7909 = vpop.f32.mrb[0].mxu0
    %v7910 = vadd.f32 %v7818, %v7909
    %7911 = vdwg.mxu0
    %v7912 = vand.u32 %v5755, 4294901760
    %v7913 = vsub.f32 %v5755, %v7912
    %7914 = vmatprep.subr.mxu0 %v7913
    %v7915 = vand.u32 %v5754, 4294901760
    %v7916 = vsub.f32 %v5754, %v7915
    %7917 = vmatpush1.msra.mxu0 %v7916
    %v7918 = vand.u32 %v5757, 4294901760
    %v7919 = vsub.f32 %v5757, %v7918
    %7920 = vmatprep.subr.mxu0 %v7919
    %v7921 = vand.u32 %v5756, 4294901760
    %v7922 = vsub.f32 %v5756, %v7921
    %7923 = vmatpush1.msra.mxu0 %v7922
    %7924 = vmatprep.subr.mxu0 0.0
    %7925 = vmatpush1.msra.mxu0 0.0
    %7926 = vmatprep.subr.mxu0 0.0
    %7927 = vmatpush1.msra.mxu0 0.0
    %7928 = vmatprep.subr.mxu0 0.0
    %7929 = vmatpush1.msra.mxu0 0.0
    %7930 = vmatprep.subr.mxu0 0.0
    %7931 = vmatpush1.msra.mxu0 0.0
    %7932 = vmatprep.subr.mxu0 0.0
    %7933 = vmatpush1.msra.mxu0 0.0
    %7934 = vmatprep.subr.mxu0 0.0
    %7935 = vmatpush1.msra.mxu0 0.0
    %7936 = vmatprep.subr.mxu0 0.0
    %7937 = vmatpush1.msra.mxu0 0.0
    %7938 = vmatprep.subr.mxu0 0.0
    %7939 = vmatpush1.msra.mxu0 0.0
    %7940 = vmatprep.subr.mxu0 0.0
    %7941 = vmatpush1.msra.mxu0 0.0
    %7942 = vmatprep.subr.mxu0 0.0
    %7943 = vmatpush1.msra.mxu0 0.0
    %7944 = vmatprep.subr.mxu0 0.0
    %7945 = vmatpush1.msra.mxu0 0.0
    %7946 = vmatprep.subr.mxu0 0.0
    %7947 = vmatpush1.msra.mxu0 0.0
    %7948 = vmatprep.subr.mxu0 0.0
    %7949 = vmatpush1.msra.mxu0 0.0
    %7950 = vmatprep.subr.mxu0 0.0
    %7951 = vmatpush1.msra.mxu0 0.0
    %7952 = vmatprep.subr.mxu0 0.0
    %7953 = vmatpush1.msra.mxu0 0.0
    %7954 = vmatprep.subr.mxu0 0.0
    %7955 = vmatpush1.msra.mxu0 0.0
    %7956 = vmatprep.subr.mxu0 0.0
    %7957 = vmatpush1.msra.mxu0 0.0
    %7958 = vmatprep.subr.mxu0 0.0
    %7959 = vmatpush1.msra.mxu0 0.0
    %7960 = vmatprep.subr.mxu0 0.0
    %7961 = vmatpush1.msra.mxu0 0.0
    %7962 = vmatprep.subr.mxu0 0.0
    %7963 = vmatpush1.msra.mxu0 0.0
    %7964 = vmatprep.subr.mxu0 0.0
    %7965 = vmatpush1.msra.mxu0 0.0
    %7966 = vmatprep.subr.mxu0 0.0
    %7967 = vmatpush1.msra.mxu0 0.0
    %7968 = vmatprep.subr.mxu0 0.0
    %7969 = vmatpush1.msra.mxu0 0.0
    %7970 = vmatprep.subr.mxu0 0.0
    %7971 = vmatpush1.msra.mxu0 0.0
    %7972 = vmatprep.subr.mxu0 0.0
    %7973 = vmatpush1.msra.mxu0 0.0
    %7974 = vmatprep.subr.mxu0 0.0
    %7975 = vmatpush1.msra.mxu0 0.0
    %7976 = vmatprep.subr.mxu0 0.0
    %7977 = vmatpush1.msra.mxu0 0.0
    %7978 = vmatprep.subr.mxu0 0.0
    %7979 = vmatpush1.msra.mxu0 0.0
    %7980 = vmatprep.subr.mxu0 0.0
    %7981 = vmatpush1.msra.mxu0 0.0
    %7982 = vmatprep.subr.mxu0 0.0
    %7983 = vmatpush1.msra.mxu0 0.0
    %7984 = vmatprep.mubr.f32.mxu0 0.0
    %v7985 = vand.u32 %v7738, 4294901760
    %v7986 = vsub.f32 %v7738, %v7985
    %7987 = vmatmul.mubr.f32.gmra.mrb[0].mxu0 %v7986
    %v7988 = vpop.f32.mrb[0].mxu0
    %v7989 = vadd.f32 %v7908, %v7988
    %v7990 = vpop.f32.mrb[0].mxu0
    %v7991 = vadd.f32 %v7910, %v7990
    %7992 = vdwg.mxu0
    %v7993 = vand.u32 %v5755, 4294901760
    %7994 = vmatprep.subr.mxu0 %v7993
    %v7995 = vand.u32 %v5754, 4294901760
    %7996 = vmatpush1.msra.mxu0 %v7995
    %v7997 = vand.u32 %v5757, 4294901760
    %7998 = vmatprep.subr.mxu0 %v7997
    %v7999 = vand.u32 %v5756, 4294901760
    %8000 = vmatpush1.msra.mxu0 %v7999
    %8001 = vmatprep.subr.mxu0 0.0
    %8002 = vmatpush1.msra.mxu0 0.0
    %8003 = vmatprep.subr.mxu0 0.0
    %8004 = vmatpush1.msra.mxu0 0.0
    %8005 = vmatprep.subr.mxu0 0.0
    %8006 = vmatpush1.msra.mxu0 0.0
    %8007 = vmatprep.subr.mxu0 0.0
    %8008 = vmatpush1.msra.mxu0 0.0
    %8009 = vmatprep.subr.mxu0 0.0
    %8010 = vmatpush1.msra.mxu0 0.0
    %8011 = vmatprep.subr.mxu0 0.0
    %8012 = vmatpush1.msra.mxu0 0.0
    %8013 = vmatprep.subr.mxu0 0.0
    %8014 = vmatpush1.msra.mxu0 0.0
    %8015 = vmatprep.subr.mxu0 0.0
    %8016 = vmatpush1.msra.mxu0 0.0
    %8017 = vmatprep.subr.mxu0 0.0
    %8018 = vmatpush1.msra.mxu0 0.0
    %8019 = vmatprep.subr.mxu0 0.0
    %8020 = vmatpush1.msra.mxu0 0.0
    %8021 = vmatprep.subr.mxu0 0.0
    %8022 = vmatpush1.msra.mxu0 0.0
    %8023 = vmatprep.subr.mxu0 0.0
    %8024 = vmatpush1.msra.mxu0 0.0
    %8025 = vmatprep.subr.mxu0 0.0
    %8026 = vmatpush1.msra.mxu0 0.0
    %8027 = vmatprep.subr.mxu0 0.0
    %8028 = vmatpush1.msra.mxu0 0.0
    %8029 = vmatprep.subr.mxu0 0.0
    %8030 = vmatpush1.msra.mxu0 0.0
    %8031 = vmatprep.subr.mxu0 0.0
    %8032 = vmatpush1.msra.mxu0 0.0
    %8033 = vmatprep.subr.mxu0 0.0
    %8034 = vmatpush1.msra.mxu0 0.0
    %8035 = vmatprep.subr.mxu0 0.0
    %8036 = vmatpush1.msra.mxu0 0.0
    %8037 = vmatprep.subr.mxu0 0.0
    %8038 = vmatpush1.msra.mxu0 0.0
    %8039 = vmatprep.subr.mxu0 0.0
    %8040 = vmatpush1.msra.mxu0 0.0
    %8041 = vmatprep.subr.mxu0 0.0
    %8042 = vmatpush1.msra.mxu0 0.0
    %8043 = vmatprep.subr.mxu0 0.0
    %8044 = vmatpush1.msra.mxu0 0.0
    %8045 = vmatprep.subr.mxu0 0.0
    %8046 = vmatpush1.msra.mxu0 0.0
    %8047 = vmatprep.subr.mxu0 0.0
    %8048 = vmatpush1.msra.mxu0 0.0
    %8049 = vmatprep.subr.mxu0 0.0
    %8050 = vmatpush1.msra.mxu0 0.0
    %8051 = vmatprep.subr.mxu0 0.0
    %8052 = vmatpush1.msra.mxu0 0.0
    %8053 = vmatprep.subr.mxu0 0.0
    %8054 = vmatpush1.msra.mxu0 0.0
    %8055 = vmatprep.subr.mxu0 0.0
    %8056 = vmatpush1.msra.mxu0 0.0
    %8057 = vmatprep.subr.mxu0 0.0
    %8058 = vmatpush1.msra.mxu0 0.0
    %8059 = vmatprep.subr.mxu0 0.0
    %8060 = vmatpush1.msra.mxu0 0.0
    %8061 = vmatprep.mubr.f32.mxu0 0.0
    %v8062 = vand.u32 %v7738, 4294901760
    %v8063 = vsub.f32 %v7738, %v8062
    %v8064 = vand.u32 %v8063, 4294901760
    %8065 = vmatmul.mubr.f32.gmra.mrb[0].mxu0 %v8064
    %v8066 = vpop.f32.mrb[0].mxu0
    %v8067 = vadd.f32 %v7989, %v8066
    %v8068 = vpop.f32.mrb[0].mxu0
    %v8069 = vadd.f32 %v7991, %v8068
    %8070 = vdwg.mxu0
    %v8071 = vand.u32 %v5755, 4294901760
    %v8072 = vsub.f32 %v5755, %v8071
    %v8073 = vand.u32 %v8072, 4294901760
    %8074 = vmatprep.subr.mxu0 %v8073
    %v8075 = vand.u32 %v5754, 4294901760
    %v8076 = vsub.f32 %v5754, %v8075
    %v8077 = vand.u32 %v8076, 4294901760
    %8078 = vmatpush1.msra.mxu0 %v8077
    %v8079 = vand.u32 %v5757, 4294901760
    %v8080 = vsub.f32 %v5757, %v8079
    %v8081 = vand.u32 %v8080, 4294901760
    %8082 = vmatprep.subr.mxu0 %v8081
    %v8083 = vand.u32 %v5756, 4294901760
    %v8084 = vsub.f32 %v5756, %v8083
    %v8085 = vand.u32 %v8084, 4294901760
    %8086 = vmatpush1.msra.mxu0 %v8085
    %8087 = vmatprep.subr.mxu0 0.0
    %8088 = vmatpush1.msra.mxu0 0.0
    %8089 = vmatprep.subr.mxu0 0.0
    %8090 = vmatpush1.msra.mxu0 0.0
    %8091 = vmatprep.subr.mxu0 0.0
    %8092 = vmatpush1.msra.mxu0 0.0
    %8093 = vmatprep.subr.mxu0 0.0
    %8094 = vmatpush1.msra.mxu0 0.0
    %8095 = vmatprep.subr.mxu0 0.0
    %8096 = vmatpush1.msra.mxu0 0.0
    %8097 = vmatprep.subr.mxu0 0.0
    %8098 = vmatpush1.msra.mxu0 0.0
    %8099 = vmatprep.subr.mxu0 0.0
    %8100 = vmatpush1.msra.mxu0 0.0
    %8101 = vmatprep.subr.mxu0 0.0
    %8102 = vmatpush1.msra.mxu0 0.0
    %8103 = vmatprep.subr.mxu0 0.0
    %8104 = vmatpush1.msra.mxu0 0.0
    %8105 = vmatprep.subr.mxu0 0.0
    %8106 = vmatpush1.msra.mxu0 0.0
    %8107 = vmatprep.subr.mxu0 0.0
    %8108 = vmatpush1.msra.mxu0 0.0
    %8109 = vmatprep.subr.mxu0 0.0
    %8110 = vmatpush1.msra.mxu0 0.0
    %8111 = vmatprep.subr.mxu0 0.0
    %8112 = vmatpush1.msra.mxu0 0.0
    %8113 = vmatprep.subr.mxu0 0.0
    %8114 = vmatpush1.msra.mxu0 0.0
    %8115 = vmatprep.subr.mxu0 0.0
    %8116 = vmatpush1.msra.mxu0 0.0
    %8117 = vmatprep.subr.mxu0 0.0
    %8118 = vmatpush1.msra.mxu0 0.0
    %8119 = vmatprep.subr.mxu0 0.0
    %8120 = vmatpush1.msra.mxu0 0.0
    %8121 = vmatprep.subr.mxu0 0.0
    %8122 = vmatpush1.msra.mxu0 0.0
    %8123 = vmatprep.subr.mxu0 0.0
    %8124 = vmatpush1.msra.mxu0 0.0
    %8125 = vmatprep.subr.mxu0 0.0
    %8126 = vmatpush1.msra.mxu0 0.0
    %8127 = vmatprep.subr.mxu0 0.0
    %8128 = vmatpush1.msra.mxu0 0.0
    %8129 = vmatprep.subr.mxu0 0.0
    %8130 = vmatpush1.msra.mxu0 0.0
    %8131 = vmatprep.subr.mxu0 0.0
    %8132 = vmatpush1.msra.mxu0 0.0
    %8133 = vmatprep.subr.mxu0 0.0
    %8134 = vmatpush1.msra.mxu0 0.0
    %8135 = vmatprep.subr.mxu0 0.0
    %8136 = vmatpush1.msra.mxu0 0.0
    %8137 = vmatprep.subr.mxu0 0.0
    %8138 = vmatpush1.msra.mxu0 0.0
    %8139 = vmatprep.subr.mxu0 0.0
    %8140 = vmatpush1.msra.mxu0 0.0
    %8141 = vmatprep.subr.mxu0 0.0
    %8142 = vmatpush1.msra.mxu0 0.0
    %8143 = vmatprep.subr.mxu0 0.0
    %8144 = vmatpush1.msra.mxu0 0.0
    %8145 = vmatprep.subr.mxu0 0.0
    %8146 = vmatpush1.msra.mxu0 0.0
    %8147 = vmatprep.mubr.f32.mxu0 0.0
    %v8148 = vand.u32 %v7738, 4294901760
    %8149 = vmatmul.mubr.f32.gmra.mrb[0].mxu0 %v8148
    %v8150 = vpop.f32.mrb[0].mxu0
    %v8151 = vadd.f32 %v8067, %v8150
    %v8152 = vpop.f32.mrb[0].mxu0
    %v8153 = vadd.f32 %v8069, %v8152
    %8154 = vdwg.mxu0
    %v8155 = vand.u32 %v5755, 4294901760
    %8156 = vmatprep.subr.mxu0 %v8155
    %v8157 = vand.u32 %v5754, 4294901760
    %8158 = vmatpush1.msra.mxu0 %v8157
    %v8159 = vand.u32 %v5757, 4294901760
    %8160 = vmatprep.subr.mxu0 %v8159
    %v8161 = vand.u32 %v5756, 4294901760
    %8162 = vmatpush1.msra.mxu0 %v8161
    %8163 = vmatprep.subr.mxu0 0.0
    %8164 = vmatpush1.msra.mxu0 0.0
    %8165 = vmatprep.subr.mxu0 0.0
    %8166 = vmatpush1.msra.mxu0 0.0
    %8167 = vmatprep.subr.mxu0 0.0
    %8168 = vmatpush1.msra.mxu0 0.0
    %8169 = vmatprep.subr.mxu0 0.0
    %8170 = vmatpush1.msra.mxu0 0.0
    %8171 = vmatprep.subr.mxu0 0.0
    %8172 = vmatpush1.msra.mxu0 0.0
    %8173 = vmatprep.subr.mxu0 0.0
    %8174 = vmatpush1.msra.mxu0 0.0
    %8175 = vmatprep.subr.mxu0 0.0
    %8176 = vmatpush1.msra.mxu0 0.0
    %8177 = vmatprep.subr.mxu0 0.0
    %8178 = vmatpush1.msra.mxu0 0.0
    %8179 = vmatprep.subr.mxu0 0.0
    %8180 = vmatpush1.msra.mxu0 0.0
    %8181 = vmatprep.subr.mxu0 0.0
    %8182 = vmatpush1.msra.mxu0 0.0
    %8183 = vmatprep.subr.mxu0 0.0
    %8184 = vmatpush1.msra.mxu0 0.0
    %8185 = vmatprep.subr.mxu0 0.0
    %8186 = vmatpush1.msra.mxu0 0.0
    %8187 = vmatprep.subr.mxu0 0.0
    %8188 = vmatpush1.msra.mxu0 0.0
    %8189 = vmatprep.subr.mxu0 0.0
    %8190 = vmatpush1.msra.mxu0 0.0
    %8191 = vmatprep.subr.mxu0 0.0
    %8192 = vmatpush1.msra.mxu0 0.0
    %8193 = vmatprep.subr.mxu0 0.0
    %8194 = vmatpush1.msra.mxu0 0.0
    %8195 = vmatprep.subr.mxu0 0.0
    %8196 = vmatpush1.msra.mxu0 0.0
    %8197 = vmatprep.subr.mxu0 0.0
    %8198 = vmatpush1.msra.mxu0 0.0
    %8199 = vmatprep.subr.mxu0 0.0
    %8200 = vmatpush1.msra.mxu0 0.0
    %8201 = vmatprep.subr.mxu0 0.0
    %8202 = vmatpush1.msra.mxu0 0.0
    %8203 = vmatprep.subr.mxu0 0.0
    %8204 = vmatpush1.msra.mxu0 0.0
    %8205 = vmatprep.subr.mxu0 0.0
    %8206 = vmatpush1.msra.mxu0 0.0
    %8207 = vmatprep.subr.mxu0 0.0
    %8208 = vmatpush1.msra.mxu0 0.0
    %8209 = vmatprep.subr.mxu0 0.0
    %8210 = vmatpush1.msra.mxu0 0.0
    %8211 = vmatprep.subr.mxu0 0.0
    %8212 = vmatpush1.msra.mxu0 0.0
    %8213 = vmatprep.subr.mxu0 0.0
    %8214 = vmatpush1.msra.mxu0 0.0
    %8215 = vmatprep.subr.mxu0 0.0
    %8216 = vmatpush1.msra.mxu0 0.0
    %8217 = vmatprep.subr.mxu0 0.0
    %8218 = vmatpush1.msra.mxu0 0.0
    %8219 = vmatprep.subr.mxu0 0.0
    %8220 = vmatpush1.msra.mxu0 0.0
    %8221 = vmatprep.subr.mxu0 0.0
    %8222 = vmatpush1.msra.mxu0 0.0
    %8223 = vmatprep.mubr.f32.mxu0 0.0
    %v8224 = vand.u32 %v7738, 4294901760
    %8225 = vmatmul.mubr.f32.gmra.mrb[0].mxu0 %v8224
    %v8226 = vpop.f32.mrb[0].mxu0
    %v8227 = vadd.f32 %v8151, %v8226
    %v8228 = vpop.f32.mrb[0].mxu0
    %v8229 = vadd.f32 %v8153, %v8228
    %8230 = vdwg.mxu0
    %v8231 = vlaneseq
    %v8232 = vshrl.u32 %v8231, 7
    %v8233 = vsub.s32 0, %v8232
    %v8234 = vrot.slane %v8227, %v8233
    %v8235 = vlaneseq
    %v8236 = vshrl.u32 %v8235, 7
    %v8237 = vsub.s32 0, %v8236
    %v8238 = vrot.slane %v8229, %v8237
    %v8239 = vmul.f32 %v6993, %v8234
    %v8240 = vmul.f32 %v6994, %v8238
    %v8241 = vmul.f32 %v6995, %v8234
    %v8242 = vmul.f32 %v6996, %v8238
    %v8243 = vmul.f32 %v6997, %v8234
    %v8244 = vmul.f32 %v6998, %v8238
    %v8245 = vmax.f32 %v8239, 0.0
    %v8246 = vmax.f32 %v8240, 0.0
    %v8247 = vmax.f32 %v8241, 0.0
    %v8248 = vmax.f32 %v8242, 0.0
    %v8249 = vmax.f32 %v8243, 0.0
    %v8250 = vmax.f32 %v8244, 0.0
    %vm8251 = vcmask 162816
    %v8253 = vsel %vm8251, %v5712, 0
    %v8256 = vsel %vm8251, %v5713, 0
    %v8259 = vsel %vm5759, %v8249, 0
    %v8262 = vsel %vm5759, %v8250, 0
    %v8264 = vand.u32 %v8246, 4294901760
    %8265 = vmatprep.subr.mxu0 %v8264
    %v8266 = vand.u32 %v8245, 4294901760
    %8267 = vmatpush1.msra.mxu0 %v8266
    %v8268 = vand.u32 %v8248, 4294901760
    %8269 = vmatprep.subr.mxu0 %v8268
    %v8270 = vand.u32 %v8247, 4294901760
    %8271 = vmatpush1.msra.mxu0 %v8270
    %v8272 = vand.u32 %v8262, 4294901760
    %8273 = vmatprep.subr.mxu0 %v8272
    %v8274 = vand.u32 %v8259, 4294901760
    %8275 = vmatpush1.msra.mxu0 %v8274
    %8276 = vmatprep.subr.mxu0 0.0
    %8277 = vmatpush1.msra.mxu0 0.0
    %8278 = vmatprep.subr.mxu0 0.0
    %8279 = vmatpush1.msra.mxu0 0.0
    %8280 = vmatprep.subr.mxu0 0.0
    %8281 = vmatpush1.msra.mxu0 0.0
    %8282 = vmatprep.subr.mxu0 0.0
    %8283 = vmatpush1.msra.mxu0 0.0
    %8284 = vmatprep.subr.mxu0 0.0
    %8285 = vmatpush1.msra.mxu0 0.0
    %8286 = vmatprep.subr.mxu0 0.0
    %8287 = vmatpush1.msra.mxu0 0.0
    %8288 = vmatprep.subr.mxu0 0.0
    %8289 = vmatpush1.msra.mxu0 0.0
    %8290 = vmatprep.subr.mxu0 0.0
    %8291 = vmatpush1.msra.mxu0 0.0
    %8292 = vmatprep.subr.mxu0 0.0
    %8293 = vmatpush1.msra.mxu0 0.0
    %8294 = vmatprep.subr.mxu0 0.0
    %8295 = vmatpush1.msra.mxu0 0.0
    %8296 = vmatprep.subr.mxu0 0.0
    %8297 = vmatpush1.msra.mxu0 0.0
    %8298 = vmatprep.subr.mxu0 0.0
    %8299 = vmatpush1.msra.mxu0 0.0
    %8300 = vmatprep.subr.mxu0 0.0
    %8301 = vmatpush1.msra.mxu0 0.0
    %8302 = vmatprep.subr.mxu0 0.0
    %8303 = vmatpush1.msra.mxu0 0.0
    %8304 = vmatprep.subr.mxu0 0.0
    %8305 = vmatpush1.msra.mxu0 0.0
    %8306 = vmatprep.subr.mxu0 0.0
    %8307 = vmatpush1.msra.mxu0 0.0
    %8308 = vmatprep.subr.mxu0 0.0
    %8309 = vmatpush1.msra.mxu0 0.0
    %8310 = vmatprep.subr.mxu0 0.0
    %8311 = vmatpush1.msra.mxu0 0.0
    %8312 = vmatprep.subr.mxu0 0.0
    %8313 = vmatpush1.msra.mxu0 0.0
    %8314 = vmatprep.subr.mxu0 0.0
    %8315 = vmatpush1.msra.mxu0 0.0
    %8316 = vmatprep.subr.mxu0 0.0
    %8317 = vmatpush1.msra.mxu0 0.0
    %8318 = vmatprep.subr.mxu0 0.0
    %8319 = vmatpush1.msra.mxu0 0.0
    %8320 = vmatprep.subr.mxu0 0.0
    %8321 = vmatpush1.msra.mxu0 0.0
    %8322 = vmatprep.subr.mxu0 0.0
    %8323 = vmatpush1.msra.mxu0 0.0
    %8324 = vmatprep.subr.mxu0 0.0
    %8325 = vmatpush1.msra.mxu0 0.0
    %8326 = vmatprep.subr.mxu0 0.0
    %8327 = vmatpush1.msra.mxu0 0.0
    %8328 = vmatprep.subr.mxu0 0.0
    %8329 = vmatpush1.msra.mxu0 0.0
    %8330 = vmatprep.subr.mxu0 0.0
    %8331 = vmatpush1.msra.mxu0 0.0
    %8332 = vmatprep.subr.mxu0 0.0
    %8333 = vmatpush1.msra.mxu0 0.0
    %8334 = vmatprep.mubr.f32.mxu0 0.0
    %v8335 = vand.u32 %v8253, 4294901760
    %v8336 = vsub.f32 %v8253, %v8335
    %v8337 = vand.u32 %v8336, 4294901760
    %v8338 = vsub.f32 %v8336, %v8337
    %v8339 = vand.u32 %v8338, 4294901760
    %8340 = vmatmul.mubr.f32.gmra.mrb[0].mxu0 %v8339
    %v8341 = vpop.f32.mrb[0].mxu0
    %v8342 = vadd.f32 0.0, %v8341
    %v8343 = vpop.f32.mrb[0].mxu0
    %v8344 = vadd.f32 0.0, %v8343
    %8345 = vmatprep.mubr.f32.mxu0 0.0
    %v8346 = vand.u32 %v8256, 4294901760
    %v8347 = vsub.f32 %v8256, %v8346
    %v8348 = vand.u32 %v8347, 4294901760
    %v8349 = vsub.f32 %v8347, %v8348
    %v8350 = vand.u32 %v8349, 4294901760
    %8351 = vmatmul.mubr.f32.gmra.mrb[0].mxu0 %v8350
    %v8352 = vpop.f32.mrb[0].mxu0
    %v8353 = vadd.f32 0.0, %v8352
    %v8354 = vpop.f32.mrb[0].mxu0
    %v8355 = vadd.f32 0.0, %v8354
    %8356 = vdwg.mxu0
    %v8357 = vand.u32 %v8246, 4294901760
    %v8358 = vsub.f32 %v8246, %v8357
    %v8359 = vand.u32 %v8358, 4294901760
    %v8360 = vsub.f32 %v8358, %v8359
    %v8361 = vand.u32 %v8360, 4294901760
    %8362 = vmatprep.subr.mxu0 %v8361
    %v8363 = vand.u32 %v8245, 4294901760
    %v8364 = vsub.f32 %v8245, %v8363
    %v8365 = vand.u32 %v8364, 4294901760
    %v8366 = vsub.f32 %v8364, %v8365
    %v8367 = vand.u32 %v8366, 4294901760
    %8368 = vmatpush1.msra.mxu0 %v8367
    %v8369 = vand.u32 %v8248, 4294901760
    %v8370 = vsub.f32 %v8248, %v8369
    %v8371 = vand.u32 %v8370, 4294901760
    %v8372 = vsub.f32 %v8370, %v8371
    %v8373 = vand.u32 %v8372, 4294901760
    %8374 = vmatprep.subr.mxu0 %v8373
    %v8375 = vand.u32 %v8247, 4294901760
    %v8376 = vsub.f32 %v8247, %v8375
    %v8377 = vand.u32 %v8376, 4294901760
    %v8378 = vsub.f32 %v8376, %v8377
    %v8379 = vand.u32 %v8378, 4294901760
    %8380 = vmatpush1.msra.mxu0 %v8379
    %v8381 = vand.u32 %v8262, 4294901760
    %v8382 = vsub.f32 %v8262, %v8381
    %v8383 = vand.u32 %v8382, 4294901760
    %v8384 = vsub.f32 %v8382, %v8383
    %v8385 = vand.u32 %v8384, 4294901760
    %8386 = vmatprep.subr.mxu0 %v8385
    %v8387 = vand.u32 %v8259, 4294901760
    %v8388 = vsub.f32 %v8259, %v8387
    %v8389 = vand.u32 %v8388, 4294901760
    %v8390 = vsub.f32 %v8388, %v8389
    %v8391 = vand.u32 %v8390, 4294901760
    %8392 = vmatpush1.msra.mxu0 %v8391
    %8393 = vmatprep.subr.mxu0 0.0
    %8394 = vmatpush1.msra.mxu0 0.0
    %8395 = vmatprep.subr.mxu0 0.0
    %8396 = vmatpush1.msra.mxu0 0.0
    %8397 = vmatprep.subr.mxu0 0.0
    %8398 = vmatpush1.msra.mxu0 0.0
    %8399 = vmatprep.subr.mxu0 0.0
    %8400 = vmatpush1.msra.mxu0 0.0
    %8401 = vmatprep.subr.mxu0 0.0
    %8402 = vmatpush1.msra.mxu0 0.0
    %8403 = vmatprep.subr.mxu0 0.0
    %8404 = vmatpush1.msra.mxu0 0.0
    %8405 = vmatprep.subr.mxu0 0.0
    %8406 = vmatpush1.msra.mxu0 0.0
    %8407 = vmatprep.subr.mxu0 0.0
    %8408 = vmatpush1.msra.mxu0 0.0
    %8409 = vmatprep.subr.mxu0 0.0
    %8410 = vmatpush1.msra.mxu0 0.0
    %8411 = vmatprep.subr.mxu0 0.0
    %8412 = vmatpush1.msra.mxu0 0.0
    %8413 = vmatprep.subr.mxu0 0.0
    %8414 = vmatpush1.msra.mxu0 0.0
    %8415 = vmatprep.subr.mxu0 0.0
    %8416 = vmatpush1.msra.mxu0 0.0
    %8417 = vmatprep.subr.mxu0 0.0
    %8418 = vmatpush1.msra.mxu0 0.0
    %8419 = vmatprep.subr.mxu0 0.0
    %8420 = vmatpush1.msra.mxu0 0.0
    %8421 = vmatprep.subr.mxu0 0.0
    %8422 = vmatpush1.msra.mxu0 0.0
    %8423 = vmatprep.subr.mxu0 0.0
    %8424 = vmatpush1.msra.mxu0 0.0
    %8425 = vmatprep.subr.mxu0 0.0
    %8426 = vmatpush1.msra.mxu0 0.0
    %8427 = vmatprep.subr.mxu0 0.0
    %8428 = vmatpush1.msra.mxu0 0.0
    %8429 = vmatprep.subr.mxu0 0.0
    %8430 = vmatpush1.msra.mxu0 0.0
    %8431 = vmatprep.subr.mxu0 0.0
    %8432 = vmatpush1.msra.mxu0 0.0
    %8433 = vmatprep.subr.mxu0 0.0
    %8434 = vmatpush1.msra.mxu0 0.0
    %8435 = vmatprep.subr.mxu0 0.0
    %8436 = vmatpush1.msra.mxu0 0.0
    %8437 = vmatprep.subr.mxu0 0.0
    %8438 = vmatpush1.msra.mxu0 0.0
    %8439 = vmatprep.subr.mxu0 0.0
    %8440 = vmatpush1.msra.mxu0 0.0
    %8441 = vmatprep.subr.mxu0 0.0
    %8442 = vmatpush1.msra.mxu0 0.0
    %8443 = vmatprep.subr.mxu0 0.0
    %8444 = vmatpush1.msra.mxu0 0.0
    %8445 = vmatprep.subr.mxu0 0.0
    %8446 = vmatpush1.msra.mxu0 0.0
    %8447 = vmatprep.subr.mxu0 0.0
    %8448 = vmatpush1.msra.mxu0 0.0
    %8449 = vmatprep.subr.mxu0 0.0
    %8450 = vmatpush1.msra.mxu0 0.0
    %8451 = vmatprep.mubr.f32.mxu0 0.0
    %v8452 = vand.u32 %v8253, 4294901760
    %8453 = vmatmul.mubr.f32.gmra.mrb[0].mxu0 %v8452
    %v8454 = vpop.f32.mrb[0].mxu0
    %v8455 = vadd.f32 %v8342, %v8454
    %v8456 = vpop.f32.mrb[0].mxu0
    %v8457 = vadd.f32 %v8344, %v8456
    %8458 = vmatprep.mubr.f32.mxu0 0.0
    %v8459 = vand.u32 %v8256, 4294901760
    %8460 = vmatmul.mubr.f32.gmra.mrb[0].mxu0 %v8459
    %v8461 = vpop.f32.mrb[0].mxu0
    %v8462 = vadd.f32 %v8353, %v8461
    %v8463 = vpop.f32.mrb[0].mxu0
    %v8464 = vadd.f32 %v8355, %v8463
    %8465 = vdwg.mxu0
    %v8466 = vand.u32 %v8246, 4294901760
    %v8467 = vsub.f32 %v8246, %v8466
    %8468 = vmatprep.subr.mxu0 %v8467
    %v8469 = vand.u32 %v8245, 4294901760
    %v8470 = vsub.f32 %v8245, %v8469
    %8471 = vmatpush1.msra.mxu0 %v8470
    %v8472 = vand.u32 %v8248, 4294901760
    %v8473 = vsub.f32 %v8248, %v8472
    %8474 = vmatprep.subr.mxu0 %v8473
    %v8475 = vand.u32 %v8247, 4294901760
    %v8476 = vsub.f32 %v8247, %v8475
    %8477 = vmatpush1.msra.mxu0 %v8476
    %v8478 = vand.u32 %v8262, 4294901760
    %v8479 = vsub.f32 %v8262, %v8478
    %8480 = vmatprep.subr.mxu0 %v8479
    %v8481 = vand.u32 %v8259, 4294901760
    %v8482 = vsub.f32 %v8259, %v8481
    %8483 = vmatpush1.msra.mxu0 %v8482
    %8484 = vmatprep.subr.mxu0 0.0
    %8485 = vmatpush1.msra.mxu0 0.0
    %8486 = vmatprep.subr.mxu0 0.0
    %8487 = vmatpush1.msra.mxu0 0.0
    %8488 = vmatprep.subr.mxu0 0.0
    %8489 = vmatpush1.msra.mxu0 0.0
    %8490 = vmatprep.subr.mxu0 0.0
    %8491 = vmatpush1.msra.mxu0 0.0
    %8492 = vmatprep.subr.mxu0 0.0
    %8493 = vmatpush1.msra.mxu0 0.0
    %8494 = vmatprep.subr.mxu0 0.0
    %8495 = vmatpush1.msra.mxu0 0.0
    %8496 = vmatprep.subr.mxu0 0.0
    %8497 = vmatpush1.msra.mxu0 0.0
    %8498 = vmatprep.subr.mxu0 0.0
    %8499 = vmatpush1.msra.mxu0 0.0
    %8500 = vmatprep.subr.mxu0 0.0
    %8501 = vmatpush1.msra.mxu0 0.0
    %8502 = vmatprep.subr.mxu0 0.0
    %8503 = vmatpush1.msra.mxu0 0.0
    %8504 = vmatprep.subr.mxu0 0.0
    %8505 = vmatpush1.msra.mxu0 0.0
    %8506 = vmatprep.subr.mxu0 0.0
    %8507 = vmatpush1.msra.mxu0 0.0
    %8508 = vmatprep.subr.mxu0 0.0
    %8509 = vmatpush1.msra.mxu0 0.0
    %8510 = vmatprep.subr.mxu0 0.0
    %8511 = vmatpush1.msra.mxu0 0.0
    %8512 = vmatprep.subr.mxu0 0.0
    %8513 = vmatpush1.msra.mxu0 0.0
    %8514 = vmatprep.subr.mxu0 0.0
    %8515 = vmatpush1.msra.mxu0 0.0
    %8516 = vmatprep.subr.mxu0 0.0
    %8517 = vmatpush1.msra.mxu0 0.0
    %8518 = vmatprep.subr.mxu0 0.0
    %8519 = vmatpush1.msra.mxu0 0.0
    %8520 = vmatprep.subr.mxu0 0.0
    %8521 = vmatpush1.msra.mxu0 0.0
    %8522 = vmatprep.subr.mxu0 0.0
    %8523 = vmatpush1.msra.mxu0 0.0
    %8524 = vmatprep.subr.mxu0 0.0
    %8525 = vmatpush1.msra.mxu0 0.0
    %8526 = vmatprep.subr.mxu0 0.0
    %8527 = vmatpush1.msra.mxu0 0.0
    %8528 = vmatprep.subr.mxu0 0.0
    %8529 = vmatpush1.msra.mxu0 0.0
    %8530 = vmatprep.subr.mxu0 0.0
    %8531 = vmatpush1.msra.mxu0 0.0
    %8532 = vmatprep.subr.mxu0 0.0
    %8533 = vmatpush1.msra.mxu0 0.0
    %8534 = vmatprep.subr.mxu0 0.0
    %8535 = vmatpush1.msra.mxu0 0.0
    %8536 = vmatprep.subr.mxu0 0.0
    %8537 = vmatpush1.msra.mxu0 0.0
    %8538 = vmatprep.subr.mxu0 0.0
    %8539 = vmatpush1.msra.mxu0 0.0
    %8540 = vmatprep.subr.mxu0 0.0
    %8541 = vmatpush1.msra.mxu0 0.0
    %8542 = vmatprep.mubr.f32.mxu0 0.0
    %v8543 = vand.u32 %v8253, 4294901760
    %v8544 = vsub.f32 %v8253, %v8543
    %8545 = vmatmul.mubr.f32.gmra.mrb[0].mxu0 %v8544
    %v8546 = vpop.f32.mrb[0].mxu0
    %v8547 = vadd.f32 %v8455, %v8546
    %v8548 = vpop.f32.mrb[0].mxu0
    %v8549 = vadd.f32 %v8457, %v8548
    %8550 = vmatprep.mubr.f32.mxu0 0.0
    %v8551 = vand.u32 %v8256, 4294901760
    %v8552 = vsub.f32 %v8256, %v8551
    %8553 = vmatmul.mubr.f32.gmra.mrb[0].mxu0 %v8552
    %v8554 = vpop.f32.mrb[0].mxu0
    %v8555 = vadd.f32 %v8462, %v8554
    %v8556 = vpop.f32.mrb[0].mxu0
    %v8557 = vadd.f32 %v8464, %v8556
    %8558 = vdwg.mxu0
    %v8559 = vand.u32 %v8246, 4294901760
    %8560 = vmatprep.subr.mxu0 %v8559
    %v8561 = vand.u32 %v8245, 4294901760
    %8562 = vmatpush1.msra.mxu0 %v8561
    %v8563 = vand.u32 %v8248, 4294901760
    %8564 = vmatprep.subr.mxu0 %v8563
    %v8565 = vand.u32 %v8247, 4294901760
    %8566 = vmatpush1.msra.mxu0 %v8565
    %v8567 = vand.u32 %v8262, 4294901760
    %8568 = vmatprep.subr.mxu0 %v8567
    %v8569 = vand.u32 %v8259, 4294901760
    %8570 = vmatpush1.msra.mxu0 %v8569
    %8571 = vmatprep.subr.mxu0 0.0
    %8572 = vmatpush1.msra.mxu0 0.0
    %8573 = vmatprep.subr.mxu0 0.0
    %8574 = vmatpush1.msra.mxu0 0.0
    %8575 = vmatprep.subr.mxu0 0.0
    %8576 = vmatpush1.msra.mxu0 0.0
    %8577 = vmatprep.subr.mxu0 0.0
    %8578 = vmatpush1.msra.mxu0 0.0
    %8579 = vmatprep.subr.mxu0 0.0
    %8580 = vmatpush1.msra.mxu0 0.0
    %8581 = vmatprep.subr.mxu0 0.0
    %8582 = vmatpush1.msra.mxu0 0.0
    %8583 = vmatprep.subr.mxu0 0.0
    %8584 = vmatpush1.msra.mxu0 0.0
    %8585 = vmatprep.subr.mxu0 0.0
    %8586 = vmatpush1.msra.mxu0 0.0
    %8587 = vmatprep.subr.mxu0 0.0
    %8588 = vmatpush1.msra.mxu0 0.0
    %8589 = vmatprep.subr.mxu0 0.0
    %8590 = vmatpush1.msra.mxu0 0.0
    %8591 = vmatprep.subr.mxu0 0.0
    %8592 = vmatpush1.msra.mxu0 0.0
    %8593 = vmatprep.subr.mxu0 0.0
    %8594 = vmatpush1.msra.mxu0 0.0
    %8595 = vmatprep.subr.mxu0 0.0
    %8596 = vmatpush1.msra.mxu0 0.0
    %8597 = vmatprep.subr.mxu0 0.0
    %8598 = vmatpush1.msra.mxu0 0.0
    %8599 = vmatprep.subr.mxu0 0.0
    %8600 = vmatpush1.msra.mxu0 0.0
    %8601 = vmatprep.subr.mxu0 0.0
    %8602 = vmatpush1.msra.mxu0 0.0
    %8603 = vmatprep.subr.mxu0 0.0
    %8604 = vmatpush1.msra.mxu0 0.0
    %8605 = vmatprep.subr.mxu0 0.0
    %8606 = vmatpush1.msra.mxu0 0.0
    %8607 = vmatprep.subr.mxu0 0.0
    %8608 = vmatpush1.msra.mxu0 0.0
    %8609 = vmatprep.subr.mxu0 0.0
    %8610 = vmatpush1.msra.mxu0 0.0
    %8611 = vmatprep.subr.mxu0 0.0
    %8612 = vmatpush1.msra.mxu0 0.0
    %8613 = vmatprep.subr.mxu0 0.0
    %8614 = vmatpush1.msra.mxu0 0.0
    %8615 = vmatprep.subr.mxu0 0.0
    %8616 = vmatpush1.msra.mxu0 0.0
    %8617 = vmatprep.subr.mxu0 0.0
    %8618 = vmatpush1.msra.mxu0 0.0
    %8619 = vmatprep.subr.mxu0 0.0
    %8620 = vmatpush1.msra.mxu0 0.0
    %8621 = vmatprep.subr.mxu0 0.0
    %8622 = vmatpush1.msra.mxu0 0.0
    %8623 = vmatprep.subr.mxu0 0.0
    %8624 = vmatpush1.msra.mxu0 0.0
    %8625 = vmatprep.subr.mxu0 0.0
    %8626 = vmatpush1.msra.mxu0 0.0
    %8627 = vmatprep.subr.mxu0 0.0
    %8628 = vmatpush1.msra.mxu0 0.0
    %8629 = vmatprep.mubr.f32.mxu0 0.0
    %v8630 = vand.u32 %v8253, 4294901760
    %v8631 = vsub.f32 %v8253, %v8630
    %v8632 = vand.u32 %v8631, 4294901760
    %8633 = vmatmul.mubr.f32.gmra.mrb[0].mxu0 %v8632
    %v8634 = vpop.f32.mrb[0].mxu0
    %v8635 = vadd.f32 %v8547, %v8634
    %v8636 = vpop.f32.mrb[0].mxu0
    %v8637 = vadd.f32 %v8549, %v8636
    %8638 = vmatprep.mubr.f32.mxu0 0.0
    %v8639 = vand.u32 %v8256, 4294901760
    %v8640 = vsub.f32 %v8256, %v8639
    %v8641 = vand.u32 %v8640, 4294901760
    %8642 = vmatmul.mubr.f32.gmra.mrb[0].mxu0 %v8641
    %v8643 = vpop.f32.mrb[0].mxu0
    %v8644 = vadd.f32 %v8555, %v8643
    %v8645 = vpop.f32.mrb[0].mxu0
    %v8646 = vadd.f32 %v8557, %v8645
    %8647 = vdwg.mxu0
    %v8648 = vand.u32 %v8246, 4294901760
    %v8649 = vsub.f32 %v8246, %v8648
    %v8650 = vand.u32 %v8649, 4294901760
    %8651 = vmatprep.subr.mxu0 %v8650
    %v8652 = vand.u32 %v8245, 4294901760
    %v8653 = vsub.f32 %v8245, %v8652
    %v8654 = vand.u32 %v8653, 4294901760
    %8655 = vmatpush1.msra.mxu0 %v8654
    %v8656 = vand.u32 %v8248, 4294901760
    %v8657 = vsub.f32 %v8248, %v8656
    %v8658 = vand.u32 %v8657, 4294901760
    %8659 = vmatprep.subr.mxu0 %v8658
    %v8660 = vand.u32 %v8247, 4294901760
    %v8661 = vsub.f32 %v8247, %v8660
    %v8662 = vand.u32 %v8661, 4294901760
    %8663 = vmatpush1.msra.mxu0 %v8662
    %v8664 = vand.u32 %v8262, 4294901760
    %v8665 = vsub.f32 %v8262, %v8664
    %v8666 = vand.u32 %v8665, 4294901760
    %8667 = vmatprep.subr.mxu0 %v8666
    %v8668 = vand.u32 %v8259, 4294901760
    %v8669 = vsub.f32 %v8259, %v8668
    %v8670 = vand.u32 %v8669, 4294901760
    %8671 = vmatpush1.msra.mxu0 %v8670
    %8672 = vmatprep.subr.mxu0 0.0
    %8673 = vmatpush1.msra.mxu0 0.0
    %8674 = vmatprep.subr.mxu0 0.0
    %8675 = vmatpush1.msra.mxu0 0.0
    %8676 = vmatprep.subr.mxu0 0.0
    %8677 = vmatpush1.msra.mxu0 0.0
    %8678 = vmatprep.subr.mxu0 0.0
    %8679 = vmatpush1.msra.mxu0 0.0
    %8680 = vmatprep.subr.mxu0 0.0
    %8681 = vmatpush1.msra.mxu0 0.0
    %8682 = vmatprep.subr.mxu0 0.0
    %8683 = vmatpush1.msra.mxu0 0.0
    %8684 = vmatprep.subr.mxu0 0.0
    %8685 = vmatpush1.msra.mxu0 0.0
    %8686 = vmatprep.subr.mxu0 0.0
    %8687 = vmatpush1.msra.mxu0 0.0
    %8688 = vmatprep.subr.mxu0 0.0
    %8689 = vmatpush1.msra.mxu0 0.0
    %8690 = vmatprep.subr.mxu0 0.0
    %8691 = vmatpush1.msra.mxu0 0.0
    %8692 = vmatprep.subr.mxu0 0.0
    %8693 = vmatpush1.msra.mxu0 0.0
    %8694 = vmatprep.subr.mxu0 0.0
    %8695 = vmatpush1.msra.mxu0 0.0
    %8696 = vmatprep.subr.mxu0 0.0
    %8697 = vmatpush1.msra.mxu0 0.0
    %8698 = vmatprep.subr.mxu0 0.0
    %8699 = vmatpush1.msra.mxu0 0.0
    %8700 = vmatprep.subr.mxu0 0.0
    %8701 = vmatpush1.msra.mxu0 0.0
    %8702 = vmatprep.subr.mxu0 0.0
    %8703 = vmatpush1.msra.mxu0 0.0
    %8704 = vmatprep.subr.mxu0 0.0
    %8705 = vmatpush1.msra.mxu0 0.0
    %8706 = vmatprep.subr.mxu0 0.0
    %8707 = vmatpush1.msra.mxu0 0.0
    %8708 = vmatprep.subr.mxu0 0.0
    %8709 = vmatpush1.msra.mxu0 0.0
    %8710 = vmatprep.subr.mxu0 0.0
    %8711 = vmatpush1.msra.mxu0 0.0
    %8712 = vmatprep.subr.mxu0 0.0
    %8713 = vmatpush1.msra.mxu0 0.0
    %8714 = vmatprep.subr.mxu0 0.0
    %8715 = vmatpush1.msra.mxu0 0.0
    %8716 = vmatprep.subr.mxu0 0.0
    %8717 = vmatpush1.msra.mxu0 0.0
    %8718 = vmatprep.subr.mxu0 0.0
    %8719 = vmatpush1.msra.mxu0 0.0
    %8720 = vmatprep.subr.mxu0 0.0
    %8721 = vmatpush1.msra.mxu0 0.0
    %8722 = vmatprep.subr.mxu0 0.0
    %8723 = vmatpush1.msra.mxu0 0.0
    %8724 = vmatprep.subr.mxu0 0.0
    %8725 = vmatpush1.msra.mxu0 0.0
    %8726 = vmatprep.subr.mxu0 0.0
    %8727 = vmatpush1.msra.mxu0 0.0
    %8728 = vmatprep.subr.mxu0 0.0
    %8729 = vmatpush1.msra.mxu0 0.0
    %8730 = vmatprep.mubr.f32.mxu0 0.0
    %v8731 = vand.u32 %v8253, 4294901760
    %8732 = vmatmul.mubr.f32.gmra.mrb[0].mxu0 %v8731
    %v8733 = vpop.f32.mrb[0].mxu0
    %v8734 = vadd.f32 %v8635, %v8733
    %v8735 = vpop.f32.mrb[0].mxu0
    %v8736 = vadd.f32 %v8637, %v8735
    %8737 = vmatprep.mubr.f32.mxu0 0.0
    %v8738 = vand.u32 %v8256, 4294901760
    %8739 = vmatmul.mubr.f32.gmra.mrb[0].mxu0 %v8738
    %v8740 = vpop.f32.mrb[0].mxu0
    %v8741 = vadd.f32 %v8644, %v8740
    %v8742 = vpop.f32.mrb[0].mxu0
    %v8743 = vadd.f32 %v8646, %v8742
    %8744 = vdwg.mxu0
    %v8745 = vand.u32 %v8246, 4294901760
    %8746 = vmatprep.subr.mxu0 %v8745
    %v8747 = vand.u32 %v8245, 4294901760
    %8748 = vmatpush1.msra.mxu0 %v8747
    %v8749 = vand.u32 %v8248, 4294901760
    %8750 = vmatprep.subr.mxu0 %v8749
    %v8751 = vand.u32 %v8247, 4294901760
    %8752 = vmatpush1.msra.mxu0 %v8751
    %v8753 = vand.u32 %v8262, 4294901760
    %8754 = vmatprep.subr.mxu0 %v8753
    %v8755 = vand.u32 %v8259, 4294901760
    %8756 = vmatpush1.msra.mxu0 %v8755
    %8757 = vmatprep.subr.mxu0 0.0
    %8758 = vmatpush1.msra.mxu0 0.0
    %8759 = vmatprep.subr.mxu0 0.0
    %8760 = vmatpush1.msra.mxu0 0.0
    %8761 = vmatprep.subr.mxu0 0.0
    %8762 = vmatpush1.msra.mxu0 0.0
    %8763 = vmatprep.subr.mxu0 0.0
    %8764 = vmatpush1.msra.mxu0 0.0
    %8765 = vmatprep.subr.mxu0 0.0
    %8766 = vmatpush1.msra.mxu0 0.0
    %8767 = vmatprep.subr.mxu0 0.0
    %8768 = vmatpush1.msra.mxu0 0.0
    %8769 = vmatprep.subr.mxu0 0.0
    %8770 = vmatpush1.msra.mxu0 0.0
    %8771 = vmatprep.subr.mxu0 0.0
    %8772 = vmatpush1.msra.mxu0 0.0
    %8773 = vmatprep.subr.mxu0 0.0
    %8774 = vmatpush1.msra.mxu0 0.0
    %8775 = vmatprep.subr.mxu0 0.0
    %8776 = vmatpush1.msra.mxu0 0.0
    %8777 = vmatprep.subr.mxu0 0.0
    %8778 = vmatpush1.msra.mxu0 0.0
    %8779 = vmatprep.subr.mxu0 0.0
    %8780 = vmatpush1.msra.mxu0 0.0
    %8781 = vmatprep.subr.mxu0 0.0
    %8782 = vmatpush1.msra.mxu0 0.0
    %8783 = vmatprep.subr.mxu0 0.0
    %8784 = vmatpush1.msra.mxu0 0.0
    %8785 = vmatprep.subr.mxu0 0.0
    %8786 = vmatpush1.msra.mxu0 0.0
    %8787 = vmatprep.subr.mxu0 0.0
    %8788 = vmatpush1.msra.mxu0 0.0
    %8789 = vmatprep.subr.mxu0 0.0
    %8790 = vmatpush1.msra.mxu0 0.0
    %8791 = vmatprep.subr.mxu0 0.0
    %8792 = vmatpush1.msra.mxu0 0.0
    %8793 = vmatprep.subr.mxu0 0.0
    %8794 = vmatpush1.msra.mxu0 0.0
    %8795 = vmatprep.subr.mxu0 0.0
    %8796 = vmatpush1.msra.mxu0 0.0
    %8797 = vmatprep.subr.mxu0 0.0
    %8798 = vmatpush1.msra.mxu0 0.0
    %8799 = vmatprep.subr.mxu0 0.0
    %8800 = vmatpush1.msra.mxu0 0.0
    %8801 = vmatprep.subr.mxu0 0.0
    %8802 = vmatpush1.msra.mxu0 0.0
    %8803 = vmatprep.subr.mxu0 0.0
    %8804 = vmatpush1.msra.mxu0 0.0
    %8805 = vmatprep.subr.mxu0 0.0
    %8806 = vmatpush1.msra.mxu0 0.0
    %8807 = vmatprep.subr.mxu0 0.0
    %8808 = vmatpush1.msra.mxu0 0.0
    %8809 = vmatprep.subr.mxu0 0.0
    %8810 = vmatpush1.msra.mxu0 0.0
    %8811 = vmatprep.subr.mxu0 0.0
    %8812 = vmatpush1.msra.mxu0 0.0
    %8813 = vmatprep.subr.mxu0 0.0
    %8814 = vmatpush1.msra.mxu0 0.0
    %8815 = vmatprep.mubr.f32.mxu0 0.0
    %v8816 = vand.u32 %v8253, 4294901760
    %8817 = vmatmul.mubr.f32.gmra.mrb[0].mxu0 %v8816
    %v8818 = vpop.f32.mrb[0].mxu0
    %v8819 = vadd.f32 %v8734, %v8818
    %v8820 = vpop.f32.mrb[0].mxu0
    %v8821 = vadd.f32 %v8736, %v8820
    %8822 = vmatprep.mubr.f32.mxu0 0.0
    %v8823 = vand.u32 %v8256, 4294901760
    %8824 = vmatmul.mubr.f32.gmra.mrb[0].mxu0 %v8823
    %v8825 = vpop.f32.mrb[0].mxu0
    %v8826 = vadd.f32 %v8741, %v8825
    %v8827 = vpop.f32.mrb[0].mxu0
    %v8828 = vadd.f32 %v8743, %v8827
    %8829 = vdwg.mxu0
    %v8831 = vsel %vm115, %v8821, 0
    %v8834 = vsel %vm115, %v8828, 0
    %8836 = vmatprep.subr.mxu0 0.0
    %v8837 = vand.u32 %v5714, 4294901760
    %8838 = vmatpush1.msra.mxu0 %v8837
    %8839 = vmatprep.subr.mxu0 0.0
    %v8840 = vand.u32 %v5715, 4294901760
    %8841 = vmatpush1.msra.mxu0 %v8840
    %8842 = vmatprep.subr.mxu0 0.0
    %v8843 = vand.u32 %v5716, 4294901760
    %8844 = vmatpush1.msra.mxu0 %v8843
    %8845 = vmatprep.subr.mxu0 0.0
    %v8846 = vand.u32 %v5717, 4294901760
    %8847 = vmatpush1.msra.mxu0 %v8846
    %8848 = vmatprep.subr.mxu0 0.0
    %v8849 = vand.u32 %v5718, 4294901760
    %8850 = vmatpush1.msra.mxu0 %v8849
    %8851 = vmatprep.subr.mxu0 0.0
    %v8852 = vand.u32 %v5719, 4294901760
    %8853 = vmatpush1.msra.mxu0 %v8852
    %8854 = vmatprep.subr.mxu0 0.0
    %v8855 = vand.u32 %v5720, 4294901760
    %8856 = vmatpush1.msra.mxu0 %v8855
    %8857 = vmatprep.subr.mxu0 0.0
    %v8858 = vand.u32 %v5721, 4294901760
    %8859 = vmatpush1.msra.mxu0 %v8858
    %8860 = vmatprep.subr.mxu0 0.0
    %v8861 = vand.u32 %v5722, 4294901760
    %8862 = vmatpush1.msra.mxu0 %v8861
    %8863 = vmatprep.subr.mxu0 0.0
    %v8864 = vand.u32 %v5723, 4294901760
    %8865 = vmatpush1.msra.mxu0 %v8864
    %8866 = vmatprep.subr.mxu0 0.0
    %v8867 = vand.u32 %v5724, 4294901760
    %8868 = vmatpush1.msra.mxu0 %v8867
    %8869 = vmatprep.subr.mxu0 0.0
    %v8870 = vand.u32 %v5725, 4294901760
    %8871 = vmatpush1.msra.mxu0 %v8870
    %8872 = vmatprep.subr.mxu0 0.0
    %v8873 = vand.u32 %v5726, 4294901760
    %8874 = vmatpush1.msra.mxu0 %v8873
    %8875 = vmatprep.subr.mxu0 0.0
    %v8876 = vand.u32 %v5727, 4294901760
    %8877 = vmatpush1.msra.mxu0 %v8876
    %8878 = vmatprep.subr.mxu0 0.0
    %v8879 = vand.u32 %v5728, 4294901760
    %8880 = vmatpush1.msra.mxu0 %v8879
    %8881 = vmatprep.subr.mxu0 0.0
    %v8882 = vand.u32 %v5729, 4294901760
    %8883 = vmatpush1.msra.mxu0 %v8882
    %8884 = vmatprep.subr.mxu0 0.0
    %v8885 = vand.u32 %v5730, 4294901760
    %8886 = vmatpush1.msra.mxu0 %v8885
    %8887 = vmatprep.subr.mxu0 0.0
    %v8888 = vand.u32 %v5731, 4294901760
    %8889 = vmatpush1.msra.mxu0 %v8888
    %8890 = vmatprep.subr.mxu0 0.0
    %v8891 = vand.u32 %v5732, 4294901760
    %8892 = vmatpush1.msra.mxu0 %v8891
    %8893 = vmatprep.subr.mxu0 0.0
    %v8894 = vand.u32 %v5733, 4294901760
    %8895 = vmatpush1.msra.mxu0 %v8894
    %8896 = vmatprep.subr.mxu0 0.0
    %8897 = vmatpush1.msra.mxu0 0.0
    %8898 = vmatprep.subr.mxu0 0.0
    %8899 = vmatpush1.msra.mxu0 0.0
    %8900 = vmatprep.subr.mxu0 0.0
    %8901 = vmatpush1.msra.mxu0 0.0
    %8902 = vmatprep.subr.mxu0 0.0
    %8903 = vmatpush1.msra.mxu0 0.0
    %8904 = vmatprep.subr.mxu0 0.0
    %8905 = vmatpush1.msra.mxu0 0.0
    %8906 = vmatprep.subr.mxu0 0.0
    %8907 = vmatpush1.msra.mxu0 0.0
    %8908 = vmatprep.subr.mxu0 0.0
    %8909 = vmatpush1.msra.mxu0 0.0
    %8910 = vmatprep.subr.mxu0 0.0
    %8911 = vmatpush1.msra.mxu0 0.0
    %8912 = vmatprep.subr.mxu0 0.0
    %8913 = vmatpush1.msra.mxu0 0.0
    %8914 = vmatprep.subr.mxu0 0.0
    %8915 = vmatpush1.msra.mxu0 0.0
    %8916 = vmatprep.subr.mxu0 0.0
    %8917 = vmatpush1.msra.mxu0 0.0
    %8918 = vmatprep.subr.mxu0 0.0
    %8919 = vmatpush1.msra.mxu0 0.0
    %v8920 = vand.u32 %v8831, 4294901760
    %v8921 = vsub.f32 %v8831, %v8920
    %v8922 = vand.u32 %v8921, 4294901760
    %v8923 = vsub.f32 %v8921, %v8922
    %v8924 = vand.u32 %v8923, 4294901760
    %8925 = vmatprep.mubr.f32.mxu0 %v8924
    %v8926 = vand.u32 %v8819, 4294901760
    %v8927 = vsub.f32 %v8819, %v8926
    %v8928 = vand.u32 %v8927, 4294901760
    %v8929 = vsub.f32 %v8927, %v8928
    %v8930 = vand.u32 %v8929, 4294901760
    %8931 = vmatmul.mubr.f32.gmra.mrb[0].mxu0 %v8930
    %v8932 = vpop.f32.mrb[0].mxu0
    %v8933 = vadd.f32 0.0, %v8932
    %v8934 = vpop.f32.mrb[0].mxu0
    %v8935 = vand.u32 %v8834, 4294901760
    %v8936 = vsub.f32 %v8834, %v8935
    %v8937 = vand.u32 %v8936, 4294901760
    %v8938 = vsub.f32 %v8936, %v8937
    %v8939 = vand.u32 %v8938, 4294901760
    %8940 = vmatprep.mubr.f32.mxu0 %v8939
    %v8941 = vand.u32 %v8826, 4294901760
    %v8942 = vsub.f32 %v8826, %v8941
    %v8943 = vand.u32 %v8942, 4294901760
    %v8944 = vsub.f32 %v8942, %v8943
    %v8945 = vand.u32 %v8944, 4294901760
    %8946 = vmatmul.mubr.f32.gmra.mrb[0].mxu0 %v8945
    %v8947 = vpop.f32.mrb[0].mxu0
    %v8948 = vadd.f32 0.0, %v8947
    %v8949 = vpop.f32.mrb[0].mxu0
    %8950 = vdwg.mxu0
    %8951 = vmatprep.subr.mxu0 0.0
    %v8952 = vand.u32 %v5714, 4294901760
    %v8953 = vsub.f32 %v5714, %v8952
    %v8954 = vand.u32 %v8953, 4294901760
    %v8955 = vsub.f32 %v8953, %v8954
    %v8956 = vand.u32 %v8955, 4294901760
    %8957 = vmatpush1.msra.mxu0 %v8956
    %8958 = vmatprep.subr.mxu0 0.0
    %v8959 = vand.u32 %v5715, 4294901760
    %v8960 = vsub.f32 %v5715, %v8959
    %v8961 = vand.u32 %v8960, 4294901760
    %v8962 = vsub.f32 %v8960, %v8961
    %v8963 = vand.u32 %v8962, 4294901760
    %8964 = vmatpush1.msra.mxu0 %v8963
    %8965 = vmatprep.subr.mxu0 0.0
    %v8966 = vand.u32 %v5716, 4294901760
    %v8967 = vsub.f32 %v5716, %v8966
    %v8968 = vand.u32 %v8967, 4294901760
    %v8969 = vsub.f32 %v8967, %v8968
    %v8970 = vand.u32 %v8969, 4294901760
    %8971 = vmatpush1.msra.mxu0 %v8970
    %8972 = vmatprep.subr.mxu0 0.0
    %v8973 = vand.u32 %v5717, 4294901760
    %v8974 = vsub.f32 %v5717, %v8973
    %v8975 = vand.u32 %v8974, 4294901760
    %v8976 = vsub.f32 %v8974, %v8975
    %v8977 = vand.u32 %v8976, 4294901760
    %8978 = vmatpush1.msra.mxu0 %v8977
    %8979 = vmatprep.subr.mxu0 0.0
    %v8980 = vand.u32 %v5718, 4294901760
    %v8981 = vsub.f32 %v5718, %v8980
    %v8982 = vand.u32 %v8981, 4294901760
    %v8983 = vsub.f32 %v8981, %v8982
    %v8984 = vand.u32 %v8983, 4294901760
    %8985 = vmatpush1.msra.mxu0 %v8984
    %8986 = vmatprep.subr.mxu0 0.0
    %v8987 = vand.u32 %v5719, 4294901760
    %v8988 = vsub.f32 %v5719, %v8987
    %v8989 = vand.u32 %v8988, 4294901760
    %v8990 = vsub.f32 %v8988, %v8989
    %v8991 = vand.u32 %v8990, 4294901760
    %8992 = vmatpush1.msra.mxu0 %v8991
    %8993 = vmatprep.subr.mxu0 0.0
    %v8994 = vand.u32 %v5720, 4294901760
    %v8995 = vsub.f32 %v5720, %v8994
    %v8996 = vand.u32 %v8995, 4294901760
    %v8997 = vsub.f32 %v8995, %v8996
    %v8998 = vand.u32 %v8997, 4294901760
    %8999 = vmatpush1.msra.mxu0 %v8998
    %9000 = vmatprep.subr.mxu0 0.0
    %v9001 = vand.u32 %v5721, 4294901760
    %v9002 = vsub.f32 %v5721, %v9001
    %v9003 = vand.u32 %v9002, 4294901760
    %v9004 = vsub.f32 %v9002, %v9003
    %v9005 = vand.u32 %v9004, 4294901760
    %9006 = vmatpush1.msra.mxu0 %v9005
    %9007 = vmatprep.subr.mxu0 0.0
    %v9008 = vand.u32 %v5722, 4294901760
    %v9009 = vsub.f32 %v5722, %v9008
    %v9010 = vand.u32 %v9009, 4294901760
    %v9011 = vsub.f32 %v9009, %v9010
    %v9012 = vand.u32 %v9011, 4294901760
    %9013 = vmatpush1.msra.mxu0 %v9012
    %9014 = vmatprep.subr.mxu0 0.0
    %v9015 = vand.u32 %v5723, 4294901760
    %v9016 = vsub.f32 %v5723, %v9015
    %v9017 = vand.u32 %v9016, 4294901760
    %v9018 = vsub.f32 %v9016, %v9017
    %v9019 = vand.u32 %v9018, 4294901760
    %9020 = vmatpush1.msra.mxu0 %v9019
    %9021 = vmatprep.subr.mxu0 0.0
    %v9022 = vand.u32 %v5724, 4294901760
    %v9023 = vsub.f32 %v5724, %v9022
    %v9024 = vand.u32 %v9023, 4294901760
    %v9025 = vsub.f32 %v9023, %v9024
    %v9026 = vand.u32 %v9025, 4294901760
    %9027 = vmatpush1.msra.mxu0 %v9026
    %9028 = vmatprep.subr.mxu0 0.0
    %v9029 = vand.u32 %v5725, 4294901760
    %v9030 = vsub.f32 %v5725, %v9029
    %v9031 = vand.u32 %v9030, 4294901760
    %v9032 = vsub.f32 %v9030, %v9031
    %v9033 = vand.u32 %v9032, 4294901760
    %9034 = vmatpush1.msra.mxu0 %v9033
    %9035 = vmatprep.subr.mxu0 0.0
    %v9036 = vand.u32 %v5726, 4294901760
    %v9037 = vsub.f32 %v5726, %v9036
    %v9038 = vand.u32 %v9037, 4294901760
    %v9039 = vsub.f32 %v9037, %v9038
    %v9040 = vand.u32 %v9039, 4294901760
    %9041 = vmatpush1.msra.mxu0 %v9040
    %9042 = vmatprep.subr.mxu0 0.0
    %v9043 = vand.u32 %v5727, 4294901760
    %v9044 = vsub.f32 %v5727, %v9043
    %v9045 = vand.u32 %v9044, 4294901760
    %v9046 = vsub.f32 %v9044, %v9045
    %v9047 = vand.u32 %v9046, 4294901760
    %9048 = vmatpush1.msra.mxu0 %v9047
    %9049 = vmatprep.subr.mxu0 0.0
    %v9050 = vand.u32 %v5728, 4294901760
    %v9051 = vsub.f32 %v5728, %v9050
    %v9052 = vand.u32 %v9051, 4294901760
    %v9053 = vsub.f32 %v9051, %v9052
    %v9054 = vand.u32 %v9053, 4294901760
    %9055 = vmatpush1.msra.mxu0 %v9054
    %9056 = vmatprep.subr.mxu0 0.0
    %v9057 = vand.u32 %v5729, 4294901760
    %v9058 = vsub.f32 %v5729, %v9057
    %v9059 = vand.u32 %v9058, 4294901760
    %v9060 = vsub.f32 %v9058, %v9059
    %v9061 = vand.u32 %v9060, 4294901760
    %9062 = vmatpush1.msra.mxu0 %v9061
    %9063 = vmatprep.subr.mxu0 0.0
    %v9064 = vand.u32 %v5730, 4294901760
    %v9065 = vsub.f32 %v5730, %v9064
    %v9066 = vand.u32 %v9065, 4294901760
    %v9067 = vsub.f32 %v9065, %v9066
    %v9068 = vand.u32 %v9067, 4294901760
    %9069 = vmatpush1.msra.mxu0 %v9068
    %9070 = vmatprep.subr.mxu0 0.0
    %v9071 = vand.u32 %v5731, 4294901760
    %v9072 = vsub.f32 %v5731, %v9071
    %v9073 = vand.u32 %v9072, 4294901760
    %v9074 = vsub.f32 %v9072, %v9073
    %v9075 = vand.u32 %v9074, 4294901760
    %9076 = vmatpush1.msra.mxu0 %v9075
    %9077 = vmatprep.subr.mxu0 0.0
    %v9078 = vand.u32 %v5732, 4294901760
    %v9079 = vsub.f32 %v5732, %v9078
    %v9080 = vand.u32 %v9079, 4294901760
    %v9081 = vsub.f32 %v9079, %v9080
    %v9082 = vand.u32 %v9081, 4294901760
    %9083 = vmatpush1.msra.mxu0 %v9082
    %9084 = vmatprep.subr.mxu0 0.0
    %v9085 = vand.u32 %v5733, 4294901760
    %v9086 = vsub.f32 %v5733, %v9085
    %v9087 = vand.u32 %v9086, 4294901760
    %v9088 = vsub.f32 %v9086, %v9087
    %v9089 = vand.u32 %v9088, 4294901760
    %9090 = vmatpush1.msra.mxu0 %v9089
    %9091 = vmatprep.subr.mxu0 0.0
    %9092 = vmatpush1.msra.mxu0 0.0
    %9093 = vmatprep.subr.mxu0 0.0
    %9094 = vmatpush1.msra.mxu0 0.0
    %9095 = vmatprep.subr.mxu0 0.0
    %9096 = vmatpush1.msra.mxu0 0.0
    %9097 = vmatprep.subr.mxu0 0.0
    %9098 = vmatpush1.msra.mxu0 0.0
    %9099 = vmatprep.subr.mxu0 0.0
    %9100 = vmatpush1.msra.mxu0 0.0
    %9101 = vmatprep.subr.mxu0 0.0
    %9102 = vmatpush1.msra.mxu0 0.0
    %9103 = vmatprep.subr.mxu0 0.0
    %9104 = vmatpush1.msra.mxu0 0.0
    %9105 = vmatprep.subr.mxu0 0.0
    %9106 = vmatpush1.msra.mxu0 0.0
    %9107 = vmatprep.subr.mxu0 0.0
    %9108 = vmatpush1.msra.mxu0 0.0
    %9109 = vmatprep.subr.mxu0 0.0
    %9110 = vmatpush1.msra.mxu0 0.0
    %9111 = vmatprep.subr.mxu0 0.0
    %9112 = vmatpush1.msra.mxu0 0.0
    %9113 = vmatprep.subr.mxu0 0.0
    %9114 = vmatpush1.msra.mxu0 0.0
    %v9115 = vand.u32 %v8831, 4294901760
    %9116 = vmatprep.mubr.f32.mxu0 %v9115
    %v9117 = vand.u32 %v8819, 4294901760
    %9118 = vmatmul.mubr.f32.gmra.mrb[0].mxu0 %v9117
    %v9119 = vpop.f32.mrb[0].mxu0
    %v9120 = vadd.f32 %v8933, %v9119
    %v9121 = vpop.f32.mrb[0].mxu0
    %v9122 = vand.u32 %v8834, 4294901760
    %9123 = vmatprep.mubr.f32.mxu0 %v9122
    %v9124 = vand.u32 %v8826, 4294901760
    %9125 = vmatmul.mubr.f32.gmra.mrb[0].mxu0 %v9124
    %v9126 = vpop.f32.mrb[0].mxu0
    %v9127 = vadd.f32 %v8948, %v9126
    %v9128 = vpop.f32.mrb[0].mxu0
    %9129 = vdwg.mxu0
    %9130 = vmatprep.subr.mxu0 0.0
    %v9131 = vand.u32 %v5714, 4294901760
    %v9132 = vsub.f32 %v5714, %v9131
    %9133 = vmatpush1.msra.mxu0 %v9132
    %9134 = vmatprep.subr.mxu0 0.0
    %v9135 = vand.u32 %v5715, 4294901760
    %v9136 = vsub.f32 %v5715, %v9135
    %9137 = vmatpush1.msra.mxu0 %v9136
    %9138 = vmatprep.subr.mxu0 0.0
    %v9139 = vand.u32 %v5716, 4294901760
    %v9140 = vsub.f32 %v5716, %v9139
    %9141 = vmatpush1.msra.mxu0 %v9140
    %9142 = vmatprep.subr.mxu0 0.0
    %v9143 = vand.u32 %v5717, 4294901760
    %v9144 = vsub.f32 %v5717, %v9143
    %9145 = vmatpush1.msra.mxu0 %v9144
    %9146 = vmatprep.subr.mxu0 0.0
    %v9147 = vand.u32 %v5718, 4294901760
    %v9148 = vsub.f32 %v5718, %v9147
    %9149 = vmatpush1.msra.mxu0 %v9148
    %9150 = vmatprep.subr.mxu0 0.0
    %v9151 = vand.u32 %v5719, 4294901760
    %v9152 = vsub.f32 %v5719, %v9151
    %9153 = vmatpush1.msra.mxu0 %v9152
    %9154 = vmatprep.subr.mxu0 0.0
    %v9155 = vand.u32 %v5720, 4294901760
    %v9156 = vsub.f32 %v5720, %v9155
    %9157 = vmatpush1.msra.mxu0 %v9156
    %9158 = vmatprep.subr.mxu0 0.0
    %v9159 = vand.u32 %v5721, 4294901760
    %v9160 = vsub.f32 %v5721, %v9159
    %9161 = vmatpush1.msra.mxu0 %v9160
    %9162 = vmatprep.subr.mxu0 0.0
    %v9163 = vand.u32 %v5722, 4294901760
    %v9164 = vsub.f32 %v5722, %v9163
    %9165 = vmatpush1.msra.mxu0 %v9164
    %9166 = vmatprep.subr.mxu0 0.0
    %v9167 = vand.u32 %v5723, 4294901760
    %v9168 = vsub.f32 %v5723, %v9167
    %9169 = vmatpush1.msra.mxu0 %v9168
    %9170 = vmatprep.subr.mxu0 0.0
    %v9171 = vand.u32 %v5724, 4294901760
    %v9172 = vsub.f32 %v5724, %v9171
    %9173 = vmatpush1.msra.mxu0 %v9172
    %9174 = vmatprep.subr.mxu0 0.0
    %v9175 = vand.u32 %v5725, 4294901760
    %v9176 = vsub.f32 %v5725, %v9175
    %9177 = vmatpush1.msra.mxu0 %v9176
    %9178 = vmatprep.subr.mxu0 0.0
    %v9179 = vand.u32 %v5726, 4294901760
    %v9180 = vsub.f32 %v5726, %v9179
    %9181 = vmatpush1.msra.mxu0 %v9180
    %9182 = vmatprep.subr.mxu0 0.0
    %v9183 = vand.u32 %v5727, 4294901760
    %v9184 = vsub.f32 %v5727, %v9183
    %9185 = vmatpush1.msra.mxu0 %v9184
    %9186 = vmatprep.subr.mxu0 0.0
    %v9187 = vand.u32 %v5728, 4294901760
    %v9188 = vsub.f32 %v5728, %v9187
    %9189 = vmatpush1.msra.mxu0 %v9188
    %9190 = vmatprep.subr.mxu0 0.0
    %v9191 = vand.u32 %v5729, 4294901760
    %v9192 = vsub.f32 %v5729, %v9191
    %9193 = vmatpush1.msra.mxu0 %v9192
    %9194 = vmatprep.subr.mxu0 0.0
    %v9195 = vand.u32 %v5730, 4294901760
    %v9196 = vsub.f32 %v5730, %v9195
    %9197 = vmatpush1.msra.mxu0 %v9196
    %9198 = vmatprep.subr.mxu0 0.0
    %v9199 = vand.u32 %v5731, 4294901760
    %v9200 = vsub.f32 %v5731, %v9199
    %9201 = vmatpush1.msra.mxu0 %v9200
    %9202 = vmatprep.subr.mxu0 0.0
    %v9203 = vand.u32 %v5732, 4294901760
    %v9204 = vsub.f32 %v5732, %v9203
    %9205 = vmatpush1.msra.mxu0 %v9204
    %9206 = vmatprep.subr.mxu0 0.0
    %v9207 = vand.u32 %v5733, 4294901760
    %v9208 = vsub.f32 %v5733, %v9207
    %9209 = vmatpush1.msra.mxu0 %v9208
    %9210 = vmatprep.subr.mxu0 0.0
    %9211 = vmatpush1.msra.mxu0 0.0
    %9212 = vmatprep.subr.mxu0 0.0
    %9213 = vmatpush1.msra.mxu0 0.0
    %9214 = vmatprep.subr.mxu0 0.0
    %9215 = vmatpush1.msra.mxu0 0.0
    %9216 = vmatprep.subr.mxu0 0.0
    %9217 = vmatpush1.msra.mxu0 0.0
    %9218 = vmatprep.subr.mxu0 0.0
    %9219 = vmatpush1.msra.mxu0 0.0
    %9220 = vmatprep.subr.mxu0 0.0
    %9221 = vmatpush1.msra.mxu0 0.0
    %9222 = vmatprep.subr.mxu0 0.0
    %9223 = vmatpush1.msra.mxu0 0.0
    %9224 = vmatprep.subr.mxu0 0.0
    %9225 = vmatpush1.msra.mxu0 0.0
    %9226 = vmatprep.subr.mxu0 0.0
    %9227 = vmatpush1.msra.mxu0 0.0
    %9228 = vmatprep.subr.mxu0 0.0
    %9229 = vmatpush1.msra.mxu0 0.0
    %9230 = vmatprep.subr.mxu0 0.0
    %9231 = vmatpush1.msra.mxu0 0.0
    %9232 = vmatprep.subr.mxu0 0.0
    %9233 = vmatpush1.msra.mxu0 0.0
    %v9234 = vand.u32 %v8831, 4294901760
    %v9235 = vsub.f32 %v8831, %v9234
    %9236 = vmatprep.mubr.f32.mxu0 %v9235
    %v9237 = vand.u32 %v8819, 4294901760
    %v9238 = vsub.f32 %v8819, %v9237
    %9239 = vmatmul.mubr.f32.gmra.mrb[0].mxu0 %v9238
    %v9240 = vpop.f32.mrb[0].mxu0
    %v9241 = vadd.f32 %v9120, %v9240
    %v9242 = vpop.f32.mrb[0].mxu0
    %v9243 = vand.u32 %v8834, 4294901760
    %v9244 = vsub.f32 %v8834, %v9243
    %9245 = vmatprep.mubr.f32.mxu0 %v9244
    %v9246 = vand.u32 %v8826, 4294901760
    %v9247 = vsub.f32 %v8826, %v9246
    %9248 = vmatmul.mubr.f32.gmra.mrb[0].mxu0 %v9247
    %v9249 = vpop.f32.mrb[0].mxu0
    %v9250 = vadd.f32 %v9127, %v9249
    %v9251 = vpop.f32.mrb[0].mxu0
    %9252 = vdwg.mxu0
    %9253 = vmatprep.subr.mxu0 0.0
    %v9254 = vand.u32 %v5714, 4294901760
    %9255 = vmatpush1.msra.mxu0 %v9254
    %9256 = vmatprep.subr.mxu0 0.0
    %v9257 = vand.u32 %v5715, 4294901760
    %9258 = vmatpush1.msra.mxu0 %v9257
    %9259 = vmatprep.subr.mxu0 0.0
    %v9260 = vand.u32 %v5716, 4294901760
    %9261 = vmatpush1.msra.mxu0 %v9260
    %9262 = vmatprep.subr.mxu0 0.0
    %v9263 = vand.u32 %v5717, 4294901760
    %9264 = vmatpush1.msra.mxu0 %v9263
    %9265 = vmatprep.subr.mxu0 0.0
    %v9266 = vand.u32 %v5718, 4294901760
    %9267 = vmatpush1.msra.mxu0 %v9266
    %9268 = vmatprep.subr.mxu0 0.0
    %v9269 = vand.u32 %v5719, 4294901760
    %9270 = vmatpush1.msra.mxu0 %v9269
    %9271 = vmatprep.subr.mxu0 0.0
    %v9272 = vand.u32 %v5720, 4294901760
    %9273 = vmatpush1.msra.mxu0 %v9272
    %9274 = vmatprep.subr.mxu0 0.0
    %v9275 = vand.u32 %v5721, 4294901760
    %9276 = vmatpush1.msra.mxu0 %v9275
    %9277 = vmatprep.subr.mxu0 0.0
    %v9278 = vand.u32 %v5722, 4294901760
    %9279 = vmatpush1.msra.mxu0 %v9278
    %9280 = vmatprep.subr.mxu0 0.0
    %v9281 = vand.u32 %v5723, 4294901760
    %9282 = vmatpush1.msra.mxu0 %v9281
    %9283 = vmatprep.subr.mxu0 0.0
    %v9284 = vand.u32 %v5724, 4294901760
    %9285 = vmatpush1.msra.mxu0 %v9284
    %9286 = vmatprep.subr.mxu0 0.0
    %v9287 = vand.u32 %v5725, 4294901760
    %9288 = vmatpush1.msra.mxu0 %v9287
    %9289 = vmatprep.subr.mxu0 0.0
    %v9290 = vand.u32 %v5726, 4294901760
    %9291 = vmatpush1.msra.mxu0 %v9290
    %9292 = vmatprep.subr.mxu0 0.0
    %v9293 = vand.u32 %v5727, 4294901760
    %9294 = vmatpush1.msra.mxu0 %v9293
    %9295 = vmatprep.subr.mxu0 0.0
    %v9296 = vand.u32 %v5728, 4294901760
    %9297 = vmatpush1.msra.mxu0 %v9296
    %9298 = vmatprep.subr.mxu0 0.0
    %v9299 = vand.u32 %v5729, 4294901760
    %9300 = vmatpush1.msra.mxu0 %v9299
    %9301 = vmatprep.subr.mxu0 0.0
    %v9302 = vand.u32 %v5730, 4294901760
    %9303 = vmatpush1.msra.mxu0 %v9302
    %9304 = vmatprep.subr.mxu0 0.0
    %v9305 = vand.u32 %v5731, 4294901760
    %9306 = vmatpush1.msra.mxu0 %v9305
    %9307 = vmatprep.subr.mxu0 0.0
    %v9308 = vand.u32 %v5732, 4294901760
    %9309 = vmatpush1.msra.mxu0 %v9308
    %9310 = vmatprep.subr.mxu0 0.0
    %v9311 = vand.u32 %v5733, 4294901760
    %9312 = vmatpush1.msra.mxu0 %v9311
    %9313 = vmatprep.subr.mxu0 0.0
    %9314 = vmatpush1.msra.mxu0 0.0
    %9315 = vmatprep.subr.mxu0 0.0
    %9316 = vmatpush1.msra.mxu0 0.0
    %9317 = vmatprep.subr.mxu0 0.0
    %9318 = vmatpush1.msra.mxu0 0.0
    %9319 = vmatprep.subr.mxu0 0.0
    %9320 = vmatpush1.msra.mxu0 0.0
    %9321 = vmatprep.subr.mxu0 0.0
    %9322 = vmatpush1.msra.mxu0 0.0
    %9323 = vmatprep.subr.mxu0 0.0
    %9324 = vmatpush1.msra.mxu0 0.0
    %9325 = vmatprep.subr.mxu0 0.0
    %9326 = vmatpush1.msra.mxu0 0.0
    %9327 = vmatprep.subr.mxu0 0.0
    %9328 = vmatpush1.msra.mxu0 0.0
    %9329 = vmatprep.subr.mxu0 0.0
    %9330 = vmatpush1.msra.mxu0 0.0
    %9331 = vmatprep.subr.mxu0 0.0
    %9332 = vmatpush1.msra.mxu0 0.0
    %9333 = vmatprep.subr.mxu0 0.0
    %9334 = vmatpush1.msra.mxu0 0.0
    %9335 = vmatprep.subr.mxu0 0.0
    %9336 = vmatpush1.msra.mxu0 0.0
    %v9337 = vand.u32 %v8831, 4294901760
    %v9338 = vsub.f32 %v8831, %v9337
    %v9339 = vand.u32 %v9338, 4294901760
    %9340 = vmatprep.mubr.f32.mxu0 %v9339
    %v9341 = vand.u32 %v8819, 4294901760
    %v9342 = vsub.f32 %v8819, %v9341
    %v9343 = vand.u32 %v9342, 4294901760
    %9344 = vmatmul.mubr.f32.gmra.mrb[0].mxu0 %v9343
    %v9345 = vpop.f32.mrb[0].mxu0
    %v9346 = vadd.f32 %v9241, %v9345
    %v9347 = vpop.f32.mrb[0].mxu0
    %v9348 = vand.u32 %v8834, 4294901760
    %v9349 = vsub.f32 %v8834, %v9348
    %v9350 = vand.u32 %v9349, 4294901760
    %9351 = vmatprep.mubr.f32.mxu0 %v9350
    %v9352 = vand.u32 %v8826, 4294901760
    %v9353 = vsub.f32 %v8826, %v9352
    %v9354 = vand.u32 %v9353, 4294901760
    %9355 = vmatmul.mubr.f32.gmra.mrb[0].mxu0 %v9354
    %v9356 = vpop.f32.mrb[0].mxu0
    %v9357 = vadd.f32 %v9250, %v9356
    %v9358 = vpop.f32.mrb[0].mxu0
    %9359 = vdwg.mxu0
    %9360 = vmatprep.subr.mxu0 0.0
    %v9361 = vand.u32 %v5714, 4294901760
    %v9362 = vsub.f32 %v5714, %v9361
    %v9363 = vand.u32 %v9362, 4294901760
    %9364 = vmatpush1.msra.mxu0 %v9363
    %9365 = vmatprep.subr.mxu0 0.0
    %v9366 = vand.u32 %v5715, 4294901760
    %v9367 = vsub.f32 %v5715, %v9366
    %v9368 = vand.u32 %v9367, 4294901760
    %9369 = vmatpush1.msra.mxu0 %v9368
    %9370 = vmatprep.subr.mxu0 0.0
    %v9371 = vand.u32 %v5716, 4294901760
    %v9372 = vsub.f32 %v5716, %v9371
    %v9373 = vand.u32 %v9372, 4294901760
    %9374 = vmatpush1.msra.mxu0 %v9373
    %9375 = vmatprep.subr.mxu0 0.0
    %v9376 = vand.u32 %v5717, 4294901760
    %v9377 = vsub.f32 %v5717, %v9376
    %v9378 = vand.u32 %v9377, 4294901760
    %9379 = vmatpush1.msra.mxu0 %v9378
    %9380 = vmatprep.subr.mxu0 0.0
    %v9381 = vand.u32 %v5718, 4294901760
    %v9382 = vsub.f32 %v5718, %v9381
    %v9383 = vand.u32 %v9382, 4294901760
    %9384 = vmatpush1.msra.mxu0 %v9383
    %9385 = vmatprep.subr.mxu0 0.0
    %v9386 = vand.u32 %v5719, 4294901760
    %v9387 = vsub.f32 %v5719, %v9386
    %v9388 = vand.u32 %v9387, 4294901760
    %9389 = vmatpush1.msra.mxu0 %v9388
    %9390 = vmatprep.subr.mxu0 0.0
    %v9391 = vand.u32 %v5720, 4294901760
    %v9392 = vsub.f32 %v5720, %v9391
    %v9393 = vand.u32 %v9392, 4294901760
    %9394 = vmatpush1.msra.mxu0 %v9393
    %9395 = vmatprep.subr.mxu0 0.0
    %v9396 = vand.u32 %v5721, 4294901760
    %v9397 = vsub.f32 %v5721, %v9396
    %v9398 = vand.u32 %v9397, 4294901760
    %9399 = vmatpush1.msra.mxu0 %v9398
    %9400 = vmatprep.subr.mxu0 0.0
    %v9401 = vand.u32 %v5722, 4294901760
    %v9402 = vsub.f32 %v5722, %v9401
    %v9403 = vand.u32 %v9402, 4294901760
    %9404 = vmatpush1.msra.mxu0 %v9403
    %9405 = vmatprep.subr.mxu0 0.0
    %v9406 = vand.u32 %v5723, 4294901760
    %v9407 = vsub.f32 %v5723, %v9406
    %v9408 = vand.u32 %v9407, 4294901760
    %9409 = vmatpush1.msra.mxu0 %v9408
    %9410 = vmatprep.subr.mxu0 0.0
    %v9411 = vand.u32 %v5724, 4294901760
    %v9412 = vsub.f32 %v5724, %v9411
    %v9413 = vand.u32 %v9412, 4294901760
    %9414 = vmatpush1.msra.mxu0 %v9413
    %9415 = vmatprep.subr.mxu0 0.0
    %v9416 = vand.u32 %v5725, 4294901760
    %v9417 = vsub.f32 %v5725, %v9416
    %v9418 = vand.u32 %v9417, 4294901760
    %9419 = vmatpush1.msra.mxu0 %v9418
    %9420 = vmatprep.subr.mxu0 0.0
    %v9421 = vand.u32 %v5726, 4294901760
    %v9422 = vsub.f32 %v5726, %v9421
    %v9423 = vand.u32 %v9422, 4294901760
    %9424 = vmatpush1.msra.mxu0 %v9423
    %9425 = vmatprep.subr.mxu0 0.0
    %v9426 = vand.u32 %v5727, 4294901760
    %v9427 = vsub.f32 %v5727, %v9426
    %v9428 = vand.u32 %v9427, 4294901760
    %9429 = vmatpush1.msra.mxu0 %v9428
    %9430 = vmatprep.subr.mxu0 0.0
    %v9431 = vand.u32 %v5728, 4294901760
    %v9432 = vsub.f32 %v5728, %v9431
    %v9433 = vand.u32 %v9432, 4294901760
    %9434 = vmatpush1.msra.mxu0 %v9433
    %9435 = vmatprep.subr.mxu0 0.0
    %v9436 = vand.u32 %v5729, 4294901760
    %v9437 = vsub.f32 %v5729, %v9436
    %v9438 = vand.u32 %v9437, 4294901760
    %9439 = vmatpush1.msra.mxu0 %v9438
    %9440 = vmatprep.subr.mxu0 0.0
    %v9441 = vand.u32 %v5730, 4294901760
    %v9442 = vsub.f32 %v5730, %v9441
    %v9443 = vand.u32 %v9442, 4294901760
    %9444 = vmatpush1.msra.mxu0 %v9443
    %9445 = vmatprep.subr.mxu0 0.0
    %v9446 = vand.u32 %v5731, 4294901760
    %v9447 = vsub.f32 %v5731, %v9446
    %v9448 = vand.u32 %v9447, 4294901760
    %9449 = vmatpush1.msra.mxu0 %v9448
    %9450 = vmatprep.subr.mxu0 0.0
    %v9451 = vand.u32 %v5732, 4294901760
    %v9452 = vsub.f32 %v5732, %v9451
    %v9453 = vand.u32 %v9452, 4294901760
    %9454 = vmatpush1.msra.mxu0 %v9453
    %9455 = vmatprep.subr.mxu0 0.0
    %v9456 = vand.u32 %v5733, 4294901760
    %v9457 = vsub.f32 %v5733, %v9456
    %v9458 = vand.u32 %v9457, 4294901760
    %9459 = vmatpush1.msra.mxu0 %v9458
    %9460 = vmatprep.subr.mxu0 0.0
    %9461 = vmatpush1.msra.mxu0 0.0
    %9462 = vmatprep.subr.mxu0 0.0
    %9463 = vmatpush1.msra.mxu0 0.0
    %9464 = vmatprep.subr.mxu0 0.0
    %9465 = vmatpush1.msra.mxu0 0.0
    %9466 = vmatprep.subr.mxu0 0.0
    %9467 = vmatpush1.msra.mxu0 0.0
    %9468 = vmatprep.subr.mxu0 0.0
    %9469 = vmatpush1.msra.mxu0 0.0
    %9470 = vmatprep.subr.mxu0 0.0
    %9471 = vmatpush1.msra.mxu0 0.0
    %9472 = vmatprep.subr.mxu0 0.0
    %9473 = vmatpush1.msra.mxu0 0.0
    %9474 = vmatprep.subr.mxu0 0.0
    %9475 = vmatpush1.msra.mxu0 0.0
    %9476 = vmatprep.subr.mxu0 0.0
    %9477 = vmatpush1.msra.mxu0 0.0
    %9478 = vmatprep.subr.mxu0 0.0
    %9479 = vmatpush1.msra.mxu0 0.0
    %9480 = vmatprep.subr.mxu0 0.0
    %9481 = vmatpush1.msra.mxu0 0.0
    %9482 = vmatprep.subr.mxu0 0.0
    %9483 = vmatpush1.msra.mxu0 0.0
    %v9484 = vand.u32 %v8831, 4294901760
    %9485 = vmatprep.mubr.f32.mxu0 %v9484
    %v9486 = vand.u32 %v8819, 4294901760
    %9487 = vmatmul.mubr.f32.gmra.mrb[0].mxu0 %v9486
    %v9488 = vpop.f32.mrb[0].mxu0
    %v9489 = vadd.f32 %v9346, %v9488
    %v9490 = vpop.f32.mrb[0].mxu0
    %v9491 = vand.u32 %v8834, 4294901760
    %9492 = vmatprep.mubr.f32.mxu0 %v9491
    %v9493 = vand.u32 %v8826, 4294901760
    %9494 = vmatmul.mubr.f32.gmra.mrb[0].mxu0 %v9493
    %v9495 = vpop.f32.mrb[0].mxu0
    %v9496 = vadd.f32 %v9357, %v9495
    %v9497 = vpop.f32.mrb[0].mxu0
    %9498 = vdwg.mxu0
    %9499 = vmatprep.subr.mxu0 0.0
    %v9500 = vand.u32 %v5714, 4294901760
    %9501 = vmatpush1.msra.mxu0 %v9500
    %9502 = vmatprep.subr.mxu0 0.0
    %v9503 = vand.u32 %v5715, 4294901760
    %9504 = vmatpush1.msra.mxu0 %v9503
    %9505 = vmatprep.subr.mxu0 0.0
    %v9506 = vand.u32 %v5716, 4294901760
    %9507 = vmatpush1.msra.mxu0 %v9506
    %9508 = vmatprep.subr.mxu0 0.0
    %v9509 = vand.u32 %v5717, 4294901760
    %9510 = vmatpush1.msra.mxu0 %v9509
    %9511 = vmatprep.subr.mxu0 0.0
    %v9512 = vand.u32 %v5718, 4294901760
    %9513 = vmatpush1.msra.mxu0 %v9512
    %9514 = vmatprep.subr.mxu0 0.0
    %v9515 = vand.u32 %v5719, 4294901760
    %9516 = vmatpush1.msra.mxu0 %v9515
    %9517 = vmatprep.subr.mxu0 0.0
    %v9518 = vand.u32 %v5720, 4294901760
    %9519 = vmatpush1.msra.mxu0 %v9518
    %9520 = vmatprep.subr.mxu0 0.0
    %v9521 = vand.u32 %v5721, 4294901760
    %9522 = vmatpush1.msra.mxu0 %v9521
    %9523 = vmatprep.subr.mxu0 0.0
    %v9524 = vand.u32 %v5722, 4294901760
    %9525 = vmatpush1.msra.mxu0 %v9524
    %9526 = vmatprep.subr.mxu0 0.0
    %v9527 = vand.u32 %v5723, 4294901760
    %9528 = vmatpush1.msra.mxu0 %v9527
    %9529 = vmatprep.subr.mxu0 0.0
    %v9530 = vand.u32 %v5724, 4294901760
    %9531 = vmatpush1.msra.mxu0 %v9530
    %9532 = vmatprep.subr.mxu0 0.0
    %v9533 = vand.u32 %v5725, 4294901760
    %9534 = vmatpush1.msra.mxu0 %v9533
    %9535 = vmatprep.subr.mxu0 0.0
    %v9536 = vand.u32 %v5726, 4294901760
    %9537 = vmatpush1.msra.mxu0 %v9536
    %9538 = vmatprep.subr.mxu0 0.0
    %v9539 = vand.u32 %v5727, 4294901760
    %9540 = vmatpush1.msra.mxu0 %v9539
    %9541 = vmatprep.subr.mxu0 0.0
    %v9542 = vand.u32 %v5728, 4294901760
    %9543 = vmatpush1.msra.mxu0 %v9542
    %9544 = vmatprep.subr.mxu0 0.0
    %v9545 = vand.u32 %v5729, 4294901760
    %9546 = vmatpush1.msra.mxu0 %v9545
    %9547 = vmatprep.subr.mxu0 0.0
    %v9548 = vand.u32 %v5730, 4294901760
    %9549 = vmatpush1.msra.mxu0 %v9548
    %9550 = vmatprep.subr.mxu0 0.0
    %v9551 = vand.u32 %v5731, 4294901760
    %9552 = vmatpush1.msra.mxu0 %v9551
    %9553 = vmatprep.subr.mxu0 0.0
    %v9554 = vand.u32 %v5732, 4294901760
    %9555 = vmatpush1.msra.mxu0 %v9554
    %9556 = vmatprep.subr.mxu0 0.0
    %v9557 = vand.u32 %v5733, 4294901760
    %9558 = vmatpush1.msra.mxu0 %v9557
    %9559 = vmatprep.subr.mxu0 0.0
    %9560 = vmatpush1.msra.mxu0 0.0
    %9561 = vmatprep.subr.mxu0 0.0
    %9562 = vmatpush1.msra.mxu0 0.0
    %9563 = vmatprep.subr.mxu0 0.0
    %9564 = vmatpush1.msra.mxu0 0.0
    %9565 = vmatprep.subr.mxu0 0.0
    %9566 = vmatpush1.msra.mxu0 0.0
    %9567 = vmatprep.subr.mxu0 0.0
    %9568 = vmatpush1.msra.mxu0 0.0
    %9569 = vmatprep.subr.mxu0 0.0
    %9570 = vmatpush1.msra.mxu0 0.0
    %9571 = vmatprep.subr.mxu0 0.0
    %9572 = vmatpush1.msra.mxu0 0.0
    %9573 = vmatprep.subr.mxu0 0.0
    %9574 = vmatpush1.msra.mxu0 0.0
    %9575 = vmatprep.subr.mxu0 0.0
    %9576 = vmatpush1.msra.mxu0 0.0
    %9577 = vmatprep.subr.mxu0 0.0
    %9578 = vmatpush1.msra.mxu0 0.0
    %9579 = vmatprep.subr.mxu0 0.0
    %9580 = vmatpush1.msra.mxu0 0.0
    %9581 = vmatprep.subr.mxu0 0.0
    %9582 = vmatpush1.msra.mxu0 0.0
    %v9583 = vand.u32 %v8831, 4294901760
    %9584 = vmatprep.mubr.f32.mxu0 %v9583
    %v9585 = vand.u32 %v8819, 4294901760
    %9586 = vmatmul.mubr.f32.gmra.mrb[0].mxu0 %v9585
    %v9587 = vpop.f32.mrb[0].mxu0
    %v9588 = vadd.f32 %v9489, %v9587
    %v9589 = vpop.f32.mrb[0].mxu0
    %v9590 = vand.u32 %v8834, 4294901760
    %9591 = vmatprep.mubr.f32.mxu0 %v9590
    %v9592 = vand.u32 %v8826, 4294901760
    %9593 = vmatmul.mubr.f32.gmra.mrb[0].mxu0 %v9592
    %v9594 = vpop.f32.mrb[0].mxu0
    %v9595 = vadd.f32 %v9496, %v9594
    %v9596 = vpop.f32.mrb[0].mxu0
    %9597 = vdwg.mxu0
    %v9598 = vpack.c.bf16 %v9595, %v9588
    %v9600 = vunpack.c.l.b16 %v9598
    %v9601 = vunpack.c.h.b16 %v9598
    %v9602 = vpack.c.b16 %v9600, %v9600
    %v9603 = vpack.c.b16 %v9601, %v9601
    %vm9606 = vcmask 650240
    %9607 = vst.msk [vmem:[#allocation3] sm:$0xf] %vm9606, %v9602
    %vm9608 = vcmask 647168
    %9609 = vst.msk [vmem:[#allocation3 + $0x4] sm:$0x1] %vm9608, %v9603
    %v9610 = vld [vmem:[#allocation3] sm:$0x1]
    %v9611 = vld [vmem:[%s3] sm:$0xf]
    %v9612 = vld [vmem:[%s3 + $0x4] sm:$0xf]
    %v9613 = vld [vmem:[%s3 + $0x8] sm:$0xf]
    %v9614 = vld [vmem:[%s3 + $0xc] sm:$0xf]
    %v9615 = vld [vmem:[%s3 + $0x10] sm:$0xf]
    %v9616 = vld [vmem:[%s3 + $0x14] sm:$0xf]
    %v9617 = vld [vmem:[%s3 + $0x18] sm:$0xf]
    %v9618 = vld [vmem:[%s3 + $0x1c] sm:$0xf]
    %v9619 = vld [vmem:[%s3 + $0x20] sm:$0xf]
    %v9620 = vld [vmem:[%s3 + $0x24] sm:$0xf]
    %v9621 = vld [vmem:[#allocation3] sm:$0x2]
    %s9622 = scalar_lea.vmem %s3, 40
    %v9623 = vld [vmem:[%s9622] sm:$0xf]
    %v9624 = vld [vmem:[%s9622 + $0x4] sm:$0xf]
    %v9625 = vld [vmem:[%s9622 + $0x8] sm:$0xf]
    %v9626 = vld [vmem:[%s9622 + $0xc] sm:$0xf]
    %v9627 = vld [vmem:[%s9622 + $0x10] sm:$0xf]
    %v9628 = vld [vmem:[%s9622 + $0x14] sm:$0xf]
    %v9629 = vld [vmem:[%s9622 + $0x18] sm:$0xf]
    %v9630 = vld [vmem:[%s9622 + $0x1c] sm:$0xf]
    %v9631 = vld [vmem:[%s9622 + $0x20] sm:$0xf]
    %v9632 = vld [vmem:[%s9622 + $0x24] sm:$0xf]
    %v9634 = vunpack.c.l.b16 %v9621
    %v9635 = vpack.c.b16 %v9634, %v9634
    %v9636 = vrot.slane %v9635, 1
    %v9647 = vunpack.c.l.b16 %v9623
    %v9648 = vunpack.c.l.b16 %v9624
    %v9649 = vunpack.c.l.b16 %v9625
    %v9650 = vunpack.c.l.b16 %v9626
    %v9651 = vunpack.c.l.b16 %v9627
    %v9652 = vunpack.c.l.b16 %v9628
    %v9653 = vunpack.c.l.b16 %v9629
    %v9654 = vunpack.c.l.b16 %v9630
    %v9655 = vunpack.c.l.b16 %v9631
    %v9656 = vunpack.c.l.b16 %v9632
    %v9657 = vpack.c.b16 %v9648, %v9647
    %v9658 = vpack.c.b16 %v9650, %v9649
    %v9659 = vpack.c.b16 %v9652, %v9651
    %v9660 = vpack.c.b16 %v9654, %v9653
    %v9661 = vpack.c.b16 %v9656, %v9655
    %vm9667 = vcmask 654336
    %v9669 = vsel %vm9667, %v9636, 0
    %9671 = vmatprep.subr.bf16.mxu0 0
    %9672 = vmatpush1.bf16.msra.mxu0 %v9657
    %9673 = vmatprep.subr.bf16.mxu0 0
    %9674 = vmatpush1.bf16.msra.mxu0 %v9658
    %9675 = vmatprep.subr.bf16.mxu0 0
    %9676 = vmatpush1.bf16.msra.mxu0 %v9659
    %9677 = vmatprep.subr.bf16.mxu0 0
    %9678 = vmatpush1.bf16.msra.mxu0 %v9660
    %9679 = vmatprep.subr.bf16.mxu0 0
    %9680 = vmatpush1.bf16.msra.mxu0 %v9661
    %9681 = vmatprep.subr.bf16.mxu0 0
    %9682 = vmatpush1.bf16.msra.mxu0 0
    %9683 = vmatprep.subr.bf16.mxu0 0
    %9684 = vmatpush1.bf16.msra.mxu0 0
    %9685 = vmatprep.subr.bf16.mxu0 0
    %9686 = vmatpush1.bf16.msra.mxu0 0
    %9687 = vmatprep.subr.bf16.mxu0 0
    %9688 = vmatpush1.bf16.msra.mxu0 0
    %9689 = vmatprep.subr.bf16.mxu0 0
    %9690 = vmatpush1.bf16.msra.mxu0 0
    %9691 = vmatprep.subr.bf16.mxu0 0
    %9692 = vmatpush1.bf16.msra.mxu0 0
    %9693 = vmatprep.subr.bf16.mxu0 0
    %9694 = vmatpush1.bf16.msra.mxu0 0
    %9695 = vmatprep.subr.bf16.mxu0 0
    %9696 = vmatpush1.bf16.msra.mxu0 0
    %9697 = vmatprep.subr.bf16.mxu0 0
    %9698 = vmatpush1.bf16.msra.mxu0 0
    %9699 = vmatprep.subr.bf16.mxu0 0
    %9700 = vmatpush1.bf16.msra.mxu0 0
    %9701 = vmatprep.subr.bf16.mxu0 0
    %9702 = vmatpush1.bf16.msra.mxu0 0
    %9703 = vmatprep.mubr.bf16.mxu0 0
    %9704 = vmatmul.mubr.bf16.gmra.mrb[0].mxu0 %v9669
    %v9705 = vpop.f32.mrb[0].mxu0
    %v9706 = vadd.f32 0.0, %v9705
    %v9707 = vpop.f32.mrb[0].mxu0
    %v9708 = vpop.f32.mrb[0].mxu0
    %v9709 = vpop.f32.mrb[0].mxu0
    %9710 = vdwg.mxu0
    %v9721 = vunpack.c.l.b16 %v9611
    %v9722 = vunpack.c.l.b16 %v9612
    %v9723 = vunpack.c.l.b16 %v9613
    %v9724 = vunpack.c.l.b16 %v9614
    %v9725 = vunpack.c.l.b16 %v9615
    %v9726 = vunpack.c.l.b16 %v9616
    %v9727 = vunpack.c.l.b16 %v9617
    %v9728 = vunpack.c.l.b16 %v9618
    %v9729 = vunpack.c.l.b16 %v9619
    %v9730 = vunpack.c.l.b16 %v9620
    %v9731 = vpack.c.b16 %v9722, %v9721
    %v9732 = vpack.c.b16 %v9724, %v9723
    %v9733 = vpack.c.b16 %v9726, %v9725
    %v9734 = vpack.c.b16 %v9728, %v9727
    %v9735 = vpack.c.b16 %v9730, %v9729
    %v9742 = vsel %vm9667, %v9610, 0
    %9744 = vmatprep.subr.bf16.mxu0 0
    %9745 = vmatpush1.bf16.msra.mxu0 %v9731
    %9746 = vmatprep.subr.bf16.mxu0 0
    %9747 = vmatpush1.bf16.msra.mxu0 %v9732
    %9748 = vmatprep.subr.bf16.mxu0 0
    %9749 = vmatpush1.bf16.msra.mxu0 %v9733
    %9750 = vmatprep.subr.bf16.mxu0 0
    %9751 = vmatpush1.bf16.msra.mxu0 %v9734
    %9752 = vmatprep.subr.bf16.mxu0 0
    %9753 = vmatpush1.bf16.msra.mxu0 %v9735
    %9754 = vmatprep.subr.bf16.mxu0 0
    %9755 = vmatpush1.bf16.msra.mxu0 0
    %9756 = vmatprep.subr.bf16.mxu0 0
    %9757 = vmatpush1.bf16.msra.mxu0 0
    %9758 = vmatprep.subr.bf16.mxu0 0
    %9759 = vmatpush1.bf16.msra.mxu0 0
    %9760 = vmatprep.subr.bf16.mxu0 0
    %9761 = vmatpush1.bf16.msra.mxu0 0
    %9762 = vmatprep.subr.bf16.mxu0 0
    %9763 = vmatpush1.bf16.msra.mxu0 0
    %9764 = vmatprep.subr.bf16.mxu0 0
    %9765 = vmatpush1.bf16.msra.mxu0 0
    %9766 = vmatprep.subr.bf16.mxu0 0
    %9767 = vmatpush1.bf16.msra.mxu0 0
    %9768 = vmatprep.subr.bf16.mxu0 0
    %9769 = vmatpush1.bf16.msra.mxu0 0
    %9770 = vmatprep.subr.bf16.mxu0 0
    %9771 = vmatpush1.bf16.msra.mxu0 0
    %9772 = vmatprep.subr.bf16.mxu0 0
    %9773 = vmatpush1.bf16.msra.mxu0 0
    %9774 = vmatprep.subr.bf16.mxu0 0
    %9775 = vmatpush1.bf16.msra.mxu0 0
    %9776 = vmatprep.mubr.bf16.mxu0 0
    %9777 = vmatmul.mubr.bf16.gmra.mrb[0].mxu0 %v9742
    %v9778 = vpop.f32.mrb[0].mxu0
    %v9779 = vadd.f32 %v9706, %v9778
    %v9780 = vpop.f32.mrb[0].mxu0
    %v9781 = vpop.f32.mrb[0].mxu0
    %v9782 = vpop.f32.mrb[0].mxu0
    %9783 = vdwg.mxu0
    %v9784 = vld [vmem:[#allocation3] sm:$0x4]
    %s9785 = scalar_lea.vmem %s3, 80
    %v9786 = vld [vmem:[%s9785] sm:$0xf]
    %v9787 = vld [vmem:[%s9785 + $0x4] sm:$0xf]
    %v9788 = vld [vmem:[%s9785 + $0x8] sm:$0xf]
    %v9789 = vld [vmem:[%s9785 + $0xc] sm:$0xf]
    %v9790 = vld [vmem:[%s9785 + $0x10] sm:$0xf]
    %v9791 = vld [vmem:[%s9785 + $0x14] sm:$0xf]
    %v9792 = vld [vmem:[%s9785 + $0x18] sm:$0xf]
    %v9793 = vld [vmem:[%s9785 + $0x1c] sm:$0xf]
    %v9794 = vld [vmem:[%s9785 + $0x20] sm:$0xf]
    %v9795 = vld [vmem:[%s9785 + $0x24] sm:$0xf]
    %v9797 = vunpack.c.l.b16 %v9784
    %v9798 = vpack.c.b16 %v9797, %v9797
    %v9799 = vrot.slane %v9798, 2
    %v9810 = vunpack.c.l.b16 %v9786
    %v9811 = vunpack.c.l.b16 %v9787
    %v9812 = vunpack.c.l.b16 %v9788
    %v9813 = vunpack.c.l.b16 %v9789
    %v9814 = vunpack.c.l.b16 %v9790
    %v9815 = vunpack.c.l.b16 %v9791
    %v9816 = vunpack.c.l.b16 %v9792
    %v9817 = vunpack.c.l.b16 %v9793
    %v9818 = vunpack.c.l.b16 %v9794
    %v9819 = vunpack.c.l.b16 %v9795
    %v9820 = vpack.c.b16 %v9811, %v9810
    %v9821 = vpack.c.b16 %v9813, %v9812
    %v9822 = vpack.c.b16 %v9815, %v9814
    %v9823 = vpack.c.b16 %v9817, %v9816
    %v9824 = vpack.c.b16 %v9819, %v9818
    %v9831 = vsel %vm9667, %v9799, 0
    %9833 = vmatprep.subr.bf16.mxu0 0
    %9834 = vmatpush1.bf16.msra.mxu0 %v9820
    %9835 = vmatprep.subr.bf16.mxu0 0
    %9836 = vmatpush1.bf16.msra.mxu0 %v9821
    %9837 = vmatprep.subr.bf16.mxu0 0
    %9838 = vmatpush1.bf16.msra.mxu0 %v9822
    %9839 = vmatprep.subr.bf16.mxu0 0
    %9840 = vmatpush1.bf16.msra.mxu0 %v9823
    %9841 = vmatprep.subr.bf16.mxu0 0
    %9842 = vmatpush1.bf16.msra.mxu0 %v9824
    %9843 = vmatprep.subr.bf16.mxu0 0
    %9844 = vmatpush1.bf16.msra.mxu0 0
    %9845 = vmatprep.subr.bf16.mxu0 0
    %9846 = vmatpush1.bf16.msra.mxu0 0
    %9847 = vmatprep.subr.bf16.mxu0 0
    %9848 = vmatpush1.bf16.msra.mxu0 0
    %9849 = vmatprep.subr.bf16.mxu0 0
    %9850 = vmatpush1.bf16.msra.mxu0 0
    %9851 = vmatprep.subr.bf16.mxu0 0
    %9852 = vmatpush1.bf16.msra.mxu0 0
    %9853 = vmatprep.subr.bf16.mxu0 0
    %9854 = vmatpush1.bf16.msra.mxu0 0
    %9855 = vmatprep.subr.bf16.mxu0 0
    %9856 = vmatpush1.bf16.msra.mxu0 0
    %9857 = vmatprep.subr.bf16.mxu0 0
    %9858 = vmatpush1.bf16.msra.mxu0 0
    %9859 = vmatprep.subr.bf16.mxu0 0
    %9860 = vmatpush1.bf16.msra.mxu0 0
    %9861 = vmatprep.subr.bf16.mxu0 0
    %9862 = vmatpush1.bf16.msra.mxu0 0
    %9863 = vmatprep.subr.bf16.mxu0 0
    %9864 = vmatpush1.bf16.msra.mxu0 0
    %9865 = vmatprep.mubr.bf16.mxu0 0
    %9866 = vmatmul.mubr.bf16.gmra.mrb[0].mxu0 %v9831
    %v9867 = vpop.f32.mrb[0].mxu0
    %v9868 = vadd.f32 0.0, %v9867
    %v9869 = vpop.f32.mrb[0].mxu0
    %v9870 = vpop.f32.mrb[0].mxu0
    %v9871 = vpop.f32.mrb[0].mxu0
    %9872 = vdwg.mxu0
    %v9873 = vadd.f32 %v9779, %v9868
    %v9874 = vld [vmem:[#allocation3] sm:$0x8]
    %s9875 = scalar_lea.vmem %s3, 120
    %v9876 = vld [vmem:[%s9875] sm:$0xf]
    %v9877 = vld [vmem:[%s9875 + $0x4] sm:$0xf]
    %v9878 = vld [vmem:[%s9875 + $0x8] sm:$0xf]
    %v9879 = vld [vmem:[%s9875 + $0xc] sm:$0xf]
    %v9880 = vld [vmem:[%s9875 + $0x10] sm:$0xf]
    %v9881 = vld [vmem:[%s9875 + $0x14] sm:$0xf]
    %v9882 = vld [vmem:[%s9875 + $0x18] sm:$0xf]
    %v9883 = vld [vmem:[%s9875 + $0x1c] sm:$0xf]
    %v9884 = vld [vmem:[%s9875 + $0x20] sm:$0xf]
    %v9885 = vld [vmem:[%s9875 + $0x24] sm:$0xf]
    %v9887 = vunpack.c.l.b16 %v9874
    %v9888 = vpack.c.b16 %v9887, %v9887
    %v9889 = vrot.slane %v9888, 3
    %v9900 = vunpack.c.l.b16 %v9876
    %v9901 = vunpack.c.l.b16 %v9877
    %v9902 = vunpack.c.l.b16 %v9878
    %v9903 = vunpack.c.l.b16 %v9879
    %v9904 = vunpack.c.l.b16 %v9880
    %v9905 = vunpack.c.l.b16 %v9881
    %v9906 = vunpack.c.l.b16 %v9882
    %v9907 = vunpack.c.l.b16 %v9883
    %v9908 = vunpack.c.l.b16 %v9884
    %v9909 = vunpack.c.l.b16 %v9885
    %v9910 = vpack.c.b16 %v9901, %v9900
    %v9911 = vpack.c.b16 %v9903, %v9902
    %v9912 = vpack.c.b16 %v9905, %v9904
    %v9913 = vpack.c.b16 %v9907, %v9906
    %v9914 = vpack.c.b16 %v9909, %v9908
    %v9921 = vsel %vm9667, %v9889, 0
    %9923 = vmatprep.subr.bf16.mxu0 0
    %9924 = vmatpush1.bf16.msra.mxu0 %v9910
    %9925 = vmatprep.subr.bf16.mxu0 0
    %9926 = vmatpush1.bf16.msra.mxu0 %v9911
    %9927 = vmatprep.subr.bf16.mxu0 0
    %9928 = vmatpush1.bf16.msra.mxu0 %v9912
    %9929 = vmatprep.subr.bf16.mxu0 0
    %9930 = vmatpush1.bf16.msra.mxu0 %v9913
    %9931 = vmatprep.subr.bf16.mxu0 0
    %9932 = vmatpush1.bf16.msra.mxu0 %v9914
    %9933 = vmatprep.subr.bf16.mxu0 0
    %9934 = vmatpush1.bf16.msra.mxu0 0
    %9935 = vmatprep.subr.bf16.mxu0 0
    %9936 = vmatpush1.bf16.msra.mxu0 0
    %9937 = vmatprep.subr.bf16.mxu0 0
    %9938 = vmatpush1.bf16.msra.mxu0 0
    %9939 = vmatprep.subr.bf16.mxu0 0
    %9940 = vmatpush1.bf16.msra.mxu0 0
    %9941 = vmatprep.subr.bf16.mxu0 0
    %9942 = vmatpush1.bf16.msra.mxu0 0
    %9943 = vmatprep.subr.bf16.mxu0 0
    %9944 = vmatpush1.bf16.msra.mxu0 0
    %9945 = vmatprep.subr.bf16.mxu0 0
    %9946 = vmatpush1.bf16.msra.mxu0 0
    %9947 = vmatprep.subr.bf16.mxu0 0
    %9948 = vmatpush1.bf16.msra.mxu0 0
    %9949 = vmatprep.subr.bf16.mxu0 0
    %9950 = vmatpush1.bf16.msra.mxu0 0
    %9951 = vmatprep.subr.bf16.mxu0 0
    %9952 = vmatpush1.bf16.msra.mxu0 0
    %9953 = vmatprep.subr.bf16.mxu0 0
    %9954 = vmatpush1.bf16.msra.mxu0 0
    %9955 = vmatprep.mubr.bf16.mxu0 0
    %9956 = vmatmul.mubr.bf16.gmra.mrb[0].mxu0 %v9921
    %v9957 = vpop.f32.mrb[0].mxu0
    %v9958 = vadd.f32 0.0, %v9957
    %v9959 = vpop.f32.mrb[0].mxu0
    %v9960 = vpop.f32.mrb[0].mxu0
    %v9961 = vpop.f32.mrb[0].mxu0
    %9962 = vdwg.mxu0
    %v9963 = vadd.f32 %v9873, %v9958
    %v9964 = vld [vmem:[#allocation3 + $0x4] sm:$0x1]
    %s9965 = scalar_lea.vmem %s3, 160
    %v9966 = vld [vmem:[%s9965] sm:$0xf]
    %v9967 = vld [vmem:[%s9965 + $0x4] sm:$0xf]
    %v9968 = vld [vmem:[%s9965 + $0x8] sm:$0xf]
    %v9969 = vld [vmem:[%s9965 + $0xc] sm:$0xf]
    %v9970 = vld [vmem:[%s9965 + $0x10] sm:$0xf]
    %v9971 = vld [vmem:[%s9965 + $0x14] sm:$0xf]
    %v9972 = vld [vmem:[%s9965 + $0x18] sm:$0xf]
    %v9973 = vld [vmem:[%s9965 + $0x1c] sm:$0xf]
    %v9974 = vld [vmem:[%s9965 + $0x20] sm:$0xf]
    %v9975 = vld [vmem:[%s9965 + $0x24] sm:$0xf]
    %v9986 = vunpack.c.l.b16 %v9966
    %v9987 = vunpack.c.l.b16 %v9967
    %v9988 = vunpack.c.l.b16 %v9968
    %v9989 = vunpack.c.l.b16 %v9969
    %v9990 = vunpack.c.l.b16 %v9970
    %v9991 = vunpack.c.l.b16 %v9971
    %v9992 = vunpack.c.l.b16 %v9972
    %v9993 = vunpack.c.l.b16 %v9973
    %v9994 = vunpack.c.l.b16 %v9974
    %v9995 = vunpack.c.l.b16 %v9975
    %v9996 = vpack.c.b16 %v9987, %v9986
    %v9997 = vpack.c.b16 %v9989, %v9988
    %v9998 = vpack.c.b16 %v9991, %v9990
    %v9999 = vpack.c.b16 %v9993, %v9992
    %v10000 = vpack.c.b16 %v9995, %v9994
    %v10007 = vsel %vm9667, %v9964, 0
    %10009 = vmatprep.subr.bf16.mxu0 0
    %10010 = vmatpush1.bf16.msra.mxu0 %v9996
    %10011 = vmatprep.subr.bf16.mxu0 0
    %10012 = vmatpush1.bf16.msra.mxu0 %v9997
    %10013 = vmatprep.subr.bf16.mxu0 0
    %10014 = vmatpush1.bf16.msra.mxu0 %v9998
    %10015 = vmatprep.subr.bf16.mxu0 0
    %10016 = vmatpush1.bf16.msra.mxu0 %v9999
    %10017 = vmatprep.subr.bf16.mxu0 0
    %10018 = vmatpush1.bf16.msra.mxu0 %v10000
    %10019 = vmatprep.subr.bf16.mxu0 0
    %10020 = vmatpush1.bf16.msra.mxu0 0
    %10021 = vmatprep.subr.bf16.mxu0 0
    %10022 = vmatpush1.bf16.msra.mxu0 0
    %10023 = vmatprep.subr.bf16.mxu0 0
    %10024 = vmatpush1.bf16.msra.mxu0 0
    %10025 = vmatprep.subr.bf16.mxu0 0
    %10026 = vmatpush1.bf16.msra.mxu0 0
    %10027 = vmatprep.subr.bf16.mxu0 0
    %10028 = vmatpush1.bf16.msra.mxu0 0
    %10029 = vmatprep.subr.bf16.mxu0 0
    %10030 = vmatpush1.bf16.msra.mxu0 0
    %10031 = vmatprep.subr.bf16.mxu0 0
    %10032 = vmatpush1.bf16.msra.mxu0 0
    %10033 = vmatprep.subr.bf16.mxu0 0
    %10034 = vmatpush1.bf16.msra.mxu0 0
    %10035 = vmatprep.subr.bf16.mxu0 0
    %10036 = vmatpush1.bf16.msra.mxu0 0
    %10037 = vmatprep.subr.bf16.mxu0 0
    %10038 = vmatpush1.bf16.msra.mxu0 0
    %10039 = vmatprep.subr.bf16.mxu0 0
    %10040 = vmatpush1.bf16.msra.mxu0 0
    %10041 = vmatprep.mubr.bf16.mxu0 0
    %10042 = vmatmul.mubr.bf16.gmra.mrb[0].mxu0 %v10007
    %v10043 = vpop.f32.mrb[0].mxu0
    %v10044 = vadd.f32 0.0, %v10043
    %v10045 = vpop.f32.mrb[0].mxu0
    %v10046 = vpop.f32.mrb[0].mxu0
    %v10047 = vpop.f32.mrb[0].mxu0
    %10048 = vdwg.mxu0
    %v10049 = vadd.f32 %v9963, %v10044
    %vm10050 = vcmask 975872
    %v10051 = vsel %vm10050, %v10049, 0.0
    %v10052 = vrot.slane %v10051, 4
    %v10053 = vadd.f32 %v10051, %v10052
    %v10054 = vrot.slane %v10053, 2
    %v10055 = vadd.f32 %v10053, %v10054
    %v10056 = vrot.slane %v10055, 1
    %v10057 = vadd.f32 %v10055, %v10056
    %v10058 = vrcp.pop 2.0
    %v10059 = vmul.f32 %v10057, %v10058
    %v10060 = vsub.f32 %v10049, %v10059
    %v10061 = vmul.f32 %v10060, %v10060
    %v10062 = vsel %vm10050, %v10061, 0.0
    %v10063 = vrot.slane %v10062, 4
    %v10064 = vadd.f32 %v10062, %v10063
    %v10065 = vrot.slane %v10064, 2
    %v10066 = vadd.f32 %v10064, %v10065
    %v10067 = vrot.slane %v10066, 1
    %v10068 = vadd.f32 %v10066, %v10067
    %v10069 = vmul.f32 %v10068, %v10058
    %v10070 = vadd.f32 %v10069, 1e-05
    %v10071 = vrsqrt.pop %v10070
    %v10072 = vmul.f32 %v10060, %v10071
    %v10073 = vld [vmem:[%s4] sm:$0xf]
    %v10074 = vld [vmem:[%s4 + $0x4] sm:$0xf]
    %v10075 = vld [vmem:[%s4 + $0x8] sm:$0xf]
    %v10076 = vld [vmem:[%s4 + $0xc] sm:$0xf]
    %v10077 = vld [vmem:[%s4 + $0x10] sm:$0xf]
    %v10078 = vld [vmem:[%s4 + $0x14] sm:$0xf]
    %v10079 = vld [vmem:[%s4 + $0x18] sm:$0xf]
    %v10080 = vld [vmem:[%s4 + $0x1c] sm:$0xf]
    %v10081 = vld [vmem:[%s4 + $0x20] sm:$0xf]
    %v10082 = vld [vmem:[%s4 + $0x24] sm:$0xf]
    %v10083 = vld [vmem:[%s4 + $0x28] sm:$0xf]
    %v10084 = vld [vmem:[%s4 + $0x2c] sm:$0xf]
    %v10085 = vld [vmem:[%s4 + $0x30] sm:$0xf]
    %v10086 = vld [vmem:[%s4 + $0x34] sm:$0xf]
    %v10087 = vld [vmem:[%s4 + $0x38] sm:$0xf]
    %v10088 = vpack.c.bf16 %v10072, %v10072
    %v10104 = vunpack.c.l.b16 %v10073
    %v10105 = vunpack.c.l.b16 %v10074
    %v10106 = vunpack.c.l.b16 %v10075
    %v10107 = vunpack.c.l.b16 %v10076
    %v10108 = vunpack.c.l.b16 %v10077
    %v10109 = vunpack.c.l.b16 %v10078
    %v10110 = vunpack.c.l.b16 %v10079
    %v10111 = vunpack.c.l.b16 %v10080
    %v10112 = vunpack.c.l.b16 %v10081
    %v10113 = vunpack.c.l.b16 %v10082
    %v10114 = vunpack.c.l.b16 %v10083
    %v10115 = vunpack.c.l.b16 %v10084
    %v10116 = vunpack.c.l.b16 %v10085
    %v10117 = vunpack.c.l.b16 %v10086
    %v10118 = vunpack.c.l.b16 %v10087
    %v10119 = vpack.c.b16 %v10105, %v10104
    %v10120 = vpack.c.b16 %v10107, %v10106
    %v10121 = vpack.c.b16 %v10109, %v10108
    %v10122 = vpack.c.b16 %v10111, %v10110
    %v10123 = vpack.c.b16 %v10113, %v10112
    %v10124 = vpack.c.b16 %v10115, %v10114
    %v10125 = vpack.c.b16 %v10117, %v10116
    %v10126 = vpack.c.b16 %v10118, %v10118
    %vm10134 = vcmask 982016
    %v10136 = vsel %vm10134, %v10088, 0
    %v10139 = vsel %vm5759, %v10126, 0
    %10141 = vmatprep.subr.bf16.mxu0 0
    %10142 = vmatpush1.bf16.msra.mxu0 %v10119
    %10143 = vmatprep.subr.bf16.mxu0 0
    %10144 = vmatpush1.bf16.msra.mxu0 %v10120
    %10145 = vmatprep.subr.bf16.mxu0 0
    %10146 = vmatpush1.bf16.msra.mxu0 %v10121
    %10147 = vmatprep.subr.bf16.mxu0 0
    %10148 = vmatpush1.bf16.msra.mxu0 %v10122
    %10149 = vmatprep.subr.bf16.mxu0 0
    %10150 = vmatpush1.bf16.msra.mxu0 %v10123
    %10151 = vmatprep.subr.bf16.mxu0 0
    %10152 = vmatpush1.bf16.msra.mxu0 %v10124
    %10153 = vmatprep.subr.bf16.mxu0 0
    %10154 = vmatpush1.bf16.msra.mxu0 %v10125
    %10155 = vmatprep.subr.bf16.mxu0 0
    %10156 = vmatpush1.bf16.msra.mxu0 %v10139
    %10157 = vmatprep.subr.bf16.mxu0 0
    %10158 = vmatpush1.bf16.msra.mxu0 0
    %10159 = vmatprep.subr.bf16.mxu0 0
    %10160 = vmatpush1.bf16.msra.mxu0 0
    %10161 = vmatprep.subr.bf16.mxu0 0
    %10162 = vmatpush1.bf16.msra.mxu0 0
    %10163 = vmatprep.subr.bf16.mxu0 0
    %10164 = vmatpush1.bf16.msra.mxu0 0
    %10165 = vmatprep.subr.bf16.mxu0 0
    %10166 = vmatpush1.bf16.msra.mxu0 0
    %10167 = vmatprep.subr.bf16.mxu0 0
    %10168 = vmatpush1.bf16.msra.mxu0 0
    %10169 = vmatprep.subr.bf16.mxu0 0
    %10170 = vmatpush1.bf16.msra.mxu0 0
    %10171 = vmatprep.subr.bf16.mxu0 0
    %10172 = vmatpush1.bf16.msra.mxu0 0
    %10173 = vmatprep.mubr.bf16.mxu0 0
    %10174 = vmatmul.mubr.bf16.gmra.mrb[0].mxu0 %v10136
    %v10175 = vpop.f32.mrb[0].mxu0
    %v10176 = vadd.f32 0.0, %v10175
    %v10177 = vpop.f32.mrb[0].mxu0
    %v10178 = vpop.f32.mrb[0].mxu0
    %v10179 = vpop.f32.mrb[0].mxu0
    %10180 = vdwg.mxu0
    %v10181 = vsel %vm4986, %v10176, 0.0
    %v10182 = vrot.slane %v10181, 4
    %v10183 = vadd.f32 %v10181, %v10182
    %v10184 = vrot.slane %v10183, 2
    %v10185 = vadd.f32 %v10183, %v10184
    %v10186 = vrot.slane %v10185, 1
    %v10187 = vadd.f32 %v10185, %v10186
    %v10188 = vmul.f32 %v10187, %v10058
    %v10189 = vsub.f32 %v10176, %v10188
    %v10190 = vmul.f32 %v10189, %v10189
    %v10191 = vsel %vm4986, %v10190, 0.0
    %v10192 = vrot.slane %v10191, 4
    %v10193 = vadd.f32 %v10191, %v10192
    %v10194 = vrot.slane %v10193, 2
    %v10195 = vadd.f32 %v10193, %v10194
    %v10196 = vrot.slane %v10195, 1
    %v10197 = vadd.f32 %v10195, %v10196
    %v10198 = vmul.f32 %v10197, %v10058
    %v10199 = vadd.f32 %v10198, 1e-05
    %v10200 = vrsqrt.pop %v10199
    %v10201 = vmul.f32 %v10189, %v10200
    %v10202 = vld [vmem:[%s5] sm:$0xf]
    %v10203 = vld [vmem:[%s5 + $0x4] sm:$0xf]
    %v10204 = vld [vmem:[%s5 + $0x8] sm:$0xf]
    %v10205 = vld [vmem:[%s5 + $0xc] sm:$0xf]
    %v10206 = vld [vmem:[%s5 + $0x10] sm:$0xf]
    %v10207 = vld [vmem:[%s5 + $0x14] sm:$0xf]
    %v10208 = vld [vmem:[%s5 + $0x18] sm:$0xf]
    %v10209 = vld [vmem:[%s5 + $0x1c] sm:$0xf]
    %v10210 = vld [vmem:[%s5 + $0x20] sm:$0xf]
    %v10211 = vld [vmem:[%s5 + $0x24] sm:$0xf]
    %v10212 = vld [vmem:[%s5 + $0x28] sm:$0x3]
    %v10213 = vpack.c.bf16 %v10201, %v10201
    %v10225 = vunpack.c.l.b16 %v10202
    %v10226 = vunpack.c.l.b16 %v10203
    %v10227 = vunpack.c.l.b16 %v10204
    %v10228 = vunpack.c.l.b16 %v10205
    %v10229 = vunpack.c.l.b16 %v10206
    %v10230 = vunpack.c.l.b16 %v10207
    %v10231 = vunpack.c.l.b16 %v10208
    %v10232 = vunpack.c.l.b16 %v10209
    %v10233 = vunpack.c.l.b16 %v10210
    %v10234 = vunpack.c.l.b16 %v10211
    %v10235 = vunpack.c.l.b16 %v10212
    %v10236 = vpack.c.b16 %v10226, %v10225
    %v10237 = vpack.c.b16 %v10228, %v10227
    %v10238 = vpack.c.b16 %v10230, %v10229
    %v10239 = vpack.c.b16 %v10232, %v10231
    %v10240 = vpack.c.b16 %v10234, %v10233
    %v10241 = vpack.c.b16 %v10235, %v10235
    %v10248 = vsel %vm5082, %v10213, 0
    %v10251 = vsel %vm5089, %v10241, 0
    %10253 = vmatprep.subr.bf16.mxu0 0
    %10254 = vmatpush1.bf16.msra.mxu0 %v10236
    %10255 = vmatprep.subr.bf16.mxu0 0
    %10256 = vmatpush1.bf16.msra.mxu0 %v10237
    %10257 = vmatprep.subr.bf16.mxu0 0
    %10258 = vmatpush1.bf16.msra.mxu0 %v10238
    %10259 = vmatprep.subr.bf16.mxu0 0
    %10260 = vmatpush1.bf16.msra.mxu0 %v10239
    %10261 = vmatprep.subr.bf16.mxu0 0
    %10262 = vmatpush1.bf16.msra.mxu0 %v10240
    %10263 = vmatprep.subr.bf16.mxu0 0
    %10264 = vmatpush1.bf16.msra.mxu0 %v10251
    %10265 = vmatprep.subr.bf16.mxu0 0
    %10266 = vmatpush1.bf16.msra.mxu0 0
    %10267 = vmatprep.subr.bf16.mxu0 0
    %10268 = vmatpush1.bf16.msra.mxu0 0
    %10269 = vmatprep.subr.bf16.mxu0 0
    %10270 = vmatpush1.bf16.msra.mxu0 0
    %10271 = vmatprep.subr.bf16.mxu0 0
    %10272 = vmatpush1.bf16.msra.mxu0 0
    %10273 = vmatprep.subr.bf16.mxu0 0
    %10274 = vmatpush1.bf16.msra.mxu0 0
    %10275 = vmatprep.subr.bf16.mxu0 0
    %10276 = vmatpush1.bf16.msra.mxu0 0
    %10277 = vmatprep.subr.bf16.mxu0 0
    %10278 = vmatpush1.bf16.msra.mxu0 0
    %10279 = vmatprep.subr.bf16.mxu0 0
    %10280 = vmatpush1.bf16.msra.mxu0 0
    %10281 = vmatprep.subr.bf16.mxu0 0
    %10282 = vmatpush1.bf16.msra.mxu0 0
    %10283 = vmatprep.subr.bf16.mxu0 0
    %10284 = vmatpush1.bf16.msra.mxu0 0
    %10285 = vmatprep.mubr.bf16.mxu0 0
    %10286 = vmatmul.mubr.bf16.gmra.mrb[0].mxu0 %v10248
    %v10287 = vpop.f32.mrb[0].mxu0
    %v10288 = vadd.f32 0.0, %v10287
    %v10289 = vpop.f32.mrb[0].mxu0
    %v10290 = vpop.f32.mrb[0].mxu0
    %v10291 = vpop.f32.mrb[0].mxu0
    %10292 = vdwg.mxu0
    %vm10293 = vcmask 74752
    %v10294 = vsel %vm10293, %v10288, 0.0
    %v10295 = vrot.slane %v10294, 4
    %v10296 = vadd.f32 %v10294, %v10295
    %v10297 = vrot.slane %v10296, 2
    %v10298 = vadd.f32 %v10296, %v10297
    %v10299 = vrot.slane %v10298, 1
    %v10300 = vadd.f32 %v10298, %v10299
    %v10301 = vmul.f32 %v10300, %v10058
    %v10302 = vsub.f32 %v10288, %v10301
    %v10303 = vmul.f32 %v10302, %v10302
    %v10304 = vsel %vm10293, %v10303, 0.0
    %v10305 = vrot.slane %v10304, 4
    %v10306 = vadd.f32 %v10304, %v10305
    %v10307 = vrot.slane %v10306, 2
    %v10308 = vadd.f32 %v10306, %v10307
    %v10309 = vrot.slane %v10308, 1
    %v10310 = vadd.f32 %v10308, %v10309
    %v10311 = vmul.f32 %v10310, %v10058
    %v10312 = vadd.f32 %v10311, 1e-05
    %v10313 = vrsqrt.pop %v10312
    %v10314 = vmul.f32 %v10302, %v10313
    %10315 = vst.msk [vmem:[#allocation4] sm:$0x3] %vm10293, %v10314
    // Predicated region
    $region58: #{cnn_batch_forward.1} parent=1 // pred_check
      _
    $region59: #{cnn_batch_forward.1} parent=1 // pred_check_branch
      %10317 = sbr.rel (0) target = $region61
    $region60: #{cnn_batch_forward.1} parent=1 // pred_region
      %s10319 = ssub.s32 32, 32
      %10320 = vsyncadd [#allocation5], %s10319
      %s10322 = sshll.u32 [#allocation4], 4
      %s10323 = int_to_ptr.vmem [resolvable:$true] %s10322
      %10325 = dma.vmem_to_hbm [thread:$0]  %s10323, 32, %s14, [#allocation5]
    $region61: #{cnn_batch_forward.1} parent=1 // pred_fallthru
      _
    // Predicated region
    $region62: #{cnn_batch_forward.1} parent=1 // pred_check
      _
    $region63: #{cnn_batch_forward.1} parent=1 // pred_check_branch
      %10327 = sbr.rel (0) target = $region65
    $region64: #{cnn_batch_forward.1} parent=1 // pred_region
      %10328 = dma.done [#allocation5], 32
    $region65: #{cnn_batch_forward.1} parent=1 // pred_fallthru
      _
    %10329 = vsyncpa [#allocation5], 1

</llo_original>
